<compile_context>
chip_gen: v6e
topology: v6e:2x2x1
jax: 0.10.0
libtpu: 0.0.40
codegen_flags: <defaults>
</compile_context>

<pallas_src>
import functools

import numpy as np

import jax
import jax.numpy as jnp
from jax.experimental import pallas as pl
from jax.experimental.pallas import tpu as pltpu


# ----------------------------------------------------------------------------
# Host-side constant builders (numpy -> baked-in constants under jit)
# ----------------------------------------------------------------------------
def _interp_matrix(n_in, n_out):
    """Row-stochastic bilinear interpolation matrix, align_corners=True."""
    if n_in == 1:
        return np.ones((n_out, 1), np.float32)
    src = np.arange(n_out, dtype=np.float64) * (n_in - 1) / (n_out - 1)
    lo = np.clip(np.floor(src).astype(np.int64), 0, n_in - 1)
    hi = np.minimum(lo + 1, n_in - 1)
    frac = (src - lo).astype(np.float32)
    m = np.zeros((n_out, n_in), np.float32)
    m[np.arange(n_out), lo] += 1.0 - frac
    m[np.arange(n_out), hi] += frac
    return m


def _upsample_pad_matrix(h_in, w_in, h_out, w_out):
    """(h_out*w_out, h_in*w_in): bilinear 2x upsample (align_corners=True) followed by
    F.pad placement into the (h_out, w_out) skip-connection grid (rows outside the
    upsampled window are all-zero)."""
    ho, wo = 2 * h_in, 2 * w_in
    uh = _interp_matrix(h_in, ho)          # (ho, h_in)
    uw = _interp_matrix(w_in, wo)          # (wo, w_in)
    dy, dx = h_out - ho, w_out - wo
    py, px = dy // 2, dx // 2
    m = np.zeros((h_out, w_out, h_in, w_in), np.float32)
    m[py:py + ho, px:px + wo] = np.einsum("ah,bw->abhw", uh, uw)
    return m.reshape(h_out * w_out, h_in * w_in)


def _tap_masks(h, w):
    """(9, 1, h*w) {0,1} masks: mask[t, 0, p] = 1 iff tap t of a padding=1 3x3 conv at
    flattened output position p reads an in-bounds pixel (kills rolled-wrap taps)."""
    hh, ww = np.meshgrid(np.arange(h), np.arange(w), indexing="ij")
    masks = []
    for oy in (-1, 0, 1):
        for ox in (-1, 0, 1):
            ok = (hh + oy >= 0) & (hh + oy < h) & (ww + ox >= 0) & (ww + ox < w)
            masks.append(ok.astype(np.float32).reshape(1, h * w))
    return np.stack(masks, axis=0)


def _group_reduce_matrix(c, groups):
    """(groups, c) one-hot matrix: row g sums the channels of GroupNorm group g."""
    ch_group = np.arange(c) // (c // groups)
    return (ch_group[None, :] == np.arange(groups)[:, None]).astype(np.float32)


def _compiler_params():
    # Megacore: shard the per-sample grid axis across TensorCores (v7x); no-op on v5e/v6e.
    cp = getattr(pltpu, "CompilerParams", None) or getattr(pltpu, "TPUCompilerParams")
    return cp(dimension_semantics=("parallel",))


# ----------------------------------------------------------------------------
# Fused Pallas kernel: one grid step == one sample, activations are (C, H*W)
# ----------------------------------------------------------------------------
def _up_kernel(
    x1_ref, x2_ref, up_ref, masks_ref, gredT_ref, gbcT_ref,
    w1a_ref, w1b_ref, gn1_g_ref, gn1_b_ref, w2_ref,
    rc1_w_ref, rc1_b_ref,
    rl0_w_ref, rl0_b_ref, rl0_g_ref, rl0_beta_ref,
    rl1_w_ref, rl1_b_ref, rl1_g_ref, rl1_beta_ref,
    rc2_w_ref, rc2_b_ref,
    gn2_g_ref, gn2_b_ref,
    o_ref, *, H, W, cout, groups):
    f32, bf16 = jnp.float32, jnp.bfloat16
    HW = H * W

    def conv3x3(z, w_ref, bias_ref=None):
        # z: (Cin, HW) f32.  w_ref: (9, Cout, Cin) bf16, taps in (ky, kx) row-major
        # order == torch weight (Cout, Cin, 3, 3).transpose(2, 3, 0, 1).reshape(9, Cout, Cin).
        # padding=1 3x3 conv as 9 lane-rolled tap matmuls, f32 accumulation (no im2col).
        acc = jnp.zeros((cout, HW), f32)
        tap = 0
        for oy in (-1, 0, 1):
            for ox in (-1, 0, 1):
                off = oy * W + ox
                # want src[c, p] = z[c, p + off]; jnp.roll semantics -> shift = -off
                src = z if off == 0 else pltpu.roll(z, shift=(-off) % HW, axis=1)
                src = src * masks_ref[tap]          # (1, HW) border mask
                acc = acc + jnp.dot(w_ref[tap], src.astype(bf16),
                                    preferred_element_type=f32)
                tap += 1
        if bias_ref is not None:
            acc = acc + bias_ref[...]               # (Cout, 1) broadcast over lanes
        return acc

    def conv1x1(z, w_ref, bias_ref):
        return jnp.dot(w_ref[...], z.astype(bf16),
                       preferred_element_type=f32) + bias_ref[...]

    def gn_silu(h, g_ref, b_ref):
        # GroupNorm(groups, cout, eps=1e-5, affine) + SiLU; stats/elementwise kept in f32.
        cnt = float(HW * (cout // groups))
        s1 = jnp.sum(h, axis=1, keepdims=True)          # (C, 1) per-channel sum
        s2 = jnp.sum(h * h, axis=1, keepdims=True)
        mean = jnp.dot(gbcT_ref[...],
                       jnp.dot(gredT_ref[...], s1, preferred_element_type=f32),
                       preferred_element_type=f32) / cnt
        msq = jnp.dot(gbcT_ref[...],
                      jnp.dot(gredT_ref[...], s2, preferred_element_type=f32),
                      preferred_element_type=f32) / cnt
        var = msq - mean * mean                          # biased variance (torch GN)
        inv = jax.lax.rsqrt(var + 1e-5)
        y = (h - mean) * inv * g_ref[...] + b_ref[...]
        return y * jax.nn.sigmoid(y)                     # SiLU

    # bilinear 2x upsample (align_corners=True) + F.pad, folded into one matmul
    x1u = jnp.dot(x1_ref[...].astype(bf16), up_ref[...],
                  preferred_element_type=f32)            # (C1, HW)
    x2 = x2_ref[...]                                      # (C2, HW)

    # ---- DoubleConv ----
    # first 3x3 conv over torch.cat([x2, x1], dim=1) == sum of convs with split weights
    h = conv3x3(x2, w1a_ref) + conv3x3(x1u, w1b_ref)      # bias=False
    h = gn_silu(h, gn1_g_ref, gn1_b_ref)
    h = conv3x3(h, w2_ref)                                # bias=False

    # ---- ResBlock(cout, cout) ----
    r = conv1x1(h, rc1_w_ref, rc1_b_ref)
    r = gn_silu(conv3x3(r, rl0_w_ref, rl0_b_ref), rl0_g_ref, rl0_beta_ref) + r
    r = gn_silu(conv3x3(r, rl1_w_ref, rl1_b_ref), rl1_g_ref, rl1_beta_ref) + r
    # skip is nn.Identity and is applied to the *post-layers* tensor: x + skip(x) == 2x
    r = r + r
    r = conv1x1(r, rc2_w_ref, rc2_b_ref)

    # ---- trailing GroupNorm + SiLU of DoubleConv ----
    o_ref[...] = gn_silu(r, gn2_g_ref, gn2_b_ref)


# ----------------------------------------------------------------------------
# Up.forward wrapper (inputs/outputs in NCHW, matching the PyTorch module)
# ----------------------------------------------------------------------------
def up_forward(params, x1, x2):
    """x1: (N, C1, H1, W1) low-res features; x2: (N, C2, 2*H1.., 2*W1..) skip connection.
    Returns (N, Cout, H2, W2), matching Up(in_channels=C1+C2, out_channels).forward."""
    N, C1, H1, W1 = x1.shape
    N2, C2, H2, W2 = x2.shape
    assert N == N2 and H2 >= 2 * H1 and W2 >= 2 * W1
    COUT = params["dc_gn1_g"].shape[0]
    G = 8
    assert COUT % G == 0
    assert params["dc_w1"].shape == (9, COUT, C1 + C2)
    HW1, HW2 = H1 * W1, H2 * W2

    # Constants (built with numpy at trace time -> jit-time constants).
    upT = jnp.asarray(np.ascontiguousarray(_upsample_pad_matrix(H1, W1, H2, W2).T),
                      jnp.bfloat16)                                  # (HW1, HW2)
    masks = jnp.asarray(_tap_masks(H2, W2), jnp.float32)             # (9, 1, HW2)
    gredT_np = _group_reduce_matrix(COUT, G)
    gredT = jnp.asarray(gredT_np, jnp.float32)                       # (G, COUT)
    gbcT = jnp.asarray(np.ascontiguousarray(gredT_np.T), jnp.float32)  # (COUT, G)

    bf = lambda a: a.astype(jnp.bfloat16)          # MXU operands in bf16
    col = lambda a: a.reshape(-1, 1).astype(jnp.float32)   # (C,) -> (C, 1) lane-broadcast
    w1 = bf(params["dc_w1"])                       # (9, COUT, C2 + C1): cin = [x2 | x1]
    w1a, w1b = w1[:, :, :C2], w1[:, :, C2:]

    operands = (
        x1.reshape(N, C1, HW1).astype(jnp.float32),
        x2.reshape(N, C2, HW2).astype(jnp.float32),
        upT, masks, gredT, gbcT,
        w1a, w1b, col(params["dc_gn1_g"]), col(params["dc_gn1_b"]),
        bf(params["dc_w2"]),
        bf(params["rb_c1_w"]), col(params["rb_c1_b"]),
        bf(params["rb_l0_w"]), col(params["rb_l0_b"]),
        col(params["rb_l0_gn_g"]), col(params["rb_l0_gn_b"]),
        bf(params["rb_l1_w"]), col(params["rb_l1_b"]),
        col(params["rb_l1_gn_g"]), col(params["rb_l1_gn_b"]),
        bf(params["rb_c2_w"]), col(params["rb_c2_b"]),
        col(params["dc_gn2_g"]), col(params["dc_gn2_b"]),
    )

    def full(shape):
        zero = (0,) * len(shape)
        return pl.BlockSpec(shape, lambda n: zero)      # resident across the grid

    def per_sample(inner):
        return pl.BlockSpec((None,) + inner, lambda n: (n, 0, 0))

    in_specs = [
        per_sample((C1, HW1)),
        per_sample((C2, HW2)),
        full((HW1, HW2)),
        full((9, 1, HW2)),
        full((G, COUT)),
        full((COUT, G)),
        full((9, COUT, C2)),
        full((9, COUT, C1)),
        full((COUT, 1)), full((COUT, 1)),
        full((9, COUT, COUT)),
        full((COUT, COUT)), full((COUT, 1)),
        full((9, COUT, COUT)), full((COUT, 1)),
        full((COUT, 1)), full((COUT, 1)),
        full((9, COUT, COUT)), full((COUT, 1)),
        full((COUT, 1)), full((COUT, 1)),
        full((COUT, COUT)), full((COUT, 1)),
        full((COUT, 1)), full((COUT, 1)),
    ]

    kernel = functools.partial(_up_kernel, H=H2, W=W2, cout=COUT, groups=G)

    out = pl.pallas_call(
        kernel,
        out_shape=jax.ShapeDtypeStruct((N, COUT, HW2), jnp.float32),
        grid=(N,),
        in_specs=in_specs,
        out_specs=pl.BlockSpec((None, COUT, HW2), lambda n: (n, 0, 0)),
        compiler_params=_compiler_params(),
    )(*operands)
    return out.reshape(N, COUT, H2, W2)


# ----------------------------------------------------------------------------
# Synthetic parameters (kernel layout)
# ----------------------------------------------------------------------------
def make_params(in_channels, out_channels, key):
    """3x3 conv weights: (9, Cout, Cin) with taps in (ky, kx) row-major order
       (== torch (Cout, Cin, 3, 3).transpose(2, 3, 0, 1).reshape(9, Cout, Cin));
       1x1 conv weights: (Cout, Cin); biases / GroupNorm affine: (C,)."""
    ks = jax.random.split(key, 10)
    w = lambda k, shape: (0.1 * jax.random.normal(k, shape)).astype(jnp.float32)
    b = lambda k, shape: (0.05 * jax.random.normal(k, shape)).astype(jnp.float32)
    ones = jnp.ones((out_channels,), jnp.float32)
    zeros = jnp.zeros((out_channels,), jnp.float32)
    return {
        # DoubleConv
        "dc_w1": w(ks[0], (9, out_channels, in_channels)),
        "dc_gn1_g": ones, "dc_gn1_b": zeros,
        "dc_w2": w(ks[1], (9, out_channels, out_channels)),
        # ResBlock(out, out)
        "rb_c1_w": w(ks[2], (out_channels, out_channels)),
        "rb_c1_b": b(ks[3], (out_channels,)),
        "rb_l0_w": w(ks[4], (9, out_channels, out_channels)),
        "rb_l0_b": b(ks[5], (out_channels,)),
        "rb_l0_gn_g": ones, "rb_l0_gn_b": zeros,
        "rb_l1_w": w(ks[6], (9, out_channels, out_channels)),
        "rb_l1_b": b(ks[7], (out_channels,)),
        "rb_l1_gn_g": ones, "rb_l1_gn_b": zeros,
        "rb_c2_w": w(ks[8], (out_channels, out_channels)),
        "rb_c2_b": b(ks[9], (out_channels,)),
        # trailing GroupNorm of DoubleConv
        "dc_gn2_g": ones, "dc_gn2_b": zeros,
    }


if __name__ == "__main__":
    key = jax.random.PRNGKey(0)
    k1, k2, kp = jax.random.split(key, 3)

    # NCHW, matching the PyTorch module:
    #   x1: low-res features (N=2, C=8, 8x8); x2: skip connection (N=2, C=8, 16x16)
    #   Up(in_channels=16, out_channels=16)   (16 = 8 + 8 concatenated channels)
    x1 = jax.random.normal(k1, (2, 8, 8, 8), jnp.float32)
    x2 = jax.random.normal(k2, (2, 8, 16, 16), jnp.float32)
    params = make_params(in_channels=16, out_channels=16, key=kp)

    fwd = jax.jit(up_forward)
    out = jax.block_until_ready(fwd(params, x1, x2))
    assert out.shape == (2, 16, 16, 16) and out.dtype == jnp.float32
    assert bool(jnp.isfinite(out).all())
    print("KERNEL_OK")
</pallas_src>

<mosaic_0001>
module attributes {stable_mosaic.version = 11 : i64} {
  func.func @_up_kernel(%arg0: i32, %arg1: memref<1x8x64xf32, #tpu.memory_space<vmem>>, %arg2: memref<1x8x256xf32, #tpu.memory_space<vmem>>, %arg3: memref<64x256xbf16, #tpu.memory_space<vmem>>, %arg4: memref<9x1x256xf32, #tpu.memory_space<vmem>>, %arg5: memref<8x16xf32, #tpu.memory_space<vmem>>, %arg6: memref<16x8xf32, #tpu.memory_space<vmem>>, %arg7: memref<9x16x8xbf16, #tpu.memory_space<vmem>>, %arg8: memref<9x16x8xbf16, #tpu.memory_space<vmem>>, %arg9: memref<16x1xf32, #tpu.memory_space<vmem>>, %arg10: memref<16x1xf32, #tpu.memory_space<vmem>>, %arg11: memref<9x16x16xbf16, #tpu.memory_space<vmem>>, %arg12: memref<16x16xbf16, #tpu.memory_space<vmem>>, %arg13: memref<16x1xf32, #tpu.memory_space<vmem>>, %arg14: memref<9x16x16xbf16, #tpu.memory_space<vmem>>, %arg15: memref<16x1xf32, #tpu.memory_space<vmem>>, %arg16: memref<16x1xf32, #tpu.memory_space<vmem>>, %arg17: memref<16x1xf32, #tpu.memory_space<vmem>>, %arg18: memref<9x16x16xbf16, #tpu.memory_space<vmem>>, %arg19: memref<16x1xf32, #tpu.memory_space<vmem>>, %arg20: memref<16x1xf32, #tpu.memory_space<vmem>>, %arg21: memref<16x1xf32, #tpu.memory_space<vmem>>, %arg22: memref<16x16xbf16, #tpu.memory_space<vmem>>, %arg23: memref<16x1xf32, #tpu.memory_space<vmem>>, %arg24: memref<16x1xf32, #tpu.memory_space<vmem>>, %arg25: memref<16x1xf32, #tpu.memory_space<vmem>>, %arg26: memref<1x16x256xf32, #tpu.memory_space<vmem>>) attributes {dimension_semantics = [#tpu.dimension_semantics<parallel>], iteration_bounds = array<i64: 2>, scalar_prefetch = 0 : i64, scratch_operands = 0 : i64, tpu.core_type = #tpu.core_type<tc>, window_params = [{transform_indices = @transform_0, window_bounds = array<i64: 1, 8, 64>}, {transform_indices = @transform_1, window_bounds = array<i64: 1, 8, 256>}, {pipeline_mode = #tpu.pipeline_mode<synchronous>, transform_indices = @transform_2, window_bounds = array<i64: 64, 256>}, {pipeline_mode = #tpu.pipeline_mode<synchronous>, transform_indices = @transform_3, window_bounds = array<i64: 9, 1, 256>}, {pipeline_mode = #tpu.pipeline_mode<synchronous>, transform_indices = @transform_4, window_bounds = array<i64: 8, 16>}, {pipeline_mode = #tpu.pipeline_mode<synchronous>, transform_indices = @transform_5, window_bounds = array<i64: 16, 8>}, {pipeline_mode = #tpu.pipeline_mode<synchronous>, transform_indices = @transform_6, window_bounds = array<i64: 9, 16, 8>}, {pipeline_mode = #tpu.pipeline_mode<synchronous>, transform_indices = @transform_7, window_bounds = array<i64: 9, 16, 8>}, {pipeline_mode = #tpu.pipeline_mode<synchronous>, transform_indices = @transform_8, window_bounds = array<i64: 16, 1>}, {pipeline_mode = #tpu.pipeline_mode<synchronous>, transform_indices = @transform_9, window_bounds = array<i64: 16, 1>}, {pipeline_mode = #tpu.pipeline_mode<synchronous>, transform_indices = @transform_10, window_bounds = array<i64: 9, 16, 16>}, {pipeline_mode = #tpu.pipeline_mode<synchronous>, transform_indices = @transform_11, window_bounds = array<i64: 16, 16>}, {pipeline_mode = #tpu.pipeline_mode<synchronous>, transform_indices = @transform_12, window_bounds = array<i64: 16, 1>}, {pipeline_mode = #tpu.pipeline_mode<synchronous>, transform_indices = @transform_13, window_bounds = array<i64: 9, 16, 16>}, {pipeline_mode = #tpu.pipeline_mode<synchronous>, transform_indices = @transform_14, window_bounds = array<i64: 16, 1>}, {pipeline_mode = #tpu.pipeline_mode<synchronous>, transform_indices = @transform_15, window_bounds = array<i64: 16, 1>}, {pipeline_mode = #tpu.pipeline_mode<synchronous>, transform_indices = @transform_16, window_bounds = array<i64: 16, 1>}, {pipeline_mode = #tpu.pipeline_mode<synchronous>, transform_indices = @transform_17, window_bounds = array<i64: 9, 16, 16>}, {pipeline_mode = #tpu.pipeline_mode<synchronous>, transform_indices = @transform_18, window_bounds = array<i64: 16, 1>}, {pipeline_mode = #tpu.pipeline_mode<synchronous>, transform_indices = @transform_19, window_bounds = array<i64: 16, 1>}, {pipeline_mode = #tpu.pipeline_mode<synchronous>, transform_indices = @transform_20, window_bounds = array<i64: 16, 1>}, {pipeline_mode = #tpu.pipeline_mode<synchronous>, transform_indices = @transform_21, window_bounds = array<i64: 16, 16>}, {pipeline_mode = #tpu.pipeline_mode<synchronous>, transform_indices = @transform_22, window_bounds = array<i64: 16, 1>}, {pipeline_mode = #tpu.pipeline_mode<synchronous>, transform_indices = @transform_23, window_bounds = array<i64: 16, 1>}, {pipeline_mode = #tpu.pipeline_mode<synchronous>, transform_indices = @transform_24, window_bounds = array<i64: 16, 1>}, {transform_indices = @transform_25, window_bounds = array<i64: 1, 16, 256>}]} {
    %c0 = arith.constant 0 : index
    %c0_0 = arith.constant 0 : index
    %c0_1 = arith.constant 0 : index
    %0 = vector.load %arg1[%c0, %c0_0, %c0_1] : memref<1x8x64xf32, #tpu.memory_space<vmem>>, vector<1x8x64xf32>
    %1 = vector.shape_cast %0 : vector<1x8x64xf32> to vector<8x64xf32>
    %2 = arith.truncf %1 : vector<8x64xf32> to vector<8x64xbf16>
    %c0_2 = arith.constant 0 : index
    %c0_3 = arith.constant 0 : index
    %3 = vector.load %arg3[%c0_2, %c0_3] : memref<64x256xbf16, #tpu.memory_space<vmem>>, vector<64x256xbf16>
    %cst = arith.constant dense<0.000000e+00> : vector<8x256xf32>
    %4 = tpu.matmul %2, %3, %cst {dimension_numbers = #tpu.dot_dimension_numbers<[1], [0], [0], [1], [0, 0, 1, 1], [], []>} : vector<8x64xbf16>, vector<64x256xbf16>, vector<8x256xf32> -> vector<8x256xf32>
    %c0_4 = arith.constant 0 : index
    %c0_5 = arith.constant 0 : index
    %c0_6 = arith.constant 0 : index
    %5 = vector.load %arg2[%c0_4, %c0_5, %c0_6] : memref<1x8x256xf32, #tpu.memory_space<vmem>>, vector<1x8x256xf32>
    %6 = vector.shape_cast %5 : vector<1x8x256xf32> to vector<8x256xf32>
    %cst_7 = arith.constant 0.000000e+00 : f32
    %7 = vector.broadcast %cst_7 : f32 to vector<16x256xf32>
    %c17_i32 = arith.constant 17 : i32
    %8 = tpu.dynamic_rotate %6 by %c17_i32 dim 1 : vector<8x256xf32>, i32 -> vector<8x256xf32>
    %c0_8 = arith.constant 0 : index
    %c0_9 = arith.constant 0 : index
    %c0_10 = arith.constant 0 : index
    %9 = vector.load %arg4[%c0_8, %c0_9, %c0_10] : memref<9x1x256xf32, #tpu.memory_space<vmem>>, vector<1x1x256xf32>
    %10 = vector.shape_cast %9 : vector<1x1x256xf32> to vector<1x256xf32>
    %11 = vector.broadcast %10 : vector<1x256xf32> to vector<8x256xf32>
    %12 = arith.mulf %8, %11 : vector<8x256xf32>
    %c0_11 = arith.constant 0 : index
    %c0_12 = arith.constant 0 : index
    %c0_13 = arith.constant 0 : index
    %13 = vector.load %arg7[%c0_11, %c0_12, %c0_13] : memref<9x16x8xbf16, #tpu.memory_space<vmem>>, vector<1x16x8xbf16>
    %14 = vector.shape_cast %13 : vector<1x16x8xbf16> to vector<16x8xbf16>
    %15 = arith.truncf %12 : vector<8x256xf32> to vector<8x256xbf16>
    %cst_14 = arith.constant dense<0.000000e+00> : vector<16x256xf32>
    %16 = tpu.matmul %14, %15, %cst_14 {dimension_numbers = #tpu.dot_dimension_numbers<[1], [0], [0], [1], [0, 0, 1, 1], [], []>} : vector<16x8xbf16>, vector<8x256xbf16>, vector<16x256xf32> -> vector<16x256xf32>
    %17 = arith.addf %7, %16 : vector<16x256xf32>
    %c16_i32 = arith.constant 16 : i32
    %18 = tpu.dynamic_rotate %6 by %c16_i32 dim 1 : vector<8x256xf32>, i32 -> vector<8x256xf32>
    %c1 = arith.constant 1 : index
    %c0_15 = arith.constant 0 : index
    %c0_16 = arith.constant 0 : index
    %19 = vector.load %arg4[%c1, %c0_15, %c0_16] : memref<9x1x256xf32, #tpu.memory_space<vmem>>, vector<1x1x256xf32>
    %20 = vector.shape_cast %19 : vector<1x1x256xf32> to vector<1x256xf32>
    %21 = vector.broadcast %20 : vector<1x256xf32> to vector<8x256xf32>
    %22 = arith.mulf %18, %21 : vector<8x256xf32>
    %c1_17 = arith.constant 1 : index
    %c0_18 = arith.constant 0 : index
    %c0_19 = arith.constant 0 : index
    %23 = vector.load %arg7[%c1_17, %c0_18, %c0_19] : memref<9x16x8xbf16, #tpu.memory_space<vmem>>, vector<1x16x8xbf16>
    %24 = vector.shape_cast %23 : vector<1x16x8xbf16> to vector<16x8xbf16>
    %25 = arith.truncf %22 : vector<8x256xf32> to vector<8x256xbf16>
    %cst_20 = arith.constant dense<0.000000e+00> : vector<16x256xf32>
    %26 = tpu.matmul %24, %25, %cst_20 {dimension_numbers = #tpu.dot_dimension_numbers<[1], [0], [0], [1], [0, 0, 1, 1], [], []>} : vector<16x8xbf16>, vector<8x256xbf16>, vector<16x256xf32> -> vector<16x256xf32>
    %27 = arith.addf %17, %26 : vector<16x256xf32>
    %c15_i32 = arith.constant 15 : i32
    %28 = tpu.dynamic_rotate %6 by %c15_i32 dim 1 : vector<8x256xf32>, i32 -> vector<8x256xf32>
    %c2 = arith.constant 2 : index
    %c0_21 = arith.constant 0 : index
    %c0_22 = arith.constant 0 : index
    %29 = vector.load %arg4[%c2, %c0_21, %c0_22] : memref<9x1x256xf32, #tpu.memory_space<vmem>>, vector<1x1x256xf32>
    %30 = vector.shape_cast %29 : vector<1x1x256xf32> to vector<1x256xf32>
    %31 = vector.broadcast %30 : vector<1x256xf32> to vector<8x256xf32>
    %32 = arith.mulf %28, %31 : vector<8x256xf32>
    %c2_23 = arith.constant 2 : index
    %c0_24 = arith.constant 0 : index
    %c0_25 = arith.constant 0 : index
    %33 = vector.load %arg7[%c2_23, %c0_24, %c0_25] : memref<9x16x8xbf16, #tpu.memory_space<vmem>>, vector<1x16x8xbf16>
    %34 = vector.shape_cast %33 : vector<1x16x8xbf16> to vector<16x8xbf16>
    %35 = arith.truncf %32 : vector<8x256xf32> to vector<8x256xbf16>
    %cst_26 = arith.constant dense<0.000000e+00> : vector<16x256xf32>
    %36 = tpu.matmul %34, %35, %cst_26 {dimension_numbers = #tpu.dot_dimension_numbers<[1], [0], [0], [1], [0, 0, 1, 1], [], []>} : vector<16x8xbf16>, vector<8x256xbf16>, vector<16x256xf32> -> vector<16x256xf32>
    %37 = arith.addf %27, %36 : vector<16x256xf32>
    %c1_i32 = arith.constant 1 : i32
    %38 = tpu.dynamic_rotate %6 by %c1_i32 dim 1 : vector<8x256xf32>, i32 -> vector<8x256xf32>
    %c3 = arith.constant 3 : index
    %c0_27 = arith.constant 0 : index
    %c0_28 = arith.constant 0 : index
    %39 = vector.load %arg4[%c3, %c0_27, %c0_28] : memref<9x1x256xf32, #tpu.memory_space<vmem>>, vector<1x1x256xf32>
    %40 = vector.shape_cast %39 : vector<1x1x256xf32> to vector<1x256xf32>
    %41 = vector.broadcast %40 : vector<1x256xf32> to vector<8x256xf32>
    %42 = arith.mulf %38, %41 : vector<8x256xf32>
    %c3_29 = arith.constant 3 : index
    %c0_30 = arith.constant 0 : index
    %c0_31 = arith.constant 0 : index
    %43 = vector.load %arg7[%c3_29, %c0_30, %c0_31] : memref<9x16x8xbf16, #tpu.memory_space<vmem>>, vector<1x16x8xbf16>
    %44 = vector.shape_cast %43 : vector<1x16x8xbf16> to vector<16x8xbf16>
    %45 = arith.truncf %42 : vector<8x256xf32> to vector<8x256xbf16>
    %cst_32 = arith.constant dense<0.000000e+00> : vector<16x256xf32>
    %46 = tpu.matmul %44, %45, %cst_32 {dimension_numbers = #tpu.dot_dimension_numbers<[1], [0], [0], [1], [0, 0, 1, 1], [], []>} : vector<16x8xbf16>, vector<8x256xbf16>, vector<16x256xf32> -> vector<16x256xf32>
    %47 = arith.addf %37, %46 : vector<16x256xf32>
    %c4 = arith.constant 4 : index
    %c0_33 = arith.constant 0 : index
    %c0_34 = arith.constant 0 : index
    %48 = vector.load %arg4[%c4, %c0_33, %c0_34] : memref<9x1x256xf32, #tpu.memory_space<vmem>>, vector<1x1x256xf32>
    %49 = vector.shape_cast %48 : vector<1x1x256xf32> to vector<1x256xf32>
    %50 = vector.broadcast %49 : vector<1x256xf32> to vector<8x256xf32>
    %51 = arith.mulf %6, %50 : vector<8x256xf32>
    %c4_35 = arith.constant 4 : index
    %c0_36 = arith.constant 0 : index
    %c0_37 = arith.constant 0 : index
    %52 = vector.load %arg7[%c4_35, %c0_36, %c0_37] : memref<9x16x8xbf16, #tpu.memory_space<vmem>>, vector<1x16x8xbf16>
    %53 = vector.shape_cast %52 : vector<1x16x8xbf16> to vector<16x8xbf16>
    %54 = arith.truncf %51 : vector<8x256xf32> to vector<8x256xbf16>
    %cst_38 = arith.constant dense<0.000000e+00> : vector<16x256xf32>
    %55 = tpu.matmul %53, %54, %cst_38 {dimension_numbers = #tpu.dot_dimension_numbers<[1], [0], [0], [1], [0, 0, 1, 1], [], []>} : vector<16x8xbf16>, vector<8x256xbf16>, vector<16x256xf32> -> vector<16x256xf32>
    %56 = arith.addf %47, %55 : vector<16x256xf32>
    %c255_i32 = arith.constant 255 : i32
    %57 = tpu.dynamic_rotate %6 by %c255_i32 dim 1 : vector<8x256xf32>, i32 -> vector<8x256xf32>
    %c5 = arith.constant 5 : index
    %c0_39 = arith.constant 0 : index
    %c0_40 = arith.constant 0 : index
    %58 = vector.load %arg4[%c5, %c0_39, %c0_40] : memref<9x1x256xf32, #tpu.memory_space<vmem>>, vector<1x1x256xf32>
    %59 = vector.shape_cast %58 : vector<1x1x256xf32> to vector<1x256xf32>
    %60 = vector.broadcast %59 : vector<1x256xf32> to vector<8x256xf32>
    %61 = arith.mulf %57, %60 : vector<8x256xf32>
    %c5_41 = arith.constant 5 : index
    %c0_42 = arith.constant 0 : index
    %c0_43 = arith.constant 0 : index
    %62 = vector.load %arg7[%c5_41, %c0_42, %c0_43] : memref<9x16x8xbf16, #tpu.memory_space<vmem>>, vector<1x16x8xbf16>
    %63 = vector.shape_cast %62 : vector<1x16x8xbf16> to vector<16x8xbf16>
    %64 = arith.truncf %61 : vector<8x256xf32> to vector<8x256xbf16>
    %cst_44 = arith.constant dense<0.000000e+00> : vector<16x256xf32>
    %65 = tpu.matmul %63, %64, %cst_44 {dimension_numbers = #tpu.dot_dimension_numbers<[1], [0], [0], [1], [0, 0, 1, 1], [], []>} : vector<16x8xbf16>, vector<8x256xbf16>, vector<16x256xf32> -> vector<16x256xf32>
    %66 = arith.addf %56, %65 : vector<16x256xf32>
    %c241_i32 = arith.constant 241 : i32
    %67 = tpu.dynamic_rotate %6 by %c241_i32 dim 1 : vector<8x256xf32>, i32 -> vector<8x256xf32>
    %c6 = arith.constant 6 : index
    %c0_45 = arith.constant 0 : index
    %c0_46 = arith.constant 0 : index
    %68 = vector.load %arg4[%c6, %c0_45, %c0_46] : memref<9x1x256xf32, #tpu.memory_space<vmem>>, vector<1x1x256xf32>
    %69 = vector.shape_cast %68 : vector<1x1x256xf32> to vector<1x256xf32>
    %70 = vector.broadcast %69 : vector<1x256xf32> to vector<8x256xf32>
    %71 = arith.mulf %67, %70 : vector<8x256xf32>
    %c6_47 = arith.constant 6 : index
    %c0_48 = arith.constant 0 : index
    %c0_49 = arith.constant 0 : index
    %72 = vector.load %arg7[%c6_47, %c0_48, %c0_49] : memref<9x16x8xbf16, #tpu.memory_space<vmem>>, vector<1x16x8xbf16>
    %73 = vector.shape_cast %72 : vector<1x16x8xbf16> to vector<16x8xbf16>
    %74 = arith.truncf %71 : vector<8x256xf32> to vector<8x256xbf16>
    %cst_50 = arith.constant dense<0.000000e+00> : vector<16x256xf32>
    %75 = tpu.matmul %73, %74, %cst_50 {dimension_numbers = #tpu.dot_dimension_numbers<[1], [0], [0], [1], [0, 0, 1, 1], [], []>} : vector<16x8xbf16>, vector<8x256xbf16>, vector<16x256xf32> -> vector<16x256xf32>
    %76 = arith.addf %66, %75 : vector<16x256xf32>
    %c240_i32 = arith.constant 240 : i32
    %77 = tpu.dynamic_rotate %6 by %c240_i32 dim 1 : vector<8x256xf32>, i32 -> vector<8x256xf32>
    %c7 = arith.constant 7 : index
    %c0_51 = arith.constant 0 : index
    %c0_52 = arith.constant 0 : index
    %78 = vector.load %arg4[%c7, %c0_51, %c0_52] : memref<9x1x256xf32, #tpu.memory_space<vmem>>, vector<1x1x256xf32>
    %79 = vector.shape_cast %78 : vector<1x1x256xf32> to vector<1x256xf32>
    %80 = vector.broadcast %79 : vector<1x256xf32> to vector<8x256xf32>
    %81 = arith.mulf %77, %80 : vector<8x256xf32>
    %c7_53 = arith.constant 7 : index
    %c0_54 = arith.constant 0 : index
    %c0_55 = arith.constant 0 : index
    %82 = vector.load %arg7[%c7_53, %c0_54, %c0_55] : memref<9x16x8xbf16, #tpu.memory_space<vmem>>, vector<1x16x8xbf16>
    %83 = vector.shape_cast %82 : vector<1x16x8xbf16> to vector<16x8xbf16>
    %84 = arith.truncf %81 : vector<8x256xf32> to vector<8x256xbf16>
    %cst_56 = arith.constant dense<0.000000e+00> : vector<16x256xf32>
    %85 = tpu.matmul %83, %84, %cst_56 {dimension_numbers = #tpu.dot_dimension_numbers<[1], [0], [0], [1], [0, 0, 1, 1], [], []>} : vector<16x8xbf16>, vector<8x256xbf16>, vector<16x256xf32> -> vector<16x256xf32>
    %86 = arith.addf %76, %85 : vector<16x256xf32>
    %c239_i32 = arith.constant 239 : i32
    %87 = tpu.dynamic_rotate %6 by %c239_i32 dim 1 : vector<8x256xf32>, i32 -> vector<8x256xf32>
    %c8 = arith.constant 8 : index
    %c0_57 = arith.constant 0 : index
    %c0_58 = arith.constant 0 : index
    %88 = vector.load %arg4[%c8, %c0_57, %c0_58] : memref<9x1x256xf32, #tpu.memory_space<vmem>>, vector<1x1x256xf32>
    %89 = vector.shape_cast %88 : vector<1x1x256xf32> to vector<1x256xf32>
    %90 = vector.broadcast %89 : vector<1x256xf32> to vector<8x256xf32>
    %91 = arith.mulf %87, %90 : vector<8x256xf32>
    %c8_59 = arith.constant 8 : index
    %c0_60 = arith.constant 0 : index
    %c0_61 = arith.constant 0 : index
    %92 = vector.load %arg7[%c8_59, %c0_60, %c0_61] : memref<9x16x8xbf16, #tpu.memory_space<vmem>>, vector<1x16x8xbf16>
    %93 = vector.shape_cast %92 : vector<1x16x8xbf16> to vector<16x8xbf16>
    %94 = arith.truncf %91 : vector<8x256xf32> to vector<8x256xbf16>
    %cst_62 = arith.constant dense<0.000000e+00> : vector<16x256xf32>
    %95 = tpu.matmul %93, %94, %cst_62 {dimension_numbers = #tpu.dot_dimension_numbers<[1], [0], [0], [1], [0, 0, 1, 1], [], []>} : vector<16x8xbf16>, vector<8x256xbf16>, vector<16x256xf32> -> vector<16x256xf32>
    %96 = arith.addf %86, %95 : vector<16x256xf32>
    %cst_63 = arith.constant 0.000000e+00 : f32
    %97 = vector.broadcast %cst_63 : f32 to vector<16x256xf32>
    %c17_i32_64 = arith.constant 17 : i32
    %98 = tpu.dynamic_rotate %4 by %c17_i32_64 dim 1 : vector<8x256xf32>, i32 -> vector<8x256xf32>
    %c0_65 = arith.constant 0 : index
    %c0_66 = arith.constant 0 : index
    %c0_67 = arith.constant 0 : index
    %99 = vector.load %arg4[%c0_65, %c0_66, %c0_67] : memref<9x1x256xf32, #tpu.memory_space<vmem>>, vector<1x1x256xf32>
    %100 = vector.shape_cast %99 : vector<1x1x256xf32> to vector<1x256xf32>
    %101 = vector.broadcast %100 : vector<1x256xf32> to vector<8x256xf32>
    %102 = arith.mulf %98, %101 : vector<8x256xf32>
    %c0_68 = arith.constant 0 : index
    %c0_69 = arith.constant 0 : index
    %c0_70 = arith.constant 0 : index
    %103 = vector.load %arg8[%c0_68, %c0_69, %c0_70] : memref<9x16x8xbf16, #tpu.memory_space<vmem>>, vector<1x16x8xbf16>
    %104 = vector.shape_cast %103 : vector<1x16x8xbf16> to vector<16x8xbf16>
    %105 = arith.truncf %102 : vector<8x256xf32> to vector<8x256xbf16>
    %cst_71 = arith.constant dense<0.000000e+00> : vector<16x256xf32>
    %106 = tpu.matmul %104, %105, %cst_71 {dimension_numbers = #tpu.dot_dimension_numbers<[1], [0], [0], [1], [0, 0, 1, 1], [], []>} : vector<16x8xbf16>, vector<8x256xbf16>, vector<16x256xf32> -> vector<16x256xf32>
    %107 = arith.addf %97, %106 : vector<16x256xf32>
    %c16_i32_72 = arith.constant 16 : i32
    %108 = tpu.dynamic_rotate %4 by %c16_i32_72 dim 1 : vector<8x256xf32>, i32 -> vector<8x256xf32>
    %c1_73 = arith.constant 1 : index
    %c0_74 = arith.constant 0 : index
    %c0_75 = arith.constant 0 : index
    %109 = vector.load %arg4[%c1_73, %c0_74, %c0_75] : memref<9x1x256xf32, #tpu.memory_space<vmem>>, vector<1x1x256xf32>
    %110 = vector.shape_cast %109 : vector<1x1x256xf32> to vector<1x256xf32>
    %111 = vector.broadcast %110 : vector<1x256xf32> to vector<8x256xf32>
    %112 = arith.mulf %108, %111 : vector<8x256xf32>
    %c1_76 = arith.constant 1 : index
    %c0_77 = arith.constant 0 : index
    %c0_78 = arith.constant 0 : index
    %113 = vector.load %arg8[%c1_76, %c0_77, %c0_78] : memref<9x16x8xbf16, #tpu.memory_space<vmem>>, vector<1x16x8xbf16>
    %114 = vector.shape_cast %113 : vector<1x16x8xbf16> to vector<16x8xbf16>
    %115 = arith.truncf %112 : vector<8x256xf32> to vector<8x256xbf16>
    %cst_79 = arith.constant dense<0.000000e+00> : vector<16x256xf32>
    %116 = tpu.matmul %114, %115, %cst_79 {dimension_numbers = #tpu.dot_dimension_numbers<[1], [0], [0], [1], [0, 0, 1, 1], [], []>} : vector<16x8xbf16>, vector<8x256xbf16>, vector<16x256xf32> -> vector<16x256xf32>
    %117 = arith.addf %107, %116 : vector<16x256xf32>
    %c15_i32_80 = arith.constant 15 : i32
    %118 = tpu.dynamic_rotate %4 by %c15_i32_80 dim 1 : vector<8x256xf32>, i32 -> vector<8x256xf32>
    %c2_81 = arith.constant 2 : index
    %c0_82 = arith.constant 0 : index
    %c0_83 = arith.constant 0 : index
    %119 = vector.load %arg4[%c2_81, %c0_82, %c0_83] : memref<9x1x256xf32, #tpu.memory_space<vmem>>, vector<1x1x256xf32>
    %120 = vector.shape_cast %119 : vector<1x1x256xf32> to vector<1x256xf32>
    %121 = vector.broadcast %120 : vector<1x256xf32> to vector<8x256xf32>
    %122 = arith.mulf %118, %121 : vector<8x256xf32>
    %c2_84 = arith.constant 2 : index
    %c0_85 = arith.constant 0 : index
    %c0_86 = arith.constant 0 : index
    %123 = vector.load %arg8[%c2_84, %c0_85, %c0_86] : memref<9x16x8xbf16, #tpu.memory_space<vmem>>, vector<1x16x8xbf16>
    %124 = vector.shape_cast %123 : vector<1x16x8xbf16> to vector<16x8xbf16>
    %125 = arith.truncf %122 : vector<8x256xf32> to vector<8x256xbf16>
    %cst_87 = arith.constant dense<0.000000e+00> : vector<16x256xf32>
    %126 = tpu.matmul %124, %125, %cst_87 {dimension_numbers = #tpu.dot_dimension_numbers<[1], [0], [0], [1], [0, 0, 1, 1], [], []>} : vector<16x8xbf16>, vector<8x256xbf16>, vector<16x256xf32> -> vector<16x256xf32>
    %127 = arith.addf %117, %126 : vector<16x256xf32>
    %c1_i32_88 = arith.constant 1 : i32
    %128 = tpu.dynamic_rotate %4 by %c1_i32_88 dim 1 : vector<8x256xf32>, i32 -> vector<8x256xf32>
    %c3_89 = arith.constant 3 : index
    %c0_90 = arith.constant 0 : index
    %c0_91 = arith.constant 0 : index
    %129 = vector.load %arg4[%c3_89, %c0_90, %c0_91] : memref<9x1x256xf32, #tpu.memory_space<vmem>>, vector<1x1x256xf32>
    %130 = vector.shape_cast %129 : vector<1x1x256xf32> to vector<1x256xf32>
    %131 = vector.broadcast %130 : vector<1x256xf32> to vector<8x256xf32>
    %132 = arith.mulf %128, %131 : vector<8x256xf32>
    %c3_92 = arith.constant 3 : index
    %c0_93 = arith.constant 0 : index
    %c0_94 = arith.constant 0 : index
    %133 = vector.load %arg8[%c3_92, %c0_93, %c0_94] : memref<9x16x8xbf16, #tpu.memory_space<vmem>>, vector<1x16x8xbf16>
    %134 = vector.shape_cast %133 : vector<1x16x8xbf16> to vector<16x8xbf16>
    %135 = arith.truncf %132 : vector<8x256xf32> to vector<8x256xbf16>
    %cst_95 = arith.constant dense<0.000000e+00> : vector<16x256xf32>
    %136 = tpu.matmul %134, %135, %cst_95 {dimension_numbers = #tpu.dot_dimension_numbers<[1], [0], [0], [1], [0, 0, 1, 1], [], []>} : vector<16x8xbf16>, vector<8x256xbf16>, vector<16x256xf32> -> vector<16x256xf32>
    %137 = arith.addf %127, %136 : vector<16x256xf32>
    %c4_96 = arith.constant 4 : index
    %c0_97 = arith.constant 0 : index
    %c0_98 = arith.constant 0 : index
    %138 = vector.load %arg4[%c4_96, %c0_97, %c0_98] : memref<9x1x256xf32, #tpu.memory_space<vmem>>, vector<1x1x256xf32>
    %139 = vector.shape_cast %138 : vector<1x1x256xf32> to vector<1x256xf32>
    %140 = vector.broadcast %139 : vector<1x256xf32> to vector<8x256xf32>
    %141 = arith.mulf %4, %140 : vector<8x256xf32>
    %c4_99 = arith.constant 4 : index
    %c0_100 = arith.constant 0 : index
    %c0_101 = arith.constant 0 : index
    %142 = vector.load %arg8[%c4_99, %c0_100, %c0_101] : memref<9x16x8xbf16, #tpu.memory_space<vmem>>, vector<1x16x8xbf16>
    %143 = vector.shape_cast %142 : vector<1x16x8xbf16> to vector<16x8xbf16>
    %144 = arith.truncf %141 : vector<8x256xf32> to vector<8x256xbf16>
    %cst_102 = arith.constant dense<0.000000e+00> : vector<16x256xf32>
    %145 = tpu.matmul %143, %144, %cst_102 {dimension_numbers = #tpu.dot_dimension_numbers<[1], [0], [0], [1], [0, 0, 1, 1], [], []>} : vector<16x8xbf16>, vector<8x256xbf16>, vector<16x256xf32> -> vector<16x256xf32>
    %146 = arith.addf %137, %145 : vector<16x256xf32>
    %c255_i32_103 = arith.constant 255 : i32
    %147 = tpu.dynamic_rotate %4 by %c255_i32_103 dim 1 : vector<8x256xf32>, i32 -> vector<8x256xf32>
    %c5_104 = arith.constant 5 : index
    %c0_105 = arith.constant 0 : index
    %c0_106 = arith.constant 0 : index
    %148 = vector.load %arg4[%c5_104, %c0_105, %c0_106] : memref<9x1x256xf32, #tpu.memory_space<vmem>>, vector<1x1x256xf32>
    %149 = vector.shape_cast %148 : vector<1x1x256xf32> to vector<1x256xf32>
    %150 = vector.broadcast %149 : vector<1x256xf32> to vector<8x256xf32>
    %151 = arith.mulf %147, %150 : vector<8x256xf32>
    %c5_107 = arith.constant 5 : index
    %c0_108 = arith.constant 0 : index
    %c0_109 = arith.constant 0 : index
    %152 = vector.load %arg8[%c5_107, %c0_108, %c0_109] : memref<9x16x8xbf16, #tpu.memory_space<vmem>>, vector<1x16x8xbf16>
    %153 = vector.shape_cast %152 : vector<1x16x8xbf16> to vector<16x8xbf16>
    %154 = arith.truncf %151 : vector<8x256xf32> to vector<8x256xbf16>
    %cst_110 = arith.constant dense<0.000000e+00> : vector<16x256xf32>
    %155 = tpu.matmul %153, %154, %cst_110 {dimension_numbers = #tpu.dot_dimension_numbers<[1], [0], [0], [1], [0, 0, 1, 1], [], []>} : vector<16x8xbf16>, vector<8x256xbf16>, vector<16x256xf32> -> vector<16x256xf32>
    %156 = arith.addf %146, %155 : vector<16x256xf32>
    %c241_i32_111 = arith.constant 241 : i32
    %157 = tpu.dynamic_rotate %4 by %c241_i32_111 dim 1 : vector<8x256xf32>, i32 -> vector<8x256xf32>
    %c6_112 = arith.constant 6 : index
    %c0_113 = arith.constant 0 : index
    %c0_114 = arith.constant 0 : index
    %158 = vector.load %arg4[%c6_112, %c0_113, %c0_114] : memref<9x1x256xf32, #tpu.memory_space<vmem>>, vector<1x1x256xf32>
    %159 = vector.shape_cast %158 : vector<1x1x256xf32> to vector<1x256xf32>
    %160 = vector.broadcast %159 : vector<1x256xf32> to vector<8x256xf32>
    %161 = arith.mulf %157, %160 : vector<8x256xf32>
    %c6_115 = arith.constant 6 : index
    %c0_116 = arith.constant 0 : index
    %c0_117 = arith.constant 0 : index
    %162 = vector.load %arg8[%c6_115, %c0_116, %c0_117] : memref<9x16x8xbf16, #tpu.memory_space<vmem>>, vector<1x16x8xbf16>
    %163 = vector.shape_cast %162 : vector<1x16x8xbf16> to vector<16x8xbf16>
    %164 = arith.truncf %161 : vector<8x256xf32> to vector<8x256xbf16>
    %cst_118 = arith.constant dense<0.000000e+00> : vector<16x256xf32>
    %165 = tpu.matmul %163, %164, %cst_118 {dimension_numbers = #tpu.dot_dimension_numbers<[1], [0], [0], [1], [0, 0, 1, 1], [], []>} : vector<16x8xbf16>, vector<8x256xbf16>, vector<16x256xf32> -> vector<16x256xf32>
    %166 = arith.addf %156, %165 : vector<16x256xf32>
    %c240_i32_119 = arith.constant 240 : i32
    %167 = tpu.dynamic_rotate %4 by %c240_i32_119 dim 1 : vector<8x256xf32>, i32 -> vector<8x256xf32>
    %c7_120 = arith.constant 7 : index
    %c0_121 = arith.constant 0 : index
    %c0_122 = arith.constant 0 : index
    %168 = vector.load %arg4[%c7_120, %c0_121, %c0_122] : memref<9x1x256xf32, #tpu.memory_space<vmem>>, vector<1x1x256xf32>
    %169 = vector.shape_cast %168 : vector<1x1x256xf32> to vector<1x256xf32>
    %170 = vector.broadcast %169 : vector<1x256xf32> to vector<8x256xf32>
    %171 = arith.mulf %167, %170 : vector<8x256xf32>
    %c7_123 = arith.constant 7 : index
    %c0_124 = arith.constant 0 : index
    %c0_125 = arith.constant 0 : index
    %172 = vector.load %arg8[%c7_123, %c0_124, %c0_125] : memref<9x16x8xbf16, #tpu.memory_space<vmem>>, vector<1x16x8xbf16>
    %173 = vector.shape_cast %172 : vector<1x16x8xbf16> to vector<16x8xbf16>
    %174 = arith.truncf %171 : vector<8x256xf32> to vector<8x256xbf16>
    %cst_126 = arith.constant dense<0.000000e+00> : vector<16x256xf32>
    %175 = tpu.matmul %173, %174, %cst_126 {dimension_numbers = #tpu.dot_dimension_numbers<[1], [0], [0], [1], [0, 0, 1, 1], [], []>} : vector<16x8xbf16>, vector<8x256xbf16>, vector<16x256xf32> -> vector<16x256xf32>
    %176 = arith.addf %166, %175 : vector<16x256xf32>
    %c239_i32_127 = arith.constant 239 : i32
    %177 = tpu.dynamic_rotate %4 by %c239_i32_127 dim 1 : vector<8x256xf32>, i32 -> vector<8x256xf32>
    %c8_128 = arith.constant 8 : index
    %c0_129 = arith.constant 0 : index
    %c0_130 = arith.constant 0 : index
    %178 = vector.load %arg4[%c8_128, %c0_129, %c0_130] : memref<9x1x256xf32, #tpu.memory_space<vmem>>, vector<1x1x256xf32>
    %179 = vector.shape_cast %178 : vector<1x1x256xf32> to vector<1x256xf32>
    %180 = vector.broadcast %179 : vector<1x256xf32> to vector<8x256xf32>
    %181 = arith.mulf %177, %180 : vector<8x256xf32>
    %c8_131 = arith.constant 8 : index
    %c0_132 = arith.constant 0 : index
    %c0_133 = arith.constant 0 : index
    %182 = vector.load %arg8[%c8_131, %c0_132, %c0_133] : memref<9x16x8xbf16, #tpu.memory_space<vmem>>, vector<1x16x8xbf16>
    %183 = vector.shape_cast %182 : vector<1x16x8xbf16> to vector<16x8xbf16>
    %184 = arith.truncf %181 : vector<8x256xf32> to vector<8x256xbf16>
    %cst_134 = arith.constant dense<0.000000e+00> : vector<16x256xf32>
    %185 = tpu.matmul %183, %184, %cst_134 {dimension_numbers = #tpu.dot_dimension_numbers<[1], [0], [0], [1], [0, 0, 1, 1], [], []>} : vector<16x8xbf16>, vector<8x256xbf16>, vector<16x256xf32> -> vector<16x256xf32>
    %186 = arith.addf %176, %185 : vector<16x256xf32>
    %187 = arith.addf %96, %186 : vector<16x256xf32>
    %cst_135 = arith.constant dense<0.000000e+00> : vector<16xf32>
    %188 = vector.multi_reduction <add>, %187, %cst_135 [1] : vector<16x256xf32> to vector<16xf32>
    %189 = vector.shape_cast %188 : vector<16xf32> to vector<16x1xf32>
    %190 = arith.mulf %187, %187 : vector<16x256xf32>
    %cst_136 = arith.constant dense<0.000000e+00> : vector<16xf32>
    %191 = vector.multi_reduction <add>, %190, %cst_136 [1] : vector<16x256xf32> to vector<16xf32>
    %192 = vector.shape_cast %191 : vector<16xf32> to vector<16x1xf32>
    %c0_137 = arith.constant 0 : index
    %c0_138 = arith.constant 0 : index
    %193 = vector.load %arg6[%c0_137, %c0_138] : memref<16x8xf32, #tpu.memory_space<vmem>>, vector<16x8xf32>
    %c0_139 = arith.constant 0 : index
    %c0_140 = arith.constant 0 : index
    %194 = vector.load %arg5[%c0_139, %c0_140] : memref<8x16xf32, #tpu.memory_space<vmem>>, vector<8x16xf32>
    %cst_141 = arith.constant dense<0.000000e+00> : vector<8x1xf32>
    %195 = tpu.matmul %194, %189, %cst_141 {dimension_numbers = #tpu.dot_dimension_numbers<[1], [0], [0], [1], [0, 0, 1, 1], [], []>} : vector<8x16xf32>, vector<16x1xf32>, vector<8x1xf32> -> vector<8x1xf32>
    %cst_142 = arith.constant dense<0.000000e+00> : vector<16x1xf32>
    %196 = tpu.matmul %193, %195, %cst_142 {dimension_numbers = #tpu.dot_dimension_numbers<[1], [0], [0], [1], [0, 0, 1, 1], [], []>} : vector<16x8xf32>, vector<8x1xf32>, vector<16x1xf32> -> vector<16x1xf32>
    %cst_143 = arith.constant 5.120000e+02 : f32
    %197 = vector.broadcast %cst_143 : f32 to vector<16x1xf32>
    %198 = arith.divf %196, %197 : vector<16x1xf32>
    %c0_144 = arith.constant 0 : index
    %c0_145 = arith.constant 0 : index
    %199 = vector.load %arg6[%c0_144, %c0_145] : memref<16x8xf32, #tpu.memory_space<vmem>>, vector<16x8xf32>
    %c0_146 = arith.constant 0 : index
    %c0_147 = arith.constant 0 : index
    %200 = vector.load %arg5[%c0_146, %c0_147] : memref<8x16xf32, #tpu.memory_space<vmem>>, vector<8x16xf32>
    %cst_148 = arith.constant dense<0.000000e+00> : vector<8x1xf32>
    %201 = tpu.matmul %200, %192, %cst_148 {dimension_numbers = #tpu.dot_dimension_numbers<[1], [0], [0], [1], [0, 0, 1, 1], [], []>} : vector<8x16xf32>, vector<16x1xf32>, vector<8x1xf32> -> vector<8x1xf32>
    %cst_149 = arith.constant dense<0.000000e+00> : vector<16x1xf32>
    %202 = tpu.matmul %199, %201, %cst_149 {dimension_numbers = #tpu.dot_dimension_numbers<[1], [0], [0], [1], [0, 0, 1, 1], [], []>} : vector<16x8xf32>, vector<8x1xf32>, vector<16x1xf32> -> vector<16x1xf32>
    %cst_150 = arith.constant 5.120000e+02 : f32
    %203 = vector.broadcast %cst_150 : f32 to vector<16x1xf32>
    %204 = arith.divf %202, %203 : vector<16x1xf32>
    %205 = arith.mulf %198, %198 : vector<16x1xf32>
    %206 = arith.subf %204, %205 : vector<16x1xf32>
    %cst_151 = arith.constant 9.99999974E-6 : f32
    %207 = vector.broadcast %cst_151 : f32 to vector<16x1xf32>
    %208 = arith.addf %206, %207 : vector<16x1xf32>
    %209 = math.rsqrt %208 : vector<16x1xf32>
    %210 = vector.broadcast %198 : vector<16x1xf32> to vector<16x256xf32>
    %211 = arith.subf %187, %210 : vector<16x256xf32>
    %212 = vector.broadcast %209 : vector<16x1xf32> to vector<16x256xf32>
    %213 = arith.mulf %211, %212 : vector<16x256xf32>
    %c0_152 = arith.constant 0 : index
    %c0_153 = arith.constant 0 : index
    %214 = vector.load %arg9[%c0_152, %c0_153] : memref<16x1xf32, #tpu.memory_space<vmem>>, vector<16x1xf32>
    %215 = vector.broadcast %214 : vector<16x1xf32> to vector<16x256xf32>
    %216 = arith.mulf %213, %215 : vector<16x256xf32>
    %c0_154 = arith.constant 0 : index
    %c0_155 = arith.constant 0 : index
    %217 = vector.load %arg10[%c0_154, %c0_155] : memref<16x1xf32, #tpu.memory_space<vmem>>, vector<16x1xf32>
    %218 = vector.broadcast %217 : vector<16x1xf32> to vector<16x256xf32>
    %219 = arith.addf %216, %218 : vector<16x256xf32>
    %220 = arith.negf %219 : vector<16x256xf32>
    %221 = math.exp %220 : vector<16x256xf32>
    %cst_156 = arith.constant 1.000000e+00 : f32
    %222 = vector.broadcast %cst_156 : f32 to vector<16x256xf32>
    %223 = arith.addf %222, %221 : vector<16x256xf32>
    %224 = arith.divf %222, %223 : vector<16x256xf32>
    %225 = arith.mulf %219, %224 : vector<16x256xf32>
    %cst_157 = arith.constant 0.000000e+00 : f32
    %226 = vector.broadcast %cst_157 : f32 to vector<16x256xf32>
    %c17_i32_158 = arith.constant 17 : i32
    %227 = tpu.dynamic_rotate %225 by %c17_i32_158 dim 1 : vector<16x256xf32>, i32 -> vector<16x256xf32>
    %c0_159 = arith.constant 0 : index
    %c0_160 = arith.constant 0 : index
    %c0_161 = arith.constant 0 : index
    %228 = vector.load %arg4[%c0_159, %c0_160, %c0_161] : memref<9x1x256xf32, #tpu.memory_space<vmem>>, vector<1x1x256xf32>
    %229 = vector.shape_cast %228 : vector<1x1x256xf32> to vector<1x256xf32>
    %230 = vector.broadcast %229 : vector<1x256xf32> to vector<16x256xf32>
    %231 = arith.mulf %227, %230 : vector<16x256xf32>
    %c0_162 = arith.constant 0 : index
    %c0_163 = arith.constant 0 : index
    %c0_164 = arith.constant 0 : index
    %232 = vector.load %arg11[%c0_162, %c0_163, %c0_164] : memref<9x16x16xbf16, #tpu.memory_space<vmem>>, vector<1x16x16xbf16>
    %233 = vector.shape_cast %232 : vector<1x16x16xbf16> to vector<16x16xbf16>
    %234 = arith.truncf %231 : vector<16x256xf32> to vector<16x256xbf16>
    %cst_165 = arith.constant dense<0.000000e+00> : vector<16x256xf32>
    %235 = tpu.matmul %233, %234, %cst_165 {dimension_numbers = #tpu.dot_dimension_numbers<[1], [0], [0], [1], [0, 0, 1, 1], [], []>} : vector<16x16xbf16>, vector<16x256xbf16>, vector<16x256xf32> -> vector<16x256xf32>
    %236 = arith.addf %226, %235 : vector<16x256xf32>
    %c16_i32_166 = arith.constant 16 : i32
    %237 = tpu.dynamic_rotate %225 by %c16_i32_166 dim 1 : vector<16x256xf32>, i32 -> vector<16x256xf32>
    %c1_167 = arith.constant 1 : index
    %c0_168 = arith.constant 0 : index
    %c0_169 = arith.constant 0 : index
    %238 = vector.load %arg4[%c1_167, %c0_168, %c0_169] : memref<9x1x256xf32, #tpu.memory_space<vmem>>, vector<1x1x256xf32>
    %239 = vector.shape_cast %238 : vector<1x1x256xf32> to vector<1x256xf32>
    %240 = vector.broadcast %239 : vector<1x256xf32> to vector<16x256xf32>
    %241 = arith.mulf %237, %240 : vector<16x256xf32>
    %c1_170 = arith.constant 1 : index
    %c0_171 = arith.constant 0 : index
    %c0_172 = arith.constant 0 : index
    %242 = vector.load %arg11[%c1_170, %c0_171, %c0_172] : memref<9x16x16xbf16, #tpu.memory_space<vmem>>, vector<1x16x16xbf16>
    %243 = vector.shape_cast %242 : vector<1x16x16xbf16> to vector<16x16xbf16>
    %244 = arith.truncf %241 : vector<16x256xf32> to vector<16x256xbf16>
    %cst_173 = arith.constant dense<0.000000e+00> : vector<16x256xf32>
    %245 = tpu.matmul %243, %244, %cst_173 {dimension_numbers = #tpu.dot_dimension_numbers<[1], [0], [0], [1], [0, 0, 1, 1], [], []>} : vector<16x16xbf16>, vector<16x256xbf16>, vector<16x256xf32> -> vector<16x256xf32>
    %246 = arith.addf %236, %245 : vector<16x256xf32>
    %c15_i32_174 = arith.constant 15 : i32
    %247 = tpu.dynamic_rotate %225 by %c15_i32_174 dim 1 : vector<16x256xf32>, i32 -> vector<16x256xf32>
    %c2_175 = arith.constant 2 : index
    %c0_176 = arith.constant 0 : index
    %c0_177 = arith.constant 0 : index
    %248 = vector.load %arg4[%c2_175, %c0_176, %c0_177] : memref<9x1x256xf32, #tpu.memory_space<vmem>>, vector<1x1x256xf32>
    %249 = vector.shape_cast %248 : vector<1x1x256xf32> to vector<1x256xf32>
    %250 = vector.broadcast %249 : vector<1x256xf32> to vector<16x256xf32>
    %251 = arith.mulf %247, %250 : vector<16x256xf32>
    %c2_178 = arith.constant 2 : index
    %c0_179 = arith.constant 0 : index
    %c0_180 = arith.constant 0 : index
    %252 = vector.load %arg11[%c2_178, %c0_179, %c0_180] : memref<9x16x16xbf16, #tpu.memory_space<vmem>>, vector<1x16x16xbf16>
    %253 = vector.shape_cast %252 : vector<1x16x16xbf16> to vector<16x16xbf16>
    %254 = arith.truncf %251 : vector<16x256xf32> to vector<16x256xbf16>
    %cst_181 = arith.constant dense<0.000000e+00> : vector<16x256xf32>
    %255 = tpu.matmul %253, %254, %cst_181 {dimension_numbers = #tpu.dot_dimension_numbers<[1], [0], [0], [1], [0, 0, 1, 1], [], []>} : vector<16x16xbf16>, vector<16x256xbf16>, vector<16x256xf32> -> vector<16x256xf32>
    %256 = arith.addf %246, %255 : vector<16x256xf32>
    %c1_i32_182 = arith.constant 1 : i32
    %257 = tpu.dynamic_rotate %225 by %c1_i32_182 dim 1 : vector<16x256xf32>, i32 -> vector<16x256xf32>
    %c3_183 = arith.constant 3 : index
    %c0_184 = arith.constant 0 : index
    %c0_185 = arith.constant 0 : index
    %258 = vector.load %arg4[%c3_183, %c0_184, %c0_185] : memref<9x1x256xf32, #tpu.memory_space<vmem>>, vector<1x1x256xf32>
    %259 = vector.shape_cast %258 : vector<1x1x256xf32> to vector<1x256xf32>
    %260 = vector.broadcast %259 : vector<1x256xf32> to vector<16x256xf32>
    %261 = arith.mulf %257, %260 : vector<16x256xf32>
    %c3_186 = arith.constant 3 : index
    %c0_187 = arith.constant 0 : index
    %c0_188 = arith.constant 0 : index
    %262 = vector.load %arg11[%c3_186, %c0_187, %c0_188] : memref<9x16x16xbf16, #tpu.memory_space<vmem>>, vector<1x16x16xbf16>
    %263 = vector.shape_cast %262 : vector<1x16x16xbf16> to vector<16x16xbf16>
    %264 = arith.truncf %261 : vector<16x256xf32> to vector<16x256xbf16>
    %cst_189 = arith.constant dense<0.000000e+00> : vector<16x256xf32>
    %265 = tpu.matmul %263, %264, %cst_189 {dimension_numbers = #tpu.dot_dimension_numbers<[1], [0], [0], [1], [0, 0, 1, 1], [], []>} : vector<16x16xbf16>, vector<16x256xbf16>, vector<16x256xf32> -> vector<16x256xf32>
    %266 = arith.addf %256, %265 : vector<16x256xf32>
    %c4_190 = arith.constant 4 : index
    %c0_191 = arith.constant 0 : index
    %c0_192 = arith.constant 0 : index
    %267 = vector.load %arg4[%c4_190, %c0_191, %c0_192] : memref<9x1x256xf32, #tpu.memory_space<vmem>>, vector<1x1x256xf32>
    %268 = vector.shape_cast %267 : vector<1x1x256xf32> to vector<1x256xf32>
    %269 = vector.broadcast %268 : vector<1x256xf32> to vector<16x256xf32>
    %270 = arith.mulf %225, %269 : vector<16x256xf32>
    %c4_193 = arith.constant 4 : index
    %c0_194 = arith.constant 0 : index
    %c0_195 = arith.constant 0 : index
    %271 = vector.load %arg11[%c4_193, %c0_194, %c0_195] : memref<9x16x16xbf16, #tpu.memory_space<vmem>>, vector<1x16x16xbf16>
    %272 = vector.shape_cast %271 : vector<1x16x16xbf16> to vector<16x16xbf16>
    %273 = arith.truncf %270 : vector<16x256xf32> to vector<16x256xbf16>
    %cst_196 = arith.constant dense<0.000000e+00> : vector<16x256xf32>
    %274 = tpu.matmul %272, %273, %cst_196 {dimension_numbers = #tpu.dot_dimension_numbers<[1], [0], [0], [1], [0, 0, 1, 1], [], []>} : vector<16x16xbf16>, vector<16x256xbf16>, vector<16x256xf32> -> vector<16x256xf32>
    %275 = arith.addf %266, %274 : vector<16x256xf32>
    %c255_i32_197 = arith.constant 255 : i32
    %276 = tpu.dynamic_rotate %225 by %c255_i32_197 dim 1 : vector<16x256xf32>, i32 -> vector<16x256xf32>
    %c5_198 = arith.constant 5 : index
    %c0_199 = arith.constant 0 : index
    %c0_200 = arith.constant 0 : index
    %277 = vector.load %arg4[%c5_198, %c0_199, %c0_200] : memref<9x1x256xf32, #tpu.memory_space<vmem>>, vector<1x1x256xf32>
    %278 = vector.shape_cast %277 : vector<1x1x256xf32> to vector<1x256xf32>
    %279 = vector.broadcast %278 : vector<1x256xf32> to vector<16x256xf32>
    %280 = arith.mulf %276, %279 : vector<16x256xf32>
    %c5_201 = arith.constant 5 : index
    %c0_202 = arith.constant 0 : index
    %c0_203 = arith.constant 0 : index
    %281 = vector.load %arg11[%c5_201, %c0_202, %c0_203] : memref<9x16x16xbf16, #tpu.memory_space<vmem>>, vector<1x16x16xbf16>
    %282 = vector.shape_cast %281 : vector<1x16x16xbf16> to vector<16x16xbf16>
    %283 = arith.truncf %280 : vector<16x256xf32> to vector<16x256xbf16>
    %cst_204 = arith.constant dense<0.000000e+00> : vector<16x256xf32>
    %284 = tpu.matmul %282, %283, %cst_204 {dimension_numbers = #tpu.dot_dimension_numbers<[1], [0], [0], [1], [0, 0, 1, 1], [], []>} : vector<16x16xbf16>, vector<16x256xbf16>, vector<16x256xf32> -> vector<16x256xf32>
    %285 = arith.addf %275, %284 : vector<16x256xf32>
    %c241_i32_205 = arith.constant 241 : i32
    %286 = tpu.dynamic_rotate %225 by %c241_i32_205 dim 1 : vector<16x256xf32>, i32 -> vector<16x256xf32>
    %c6_206 = arith.constant 6 : index
    %c0_207 = arith.constant 0 : index
    %c0_208 = arith.constant 0 : index
    %287 = vector.load %arg4[%c6_206, %c0_207, %c0_208] : memref<9x1x256xf32, #tpu.memory_space<vmem>>, vector<1x1x256xf32>
    %288 = vector.shape_cast %287 : vector<1x1x256xf32> to vector<1x256xf32>
    %289 = vector.broadcast %288 : vector<1x256xf32> to vector<16x256xf32>
    %290 = arith.mulf %286, %289 : vector<16x256xf32>
    %c6_209 = arith.constant 6 : index
    %c0_210 = arith.constant 0 : index
    %c0_211 = arith.constant 0 : index
    %291 = vector.load %arg11[%c6_209, %c0_210, %c0_211] : memref<9x16x16xbf16, #tpu.memory_space<vmem>>, vector<1x16x16xbf16>
    %292 = vector.shape_cast %291 : vector<1x16x16xbf16> to vector<16x16xbf16>
    %293 = arith.truncf %290 : vector<16x256xf32> to vector<16x256xbf16>
    %cst_212 = arith.constant dense<0.000000e+00> : vector<16x256xf32>
    %294 = tpu.matmul %292, %293, %cst_212 {dimension_numbers = #tpu.dot_dimension_numbers<[1], [0], [0], [1], [0, 0, 1, 1], [], []>} : vector<16x16xbf16>, vector<16x256xbf16>, vector<16x256xf32> -> vector<16x256xf32>
    %295 = arith.addf %285, %294 : vector<16x256xf32>
    %c240_i32_213 = arith.constant 240 : i32
    %296 = tpu.dynamic_rotate %225 by %c240_i32_213 dim 1 : vector<16x256xf32>, i32 -> vector<16x256xf32>
    %c7_214 = arith.constant 7 : index
    %c0_215 = arith.constant 0 : index
    %c0_216 = arith.constant 0 : index
    %297 = vector.load %arg4[%c7_214, %c0_215, %c0_216] : memref<9x1x256xf32, #tpu.memory_space<vmem>>, vector<1x1x256xf32>
    %298 = vector.shape_cast %297 : vector<1x1x256xf32> to vector<1x256xf32>
    %299 = vector.broadcast %298 : vector<1x256xf32> to vector<16x256xf32>
    %300 = arith.mulf %296, %299 : vector<16x256xf32>
    %c7_217 = arith.constant 7 : index
    %c0_218 = arith.constant 0 : index
    %c0_219 = arith.constant 0 : index
    %301 = vector.load %arg11[%c7_217, %c0_218, %c0_219] : memref<9x16x16xbf16, #tpu.memory_space<vmem>>, vector<1x16x16xbf16>
    %302 = vector.shape_cast %301 : vector<1x16x16xbf16> to vector<16x16xbf16>
    %303 = arith.truncf %300 : vector<16x256xf32> to vector<16x256xbf16>
    %cst_220 = arith.constant dense<0.000000e+00> : vector<16x256xf32>
    %304 = tpu.matmul %302, %303, %cst_220 {dimension_numbers = #tpu.dot_dimension_numbers<[1], [0], [0], [1], [0, 0, 1, 1], [], []>} : vector<16x16xbf16>, vector<16x256xbf16>, vector<16x256xf32> -> vector<16x256xf32>
    %305 = arith.addf %295, %304 : vector<16x256xf32>
    %c239_i32_221 = arith.constant 239 : i32
    %306 = tpu.dynamic_rotate %225 by %c239_i32_221 dim 1 : vector<16x256xf32>, i32 -> vector<16x256xf32>
    %c8_222 = arith.constant 8 : index
    %c0_223 = arith.constant 0 : index
    %c0_224 = arith.constant 0 : index
    %307 = vector.load %arg4[%c8_222, %c0_223, %c0_224] : memref<9x1x256xf32, #tpu.memory_space<vmem>>, vector<1x1x256xf32>
    %308 = vector.shape_cast %307 : vector<1x1x256xf32> to vector<1x256xf32>
    %309 = vector.broadcast %308 : vector<1x256xf32> to vector<16x256xf32>
    %310 = arith.mulf %306, %309 : vector<16x256xf32>
    %c8_225 = arith.constant 8 : index
    %c0_226 = arith.constant 0 : index
    %c0_227 = arith.constant 0 : index
    %311 = vector.load %arg11[%c8_225, %c0_226, %c0_227] : memref<9x16x16xbf16, #tpu.memory_space<vmem>>, vector<1x16x16xbf16>
    %312 = vector.shape_cast %311 : vector<1x16x16xbf16> to vector<16x16xbf16>
    %313 = arith.truncf %310 : vector<16x256xf32> to vector<16x256xbf16>
    %cst_228 = arith.constant dense<0.000000e+00> : vector<16x256xf32>
    %314 = tpu.matmul %312, %313, %cst_228 {dimension_numbers = #tpu.dot_dimension_numbers<[1], [0], [0], [1], [0, 0, 1, 1], [], []>} : vector<16x16xbf16>, vector<16x256xbf16>, vector<16x256xf32> -> vector<16x256xf32>
    %315 = arith.addf %305, %314 : vector<16x256xf32>
    %c0_229 = arith.constant 0 : index
    %c0_230 = arith.constant 0 : index
    %316 = vector.load %arg12[%c0_229, %c0_230] : memref<16x16xbf16, #tpu.memory_space<vmem>>, vector<16x16xbf16>
    %317 = arith.truncf %315 : vector<16x256xf32> to vector<16x256xbf16>
    %cst_231 = arith.constant dense<0.000000e+00> : vector<16x256xf32>
    %318 = tpu.matmul %316, %317, %cst_231 {dimension_numbers = #tpu.dot_dimension_numbers<[1], [0], [0], [1], [0, 0, 1, 1], [], []>} : vector<16x16xbf16>, vector<16x256xbf16>, vector<16x256xf32> -> vector<16x256xf32>
    %c0_232 = arith.constant 0 : index
    %c0_233 = arith.constant 0 : index
    %319 = vector.load %arg13[%c0_232, %c0_233] : memref<16x1xf32, #tpu.memory_space<vmem>>, vector<16x1xf32>
    %320 = vector.broadcast %319 : vector<16x1xf32> to vector<16x256xf32>
    %321 = arith.addf %318, %320 : vector<16x256xf32>
    %cst_234 = arith.constant 0.000000e+00 : f32
    %322 = vector.broadcast %cst_234 : f32 to vector<16x256xf32>
    %c17_i32_235 = arith.constant 17 : i32
    %323 = tpu.dynamic_rotate %321 by %c17_i32_235 dim 1 : vector<16x256xf32>, i32 -> vector<16x256xf32>
    %c0_236 = arith.constant 0 : index
    %c0_237 = arith.constant 0 : index
    %c0_238 = arith.constant 0 : index
    %324 = vector.load %arg4[%c0_236, %c0_237, %c0_238] : memref<9x1x256xf32, #tpu.memory_space<vmem>>, vector<1x1x256xf32>
    %325 = vector.shape_cast %324 : vector<1x1x256xf32> to vector<1x256xf32>
    %326 = vector.broadcast %325 : vector<1x256xf32> to vector<16x256xf32>
    %327 = arith.mulf %323, %326 : vector<16x256xf32>
    %c0_239 = arith.constant 0 : index
    %c0_240 = arith.constant 0 : index
    %c0_241 = arith.constant 0 : index
    %328 = vector.load %arg14[%c0_239, %c0_240, %c0_241] : memref<9x16x16xbf16, #tpu.memory_space<vmem>>, vector<1x16x16xbf16>
    %329 = vector.shape_cast %328 : vector<1x16x16xbf16> to vector<16x16xbf16>
    %330 = arith.truncf %327 : vector<16x256xf32> to vector<16x256xbf16>
    %cst_242 = arith.constant dense<0.000000e+00> : vector<16x256xf32>
    %331 = tpu.matmul %329, %330, %cst_242 {dimension_numbers = #tpu.dot_dimension_numbers<[1], [0], [0], [1], [0, 0, 1, 1], [], []>} : vector<16x16xbf16>, vector<16x256xbf16>, vector<16x256xf32> -> vector<16x256xf32>
    %332 = arith.addf %322, %331 : vector<16x256xf32>
    %c16_i32_243 = arith.constant 16 : i32
    %333 = tpu.dynamic_rotate %321 by %c16_i32_243 dim 1 : vector<16x256xf32>, i32 -> vector<16x256xf32>
    %c1_244 = arith.constant 1 : index
    %c0_245 = arith.constant 0 : index
    %c0_246 = arith.constant 0 : index
    %334 = vector.load %arg4[%c1_244, %c0_245, %c0_246] : memref<9x1x256xf32, #tpu.memory_space<vmem>>, vector<1x1x256xf32>
    %335 = vector.shape_cast %334 : vector<1x1x256xf32> to vector<1x256xf32>
    %336 = vector.broadcast %335 : vector<1x256xf32> to vector<16x256xf32>
    %337 = arith.mulf %333, %336 : vector<16x256xf32>
    %c1_247 = arith.constant 1 : index
    %c0_248 = arith.constant 0 : index
    %c0_249 = arith.constant 0 : index
    %338 = vector.load %arg14[%c1_247, %c0_248, %c0_249] : memref<9x16x16xbf16, #tpu.memory_space<vmem>>, vector<1x16x16xbf16>
    %339 = vector.shape_cast %338 : vector<1x16x16xbf16> to vector<16x16xbf16>
    %340 = arith.truncf %337 : vector<16x256xf32> to vector<16x256xbf16>
    %cst_250 = arith.constant dense<0.000000e+00> : vector<16x256xf32>
    %341 = tpu.matmul %339, %340, %cst_250 {dimension_numbers = #tpu.dot_dimension_numbers<[1], [0], [0], [1], [0, 0, 1, 1], [], []>} : vector<16x16xbf16>, vector<16x256xbf16>, vector<16x256xf32> -> vector<16x256xf32>
    %342 = arith.addf %332, %341 : vector<16x256xf32>
    %c15_i32_251 = arith.constant 15 : i32
    %343 = tpu.dynamic_rotate %321 by %c15_i32_251 dim 1 : vector<16x256xf32>, i32 -> vector<16x256xf32>
    %c2_252 = arith.constant 2 : index
    %c0_253 = arith.constant 0 : index
    %c0_254 = arith.constant 0 : index
    %344 = vector.load %arg4[%c2_252, %c0_253, %c0_254] : memref<9x1x256xf32, #tpu.memory_space<vmem>>, vector<1x1x256xf32>
    %345 = vector.shape_cast %344 : vector<1x1x256xf32> to vector<1x256xf32>
    %346 = vector.broadcast %345 : vector<1x256xf32> to vector<16x256xf32>
    %347 = arith.mulf %343, %346 : vector<16x256xf32>
    %c2_255 = arith.constant 2 : index
    %c0_256 = arith.constant 0 : index
    %c0_257 = arith.constant 0 : index
    %348 = vector.load %arg14[%c2_255, %c0_256, %c0_257] : memref<9x16x16xbf16, #tpu.memory_space<vmem>>, vector<1x16x16xbf16>
    %349 = vector.shape_cast %348 : vector<1x16x16xbf16> to vector<16x16xbf16>
    %350 = arith.truncf %347 : vector<16x256xf32> to vector<16x256xbf16>
    %cst_258 = arith.constant dense<0.000000e+00> : vector<16x256xf32>
    %351 = tpu.matmul %349, %350, %cst_258 {dimension_numbers = #tpu.dot_dimension_numbers<[1], [0], [0], [1], [0, 0, 1, 1], [], []>} : vector<16x16xbf16>, vector<16x256xbf16>, vector<16x256xf32> -> vector<16x256xf32>
    %352 = arith.addf %342, %351 : vector<16x256xf32>
    %c1_i32_259 = arith.constant 1 : i32
    %353 = tpu.dynamic_rotate %321 by %c1_i32_259 dim 1 : vector<16x256xf32>, i32 -> vector<16x256xf32>
    %c3_260 = arith.constant 3 : index
    %c0_261 = arith.constant 0 : index
    %c0_262 = arith.constant 0 : index
    %354 = vector.load %arg4[%c3_260, %c0_261, %c0_262] : memref<9x1x256xf32, #tpu.memory_space<vmem>>, vector<1x1x256xf32>
    %355 = vector.shape_cast %354 : vector<1x1x256xf32> to vector<1x256xf32>
    %356 = vector.broadcast %355 : vector<1x256xf32> to vector<16x256xf32>
    %357 = arith.mulf %353, %356 : vector<16x256xf32>
    %c3_263 = arith.constant 3 : index
    %c0_264 = arith.constant 0 : index
    %c0_265 = arith.constant 0 : index
    %358 = vector.load %arg14[%c3_263, %c0_264, %c0_265] : memref<9x16x16xbf16, #tpu.memory_space<vmem>>, vector<1x16x16xbf16>
    %359 = vector.shape_cast %358 : vector<1x16x16xbf16> to vector<16x16xbf16>
    %360 = arith.truncf %357 : vector<16x256xf32> to vector<16x256xbf16>
    %cst_266 = arith.constant dense<0.000000e+00> : vector<16x256xf32>
    %361 = tpu.matmul %359, %360, %cst_266 {dimension_numbers = #tpu.dot_dimension_numbers<[1], [0], [0], [1], [0, 0, 1, 1], [], []>} : vector<16x16xbf16>, vector<16x256xbf16>, vector<16x256xf32> -> vector<16x256xf32>
    %362 = arith.addf %352, %361 : vector<16x256xf32>
    %c4_267 = arith.constant 4 : index
    %c0_268 = arith.constant 0 : index
    %c0_269 = arith.constant 0 : index
    %363 = vector.load %arg4[%c4_267, %c0_268, %c0_269] : memref<9x1x256xf32, #tpu.memory_space<vmem>>, vector<1x1x256xf32>
    %364 = vector.shape_cast %363 : vector<1x1x256xf32> to vector<1x256xf32>
    %365 = vector.broadcast %364 : vector<1x256xf32> to vector<16x256xf32>
    %366 = arith.mulf %321, %365 : vector<16x256xf32>
    %c4_270 = arith.constant 4 : index
    %c0_271 = arith.constant 0 : index
    %c0_272 = arith.constant 0 : index
    %367 = vector.load %arg14[%c4_270, %c0_271, %c0_272] : memref<9x16x16xbf16, #tpu.memory_space<vmem>>, vector<1x16x16xbf16>
    %368 = vector.shape_cast %367 : vector<1x16x16xbf16> to vector<16x16xbf16>
    %369 = arith.truncf %366 : vector<16x256xf32> to vector<16x256xbf16>
    %cst_273 = arith.constant dense<0.000000e+00> : vector<16x256xf32>
    %370 = tpu.matmul %368, %369, %cst_273 {dimension_numbers = #tpu.dot_dimension_numbers<[1], [0], [0], [1], [0, 0, 1, 1], [], []>} : vector<16x16xbf16>, vector<16x256xbf16>, vector<16x256xf32> -> vector<16x256xf32>
    %371 = arith.addf %362, %370 : vector<16x256xf32>
    %c255_i32_274 = arith.constant 255 : i32
    %372 = tpu.dynamic_rotate %321 by %c255_i32_274 dim 1 : vector<16x256xf32>, i32 -> vector<16x256xf32>
    %c5_275 = arith.constant 5 : index
    %c0_276 = arith.constant 0 : index
    %c0_277 = arith.constant 0 : index
    %373 = vector.load %arg4[%c5_275, %c0_276, %c0_277] : memref<9x1x256xf32, #tpu.memory_space<vmem>>, vector<1x1x256xf32>
    %374 = vector.shape_cast %373 : vector<1x1x256xf32> to vector<1x256xf32>
    %375 = vector.broadcast %374 : vector<1x256xf32> to vector<16x256xf32>
    %376 = arith.mulf %372, %375 : vector<16x256xf32>
    %c5_278 = arith.constant 5 : index
    %c0_279 = arith.constant 0 : index
    %c0_280 = arith.constant 0 : index
    %377 = vector.load %arg14[%c5_278, %c0_279, %c0_280] : memref<9x16x16xbf16, #tpu.memory_space<vmem>>, vector<1x16x16xbf16>
    %378 = vector.shape_cast %377 : vector<1x16x16xbf16> to vector<16x16xbf16>
    %379 = arith.truncf %376 : vector<16x256xf32> to vector<16x256xbf16>
    %cst_281 = arith.constant dense<0.000000e+00> : vector<16x256xf32>
    %380 = tpu.matmul %378, %379, %cst_281 {dimension_numbers = #tpu.dot_dimension_numbers<[1], [0], [0], [1], [0, 0, 1, 1], [], []>} : vector<16x16xbf16>, vector<16x256xbf16>, vector<16x256xf32> -> vector<16x256xf32>
    %381 = arith.addf %371, %380 : vector<16x256xf32>
    %c241_i32_282 = arith.constant 241 : i32
    %382 = tpu.dynamic_rotate %321 by %c241_i32_282 dim 1 : vector<16x256xf32>, i32 -> vector<16x256xf32>
    %c6_283 = arith.constant 6 : index
    %c0_284 = arith.constant 0 : index
    %c0_285 = arith.constant 0 : index
    %383 = vector.load %arg4[%c6_283, %c0_284, %c0_285] : memref<9x1x256xf32, #tpu.memory_space<vmem>>, vector<1x1x256xf32>
    %384 = vector.shape_cast %383 : vector<1x1x256xf32> to vector<1x256xf32>
    %385 = vector.broadcast %384 : vector<1x256xf32> to vector<16x256xf32>
    %386 = arith.mulf %382, %385 : vector<16x256xf32>
    %c6_286 = arith.constant 6 : index
    %c0_287 = arith.constant 0 : index
    %c0_288 = arith.constant 0 : index
    %387 = vector.load %arg14[%c6_286, %c0_287, %c0_288] : memref<9x16x16xbf16, #tpu.memory_space<vmem>>, vector<1x16x16xbf16>
    %388 = vector.shape_cast %387 : vector<1x16x16xbf16> to vector<16x16xbf16>
    %389 = arith.truncf %386 : vector<16x256xf32> to vector<16x256xbf16>
    %cst_289 = arith.constant dense<0.000000e+00> : vector<16x256xf32>
    %390 = tpu.matmul %388, %389, %cst_289 {dimension_numbers = #tpu.dot_dimension_numbers<[1], [0], [0], [1], [0, 0, 1, 1], [], []>} : vector<16x16xbf16>, vector<16x256xbf16>, vector<16x256xf32> -> vector<16x256xf32>
    %391 = arith.addf %381, %390 : vector<16x256xf32>
    %c240_i32_290 = arith.constant 240 : i32
    %392 = tpu.dynamic_rotate %321 by %c240_i32_290 dim 1 : vector<16x256xf32>, i32 -> vector<16x256xf32>
    %c7_291 = arith.constant 7 : index
    %c0_292 = arith.constant 0 : index
    %c0_293 = arith.constant 0 : index
    %393 = vector.load %arg4[%c7_291, %c0_292, %c0_293] : memref<9x1x256xf32, #tpu.memory_space<vmem>>, vector<1x1x256xf32>
    %394 = vector.shape_cast %393 : vector<1x1x256xf32> to vector<1x256xf32>
    %395 = vector.broadcast %394 : vector<1x256xf32> to vector<16x256xf32>
    %396 = arith.mulf %392, %395 : vector<16x256xf32>
    %c7_294 = arith.constant 7 : index
    %c0_295 = arith.constant 0 : index
    %c0_296 = arith.constant 0 : index
    %397 = vector.load %arg14[%c7_294, %c0_295, %c0_296] : memref<9x16x16xbf16, #tpu.memory_space<vmem>>, vector<1x16x16xbf16>
    %398 = vector.shape_cast %397 : vector<1x16x16xbf16> to vector<16x16xbf16>
    %399 = arith.truncf %396 : vector<16x256xf32> to vector<16x256xbf16>
    %cst_297 = arith.constant dense<0.000000e+00> : vector<16x256xf32>
    %400 = tpu.matmul %398, %399, %cst_297 {dimension_numbers = #tpu.dot_dimension_numbers<[1], [0], [0], [1], [0, 0, 1, 1], [], []>} : vector<16x16xbf16>, vector<16x256xbf16>, vector<16x256xf32> -> vector<16x256xf32>
    %401 = arith.addf %391, %400 : vector<16x256xf32>
    %c239_i32_298 = arith.constant 239 : i32
    %402 = tpu.dynamic_rotate %321 by %c239_i32_298 dim 1 : vector<16x256xf32>, i32 -> vector<16x256xf32>
    %c8_299 = arith.constant 8 : index
    %c0_300 = arith.constant 0 : index
    %c0_301 = arith.constant 0 : index
    %403 = vector.load %arg4[%c8_299, %c0_300, %c0_301] : memref<9x1x256xf32, #tpu.memory_space<vmem>>, vector<1x1x256xf32>
    %404 = vector.shape_cast %403 : vector<1x1x256xf32> to vector<1x256xf32>
    %405 = vector.broadcast %404 : vector<1x256xf32> to vector<16x256xf32>
    %406 = arith.mulf %402, %405 : vector<16x256xf32>
    %c8_302 = arith.constant 8 : index
    %c0_303 = arith.constant 0 : index
    %c0_304 = arith.constant 0 : index
    %407 = vector.load %arg14[%c8_302, %c0_303, %c0_304] : memref<9x16x16xbf16, #tpu.memory_space<vmem>>, vector<1x16x16xbf16>
    %408 = vector.shape_cast %407 : vector<1x16x16xbf16> to vector<16x16xbf16>
    %409 = arith.truncf %406 : vector<16x256xf32> to vector<16x256xbf16>
    %cst_305 = arith.constant dense<0.000000e+00> : vector<16x256xf32>
    %410 = tpu.matmul %408, %409, %cst_305 {dimension_numbers = #tpu.dot_dimension_numbers<[1], [0], [0], [1], [0, 0, 1, 1], [], []>} : vector<16x16xbf16>, vector<16x256xbf16>, vector<16x256xf32> -> vector<16x256xf32>
    %411 = arith.addf %401, %410 : vector<16x256xf32>
    %c0_306 = arith.constant 0 : index
    %c0_307 = arith.constant 0 : index
    %412 = vector.load %arg15[%c0_306, %c0_307] : memref<16x1xf32, #tpu.memory_space<vmem>>, vector<16x1xf32>
    %413 = vector.broadcast %412 : vector<16x1xf32> to vector<16x256xf32>
    %414 = arith.addf %411, %413 : vector<16x256xf32>
    %cst_308 = arith.constant dense<0.000000e+00> : vector<16xf32>
    %415 = vector.multi_reduction <add>, %414, %cst_308 [1] : vector<16x256xf32> to vector<16xf32>
    %416 = vector.shape_cast %415 : vector<16xf32> to vector<16x1xf32>
    %417 = arith.mulf %414, %414 : vector<16x256xf32>
    %cst_309 = arith.constant dense<0.000000e+00> : vector<16xf32>
    %418 = vector.multi_reduction <add>, %417, %cst_309 [1] : vector<16x256xf32> to vector<16xf32>
    %419 = vector.shape_cast %418 : vector<16xf32> to vector<16x1xf32>
    %c0_310 = arith.constant 0 : index
    %c0_311 = arith.constant 0 : index
    %420 = vector.load %arg6[%c0_310, %c0_311] : memref<16x8xf32, #tpu.memory_space<vmem>>, vector<16x8xf32>
    %c0_312 = arith.constant 0 : index
    %c0_313 = arith.constant 0 : index
    %421 = vector.load %arg5[%c0_312, %c0_313] : memref<8x16xf32, #tpu.memory_space<vmem>>, vector<8x16xf32>
    %cst_314 = arith.constant dense<0.000000e+00> : vector<8x1xf32>
    %422 = tpu.matmul %421, %416, %cst_314 {dimension_numbers = #tpu.dot_dimension_numbers<[1], [0], [0], [1], [0, 0, 1, 1], [], []>} : vector<8x16xf32>, vector<16x1xf32>, vector<8x1xf32> -> vector<8x1xf32>
    %cst_315 = arith.constant dense<0.000000e+00> : vector<16x1xf32>
    %423 = tpu.matmul %420, %422, %cst_315 {dimension_numbers = #tpu.dot_dimension_numbers<[1], [0], [0], [1], [0, 0, 1, 1], [], []>} : vector<16x8xf32>, vector<8x1xf32>, vector<16x1xf32> -> vector<16x1xf32>
    %cst_316 = arith.constant 5.120000e+02 : f32
    %424 = vector.broadcast %cst_316 : f32 to vector<16x1xf32>
    %425 = arith.divf %423, %424 : vector<16x1xf32>
    %c0_317 = arith.constant 0 : index
    %c0_318 = arith.constant 0 : index
    %426 = vector.load %arg6[%c0_317, %c0_318] : memref<16x8xf32, #tpu.memory_space<vmem>>, vector<16x8xf32>
    %c0_319 = arith.constant 0 : index
    %c0_320 = arith.constant 0 : index
    %427 = vector.load %arg5[%c0_319, %c0_320] : memref<8x16xf32, #tpu.memory_space<vmem>>, vector<8x16xf32>
    %cst_321 = arith.constant dense<0.000000e+00> : vector<8x1xf32>
    %428 = tpu.matmul %427, %419, %cst_321 {dimension_numbers = #tpu.dot_dimension_numbers<[1], [0], [0], [1], [0, 0, 1, 1], [], []>} : vector<8x16xf32>, vector<16x1xf32>, vector<8x1xf32> -> vector<8x1xf32>
    %cst_322 = arith.constant dense<0.000000e+00> : vector<16x1xf32>
    %429 = tpu.matmul %426, %428, %cst_322 {dimension_numbers = #tpu.dot_dimension_numbers<[1], [0], [0], [1], [0, 0, 1, 1], [], []>} : vector<16x8xf32>, vector<8x1xf32>, vector<16x1xf32> -> vector<16x1xf32>
    %cst_323 = arith.constant 5.120000e+02 : f32
    %430 = vector.broadcast %cst_323 : f32 to vector<16x1xf32>
    %431 = arith.divf %429, %430 : vector<16x1xf32>
    %432 = arith.mulf %425, %425 : vector<16x1xf32>
    %433 = arith.subf %431, %432 : vector<16x1xf32>
    %cst_324 = arith.constant 9.99999974E-6 : f32
    %434 = vector.broadcast %cst_324 : f32 to vector<16x1xf32>
    %435 = arith.addf %433, %434 : vector<16x1xf32>
    %436 = math.rsqrt %435 : vector<16x1xf32>
    %437 = vector.broadcast %425 : vector<16x1xf32> to vector<16x256xf32>
    %438 = arith.subf %414, %437 : vector<16x256xf32>
    %439 = vector.broadcast %436 : vector<16x1xf32> to vector<16x256xf32>
    %440 = arith.mulf %438, %439 : vector<16x256xf32>
    %c0_325 = arith.constant 0 : index
    %c0_326 = arith.constant 0 : index
    %441 = vector.load %arg16[%c0_325, %c0_326] : memref<16x1xf32, #tpu.memory_space<vmem>>, vector<16x1xf32>
    %442 = vector.broadcast %441 : vector<16x1xf32> to vector<16x256xf32>
    %443 = arith.mulf %440, %442 : vector<16x256xf32>
    %c0_327 = arith.constant 0 : index
    %c0_328 = arith.constant 0 : index
    %444 = vector.load %arg17[%c0_327, %c0_328] : memref<16x1xf32, #tpu.memory_space<vmem>>, vector<16x1xf32>
    %445 = vector.broadcast %444 : vector<16x1xf32> to vector<16x256xf32>
    %446 = arith.addf %443, %445 : vector<16x256xf32>
    %447 = arith.negf %446 : vector<16x256xf32>
    %448 = math.exp %447 : vector<16x256xf32>
    %cst_329 = arith.constant 1.000000e+00 : f32
    %449 = vector.broadcast %cst_329 : f32 to vector<16x256xf32>
    %450 = arith.addf %449, %448 : vector<16x256xf32>
    %451 = arith.divf %449, %450 : vector<16x256xf32>
    %452 = arith.mulf %446, %451 : vector<16x256xf32>
    %453 = arith.addf %452, %321 : vector<16x256xf32>
    %cst_330 = arith.constant 0.000000e+00 : f32
    %454 = vector.broadcast %cst_330 : f32 to vector<16x256xf32>
    %c17_i32_331 = arith.constant 17 : i32
    %455 = tpu.dynamic_rotate %453 by %c17_i32_331 dim 1 : vector<16x256xf32>, i32 -> vector<16x256xf32>
    %c0_332 = arith.constant 0 : index
    %c0_333 = arith.constant 0 : index
    %c0_334 = arith.constant 0 : index
    %456 = vector.load %arg4[%c0_332, %c0_333, %c0_334] : memref<9x1x256xf32, #tpu.memory_space<vmem>>, vector<1x1x256xf32>
    %457 = vector.shape_cast %456 : vector<1x1x256xf32> to vector<1x256xf32>
    %458 = vector.broadcast %457 : vector<1x256xf32> to vector<16x256xf32>
    %459 = arith.mulf %455, %458 : vector<16x256xf32>
    %c0_335 = arith.constant 0 : index
    %c0_336 = arith.constant 0 : index
    %c0_337 = arith.constant 0 : index
    %460 = vector.load %arg18[%c0_335, %c0_336, %c0_337] : memref<9x16x16xbf16, #tpu.memory_space<vmem>>, vector<1x16x16xbf16>
    %461 = vector.shape_cast %460 : vector<1x16x16xbf16> to vector<16x16xbf16>
    %462 = arith.truncf %459 : vector<16x256xf32> to vector<16x256xbf16>
    %cst_338 = arith.constant dense<0.000000e+00> : vector<16x256xf32>
    %463 = tpu.matmul %461, %462, %cst_338 {dimension_numbers = #tpu.dot_dimension_numbers<[1], [0], [0], [1], [0, 0, 1, 1], [], []>} : vector<16x16xbf16>, vector<16x256xbf16>, vector<16x256xf32> -> vector<16x256xf32>
    %464 = arith.addf %454, %463 : vector<16x256xf32>
    %c16_i32_339 = arith.constant 16 : i32
    %465 = tpu.dynamic_rotate %453 by %c16_i32_339 dim 1 : vector<16x256xf32>, i32 -> vector<16x256xf32>
    %c1_340 = arith.constant 1 : index
    %c0_341 = arith.constant 0 : index
    %c0_342 = arith.constant 0 : index
    %466 = vector.load %arg4[%c1_340, %c0_341, %c0_342] : memref<9x1x256xf32, #tpu.memory_space<vmem>>, vector<1x1x256xf32>
    %467 = vector.shape_cast %466 : vector<1x1x256xf32> to vector<1x256xf32>
    %468 = vector.broadcast %467 : vector<1x256xf32> to vector<16x256xf32>
    %469 = arith.mulf %465, %468 : vector<16x256xf32>
    %c1_343 = arith.constant 1 : index
    %c0_344 = arith.constant 0 : index
    %c0_345 = arith.constant 0 : index
    %470 = vector.load %arg18[%c1_343, %c0_344, %c0_345] : memref<9x16x16xbf16, #tpu.memory_space<vmem>>, vector<1x16x16xbf16>
    %471 = vector.shape_cast %470 : vector<1x16x16xbf16> to vector<16x16xbf16>
    %472 = arith.truncf %469 : vector<16x256xf32> to vector<16x256xbf16>
    %cst_346 = arith.constant dense<0.000000e+00> : vector<16x256xf32>
    %473 = tpu.matmul %471, %472, %cst_346 {dimension_numbers = #tpu.dot_dimension_numbers<[1], [0], [0], [1], [0, 0, 1, 1], [], []>} : vector<16x16xbf16>, vector<16x256xbf16>, vector<16x256xf32> -> vector<16x256xf32>
    %474 = arith.addf %464, %473 : vector<16x256xf32>
    %c15_i32_347 = arith.constant 15 : i32
    %475 = tpu.dynamic_rotate %453 by %c15_i32_347 dim 1 : vector<16x256xf32>, i32 -> vector<16x256xf32>
    %c2_348 = arith.constant 2 : index
    %c0_349 = arith.constant 0 : index
    %c0_350 = arith.constant 0 : index
    %476 = vector.load %arg4[%c2_348, %c0_349, %c0_350] : memref<9x1x256xf32, #tpu.memory_space<vmem>>, vector<1x1x256xf32>
    %477 = vector.shape_cast %476 : vector<1x1x256xf32> to vector<1x256xf32>
    %478 = vector.broadcast %477 : vector<1x256xf32> to vector<16x256xf32>
    %479 = arith.mulf %475, %478 : vector<16x256xf32>
    %c2_351 = arith.constant 2 : index
    %c0_352 = arith.constant 0 : index
    %c0_353 = arith.constant 0 : index
    %480 = vector.load %arg18[%c2_351, %c0_352, %c0_353] : memref<9x16x16xbf16, #tpu.memory_space<vmem>>, vector<1x16x16xbf16>
    %481 = vector.shape_cast %480 : vector<1x16x16xbf16> to vector<16x16xbf16>
    %482 = arith.truncf %479 : vector<16x256xf32> to vector<16x256xbf16>
    %cst_354 = arith.constant dense<0.000000e+00> : vector<16x256xf32>
    %483 = tpu.matmul %481, %482, %cst_354 {dimension_numbers = #tpu.dot_dimension_numbers<[1], [0], [0], [1], [0, 0, 1, 1], [], []>} : vector<16x16xbf16>, vector<16x256xbf16>, vector<16x256xf32> -> vector<16x256xf32>
    %484 = arith.addf %474, %483 : vector<16x256xf32>
    %c1_i32_355 = arith.constant 1 : i32
    %485 = tpu.dynamic_rotate %453 by %c1_i32_355 dim 1 : vector<16x256xf32>, i32 -> vector<16x256xf32>
    %c3_356 = arith.constant 3 : index
    %c0_357 = arith.constant 0 : index
    %c0_358 = arith.constant 0 : index
    %486 = vector.load %arg4[%c3_356, %c0_357, %c0_358] : memref<9x1x256xf32, #tpu.memory_space<vmem>>, vector<1x1x256xf32>
    %487 = vector.shape_cast %486 : vector<1x1x256xf32> to vector<1x256xf32>
    %488 = vector.broadcast %487 : vector<1x256xf32> to vector<16x256xf32>
    %489 = arith.mulf %485, %488 : vector<16x256xf32>
    %c3_359 = arith.constant 3 : index
    %c0_360 = arith.constant 0 : index
    %c0_361 = arith.constant 0 : index
    %490 = vector.load %arg18[%c3_359, %c0_360, %c0_361] : memref<9x16x16xbf16, #tpu.memory_space<vmem>>, vector<1x16x16xbf16>
    %491 = vector.shape_cast %490 : vector<1x16x16xbf16> to vector<16x16xbf16>
    %492 = arith.truncf %489 : vector<16x256xf32> to vector<16x256xbf16>
    %cst_362 = arith.constant dense<0.000000e+00> : vector<16x256xf32>
    %493 = tpu.matmul %491, %492, %cst_362 {dimension_numbers = #tpu.dot_dimension_numbers<[1], [0], [0], [1], [0, 0, 1, 1], [], []>} : vector<16x16xbf16>, vector<16x256xbf16>, vector<16x256xf32> -> vector<16x256xf32>
    %494 = arith.addf %484, %493 : vector<16x256xf32>
    %c4_363 = arith.constant 4 : index
    %c0_364 = arith.constant 0 : index
    %c0_365 = arith.constant 0 : index
    %495 = vector.load %arg4[%c4_363, %c0_364, %c0_365] : memref<9x1x256xf32, #tpu.memory_space<vmem>>, vector<1x1x256xf32>
    %496 = vector.shape_cast %495 : vector<1x1x256xf32> to vector<1x256xf32>
    %497 = vector.broadcast %496 : vector<1x256xf32> to vector<16x256xf32>
    %498 = arith.mulf %453, %497 : vector<16x256xf32>
    %c4_366 = arith.constant 4 : index
    %c0_367 = arith.constant 0 : index
    %c0_368 = arith.constant 0 : index
    %499 = vector.load %arg18[%c4_366, %c0_367, %c0_368] : memref<9x16x16xbf16, #tpu.memory_space<vmem>>, vector<1x16x16xbf16>
    %500 = vector.shape_cast %499 : vector<1x16x16xbf16> to vector<16x16xbf16>
    %501 = arith.truncf %498 : vector<16x256xf32> to vector<16x256xbf16>
    %cst_369 = arith.constant dense<0.000000e+00> : vector<16x256xf32>
    %502 = tpu.matmul %500, %501, %cst_369 {dimension_numbers = #tpu.dot_dimension_numbers<[1], [0], [0], [1], [0, 0, 1, 1], [], []>} : vector<16x16xbf16>, vector<16x256xbf16>, vector<16x256xf32> -> vector<16x256xf32>
    %503 = arith.addf %494, %502 : vector<16x256xf32>
    %c255_i32_370 = arith.constant 255 : i32
    %504 = tpu.dynamic_rotate %453 by %c255_i32_370 dim 1 : vector<16x256xf32>, i32 -> vector<16x256xf32>
    %c5_371 = arith.constant 5 : index
    %c0_372 = arith.constant 0 : index
    %c0_373 = arith.constant 0 : index
    %505 = vector.load %arg4[%c5_371, %c0_372, %c0_373] : memref<9x1x256xf32, #tpu.memory_space<vmem>>, vector<1x1x256xf32>
    %506 = vector.shape_cast %505 : vector<1x1x256xf32> to vector<1x256xf32>
    %507 = vector.broadcast %506 : vector<1x256xf32> to vector<16x256xf32>
    %508 = arith.mulf %504, %507 : vector<16x256xf32>
    %c5_374 = arith.constant 5 : index
    %c0_375 = arith.constant 0 : index
    %c0_376 = arith.constant 0 : index
    %509 = vector.load %arg18[%c5_374, %c0_375, %c0_376] : memref<9x16x16xbf16, #tpu.memory_space<vmem>>, vector<1x16x16xbf16>
    %510 = vector.shape_cast %509 : vector<1x16x16xbf16> to vector<16x16xbf16>
    %511 = arith.truncf %508 : vector<16x256xf32> to vector<16x256xbf16>
    %cst_377 = arith.constant dense<0.000000e+00> : vector<16x256xf32>
    %512 = tpu.matmul %510, %511, %cst_377 {dimension_numbers = #tpu.dot_dimension_numbers<[1], [0], [0], [1], [0, 0, 1, 1], [], []>} : vector<16x16xbf16>, vector<16x256xbf16>, vector<16x256xf32> -> vector<16x256xf32>
    %513 = arith.addf %503, %512 : vector<16x256xf32>
    %c241_i32_378 = arith.constant 241 : i32
    %514 = tpu.dynamic_rotate %453 by %c241_i32_378 dim 1 : vector<16x256xf32>, i32 -> vector<16x256xf32>
    %c6_379 = arith.constant 6 : index
    %c0_380 = arith.constant 0 : index
    %c0_381 = arith.constant 0 : index
    %515 = vector.load %arg4[%c6_379, %c0_380, %c0_381] : memref<9x1x256xf32, #tpu.memory_space<vmem>>, vector<1x1x256xf32>
    %516 = vector.shape_cast %515 : vector<1x1x256xf32> to vector<1x256xf32>
    %517 = vector.broadcast %516 : vector<1x256xf32> to vector<16x256xf32>
    %518 = arith.mulf %514, %517 : vector<16x256xf32>
    %c6_382 = arith.constant 6 : index
    %c0_383 = arith.constant 0 : index
    %c0_384 = arith.constant 0 : index
    %519 = vector.load %arg18[%c6_382, %c0_383, %c0_384] : memref<9x16x16xbf16, #tpu.memory_space<vmem>>, vector<1x16x16xbf16>
    %520 = vector.shape_cast %519 : vector<1x16x16xbf16> to vector<16x16xbf16>
    %521 = arith.truncf %518 : vector<16x256xf32> to vector<16x256xbf16>
    %cst_385 = arith.constant dense<0.000000e+00> : vector<16x256xf32>
    %522 = tpu.matmul %520, %521, %cst_385 {dimension_numbers = #tpu.dot_dimension_numbers<[1], [0], [0], [1], [0, 0, 1, 1], [], []>} : vector<16x16xbf16>, vector<16x256xbf16>, vector<16x256xf32> -> vector<16x256xf32>
    %523 = arith.addf %513, %522 : vector<16x256xf32>
    %c240_i32_386 = arith.constant 240 : i32
    %524 = tpu.dynamic_rotate %453 by %c240_i32_386 dim 1 : vector<16x256xf32>, i32 -> vector<16x256xf32>
    %c7_387 = arith.constant 7 : index
    %c0_388 = arith.constant 0 : index
    %c0_389 = arith.constant 0 : index
    %525 = vector.load %arg4[%c7_387, %c0_388, %c0_389] : memref<9x1x256xf32, #tpu.memory_space<vmem>>, vector<1x1x256xf32>
    %526 = vector.shape_cast %525 : vector<1x1x256xf32> to vector<1x256xf32>
    %527 = vector.broadcast %526 : vector<1x256xf32> to vector<16x256xf32>
    %528 = arith.mulf %524, %527 : vector<16x256xf32>
    %c7_390 = arith.constant 7 : index
    %c0_391 = arith.constant 0 : index
    %c0_392 = arith.constant 0 : index
    %529 = vector.load %arg18[%c7_390, %c0_391, %c0_392] : memref<9x16x16xbf16, #tpu.memory_space<vmem>>, vector<1x16x16xbf16>
    %530 = vector.shape_cast %529 : vector<1x16x16xbf16> to vector<16x16xbf16>
    %531 = arith.truncf %528 : vector<16x256xf32> to vector<16x256xbf16>
    %cst_393 = arith.constant dense<0.000000e+00> : vector<16x256xf32>
    %532 = tpu.matmul %530, %531, %cst_393 {dimension_numbers = #tpu.dot_dimension_numbers<[1], [0], [0], [1], [0, 0, 1, 1], [], []>} : vector<16x16xbf16>, vector<16x256xbf16>, vector<16x256xf32> -> vector<16x256xf32>
    %533 = arith.addf %523, %532 : vector<16x256xf32>
    %c239_i32_394 = arith.constant 239 : i32
    %534 = tpu.dynamic_rotate %453 by %c239_i32_394 dim 1 : vector<16x256xf32>, i32 -> vector<16x256xf32>
    %c8_395 = arith.constant 8 : index
    %c0_396 = arith.constant 0 : index
    %c0_397 = arith.constant 0 : index
    %535 = vector.load %arg4[%c8_395, %c0_396, %c0_397] : memref<9x1x256xf32, #tpu.memory_space<vmem>>, vector<1x1x256xf32>
    %536 = vector.shape_cast %535 : vector<1x1x256xf32> to vector<1x256xf32>
    %537 = vector.broadcast %536 : vector<1x256xf32> to vector<16x256xf32>
    %538 = arith.mulf %534, %537 : vector<16x256xf32>
    %c8_398 = arith.constant 8 : index
    %c0_399 = arith.constant 0 : index
    %c0_400 = arith.constant 0 : index
    %539 = vector.load %arg18[%c8_398, %c0_399, %c0_400] : memref<9x16x16xbf16, #tpu.memory_space<vmem>>, vector<1x16x16xbf16>
    %540 = vector.shape_cast %539 : vector<1x16x16xbf16> to vector<16x16xbf16>
    %541 = arith.truncf %538 : vector<16x256xf32> to vector<16x256xbf16>
    %cst_401 = arith.constant dense<0.000000e+00> : vector<16x256xf32>
    %542 = tpu.matmul %540, %541, %cst_401 {dimension_numbers = #tpu.dot_dimension_numbers<[1], [0], [0], [1], [0, 0, 1, 1], [], []>} : vector<16x16xbf16>, vector<16x256xbf16>, vector<16x256xf32> -> vector<16x256xf32>
    %543 = arith.addf %533, %542 : vector<16x256xf32>
    %c0_402 = arith.constant 0 : index
    %c0_403 = arith.constant 0 : index
    %544 = vector.load %arg19[%c0_402, %c0_403] : memref<16x1xf32, #tpu.memory_space<vmem>>, vector<16x1xf32>
    %545 = vector.broadcast %544 : vector<16x1xf32> to vector<16x256xf32>
    %546 = arith.addf %543, %545 : vector<16x256xf32>
    %cst_404 = arith.constant dense<0.000000e+00> : vector<16xf32>
    %547 = vector.multi_reduction <add>, %546, %cst_404 [1] : vector<16x256xf32> to vector<16xf32>
    %548 = vector.shape_cast %547 : vector<16xf32> to vector<16x1xf32>
    %549 = arith.mulf %546, %546 : vector<16x256xf32>
    %cst_405 = arith.constant dense<0.000000e+00> : vector<16xf32>
    %550 = vector.multi_reduction <add>, %549, %cst_405 [1] : vector<16x256xf32> to vector<16xf32>
    %551 = vector.shape_cast %550 : vector<16xf32> to vector<16x1xf32>
    %c0_406 = arith.constant 0 : index
    %c0_407 = arith.constant 0 : index
    %552 = vector.load %arg6[%c0_406, %c0_407] : memref<16x8xf32, #tpu.memory_space<vmem>>, vector<16x8xf32>
    %c0_408 = arith.constant 0 : index
    %c0_409 = arith.constant 0 : index
    %553 = vector.load %arg5[%c0_408, %c0_409] : memref<8x16xf32, #tpu.memory_space<vmem>>, vector<8x16xf32>
    %cst_410 = arith.constant dense<0.000000e+00> : vector<8x1xf32>
    %554 = tpu.matmul %553, %548, %cst_410 {dimension_numbers = #tpu.dot_dimension_numbers<[1], [0], [0], [1], [0, 0, 1, 1], [], []>} : vector<8x16xf32>, vector<16x1xf32>, vector<8x1xf32> -> vector<8x1xf32>
    %cst_411 = arith.constant dense<0.000000e+00> : vector<16x1xf32>
    %555 = tpu.matmul %552, %554, %cst_411 {dimension_numbers = #tpu.dot_dimension_numbers<[1], [0], [0], [1], [0, 0, 1, 1], [], []>} : vector<16x8xf32>, vector<8x1xf32>, vector<16x1xf32> -> vector<16x1xf32>
    %cst_412 = arith.constant 5.120000e+02 : f32
    %556 = vector.broadcast %cst_412 : f32 to vector<16x1xf32>
    %557 = arith.divf %555, %556 : vector<16x1xf32>
    %c0_413 = arith.constant 0 : index
    %c0_414 = arith.constant 0 : index
    %558 = vector.load %arg6[%c0_413, %c0_414] : memref<16x8xf32, #tpu.memory_space<vmem>>, vector<16x8xf32>
    %c0_415 = arith.constant 0 : index
    %c0_416 = arith.constant 0 : index
    %559 = vector.load %arg5[%c0_415, %c0_416] : memref<8x16xf32, #tpu.memory_space<vmem>>, vector<8x16xf32>
    %cst_417 = arith.constant dense<0.000000e+00> : vector<8x1xf32>
    %560 = tpu.matmul %559, %551, %cst_417 {dimension_numbers = #tpu.dot_dimension_numbers<[1], [0], [0], [1], [0, 0, 1, 1], [], []>} : vector<8x16xf32>, vector<16x1xf32>, vector<8x1xf32> -> vector<8x1xf32>
    %cst_418 = arith.constant dense<0.000000e+00> : vector<16x1xf32>
    %561 = tpu.matmul %558, %560, %cst_418 {dimension_numbers = #tpu.dot_dimension_numbers<[1], [0], [0], [1], [0, 0, 1, 1], [], []>} : vector<16x8xf32>, vector<8x1xf32>, vector<16x1xf32> -> vector<16x1xf32>
    %cst_419 = arith.constant 5.120000e+02 : f32
    %562 = vector.broadcast %cst_419 : f32 to vector<16x1xf32>
    %563 = arith.divf %561, %562 : vector<16x1xf32>
    %564 = arith.mulf %557, %557 : vector<16x1xf32>
    %565 = arith.subf %563, %564 : vector<16x1xf32>
    %cst_420 = arith.constant 9.99999974E-6 : f32
    %566 = vector.broadcast %cst_420 : f32 to vector<16x1xf32>
    %567 = arith.addf %565, %566 : vector<16x1xf32>
    %568 = math.rsqrt %567 : vector<16x1xf32>
    %569 = vector.broadcast %557 : vector<16x1xf32> to vector<16x256xf32>
    %570 = arith.subf %546, %569 : vector<16x256xf32>
    %571 = vector.broadcast %568 : vector<16x1xf32> to vector<16x256xf32>
    %572 = arith.mulf %570, %571 : vector<16x256xf32>
    %c0_421 = arith.constant 0 : index
    %c0_422 = arith.constant 0 : index
    %573 = vector.load %arg20[%c0_421, %c0_422] : memref<16x1xf32, #tpu.memory_space<vmem>>, vector<16x1xf32>
    %574 = vector.broadcast %573 : vector<16x1xf32> to vector<16x256xf32>
    %575 = arith.mulf %572, %574 : vector<16x256xf32>
    %c0_423 = arith.constant 0 : index
    %c0_424 = arith.constant 0 : index
    %576 = vector.load %arg21[%c0_423, %c0_424] : memref<16x1xf32, #tpu.memory_space<vmem>>, vector<16x1xf32>
    %577 = vector.broadcast %576 : vector<16x1xf32> to vector<16x256xf32>
    %578 = arith.addf %575, %577 : vector<16x256xf32>
    %579 = arith.negf %578 : vector<16x256xf32>
    %580 = math.exp %579 : vector<16x256xf32>
    %cst_425 = arith.constant 1.000000e+00 : f32
    %581 = vector.broadcast %cst_425 : f32 to vector<16x256xf32>
    %582 = arith.addf %581, %580 : vector<16x256xf32>
    %583 = arith.divf %581, %582 : vector<16x256xf32>
    %584 = arith.mulf %578, %583 : vector<16x256xf32>
    %585 = arith.addf %584, %453 : vector<16x256xf32>
    %586 = arith.addf %585, %585 : vector<16x256xf32>
    %c0_426 = arith.constant 0 : index
    %c0_427 = arith.constant 0 : index
    %587 = vector.load %arg22[%c0_426, %c0_427] : memref<16x16xbf16, #tpu.memory_space<vmem>>, vector<16x16xbf16>
    %588 = arith.truncf %586 : vector<16x256xf32> to vector<16x256xbf16>
    %cst_428 = arith.constant dense<0.000000e+00> : vector<16x256xf32>
    %589 = tpu.matmul %587, %588, %cst_428 {dimension_numbers = #tpu.dot_dimension_numbers<[1], [0], [0], [1], [0, 0, 1, 1], [], []>} : vector<16x16xbf16>, vector<16x256xbf16>, vector<16x256xf32> -> vector<16x256xf32>
    %c0_429 = arith.constant 0 : index
    %c0_430 = arith.constant 0 : index
    %590 = vector.load %arg23[%c0_429, %c0_430] : memref<16x1xf32, #tpu.memory_space<vmem>>, vector<16x1xf32>
    %591 = vector.broadcast %590 : vector<16x1xf32> to vector<16x256xf32>
    %592 = arith.addf %589, %591 : vector<16x256xf32>
    %cst_431 = arith.constant dense<0.000000e+00> : vector<16xf32>
    %593 = vector.multi_reduction <add>, %592, %cst_431 [1] : vector<16x256xf32> to vector<16xf32>
    %594 = vector.shape_cast %593 : vector<16xf32> to vector<16x1xf32>
    %595 = arith.mulf %592, %592 : vector<16x256xf32>
    %cst_432 = arith.constant dense<0.000000e+00> : vector<16xf32>
    %596 = vector.multi_reduction <add>, %595, %cst_432 [1] : vector<16x256xf32> to vector<16xf32>
    %597 = vector.shape_cast %596 : vector<16xf32> to vector<16x1xf32>
    %c0_433 = arith.constant 0 : index
    %c0_434 = arith.constant 0 : index
    %598 = vector.load %arg6[%c0_433, %c0_434] : memref<16x8xf32, #tpu.memory_space<vmem>>, vector<16x8xf32>
    %c0_435 = arith.constant 0 : index
    %c0_436 = arith.constant 0 : index
    %599 = vector.load %arg5[%c0_435, %c0_436] : memref<8x16xf32, #tpu.memory_space<vmem>>, vector<8x16xf32>
    %cst_437 = arith.constant dense<0.000000e+00> : vector<8x1xf32>
    %600 = tpu.matmul %599, %594, %cst_437 {dimension_numbers = #tpu.dot_dimension_numbers<[1], [0], [0], [1], [0, 0, 1, 1], [], []>} : vector<8x16xf32>, vector<16x1xf32>, vector<8x1xf32> -> vector<8x1xf32>
    %cst_438 = arith.constant dense<0.000000e+00> : vector<16x1xf32>
    %601 = tpu.matmul %598, %600, %cst_438 {dimension_numbers = #tpu.dot_dimension_numbers<[1], [0], [0], [1], [0, 0, 1, 1], [], []>} : vector<16x8xf32>, vector<8x1xf32>, vector<16x1xf32> -> vector<16x1xf32>
    %cst_439 = arith.constant 5.120000e+02 : f32
    %602 = vector.broadcast %cst_439 : f32 to vector<16x1xf32>
    %603 = arith.divf %601, %602 : vector<16x1xf32>
    %c0_440 = arith.constant 0 : index
    %c0_441 = arith.constant 0 : index
    %604 = vector.load %arg6[%c0_440, %c0_441] : memref<16x8xf32, #tpu.memory_space<vmem>>, vector<16x8xf32>
    %c0_442 = arith.constant 0 : index
    %c0_443 = arith.constant 0 : index
    %605 = vector.load %arg5[%c0_442, %c0_443] : memref<8x16xf32, #tpu.memory_space<vmem>>, vector<8x16xf32>
    %cst_444 = arith.constant dense<0.000000e+00> : vector<8x1xf32>
    %606 = tpu.matmul %605, %597, %cst_444 {dimension_numbers = #tpu.dot_dimension_numbers<[1], [0], [0], [1], [0, 0, 1, 1], [], []>} : vector<8x16xf32>, vector<16x1xf32>, vector<8x1xf32> -> vector<8x1xf32>
    %cst_445 = arith.constant dense<0.000000e+00> : vector<16x1xf32>
    %607 = tpu.matmul %604, %606, %cst_445 {dimension_numbers = #tpu.dot_dimension_numbers<[1], [0], [0], [1], [0, 0, 1, 1], [], []>} : vector<16x8xf32>, vector<8x1xf32>, vector<16x1xf32> -> vector<16x1xf32>
    %cst_446 = arith.constant 5.120000e+02 : f32
    %608 = vector.broadcast %cst_446 : f32 to vector<16x1xf32>
    %609 = arith.divf %607, %608 : vector<16x1xf32>
    %610 = arith.mulf %603, %603 : vector<16x1xf32>
    %611 = arith.subf %609, %610 : vector<16x1xf32>
    %cst_447 = arith.constant 9.99999974E-6 : f32
    %612 = vector.broadcast %cst_447 : f32 to vector<16x1xf32>
    %613 = arith.addf %611, %612 : vector<16x1xf32>
    %614 = math.rsqrt %613 : vector<16x1xf32>
    %615 = vector.broadcast %603 : vector<16x1xf32> to vector<16x256xf32>
    %616 = arith.subf %592, %615 : vector<16x256xf32>
    %617 = vector.broadcast %614 : vector<16x1xf32> to vector<16x256xf32>
    %618 = arith.mulf %616, %617 : vector<16x256xf32>
    %c0_448 = arith.constant 0 : index
    %c0_449 = arith.constant 0 : index
    %619 = vector.load %arg24[%c0_448, %c0_449] : memref<16x1xf32, #tpu.memory_space<vmem>>, vector<16x1xf32>
    %620 = vector.broadcast %619 : vector<16x1xf32> to vector<16x256xf32>
    %621 = arith.mulf %618, %620 : vector<16x256xf32>
    %c0_450 = arith.constant 0 : index
    %c0_451 = arith.constant 0 : index
    %622 = vector.load %arg25[%c0_450, %c0_451] : memref<16x1xf32, #tpu.memory_space<vmem>>, vector<16x1xf32>
    %623 = vector.broadcast %622 : vector<16x1xf32> to vector<16x256xf32>
    %624 = arith.addf %621, %623 : vector<16x256xf32>
    %625 = arith.negf %624 : vector<16x256xf32>
    %626 = math.exp %625 : vector<16x256xf32>
    %cst_452 = arith.constant 1.000000e+00 : f32
    %627 = vector.broadcast %cst_452 : f32 to vector<16x256xf32>
    %628 = arith.addf %627, %626 : vector<16x256xf32>
    %629 = arith.divf %627, %628 : vector<16x256xf32>
    %630 = arith.mulf %624, %629 : vector<16x256xf32>
    %c0_453 = arith.constant 0 : index
    %c0_454 = arith.constant 0 : index
    %c0_455 = arith.constant 0 : index
    %631 = vector.load %arg26[%c0_453, %c0_454, %c0_455] : memref<1x16x256xf32, #tpu.memory_space<vmem>>, vector<1x16x256xf32>
    %632 = vector.shape_cast %631 : vector<1x16x256xf32> to vector<16x256xf32>
    %633 = vector.shape_cast %630 : vector<16x256xf32> to vector<1x16x256xf32>
    tpu.vector_store %arg26[%c0_453, %c0_454, %c0_455], %633 {strides = array<i32>} : memref<1x16x256xf32, #tpu.memory_space<vmem>>, vector<1x16x256xf32>,
    return
  }
  func.func @transform_0(%arg0: i32) -> (i32, i32, i32) {
    %c0_i32 = arith.constant 0 : i32
    %c0_i32_0 = arith.constant 0 : i32
    %c0_i32_1 = arith.constant 0 : i32
    return %arg0, %c0_i32, %c0_i32_0 : i32, i32, i32
  }
  func.func @transform_1(%arg0: i32) -> (i32, i32, i32) {
    %c0_i32 = arith.constant 0 : i32
    %c0_i32_0 = arith.constant 0 : i32
    %c0_i32_1 = arith.constant 0 : i32
    return %arg0, %c0_i32, %c0_i32_0 : i32, i32, i32
  }
  func.func @transform_2(%arg0: i32) -> (i32, i32) {
    %c0_i32 = arith.constant 0 : i32
    %c0_i32_0 = arith.constant 0 : i32
    %c0_i32_1 = arith.constant 0 : i32
    return %c0_i32, %c0_i32_0 : i32, i32
  }
  func.func @transform_3(%arg0: i32) -> (i32, i32, i32) {
    %c0_i32 = arith.constant 0 : i32
    %c0_i32_0 = arith.constant 0 : i32
    %c0_i32_1 = arith.constant 0 : i32
    %c0_i32_2 = arith.constant 0 : i32
    return %c0_i32, %c0_i32_0, %c0_i32_1 : i32, i32, i32
  }
  func.func @transform_4(%arg0: i32) -> (i32, i32) {
    %c0_i32 = arith.constant 0 : i32
    %c0_i32_0 = arith.constant 0 : i32
    %c0_i32_1 = arith.constant 0 : i32
    return %c0_i32, %c0_i32_0 : i32, i32
  }
  func.func @transform_5(%arg0: i32) -> (i32, i32) {
    %c0_i32 = arith.constant 0 : i32
    %c0_i32_0 = arith.constant 0 : i32
    %c0_i32_1 = arith.constant 0 : i32
    return %c0_i32, %c0_i32_0 : i32, i32
  }
  func.func @transform_6(%arg0: i32) -> (i32, i32, i32) {
    %c0_i32 = arith.constant 0 : i32
    %c0_i32_0 = arith.constant 0 : i32
    %c0_i32_1 = arith.constant 0 : i32
    %c0_i32_2 = arith.constant 0 : i32
    return %c0_i32, %c0_i32_0, %c0_i32_1 : i32, i32, i32
  }
  func.func @transform_7(%arg0: i32) -> (i32, i32, i32) {
    %c0_i32 = arith.constant 0 : i32
    %c0_i32_0 = arith.constant 0 : i32
    %c0_i32_1 = arith.constant 0 : i32
    %c0_i32_2 = arith.constant 0 : i32
    return %c0_i32, %c0_i32_0, %c0_i32_1 : i32, i32, i32
  }
  func.func @transform_8(%arg0: i32) -> (i32, i32) {
    %c0_i32 = arith.constant 0 : i32
    %c0_i32_0 = arith.constant 0 : i32
    %c0_i32_1 = arith.constant 0 : i32
    return %c0_i32, %c0_i32_0 : i32, i32
  }
  func.func @transform_9(%arg0: i32) -> (i32, i32) {
    %c0_i32 = arith.constant 0 : i32
    %c0_i32_0 = arith.constant 0 : i32
    %c0_i32_1 = arith.constant 0 : i32
    return %c0_i32, %c0_i32_0 : i32, i32
  }
  func.func @transform_10(%arg0: i32) -> (i32, i32, i32) {
    %c0_i32 = arith.constant 0 : i32
    %c0_i32_0 = arith.constant 0 : i32
    %c0_i32_1 = arith.constant 0 : i32
    %c0_i32_2 = arith.constant 0 : i32
    return %c0_i32, %c0_i32_0, %c0_i32_1 : i32, i32, i32
  }
  func.func @transform_11(%arg0: i32) -> (i32, i32) {
    %c0_i32 = arith.constant 0 : i32
    %c0_i32_0 = arith.constant 0 : i32
    %c0_i32_1 = arith.constant 0 : i32
    return %c0_i32, %c0_i32_0 : i32, i32
  }
  func.func @transform_12(%arg0: i32) -> (i32, i32) {
    %c0_i32 = arith.constant 0 : i32
    %c0_i32_0 = arith.constant 0 : i32
    %c0_i32_1 = arith.constant 0 : i32
    return %c0_i32, %c0_i32_0 : i32, i32
  }
  func.func @transform_13(%arg0: i32) -> (i32, i32, i32) {
    %c0_i32 = arith.constant 0 : i32
    %c0_i32_0 = arith.constant 0 : i32
    %c0_i32_1 = arith.constant 0 : i32
    %c0_i32_2 = arith.constant 0 : i32
    return %c0_i32, %c0_i32_0, %c0_i32_1 : i32, i32, i32
  }
  func.func @transform_14(%arg0: i32) -> (i32, i32) {
    %c0_i32 = arith.constant 0 : i32
    %c0_i32_0 = arith.constant 0 : i32
    %c0_i32_1 = arith.constant 0 : i32
    return %c0_i32, %c0_i32_0 : i32, i32
  }
  func.func @transform_15(%arg0: i32) -> (i32, i32) {
    %c0_i32 = arith.constant 0 : i32
    %c0_i32_0 = arith.constant 0 : i32
    %c0_i32_1 = arith.constant 0 : i32
    return %c0_i32, %c0_i32_0 : i32, i32
  }
  func.func @transform_16(%arg0: i32) -> (i32, i32) {
    %c0_i32 = arith.constant 0 : i32
    %c0_i32_0 = arith.constant 0 : i32
    %c0_i32_1 = arith.constant 0 : i32
    return %c0_i32, %c0_i32_0 : i32, i32
  }
  func.func @transform_17(%arg0: i32) -> (i32, i32, i32) {
    %c0_i32 = arith.constant 0 : i32
    %c0_i32_0 = arith.constant 0 : i32
    %c0_i32_1 = arith.constant 0 : i32
    %c0_i32_2 = arith.constant 0 : i32
    return %c0_i32, %c0_i32_0, %c0_i32_1 : i32, i32, i32
  }
  func.func @transform_18(%arg0: i32) -> (i32, i32) {
    %c0_i32 = arith.constant 0 : i32
    %c0_i32_0 = arith.constant 0 : i32
    %c0_i32_1 = arith.constant 0 : i32
    return %c0_i32, %c0_i32_0 : i32, i32
  }
  func.func @transform_19(%arg0: i32) -> (i32, i32) {
    %c0_i32 = arith.constant 0 : i32
    %c0_i32_0 = arith.constant 0 : i32
    %c0_i32_1 = arith.constant 0 : i32
    return %c0_i32, %c0_i32_0 : i32, i32
  }
  func.func @transform_20(%arg0: i32) -> (i32, i32) {
    %c0_i32 = arith.constant 0 : i32
    %c0_i32_0 = arith.constant 0 : i32
    %c0_i32_1 = arith.constant 0 : i32
    return %c0_i32, %c0_i32_0 : i32, i32
  }
  func.func @transform_21(%arg0: i32) -> (i32, i32) {
    %c0_i32 = arith.constant 0 : i32
    %c0_i32_0 = arith.constant 0 : i32
    %c0_i32_1 = arith.constant 0 : i32
    return %c0_i32, %c0_i32_0 : i32, i32
  }
  func.func @transform_22(%arg0: i32) -> (i32, i32) {
    %c0_i32 = arith.constant 0 : i32
    %c0_i32_0 = arith.constant 0 : i32
    %c0_i32_1 = arith.constant 0 : i32
    return %c0_i32, %c0_i32_0 : i32, i32
  }
  func.func @transform_23(%arg0: i32) -> (i32, i32) {
    %c0_i32 = arith.constant 0 : i32
    %c0_i32_0 = arith.constant 0 : i32
    %c0_i32_1 = arith.constant 0 : i32
    return %c0_i32, %c0_i32_0 : i32, i32
  }
  func.func @transform_24(%arg0: i32) -> (i32, i32) {
    %c0_i32 = arith.constant 0 : i32
    %c0_i32_0 = arith.constant 0 : i32
    %c0_i32_1 = arith.constant 0 : i32
    return %c0_i32, %c0_i32_0 : i32, i32
  }
  func.func @transform_25(%arg0: i32) -> (i32, i32, i32) {
    %c0_i32 = arith.constant 0 : i32
    %c0_i32_0 = arith.constant 0 : i32
    %c0_i32_1 = arith.constant 0 : i32
    return %arg0, %c0_i32, %c0_i32_0 : i32, i32, i32
  }
}

</mosaic_0001>

<llo_original>
// kernel: up_forward.1
$region0: #{up_forward.1}
  #allocation0 [shape = 'u32[]', space=smem, size = 0x4, offset = 0x4, fixed_abs, tag = 'smem constant byte address 0x4 - core index']
  #allocation1 [shape = 'u32[144,128]{1,0:T(1,128)}', space=vmem, size = 0x12000, scoped, tag = 'internal scratch']
  %s0 = inlined_call_operand.vmem [shape: f32[2,8,64], index: 0, kind: input, shape index: {}]
  %s1 = inlined_call_operand.vmem [shape: f32[2,8,256], index: 1, kind: input, shape index: {}]
  %s2 = inlined_call_operand.vmem [shape: bf16[64,256], index: 2, kind: input, shape index: {}]
  %s3 = inlined_call_operand.vmem [shape: f32[9,1,256], index: 3, kind: input, shape index: {}]
  %s4 = inlined_call_operand.vmem [shape: f32[8,16], index: 4, kind: input, shape index: {}]
  %s5 = inlined_call_operand.vmem [shape: f32[16,8], index: 5, kind: input, shape index: {}]
  %s6 = inlined_call_operand.vmem [shape: bf16[9,16,8], index: 6, kind: input, shape index: {}]
  %s7 = inlined_call_operand.vmem [shape: bf16[9,16,8], index: 7, kind: input, shape index: {}]
  %s8 = inlined_call_operand.vmem [shape: f32[16,1], index: 8, kind: input, shape index: {}]
  %s9 = inlined_call_operand.vmem [shape: f32[16,1], index: 9, kind: input, shape index: {}]
  %s10 = inlined_call_operand.vmem [shape: bf16[9,16,16], index: 10, kind: input, shape index: {}]
  %s11 = inlined_call_operand.vmem [shape: bf16[16,16], index: 11, kind: input, shape index: {}]
  %s12 = inlined_call_operand.vmem [shape: f32[16,1], index: 12, kind: input, shape index: {}]
  %s13 = inlined_call_operand.vmem [shape: bf16[9,16,16], index: 13, kind: input, shape index: {}]
  %s14 = inlined_call_operand.vmem [shape: f32[16,1], index: 14, kind: input, shape index: {}]
  %s15 = inlined_call_operand.vmem [shape: f32[16,1], index: 15, kind: input, shape index: {}]
  %s16 = inlined_call_operand.vmem [shape: f32[16,1], index: 16, kind: input, shape index: {}]
  %s17 = inlined_call_operand.vmem [shape: bf16[9,16,16], index: 17, kind: input, shape index: {}]
  %s18 = inlined_call_operand.vmem [shape: f32[16,1], index: 18, kind: input, shape index: {}]
  %s19 = inlined_call_operand.vmem [shape: f32[16,1], index: 19, kind: input, shape index: {}]
  %s20 = inlined_call_operand.vmem [shape: f32[16,1], index: 20, kind: input, shape index: {}]
  %s21 = inlined_call_operand.vmem [shape: bf16[16,16], index: 21, kind: input, shape index: {}]
  %s22 = inlined_call_operand.vmem [shape: f32[16,1], index: 22, kind: input, shape index: {}]
  %s23 = inlined_call_operand.vmem [shape: f32[16,1], index: 23, kind: input, shape index: {}]
  %s24 = inlined_call_operand.vmem [shape: f32[16,1], index: 24, kind: input, shape index: {}]
  %s25 = inlined_call_operand.vmem [shape: f32[2,16,256], index: 25, kind: output, shape index: {}]
  %s26 = sld [smem:[#allocation0]]
  $region133: #{up_forward.1} parent=0
    _
  %s28 = ssub.s32 1, %s26
  %s29 = scalar_select 0, %s28, %s26
  loop: start=0, step=1, limit=4
  $region2: #{up_forward.1} parent=0 // loop_pre_header
    _
  $region3: #{up_forward.1} parent=0 // loop_header
    %s31 = sphi 0, %s35
    %p32 = scmp.ge.s32.totalorder %s31, 4
    %s41 = sphi 0, %s43
    %s44 = sphi 0, %s41
    %s45 = sphi 0, %s44
    %s61 = sphi 0, %s45
    %s67 = sphi 0, %s69
    %s70 = sphi 0, %s67
    %s71 = sphi 0, %s70
    %s87 = sphi 0, %s71
    %s91 = sphi 0, %s91
    %s93 = sphi 0, %s91
    %s94 = sphi 0, %s93
    %s108 = sphi 0, %s94
    %s112 = sphi 0, %s112
    %s114 = sphi 0, %s112
    %s115 = sphi 0, %s114
    %s129 = sphi 0, %s115
    %s133 = sphi 0, %s133
    %s135 = sphi 0, %s133
    %s136 = sphi 0, %s135
    %s150 = sphi 0, %s136
    %s154 = sphi 0, %s154
    %s156 = sphi 0, %s154
    %s157 = sphi 0, %s156
    %s171 = sphi 0, %s157
    %s175 = sphi 0, %s175
    %s177 = sphi 0, %s175
    %s178 = sphi 0, %s177
    %s192 = sphi 0, %s178
    %s196 = sphi 0, %s196
    %s198 = sphi 0, %s196
    %s199 = sphi 0, %s198
    %s213 = sphi 0, %s199
    %s217 = sphi 0, %s217
    %s219 = sphi 0, %s217
    %s220 = sphi 0, %s219
    %s234 = sphi 0, %s220
    %s238 = sphi 0, %s238
    %s240 = sphi 0, %s238
    %s241 = sphi 0, %s240
    %s255 = sphi 0, %s241
    %s259 = sphi 0, %s259
    %s261 = sphi 0, %s259
    %s262 = sphi 0, %s261
    %s276 = sphi 0, %s262
    %s280 = sphi 0, %s280
    %s282 = sphi 0, %s280
    %s283 = sphi 0, %s282
    %s297 = sphi 0, %s283
    %s301 = sphi 0, %s301
    %s303 = sphi 0, %s301
    %s304 = sphi 0, %s303
    %s318 = sphi 0, %s304
    %s322 = sphi 0, %s322
    %s324 = sphi 0, %s322
    %s325 = sphi 0, %s324
    %s339 = sphi 0, %s325
    %s343 = sphi 0, %s343
    %s345 = sphi 0, %s343
    %s346 = sphi 0, %s345
    %s360 = sphi 0, %s346
    %s364 = sphi 0, %s364
    %s366 = sphi 0, %s364
    %s367 = sphi 0, %s366
    %s381 = sphi 0, %s367
    %s385 = sphi 0, %s385
    %s387 = sphi 0, %s385
    %s388 = sphi 0, %s387
    %s402 = sphi 0, %s388
    %s406 = sphi 0, %s406
    %s408 = sphi 0, %s406
    %s409 = sphi 0, %s408
    %s423 = sphi 0, %s409
    %s427 = sphi 0, %s427
    %s429 = sphi 0, %s427
    %s430 = sphi 0, %s429
    %s444 = sphi 0, %s430
    %s448 = sphi 0, %s448
    %s450 = sphi 0, %s448
    %s451 = sphi 0, %s450
    %s465 = sphi 0, %s451
    %s469 = sphi 0, %s469
    %s471 = sphi 0, %s469
    %s472 = sphi 0, %s471
    %s486 = sphi 0, %s472
    %s490 = sphi 0, %s490
    %s492 = sphi 0, %s490
    %s493 = sphi 0, %s492
    %s507 = sphi 0, %s493
    %s511 = sphi 0, %s511
    %s513 = sphi 0, %s511
    %s514 = sphi 0, %s513
    %s528 = sphi 0, %s514
    %s532 = sphi 0, %s532
    %s534 = sphi 0, %s532
    %s535 = sphi 0, %s534
    %s549 = sphi 0, %s535
    %s553 = sphi 0, %s553
    %s555 = sphi 0, %s553
    %s556 = sphi 0, %s555
    %s570 = sphi 0, %s556
    %s576 = sphi 0, %s578
    %s579 = sphi 0, %s576
    %s580 = sphi 0, %s579
    %s596 = sphi 0, %s580
  $region4: #{up_forward.1} parent=0 // loop_header_branch
    %34 = sbr.rel (%p32) target = $region8
  $region5: #{up_forward.1} parent=0 // loop_body
    %s36 = ssub.s32 %s31, 1
    %s37 = ssub.s32 %s31, 2
    %s38 = sadd.s32 %s31, 1
    %s39 = ssub.s32 %s31, %s38
    %p40 = scmp.eq.s32.totalorder %s39, 0
    %s42 = sadd.s32 %s41, 1
    %s43 = scalar_select %p40, %s41, %s42
    %p46 = pneg %p40
    %p47 = scmp.eq.s32.totalorder %s31, 1
    %p48 = por %p46, %p47
    %p49 = scmp.ne.s32.totalorder %s41, %s44
    %p50 = scmp.eq.s32.totalorder %s31, 0
    %p51 = por %p49, %p50
    %p52 = scmp.ne.s32.totalorder %s41, %s44
    %p53 = scmp.eq.s32.totalorder %s36, 1
    %p54 = por %p52, %p53
    %p55 = scmp.ne.s32.totalorder %s44, %s45
    %p56 = scmp.eq.s32.totalorder %s36, 0
    %p57 = por %p55, %p56
    %p58 = scmp.ne.s32.totalorder %s44, %s45
    %p59 = scmp.eq.s32.totalorder %s37, 1
    %p60 = por %p58, %p59
    %p62 = scmp.ne.s32.totalorder %s45, %s61
    %p63 = scmp.eq.s32.totalorder %s37, 0
    %p64 = por %p62, %p63
    %s65 = ssub.s32 %s31, %s38
    %p66 = scmp.eq.s32.totalorder %s65, 0
    %s68 = sadd.s32 %s67, 1
    %s69 = scalar_select %p66, %s67, %s68
    %p72 = pneg %p66
    %p73 = scmp.eq.s32.totalorder %s31, 1
    %p74 = por %p72, %p73
    %p75 = scmp.ne.s32.totalorder %s67, %s70
    %p76 = scmp.eq.s32.totalorder %s31, 0
    %p77 = por %p75, %p76
    %p78 = scmp.ne.s32.totalorder %s67, %s70
    %p79 = scmp.eq.s32.totalorder %s36, 1
    %p80 = por %p78, %p79
    %p81 = scmp.ne.s32.totalorder %s70, %s71
    %p82 = scmp.eq.s32.totalorder %s36, 0
    %p83 = por %p81, %p82
    %p84 = scmp.ne.s32.totalorder %s70, %s71
    %p85 = scmp.eq.s32.totalorder %s37, 1
    %p86 = por %p84, %p85
    %p88 = scmp.ne.s32.totalorder %s71, %s87
    %p89 = scmp.eq.s32.totalorder %s37, 0
    %p90 = por %p88, %p89
    %s92 = sadd.s32 %s91, 1
    %p95 = scmp.eq.s32.totalorder %s31, 1
    %p96 = scmp.ne.s32.totalorder %s91, %s93
    %p97 = scmp.eq.s32.totalorder %s31, 0
    %p98 = por %p96, %p97
    %p99 = scmp.ne.s32.totalorder %s91, %s93
    %p100 = scmp.eq.s32.totalorder %s36, 1
    %p101 = por %p99, %p100
    %p102 = scmp.ne.s32.totalorder %s93, %s94
    %p103 = scmp.eq.s32.totalorder %s36, 0
    %p104 = por %p102, %p103
    %p105 = scmp.ne.s32.totalorder %s93, %s94
    %p106 = scmp.eq.s32.totalorder %s37, 1
    %p107 = por %p105, %p106
    %p109 = scmp.ne.s32.totalorder %s94, %s108
    %p110 = scmp.eq.s32.totalorder %s37, 0
    %p111 = por %p109, %p110
    %s113 = sadd.s32 %s112, 1
    %p116 = scmp.eq.s32.totalorder %s31, 1
    %p117 = scmp.ne.s32.totalorder %s112, %s114
    %p118 = scmp.eq.s32.totalorder %s31, 0
    %p119 = por %p117, %p118
    %p120 = scmp.ne.s32.totalorder %s112, %s114
    %p121 = scmp.eq.s32.totalorder %s36, 1
    %p122 = por %p120, %p121
    %p123 = scmp.ne.s32.totalorder %s114, %s115
    %p124 = scmp.eq.s32.totalorder %s36, 0
    %p125 = por %p123, %p124
    %p126 = scmp.ne.s32.totalorder %s114, %s115
    %p127 = scmp.eq.s32.totalorder %s37, 1
    %p128 = por %p126, %p127
    %p130 = scmp.ne.s32.totalorder %s115, %s129
    %p131 = scmp.eq.s32.totalorder %s37, 0
    %p132 = por %p130, %p131
    %s134 = sadd.s32 %s133, 1
    %p137 = scmp.eq.s32.totalorder %s31, 1
    %p138 = scmp.ne.s32.totalorder %s133, %s135
    %p139 = scmp.eq.s32.totalorder %s31, 0
    %p140 = por %p138, %p139
    %p141 = scmp.ne.s32.totalorder %s133, %s135
    %p142 = scmp.eq.s32.totalorder %s36, 1
    %p143 = por %p141, %p142
    %p144 = scmp.ne.s32.totalorder %s135, %s136
    %p145 = scmp.eq.s32.totalorder %s36, 0
    %p146 = por %p144, %p145
    %p147 = scmp.ne.s32.totalorder %s135, %s136
    %p148 = scmp.eq.s32.totalorder %s37, 1
    %p149 = por %p147, %p148
    %p151 = scmp.ne.s32.totalorder %s136, %s150
    %p152 = scmp.eq.s32.totalorder %s37, 0
    %p153 = por %p151, %p152
    %s155 = sadd.s32 %s154, 1
    %p158 = scmp.eq.s32.totalorder %s31, 1
    %p159 = scmp.ne.s32.totalorder %s154, %s156
    %p160 = scmp.eq.s32.totalorder %s31, 0
    %p161 = por %p159, %p160
    %p162 = scmp.ne.s32.totalorder %s154, %s156
    %p163 = scmp.eq.s32.totalorder %s36, 1
    %p164 = por %p162, %p163
    %p165 = scmp.ne.s32.totalorder %s156, %s157
    %p166 = scmp.eq.s32.totalorder %s36, 0
    %p167 = por %p165, %p166
    %p168 = scmp.ne.s32.totalorder %s156, %s157
    %p169 = scmp.eq.s32.totalorder %s37, 1
    %p170 = por %p168, %p169
    %p172 = scmp.ne.s32.totalorder %s157, %s171
    %p173 = scmp.eq.s32.totalorder %s37, 0
    %p174 = por %p172, %p173
    %s176 = sadd.s32 %s175, 1
    %p179 = scmp.eq.s32.totalorder %s31, 1
    %p180 = scmp.ne.s32.totalorder %s175, %s177
    %p181 = scmp.eq.s32.totalorder %s31, 0
    %p182 = por %p180, %p181
    %p183 = scmp.ne.s32.totalorder %s175, %s177
    %p184 = scmp.eq.s32.totalorder %s36, 1
    %p185 = por %p183, %p184
    %p186 = scmp.ne.s32.totalorder %s177, %s178
    %p187 = scmp.eq.s32.totalorder %s36, 0
    %p188 = por %p186, %p187
    %p189 = scmp.ne.s32.totalorder %s177, %s178
    %p190 = scmp.eq.s32.totalorder %s37, 1
    %p191 = por %p189, %p190
    %p193 = scmp.ne.s32.totalorder %s178, %s192
    %p194 = scmp.eq.s32.totalorder %s37, 0
    %p195 = por %p193, %p194
    %s197 = sadd.s32 %s196, 1
    %p200 = scmp.eq.s32.totalorder %s31, 1
    %p201 = scmp.ne.s32.totalorder %s196, %s198
    %p202 = scmp.eq.s32.totalorder %s31, 0
    %p203 = por %p201, %p202
    %p204 = scmp.ne.s32.totalorder %s196, %s198
    %p205 = scmp.eq.s32.totalorder %s36, 1
    %p206 = por %p204, %p205
    %p207 = scmp.ne.s32.totalorder %s198, %s199
    %p208 = scmp.eq.s32.totalorder %s36, 0
    %p209 = por %p207, %p208
    %p210 = scmp.ne.s32.totalorder %s198, %s199
    %p211 = scmp.eq.s32.totalorder %s37, 1
    %p212 = por %p210, %p211
    %p214 = scmp.ne.s32.totalorder %s199, %s213
    %p215 = scmp.eq.s32.totalorder %s37, 0
    %p216 = por %p214, %p215
    %s218 = sadd.s32 %s217, 1
    %p221 = scmp.eq.s32.totalorder %s31, 1
    %p222 = scmp.ne.s32.totalorder %s217, %s219
    %p223 = scmp.eq.s32.totalorder %s31, 0
    %p224 = por %p222, %p223
    %p225 = scmp.ne.s32.totalorder %s217, %s219
    %p226 = scmp.eq.s32.totalorder %s36, 1
    %p227 = por %p225, %p226
    %p228 = scmp.ne.s32.totalorder %s219, %s220
    %p229 = scmp.eq.s32.totalorder %s36, 0
    %p230 = por %p228, %p229
    %p231 = scmp.ne.s32.totalorder %s219, %s220
    %p232 = scmp.eq.s32.totalorder %s37, 1
    %p233 = por %p231, %p232
    %p235 = scmp.ne.s32.totalorder %s220, %s234
    %p236 = scmp.eq.s32.totalorder %s37, 0
    %p237 = por %p235, %p236
    %s239 = sadd.s32 %s238, 1
    %p242 = scmp.eq.s32.totalorder %s31, 1
    %p243 = scmp.ne.s32.totalorder %s238, %s240
    %p244 = scmp.eq.s32.totalorder %s31, 0
    %p245 = por %p243, %p244
    %p246 = scmp.ne.s32.totalorder %s238, %s240
    %p247 = scmp.eq.s32.totalorder %s36, 1
    %p248 = por %p246, %p247
    %p249 = scmp.ne.s32.totalorder %s240, %s241
    %p250 = scmp.eq.s32.totalorder %s36, 0
    %p251 = por %p249, %p250
    %p252 = scmp.ne.s32.totalorder %s240, %s241
    %p253 = scmp.eq.s32.totalorder %s37, 1
    %p254 = por %p252, %p253
    %p256 = scmp.ne.s32.totalorder %s241, %s255
    %p257 = scmp.eq.s32.totalorder %s37, 0
    %p258 = por %p256, %p257
    %s260 = sadd.s32 %s259, 1
    %p263 = scmp.eq.s32.totalorder %s31, 1
    %p264 = scmp.ne.s32.totalorder %s259, %s261
    %p265 = scmp.eq.s32.totalorder %s31, 0
    %p266 = por %p264, %p265
    %p267 = scmp.ne.s32.totalorder %s259, %s261
    %p268 = scmp.eq.s32.totalorder %s36, 1
    %p269 = por %p267, %p268
    %p270 = scmp.ne.s32.totalorder %s261, %s262
    %p271 = scmp.eq.s32.totalorder %s36, 0
    %p272 = por %p270, %p271
    %p273 = scmp.ne.s32.totalorder %s261, %s262
    %p274 = scmp.eq.s32.totalorder %s37, 1
    %p275 = por %p273, %p274
    %p277 = scmp.ne.s32.totalorder %s262, %s276
    %p278 = scmp.eq.s32.totalorder %s37, 0
    %p279 = por %p277, %p278
    %s281 = sadd.s32 %s280, 1
    %p284 = scmp.eq.s32.totalorder %s31, 1
    %p285 = scmp.ne.s32.totalorder %s280, %s282
    %p286 = scmp.eq.s32.totalorder %s31, 0
    %p287 = por %p285, %p286
    %p288 = scmp.ne.s32.totalorder %s280, %s282
    %p289 = scmp.eq.s32.totalorder %s36, 1
    %p290 = por %p288, %p289
    %p291 = scmp.ne.s32.totalorder %s282, %s283
    %p292 = scmp.eq.s32.totalorder %s36, 0
    %p293 = por %p291, %p292
    %p294 = scmp.ne.s32.totalorder %s282, %s283
    %p295 = scmp.eq.s32.totalorder %s37, 1
    %p296 = por %p294, %p295
    %p298 = scmp.ne.s32.totalorder %s283, %s297
    %p299 = scmp.eq.s32.totalorder %s37, 0
    %p300 = por %p298, %p299
    %s302 = sadd.s32 %s301, 1
    %p305 = scmp.eq.s32.totalorder %s31, 1
    %p306 = scmp.ne.s32.totalorder %s301, %s303
    %p307 = scmp.eq.s32.totalorder %s31, 0
    %p308 = por %p306, %p307
    %p309 = scmp.ne.s32.totalorder %s301, %s303
    %p310 = scmp.eq.s32.totalorder %s36, 1
    %p311 = por %p309, %p310
    %p312 = scmp.ne.s32.totalorder %s303, %s304
    %p313 = scmp.eq.s32.totalorder %s36, 0
    %p314 = por %p312, %p313
    %p315 = scmp.ne.s32.totalorder %s303, %s304
    %p316 = scmp.eq.s32.totalorder %s37, 1
    %p317 = por %p315, %p316
    %p319 = scmp.ne.s32.totalorder %s304, %s318
    %p320 = scmp.eq.s32.totalorder %s37, 0
    %p321 = por %p319, %p320
    %s323 = sadd.s32 %s322, 1
    %p326 = scmp.eq.s32.totalorder %s31, 1
    %p327 = scmp.ne.s32.totalorder %s322, %s324
    %p328 = scmp.eq.s32.totalorder %s31, 0
    %p329 = por %p327, %p328
    %p330 = scmp.ne.s32.totalorder %s322, %s324
    %p331 = scmp.eq.s32.totalorder %s36, 1
    %p332 = por %p330, %p331
    %p333 = scmp.ne.s32.totalorder %s324, %s325
    %p334 = scmp.eq.s32.totalorder %s36, 0
    %p335 = por %p333, %p334
    %p336 = scmp.ne.s32.totalorder %s324, %s325
    %p337 = scmp.eq.s32.totalorder %s37, 1
    %p338 = por %p336, %p337
    %p340 = scmp.ne.s32.totalorder %s325, %s339
    %p341 = scmp.eq.s32.totalorder %s37, 0
    %p342 = por %p340, %p341
    %s344 = sadd.s32 %s343, 1
    %p347 = scmp.eq.s32.totalorder %s31, 1
    %p348 = scmp.ne.s32.totalorder %s343, %s345
    %p349 = scmp.eq.s32.totalorder %s31, 0
    %p350 = por %p348, %p349
    %p351 = scmp.ne.s32.totalorder %s343, %s345
    %p352 = scmp.eq.s32.totalorder %s36, 1
    %p353 = por %p351, %p352
    %p354 = scmp.ne.s32.totalorder %s345, %s346
    %p355 = scmp.eq.s32.totalorder %s36, 0
    %p356 = por %p354, %p355
    %p357 = scmp.ne.s32.totalorder %s345, %s346
    %p358 = scmp.eq.s32.totalorder %s37, 1
    %p359 = por %p357, %p358
    %p361 = scmp.ne.s32.totalorder %s346, %s360
    %p362 = scmp.eq.s32.totalorder %s37, 0
    %p363 = por %p361, %p362
    %s365 = sadd.s32 %s364, 1
    %p368 = scmp.eq.s32.totalorder %s31, 1
    %p369 = scmp.ne.s32.totalorder %s364, %s366
    %p370 = scmp.eq.s32.totalorder %s31, 0
    %p371 = por %p369, %p370
    %p372 = scmp.ne.s32.totalorder %s364, %s366
    %p373 = scmp.eq.s32.totalorder %s36, 1
    %p374 = por %p372, %p373
    %p375 = scmp.ne.s32.totalorder %s366, %s367
    %p376 = scmp.eq.s32.totalorder %s36, 0
    %p377 = por %p375, %p376
    %p378 = scmp.ne.s32.totalorder %s366, %s367
    %p379 = scmp.eq.s32.totalorder %s37, 1
    %p380 = por %p378, %p379
    %p382 = scmp.ne.s32.totalorder %s367, %s381
    %p383 = scmp.eq.s32.totalorder %s37, 0
    %p384 = por %p382, %p383
    %s386 = sadd.s32 %s385, 1
    %p389 = scmp.eq.s32.totalorder %s31, 1
    %p390 = scmp.ne.s32.totalorder %s385, %s387
    %p391 = scmp.eq.s32.totalorder %s31, 0
    %p392 = por %p390, %p391
    %p393 = scmp.ne.s32.totalorder %s385, %s387
    %p394 = scmp.eq.s32.totalorder %s36, 1
    %p395 = por %p393, %p394
    %p396 = scmp.ne.s32.totalorder %s387, %s388
    %p397 = scmp.eq.s32.totalorder %s36, 0
    %p398 = por %p396, %p397
    %p399 = scmp.ne.s32.totalorder %s387, %s388
    %p400 = scmp.eq.s32.totalorder %s37, 1
    %p401 = por %p399, %p400
    %p403 = scmp.ne.s32.totalorder %s388, %s402
    %p404 = scmp.eq.s32.totalorder %s37, 0
    %p405 = por %p403, %p404
    %s407 = sadd.s32 %s406, 1
    %p410 = scmp.eq.s32.totalorder %s31, 1
    %p411 = scmp.ne.s32.totalorder %s406, %s408
    %p412 = scmp.eq.s32.totalorder %s31, 0
    %p413 = por %p411, %p412
    %p414 = scmp.ne.s32.totalorder %s406, %s408
    %p415 = scmp.eq.s32.totalorder %s36, 1
    %p416 = por %p414, %p415
    %p417 = scmp.ne.s32.totalorder %s408, %s409
    %p418 = scmp.eq.s32.totalorder %s36, 0
    %p419 = por %p417, %p418
    %p420 = scmp.ne.s32.totalorder %s408, %s409
    %p421 = scmp.eq.s32.totalorder %s37, 1
    %p422 = por %p420, %p421
    %p424 = scmp.ne.s32.totalorder %s409, %s423
    %p425 = scmp.eq.s32.totalorder %s37, 0
    %p426 = por %p424, %p425
    %s428 = sadd.s32 %s427, 1
    %p431 = scmp.eq.s32.totalorder %s31, 1
    %p432 = scmp.ne.s32.totalorder %s427, %s429
    %p433 = scmp.eq.s32.totalorder %s31, 0
    %p434 = por %p432, %p433
    %p435 = scmp.ne.s32.totalorder %s427, %s429
    %p436 = scmp.eq.s32.totalorder %s36, 1
    %p437 = por %p435, %p436
    %p438 = scmp.ne.s32.totalorder %s429, %s430
    %p439 = scmp.eq.s32.totalorder %s36, 0
    %p440 = por %p438, %p439
    %p441 = scmp.ne.s32.totalorder %s429, %s430
    %p442 = scmp.eq.s32.totalorder %s37, 1
    %p443 = por %p441, %p442
    %p445 = scmp.ne.s32.totalorder %s430, %s444
    %p446 = scmp.eq.s32.totalorder %s37, 0
    %p447 = por %p445, %p446
    %s449 = sadd.s32 %s448, 1
    %p452 = scmp.eq.s32.totalorder %s31, 1
    %p453 = scmp.ne.s32.totalorder %s448, %s450
    %p454 = scmp.eq.s32.totalorder %s31, 0
    %p455 = por %p453, %p454
    %p456 = scmp.ne.s32.totalorder %s448, %s450
    %p457 = scmp.eq.s32.totalorder %s36, 1
    %p458 = por %p456, %p457
    %p459 = scmp.ne.s32.totalorder %s450, %s451
    %p460 = scmp.eq.s32.totalorder %s36, 0
    %p461 = por %p459, %p460
    %p462 = scmp.ne.s32.totalorder %s450, %s451
    %p463 = scmp.eq.s32.totalorder %s37, 1
    %p464 = por %p462, %p463
    %p466 = scmp.ne.s32.totalorder %s451, %s465
    %p467 = scmp.eq.s32.totalorder %s37, 0
    %p468 = por %p466, %p467
    %s470 = sadd.s32 %s469, 1
    %p473 = scmp.eq.s32.totalorder %s31, 1
    %p474 = scmp.ne.s32.totalorder %s469, %s471
    %p475 = scmp.eq.s32.totalorder %s31, 0
    %p476 = por %p474, %p475
    %p477 = scmp.ne.s32.totalorder %s469, %s471
    %p478 = scmp.eq.s32.totalorder %s36, 1
    %p479 = por %p477, %p478
    %p480 = scmp.ne.s32.totalorder %s471, %s472
    %p481 = scmp.eq.s32.totalorder %s36, 0
    %p482 = por %p480, %p481
    %p483 = scmp.ne.s32.totalorder %s471, %s472
    %p484 = scmp.eq.s32.totalorder %s37, 1
    %p485 = por %p483, %p484
    %p487 = scmp.ne.s32.totalorder %s472, %s486
    %p488 = scmp.eq.s32.totalorder %s37, 0
    %p489 = por %p487, %p488
    %s491 = sadd.s32 %s490, 1
    %p494 = scmp.eq.s32.totalorder %s31, 1
    %p495 = scmp.ne.s32.totalorder %s490, %s492
    %p496 = scmp.eq.s32.totalorder %s31, 0
    %p497 = por %p495, %p496
    %p498 = scmp.ne.s32.totalorder %s490, %s492
    %p499 = scmp.eq.s32.totalorder %s36, 1
    %p500 = por %p498, %p499
    %p501 = scmp.ne.s32.totalorder %s492, %s493
    %p502 = scmp.eq.s32.totalorder %s36, 0
    %p503 = por %p501, %p502
    %p504 = scmp.ne.s32.totalorder %s492, %s493
    %p505 = scmp.eq.s32.totalorder %s37, 1
    %p506 = por %p504, %p505
    %p508 = scmp.ne.s32.totalorder %s493, %s507
    %p509 = scmp.eq.s32.totalorder %s37, 0
    %p510 = por %p508, %p509
    %s512 = sadd.s32 %s511, 1
    %p515 = scmp.eq.s32.totalorder %s31, 1
    %p516 = scmp.ne.s32.totalorder %s511, %s513
    %p517 = scmp.eq.s32.totalorder %s31, 0
    %p518 = por %p516, %p517
    %p519 = scmp.ne.s32.totalorder %s511, %s513
    %p520 = scmp.eq.s32.totalorder %s36, 1
    %p521 = por %p519, %p520
    %p522 = scmp.ne.s32.totalorder %s513, %s514
    %p523 = scmp.eq.s32.totalorder %s36, 0
    %p524 = por %p522, %p523
    %p525 = scmp.ne.s32.totalorder %s513, %s514
    %p526 = scmp.eq.s32.totalorder %s37, 1
    %p527 = por %p525, %p526
    %p529 = scmp.ne.s32.totalorder %s514, %s528
    %p530 = scmp.eq.s32.totalorder %s37, 0
    %p531 = por %p529, %p530
    %s533 = sadd.s32 %s532, 1
    %p536 = scmp.eq.s32.totalorder %s31, 1
    %p537 = scmp.ne.s32.totalorder %s532, %s534
    %p538 = scmp.eq.s32.totalorder %s31, 0
    %p539 = por %p537, %p538
    %p540 = scmp.ne.s32.totalorder %s532, %s534
    %p541 = scmp.eq.s32.totalorder %s36, 1
    %p542 = por %p540, %p541
    %p543 = scmp.ne.s32.totalorder %s534, %s535
    %p544 = scmp.eq.s32.totalorder %s36, 0
    %p545 = por %p543, %p544
    %p546 = scmp.ne.s32.totalorder %s534, %s535
    %p547 = scmp.eq.s32.totalorder %s37, 1
    %p548 = por %p546, %p547
    %p550 = scmp.ne.s32.totalorder %s535, %s549
    %p551 = scmp.eq.s32.totalorder %s37, 0
    %p552 = por %p550, %p551
    %s554 = sadd.s32 %s553, 1
    %p557 = scmp.eq.s32.totalorder %s31, 1
    %p558 = scmp.ne.s32.totalorder %s553, %s555
    %p559 = scmp.eq.s32.totalorder %s31, 0
    %p560 = por %p558, %p559
    %p561 = scmp.ne.s32.totalorder %s553, %s555
    %p562 = scmp.eq.s32.totalorder %s36, 1
    %p563 = por %p561, %p562
    %p564 = scmp.ne.s32.totalorder %s555, %s556
    %p565 = scmp.eq.s32.totalorder %s36, 0
    %p566 = por %p564, %p565
    %p567 = scmp.ne.s32.totalorder %s555, %s556
    %p568 = scmp.eq.s32.totalorder %s37, 1
    %p569 = por %p567, %p568
    %p571 = scmp.ne.s32.totalorder %s556, %s570
    %p572 = scmp.eq.s32.totalorder %s37, 0
    %p573 = por %p571, %p572
    %s574 = ssub.s32 %s31, %s38
    %p575 = scmp.eq.s32.totalorder %s574, 0
    %s577 = sadd.s32 %s576, 1
    %s578 = scalar_select %p575, %s576, %s577
    %p581 = pneg %p575
    %p582 = scmp.eq.s32.totalorder %s31, 1
    %p583 = por %p581, %p582
    %p584 = scmp.ne.s32.totalorder %s576, %s579
    %p585 = scmp.eq.s32.totalorder %s31, 0
    %p586 = por %p584, %p585
    %p587 = scmp.ne.s32.totalorder %s576, %s579
    %p588 = scmp.eq.s32.totalorder %s36, 1
    %p589 = por %p587, %p588
    %p590 = scmp.ne.s32.totalorder %s579, %s580
    %p591 = scmp.eq.s32.totalorder %s36, 0
    %p592 = por %p590, %p591
    %p593 = scmp.ne.s32.totalorder %s579, %s580
    %p594 = scmp.eq.s32.totalorder %s37, 1
    %p595 = por %p593, %p594
    %p597 = scmp.ne.s32.totalorder %s580, %s596
    %p598 = scmp.eq.s32.totalorder %s37, 0
    %p599 = por %p597, %p598
    %p600 = scmp.le.s32.totalorder 1, %s31
    %p601 = scmp.lt.s32.totalorder %s31, 3
    %p602 = pnand %p600, %p601
    %p603 = pneg %p602
    // Predicated region
    $region9: #{up_forward.1} parent=5 // pred_check
      _
    $region10: #{up_forward.1} parent=5 // pred_check_branch
      %605 = sbr.rel (%p602) target = $region12
    $region11: #{up_forward.1} parent=5 // pred_region
      %s606 = ssub.s32 %s31, 1
      // Predicated region
      $region13: #{up_forward.1} parent=11 // pred_check
        %p607 = pneg %p104
      $region14: #{up_forward.1} parent=11 // pred_check_branch
        %609 = sbr.rel (%p607) target = $region16
      $region15: #{up_forward.1} parent=11 // pred_region
        _
      $region16: #{up_forward.1} parent=11 // pred_fallthru
        _
      // Predicated region
      $region17: #{up_forward.1} parent=11 // pred_check
        %p610 = pneg %p125
      $region18: #{up_forward.1} parent=11 // pred_check_branch
        %612 = sbr.rel (%p610) target = $region20
      $region19: #{up_forward.1} parent=11 // pred_region
        _
      $region20: #{up_forward.1} parent=11 // pred_fallthru
        _
      // Predicated region
      $region21: #{up_forward.1} parent=11 // pred_check
        %p613 = pneg %p146
      $region22: #{up_forward.1} parent=11 // pred_check_branch
        %615 = sbr.rel (%p613) target = $region24
      $region23: #{up_forward.1} parent=11 // pred_region
        _
      $region24: #{up_forward.1} parent=11 // pred_fallthru
        _
      // Predicated region
      $region25: #{up_forward.1} parent=11 // pred_check
        %p616 = pneg %p167
      $region26: #{up_forward.1} parent=11 // pred_check_branch
        %618 = sbr.rel (%p616) target = $region28
      $region27: #{up_forward.1} parent=11 // pred_region
        _
      $region28: #{up_forward.1} parent=11 // pred_fallthru
        _
      // Predicated region
      $region29: #{up_forward.1} parent=11 // pred_check
        %p619 = pneg %p188
      $region30: #{up_forward.1} parent=11 // pred_check_branch
        %621 = sbr.rel (%p619) target = $region32
      $region31: #{up_forward.1} parent=11 // pred_region
        _
      $region32: #{up_forward.1} parent=11 // pred_fallthru
        _
      // Predicated region
      $region33: #{up_forward.1} parent=11 // pred_check
        %p622 = pneg %p209
      $region34: #{up_forward.1} parent=11 // pred_check_branch
        %624 = sbr.rel (%p622) target = $region36
      $region35: #{up_forward.1} parent=11 // pred_region
        _
      $region36: #{up_forward.1} parent=11 // pred_fallthru
        _
      // Predicated region
      $region37: #{up_forward.1} parent=11 // pred_check
        %p625 = pneg %p230
      $region38: #{up_forward.1} parent=11 // pred_check_branch
        %627 = sbr.rel (%p625) target = $region40
      $region39: #{up_forward.1} parent=11 // pred_region
        _
      $region40: #{up_forward.1} parent=11 // pred_fallthru
        _
      // Predicated region
      $region41: #{up_forward.1} parent=11 // pred_check
        %p628 = pneg %p251
      $region42: #{up_forward.1} parent=11 // pred_check_branch
        %630 = sbr.rel (%p628) target = $region44
      $region43: #{up_forward.1} parent=11 // pred_region
        _
      $region44: #{up_forward.1} parent=11 // pred_fallthru
        _
      // Predicated region
      $region45: #{up_forward.1} parent=11 // pred_check
        %p631 = pneg %p272
      $region46: #{up_forward.1} parent=11 // pred_check_branch
        %633 = sbr.rel (%p631) target = $region48
      $region47: #{up_forward.1} parent=11 // pred_region
        _
      $region48: #{up_forward.1} parent=11 // pred_fallthru
        _
      // Predicated region
      $region49: #{up_forward.1} parent=11 // pred_check
        %p634 = pneg %p293
      $region50: #{up_forward.1} parent=11 // pred_check_branch
        %636 = sbr.rel (%p634) target = $region52
      $region51: #{up_forward.1} parent=11 // pred_region
        _
      $region52: #{up_forward.1} parent=11 // pred_fallthru
        _
      // Predicated region
      $region53: #{up_forward.1} parent=11 // pred_check
        %p637 = pneg %p314
      $region54: #{up_forward.1} parent=11 // pred_check_branch
        %639 = sbr.rel (%p637) target = $region56
      $region55: #{up_forward.1} parent=11 // pred_region
        _
      $region56: #{up_forward.1} parent=11 // pred_fallthru
        _
      // Predicated region
      $region57: #{up_forward.1} parent=11 // pred_check
        %p640 = pneg %p335
      $region58: #{up_forward.1} parent=11 // pred_check_branch
        %642 = sbr.rel (%p640) target = $region60
      $region59: #{up_forward.1} parent=11 // pred_region
        _
      $region60: #{up_forward.1} parent=11 // pred_fallthru
        _
      // Predicated region
      $region61: #{up_forward.1} parent=11 // pred_check
        %p643 = pneg %p356
      $region62: #{up_forward.1} parent=11 // pred_check_branch
        %645 = sbr.rel (%p643) target = $region64
      $region63: #{up_forward.1} parent=11 // pred_region
        _
      $region64: #{up_forward.1} parent=11 // pred_fallthru
        _
      // Predicated region
      $region65: #{up_forward.1} parent=11 // pred_check
        %p646 = pneg %p377
      $region66: #{up_forward.1} parent=11 // pred_check_branch
        %648 = sbr.rel (%p646) target = $region68
      $region67: #{up_forward.1} parent=11 // pred_region
        _
      $region68: #{up_forward.1} parent=11 // pred_fallthru
        _
      // Predicated region
      $region69: #{up_forward.1} parent=11 // pred_check
        %p649 = pneg %p398
      $region70: #{up_forward.1} parent=11 // pred_check_branch
        %651 = sbr.rel (%p649) target = $region72
      $region71: #{up_forward.1} parent=11 // pred_region
        _
      $region72: #{up_forward.1} parent=11 // pred_fallthru
        _
      // Predicated region
      $region73: #{up_forward.1} parent=11 // pred_check
        %p652 = pneg %p419
      $region74: #{up_forward.1} parent=11 // pred_check_branch
        %654 = sbr.rel (%p652) target = $region76
      $region75: #{up_forward.1} parent=11 // pred_region
        _
      $region76: #{up_forward.1} parent=11 // pred_fallthru
        _
      // Predicated region
      $region77: #{up_forward.1} parent=11 // pred_check
        %p655 = pneg %p440
      $region78: #{up_forward.1} parent=11 // pred_check_branch
        %657 = sbr.rel (%p655) target = $region80
      $region79: #{up_forward.1} parent=11 // pred_region
        _
      $region80: #{up_forward.1} parent=11 // pred_fallthru
        _
      // Predicated region
      $region81: #{up_forward.1} parent=11 // pred_check
        %p658 = pneg %p461
      $region82: #{up_forward.1} parent=11 // pred_check_branch
        %660 = sbr.rel (%p658) target = $region84
      $region83: #{up_forward.1} parent=11 // pred_region
        _
      $region84: #{up_forward.1} parent=11 // pred_fallthru
        _
      // Predicated region
      $region85: #{up_forward.1} parent=11 // pred_check
        %p661 = pneg %p482
      $region86: #{up_forward.1} parent=11 // pred_check_branch
        %663 = sbr.rel (%p661) target = $region88
      $region87: #{up_forward.1} parent=11 // pred_region
        _
      $region88: #{up_forward.1} parent=11 // pred_fallthru
        _
      // Predicated region
      $region89: #{up_forward.1} parent=11 // pred_check
        %p664 = pneg %p503
      $region90: #{up_forward.1} parent=11 // pred_check_branch
        %666 = sbr.rel (%p664) target = $region92
      $region91: #{up_forward.1} parent=11 // pred_region
        _
      $region92: #{up_forward.1} parent=11 // pred_fallthru
        _
      // Predicated region
      $region93: #{up_forward.1} parent=11 // pred_check
        %p667 = pneg %p524
      $region94: #{up_forward.1} parent=11 // pred_check_branch
        %669 = sbr.rel (%p667) target = $region96
      $region95: #{up_forward.1} parent=11 // pred_region
        _
      $region96: #{up_forward.1} parent=11 // pred_fallthru
        _
      // Predicated region
      $region97: #{up_forward.1} parent=11 // pred_check
        %p670 = pneg %p545
      $region98: #{up_forward.1} parent=11 // pred_check_branch
        %672 = sbr.rel (%p670) target = $region100
      $region99: #{up_forward.1} parent=11 // pred_region
        _
      $region100: #{up_forward.1} parent=11 // pred_fallthru
        _
      // Predicated region
      $region101: #{up_forward.1} parent=11 // pred_check
        %p673 = pneg %p566
      $region102: #{up_forward.1} parent=11 // pred_check_branch
        %675 = sbr.rel (%p673) target = $region104
      $region103: #{up_forward.1} parent=11 // pred_region
        _
      $region104: #{up_forward.1} parent=11 // pred_fallthru
        _
    $region12: #{up_forward.1} parent=5 // pred_fallthru
      _
    %p676 = scmp.lt.s32.totalorder %s31, 2
    // Predicated region
    $region105: #{up_forward.1} parent=5 // pred_check
      %p677 = pneg %p676
    $region106: #{up_forward.1} parent=5 // pred_check_branch
      %679 = sbr.rel (%p677) target = $region108
    $region107: #{up_forward.1} parent=5 // pred_region
      // Predicated region
      $region109: #{up_forward.1} parent=107 // pred_check
        %p680 = pneg %p51
      $region110: #{up_forward.1} parent=107 // pred_check_branch
        %682 = sbr.rel (%p680) target = $region112
      $region111: #{up_forward.1} parent=107 // pred_region
        %p683 = scmp.lt.s32.totalorder %s31, 1
        %s684 = scalar_select %p683, %s31, 1
        %s685 = smul.addr %s684, 8
        %s686 = scalar_lea.vmem %s0, %s685
      $region112: #{up_forward.1} parent=107 // pred_fallthru
        _
      // Predicated region
      $region113: #{up_forward.1} parent=107 // pred_check
        %p687 = pneg %p77
      $region114: #{up_forward.1} parent=107 // pred_check_branch
        %689 = sbr.rel (%p687) target = $region116
      $region115: #{up_forward.1} parent=107 // pred_region
        %p690 = scmp.lt.s32.totalorder %s31, 1
        %s691 = scalar_select %p690, %s31, 1
        %s692 = smul.addr %s691, 2
        %s693 = smul.addr %s692, 8
        %s694 = scalar_lea.vmem %s1, %s693
      $region116: #{up_forward.1} parent=107 // pred_fallthru
        _
    $region108: #{up_forward.1} parent=5 // pred_fallthru
      _
    %p695 = scmp.le.s32.totalorder 1, %s31
    %p696 = scmp.lt.s32.totalorder %s31, 3
    %p697 = pnand %p695, %p696
    %p698 = pneg %p697
    // Predicated region
    $region117: #{up_forward.1} parent=5 // pred_check
      _
    $region118: #{up_forward.1} parent=5 // pred_check_branch
      %700 = sbr.rel (%p697) target = $region120
    $region119: #{up_forward.1} parent=5 // pred_region
      %s701 = ssub.s32 %s31, 1
      %p702 = scmp.lt.s32.totalorder %s36, 1
      %s703 = scalar_select %p702, %s36, 1
      %s704 = smul.addr %s703, 8
      %s705 = scalar_lea.vmem %s0, %s704
      %p706 = pneg %p57
      %p707 = pneg %p54
      %p708 = scmp.lt.s32.totalorder %s36, 1
      %s709 = scalar_select %p708, %s36, 1
      %s710 = smul.addr %s709, 2
      %s711 = smul.addr %s710, 8
      %s712 = scalar_lea.vmem %s1, %s711
      %p713 = pneg %p83
      %p714 = pneg %p80
      %p715 = pneg %p104
      %p716 = pneg %p101
      %p717 = pneg %p125
      %p718 = pneg %p122
      %p719 = pneg %p146
      %p720 = pneg %p143
      %p721 = pneg %p167
      %p722 = pneg %p164
      %p723 = pneg %p188
      %p724 = pneg %p185
      %p725 = pneg %p209
      %p726 = pneg %p206
      %p727 = pneg %p230
      %p728 = pneg %p227
      %p729 = pneg %p251
      %p730 = pneg %p248
      %p731 = pneg %p272
      %p732 = pneg %p269
      %p733 = pneg %p293
      %p734 = pneg %p290
      %p735 = pneg %p314
      %p736 = pneg %p311
      %p737 = pneg %p335
      %p738 = pneg %p332
      %p739 = pneg %p356
      %p740 = pneg %p353
      %p741 = pneg %p377
      %p742 = pneg %p374
      %p743 = pneg %p398
      %p744 = pneg %p395
      %p745 = pneg %p419
      %p746 = pneg %p416
      %p747 = pneg %p440
      %p748 = pneg %p437
      %p749 = pneg %p461
      %p750 = pneg %p458
      %p751 = pneg %p482
      %p752 = pneg %p479
      %p753 = pneg %p503
      %p754 = pneg %p500
      %p755 = pneg %p524
      %p756 = pneg %p521
      %p757 = pneg %p545
      %p758 = pneg %p542
      %p759 = pneg %p566
      %p760 = pneg %p563
      %p761 = pneg %p592
      %p762 = pneg %p589
      %p763 = scmp.lt.s32.totalorder %s36, 1
      %s764 = scalar_select %p763, %s36, 1
      %s765 = smul.addr %s764, 4
      %s766 = smul.addr %s765, 8
      %s767 = scalar_lea.vmem %s25, %s766
      %p768 = scmp.lt.s32.totalorder %s36, 1
      %s769 = scalar_select %p768, %s36, 1
      %s770 = smul.addr %s769, 8
      %s771 = scalar_lea.vmem %s0, %s770
      %p772 = scmp.lt.s32.totalorder %s36, 1
      %s773 = scalar_select %p772, %s36, 1
      %s774 = smul.addr %s773, 2
      %s775 = smul.addr %s774, 8
      %s776 = scalar_lea.vmem %s1, %s775
      %p777 = scmp.lt.s32.totalorder %s36, 1
      %s778 = scalar_select %p777, %s36, 1
      %s779 = smul.addr %s778, 4
      %s780 = smul.addr %s779, 8
      %s781 = scalar_lea.vmem %s25, %s780
      %v783 = vld [vmem:[%s771] sm:$0xff]
      %v784 = vpack.c.bf16 %v783, %v783
      %v785 = vld [vmem:[%s2] sm:$0xff]
      %v786 = vld [vmem:[%s2 + $0x8] sm:$0xff]
      %v787 = vld [vmem:[%s2 + $0x10] sm:$0xff]
      %v788 = vld [vmem:[%s2 + $0x18] sm:$0xff]
      %v789 = vld [vmem:[%s2 + $0x20] sm:$0xff]
      %v790 = vld [vmem:[%s2 + $0x28] sm:$0xff]
      %v791 = vld [vmem:[%s2 + $0x30] sm:$0xff]
      %v792 = vld [vmem:[%s2 + $0x38] sm:$0xff]
      %v801 = vunpack.c.l.b16 %v785
      %v802 = vunpack.c.h.b16 %v785
      %v803 = vunpack.c.l.b16 %v786
      %v804 = vunpack.c.h.b16 %v786
      %v805 = vunpack.c.l.b16 %v787
      %v806 = vunpack.c.h.b16 %v787
      %v807 = vunpack.c.l.b16 %v788
      %v808 = vunpack.c.h.b16 %v788
      %v809 = vunpack.c.l.b16 %v789
      %v810 = vunpack.c.h.b16 %v789
      %v811 = vunpack.c.l.b16 %v790
      %v812 = vunpack.c.h.b16 %v790
      %v813 = vunpack.c.l.b16 %v791
      %v814 = vunpack.c.h.b16 %v791
      %v815 = vunpack.c.l.b16 %v792
      %v816 = vunpack.c.h.b16 %v792
      %v817 = vpack.c.b16 %v803, %v801
      %v818 = vpack.c.b16 %v804, %v802
      %v819 = vpack.c.b16 %v807, %v805
      %v820 = vpack.c.b16 %v808, %v806
      %v821 = vpack.c.b16 %v811, %v809
      %v822 = vpack.c.b16 %v812, %v810
      %v823 = vpack.c.b16 %v815, %v813
      %v824 = vpack.c.b16 %v816, %v814
      %vm833 = vcmask 523264
      %v835 = vsel %vm833, %v784, 0
      %837 = vmatprep.subr.bf16.mxu0 0
      %838 = vmatpush1.bf16.msra.mxu0 0
      %839 = vmatprep.subr.bf16.mxu0 0
      %840 = vmatpush1.bf16.msra.mxu0 0
      %841 = vmatprep.subr.bf16.mxu0 0
      %842 = vmatpush1.bf16.msra.mxu0 0
      %843 = vmatprep.subr.bf16.mxu0 0
      %844 = vmatpush1.bf16.msra.mxu0 0
      %845 = vmatprep.subr.bf16.mxu0 %v824
      %846 = vmatpush1.bf16.msra.mxu0 %v823
      %847 = vmatprep.subr.bf16.mxu0 %v822
      %848 = vmatpush1.bf16.msra.mxu0 %v821
      %849 = vmatprep.subr.bf16.mxu0 %v820
      %850 = vmatpush1.bf16.msra.mxu0 %v819
      %851 = vmatprep.subr.bf16.mxu0 %v818
      %852 = vmatpush1.bf16.msra.mxu0 %v817
      %853 = vmatprep.subr.bf16.mxu0 0
      %854 = vmatpush2.bf16.msra.mxu0 0
      %855 = vmatprep.subr.bf16.mxu0 0
      %856 = vmatpush2.bf16.msra.mxu0 0
      %857 = vmatprep.subr.bf16.mxu0 0
      %858 = vmatpush2.bf16.msra.mxu0 0
      %859 = vmatprep.subr.bf16.mxu0 0
      %860 = vmatpush2.bf16.msra.mxu0 0
      %861 = vmatprep.subr.bf16.mxu0 0
      %862 = vmatpush2.bf16.msra.mxu0 0
      %863 = vmatprep.subr.bf16.mxu0 0
      %864 = vmatpush2.bf16.msra.mxu0 0
      %865 = vmatprep.subr.bf16.mxu0 0
      %866 = vmatpush2.bf16.msra.mxu0 0
      %867 = vmatprep.subr.bf16.mxu0 0
      %868 = vmatpush2.bf16.msra.mxu0 0
      %869 = vmatprep.mubr.bf16.mxu0 0
      %870 = vmatmul.mubr.bf16.gmra.mxu0 %v835
      %v871 = vpop.f32.mrf.mxu0
      %v872 = vadd.f32 0.0, %v871
      %v873 = vpop.f32.mrf.mxu0
      %v874 = vadd.f32 0.0, %v873
      %v875 = vpop.f32.mrf.mxu0
      %v876 = vpop.f32.mrf.mxu0
      %877 = vdwg.mxu0
      %v878 = vld [vmem:[%s776] sm:$0xff]
      %v879 = vld [vmem:[%s776 + $0x8] sm:$0xff]
      %880 = vrot.lane.b32.xlu0 %v878, 17
      %v881 = vpop.permute.xlu0 %880
      %882 = vrot.lane.b32.xlu0 %v879, 17
      %v883 = vpop.permute.xlu0 %882
      %v884 = vlaneseq
      %v885 = vand.u32 %v884, 127
      %vm886 = vcmp.lt.s32.totalorder %v885, 17
      %v887 = vsel %vm886, %v881, %v883
      %v888 = vsel %vm886, %v883, %v881
      %v889 = vld [vmem:[%s3] sm:$0x3]
      %v891 = vlaneseq
      %v892 = vshrl.u32 %v891, 7
      %v893 = vsub.s32 0, %v892
      %v894 = vrot.slane %v889, %v893
      %v895 = vlaneseq
      %v896 = vshrl.u32 %v895, 7
      %v897 = vsub.s32 1, %v896
      %v898 = vrot.slane %v889, %v897
      %v901 = vmul.f32 %v888, %v894
      %v902 = vmul.f32 %v887, %v898
      %v903 = vld [vmem:[%s6] sm:$0xf]
      %v904 = vld [vmem:[%s6 + $0x4] sm:$0xf]
      %v905 = vpack.c.bf16 %v901, %v901
      %v906 = vpack.c.bf16 %v902, %v902
      %907 = vrot.lane.b32.xlu0 %v878, 16
      %v908 = vpop.permute.xlu0 %907
      %909 = vrot.lane.b32.xlu0 %v879, 16
      %v910 = vpop.permute.xlu0 %909
      %vm911 = vcmp.lt.s32.totalorder %v885, 16
      %v912 = vsel %vm911, %v908, %v910
      %v913 = vsel %vm911, %v910, %v908
      %s914 = scalar_lea.vmem %s3, 2
      %v915 = vld [vmem:[%s914] sm:$0x3]
      %v917 = vlaneseq
      %v918 = vshrl.u32 %v917, 7
      %v919 = vsub.s32 0, %v918
      %v920 = vrot.slane %v915, %v919
      %v921 = vlaneseq
      %v922 = vshrl.u32 %v921, 7
      %v923 = vsub.s32 1, %v922
      %v924 = vrot.slane %v915, %v923
      %v927 = vmul.f32 %v913, %v920
      %v928 = vmul.f32 %v912, %v924
      %s929 = scalar_lea.vmem %s6, 8
      %v930 = vld [vmem:[%s929] sm:$0xf]
      %v931 = vld [vmem:[%s929 + $0x4] sm:$0xf]
      %v932 = vpack.c.bf16 %v927, %v927
      %v933 = vpack.c.bf16 %v928, %v928
      %v936 = vunpack.c.l.b16 %v930
      %v937 = vunpack.c.l.b16 %v931
      %v938 = vpack.c.b16 %v937, %v936
      %vm939 = vcmask 64512
      %v941 = vsel %vm939, %v938, 0
      %vm943 = vcmask 1043456
      %v945 = vsel %vm943, %v932, 0
      %v948 = vsel %vm943, %v933, 0
      %950 = vmatprep.subr.bf16.mxu0 0
      %951 = vmatpush1.bf16.msra.mxu0 0
      %952 = vmatprep.subr.bf16.mxu0 0
      %953 = vmatpush1.bf16.msra.mxu0 0
      %954 = vmatprep.subr.bf16.mxu0 0
      %955 = vmatpush1.bf16.msra.mxu0 0
      %956 = vmatprep.subr.bf16.mxu0 0
      %957 = vmatpush1.bf16.msra.mxu0 0
      %958 = vmatprep.subr.bf16.mxu0 0
      %959 = vmatpush1.bf16.msra.mxu0 0
      %960 = vmatprep.subr.bf16.mxu0 0
      %961 = vmatpush1.bf16.msra.mxu0 0
      %962 = vmatprep.subr.bf16.mxu0 0
      %963 = vmatpush1.bf16.msra.mxu0 0
      %964 = vmatprep.subr.bf16.mxu0 %v948
      %965 = vmatpush1.bf16.msra.mxu0 %v945
      %966 = vmatprep.subr.bf16.mxu0 0
      %967 = vmatpush2.bf16.msra.mxu0 0
      %968 = vmatprep.subr.bf16.mxu0 0
      %969 = vmatpush2.bf16.msra.mxu0 0
      %970 = vmatprep.subr.bf16.mxu0 0
      %971 = vmatpush2.bf16.msra.mxu0 0
      %972 = vmatprep.subr.bf16.mxu0 0
      %973 = vmatpush2.bf16.msra.mxu0 0
      %974 = vmatprep.subr.bf16.mxu0 0
      %975 = vmatpush2.bf16.msra.mxu0 0
      %976 = vmatprep.subr.bf16.mxu0 0
      %977 = vmatpush2.bf16.msra.mxu0 0
      %978 = vmatprep.subr.bf16.mxu0 0
      %979 = vmatpush2.bf16.msra.mxu0 0
      %980 = vmatprep.subr.bf16.mxu0 0
      %981 = vmatpush2.bf16.msra.mxu0 0
      %982 = vmatprep.mubr.bf16.mxu0 0
      %983 = vmatmul.mubr.bf16.gmra.mxu0 %v941
      %v984 = vpop.f32.mrf.mxu0
      %v985 = vadd.f32 0.0, %v984
      %v986 = vpop.f32.mrf.mxu0
      %v987 = vadd.f32 0.0, %v986
      %v988 = vpop.f32.mrf.mxu0
      %v989 = vadd.f32 0.0, %v988
      %v990 = vpop.f32.mrf.mxu0
      %v991 = vadd.f32 0.0, %v990
      %992 = vdwg.mxu0
      %v995 = vunpack.c.l.b16 %v903
      %v996 = vunpack.c.l.b16 %v904
      %v997 = vpack.c.b16 %v996, %v995
      %v999 = vsel %vm939, %v997, 0
      %v1002 = vsel %vm943, %v905, 0
      %v1005 = vsel %vm943, %v906, 0
      %1007 = vmatprep.subr.bf16.mxu0 0
      %1008 = vmatpush1.bf16.msra.mxu0 0
      %1009 = vmatprep.subr.bf16.mxu0 0
      %1010 = vmatpush1.bf16.msra.mxu0 0
      %1011 = vmatprep.subr.bf16.mxu0 0
      %1012 = vmatpush1.bf16.msra.mxu0 0
      %1013 = vmatprep.subr.bf16.mxu0 0
      %1014 = vmatpush1.bf16.msra.mxu0 0
      %1015 = vmatprep.subr.bf16.mxu0 0
      %1016 = vmatpush1.bf16.msra.mxu0 0
      %1017 = vmatprep.subr.bf16.mxu0 0
      %1018 = vmatpush1.bf16.msra.mxu0 0
      %1019 = vmatprep.subr.bf16.mxu0 0
      %1020 = vmatpush1.bf16.msra.mxu0 0
      %1021 = vmatprep.subr.bf16.mxu0 %v1005
      %1022 = vmatpush1.bf16.msra.mxu0 %v1002
      %1023 = vmatprep.subr.bf16.mxu0 0
      %1024 = vmatpush2.bf16.msra.mxu0 0
      %1025 = vmatprep.subr.bf16.mxu0 0
      %1026 = vmatpush2.bf16.msra.mxu0 0
      %1027 = vmatprep.subr.bf16.mxu0 0
      %1028 = vmatpush2.bf16.msra.mxu0 0
      %1029 = vmatprep.subr.bf16.mxu0 0
      %1030 = vmatpush2.bf16.msra.mxu0 0
      %1031 = vmatprep.subr.bf16.mxu0 0
      %1032 = vmatpush2.bf16.msra.mxu0 0
      %1033 = vmatprep.subr.bf16.mxu0 0
      %1034 = vmatpush2.bf16.msra.mxu0 0
      %1035 = vmatprep.subr.bf16.mxu0 0
      %1036 = vmatpush2.bf16.msra.mxu0 0
      %1037 = vmatprep.subr.bf16.mxu0 0
      %1038 = vmatpush2.bf16.msra.mxu0 0
      %1039 = vmatprep.mubr.bf16.mxu0 0
      %1040 = vmatmul.mubr.bf16.gmra.mxu0 %v999
      %v1041 = vpop.f32.mrf.mxu0
      %v1042 = vadd.f32 %v985, %v1041
      %v1043 = vpop.f32.mrf.mxu0
      %v1044 = vadd.f32 %v987, %v1043
      %v1045 = vpop.f32.mrf.mxu0
      %v1046 = vadd.f32 %v989, %v1045
      %v1047 = vpop.f32.mrf.mxu0
      %v1048 = vadd.f32 %v991, %v1047
      %1049 = vdwg.mxu0
      %1050 = vrot.lane.b32.xlu0 %v878, 15
      %v1051 = vpop.permute.xlu0 %1050
      %1052 = vrot.lane.b32.xlu0 %v879, 15
      %v1053 = vpop.permute.xlu0 %1052
      %vm1054 = vcmp.lt.s32.totalorder %v885, 15
      %v1055 = vsel %vm1054, %v1051, %v1053
      %v1056 = vsel %vm1054, %v1053, %v1051
      %s1057 = scalar_lea.vmem %s3, 4
      %v1058 = vld [vmem:[%s1057] sm:$0x3]
      %v1060 = vlaneseq
      %v1061 = vshrl.u32 %v1060, 7
      %v1062 = vsub.s32 0, %v1061
      %v1063 = vrot.slane %v1058, %v1062
      %v1064 = vlaneseq
      %v1065 = vshrl.u32 %v1064, 7
      %v1066 = vsub.s32 1, %v1065
      %v1067 = vrot.slane %v1058, %v1066
      %v1070 = vmul.f32 %v1056, %v1063
      %v1071 = vmul.f32 %v1055, %v1067
      %s1072 = scalar_lea.vmem %s6, 16
      %v1073 = vld [vmem:[%s1072] sm:$0xf]
      %v1074 = vld [vmem:[%s1072 + $0x4] sm:$0xf]
      %v1075 = vpack.c.bf16 %v1070, %v1070
      %v1076 = vpack.c.bf16 %v1071, %v1071
      %v1079 = vunpack.c.l.b16 %v1073
      %v1080 = vunpack.c.l.b16 %v1074
      %v1081 = vpack.c.b16 %v1080, %v1079
      %v1083 = vsel %vm939, %v1081, 0
      %v1086 = vsel %vm943, %v1075, 0
      %v1089 = vsel %vm943, %v1076, 0
      %1091 = vmatprep.subr.bf16.mxu0 0
      %1092 = vmatpush1.bf16.msra.mxu0 0
      %1093 = vmatprep.subr.bf16.mxu0 0
      %1094 = vmatpush1.bf16.msra.mxu0 0
      %1095 = vmatprep.subr.bf16.mxu0 0
      %1096 = vmatpush1.bf16.msra.mxu0 0
      %1097 = vmatprep.subr.bf16.mxu0 0
      %1098 = vmatpush1.bf16.msra.mxu0 0
      %1099 = vmatprep.subr.bf16.mxu0 0
      %1100 = vmatpush1.bf16.msra.mxu0 0
      %1101 = vmatprep.subr.bf16.mxu0 0
      %1102 = vmatpush1.bf16.msra.mxu0 0
      %1103 = vmatprep.subr.bf16.mxu0 0
      %1104 = vmatpush1.bf16.msra.mxu0 0
      %1105 = vmatprep.subr.bf16.mxu0 %v1089
      %1106 = vmatpush1.bf16.msra.mxu0 %v1086
      %1107 = vmatprep.subr.bf16.mxu0 0
      %1108 = vmatpush2.bf16.msra.mxu0 0
      %1109 = vmatprep.subr.bf16.mxu0 0
      %1110 = vmatpush2.bf16.msra.mxu0 0
      %1111 = vmatprep.subr.bf16.mxu0 0
      %1112 = vmatpush2.bf16.msra.mxu0 0
      %1113 = vmatprep.subr.bf16.mxu0 0
      %1114 = vmatpush2.bf16.msra.mxu0 0
      %1115 = vmatprep.subr.bf16.mxu0 0
      %1116 = vmatpush2.bf16.msra.mxu0 0
      %1117 = vmatprep.subr.bf16.mxu0 0
      %1118 = vmatpush2.bf16.msra.mxu0 0
      %1119 = vmatprep.subr.bf16.mxu0 0
      %1120 = vmatpush2.bf16.msra.mxu0 0
      %1121 = vmatprep.subr.bf16.mxu0 0
      %1122 = vmatpush2.bf16.msra.mxu0 0
      %1123 = vmatprep.mubr.bf16.mxu0 0
      %1124 = vmatmul.mubr.bf16.gmra.mxu0 %v1083
      %v1125 = vpop.f32.mrf.mxu0
      %v1126 = vadd.f32 0.0, %v1125
      %v1127 = vpop.f32.mrf.mxu0
      %v1128 = vadd.f32 0.0, %v1127
      %v1129 = vpop.f32.mrf.mxu0
      %v1130 = vadd.f32 0.0, %v1129
      %v1131 = vpop.f32.mrf.mxu0
      %v1132 = vadd.f32 0.0, %v1131
      %1133 = vdwg.mxu0
      %v1134 = vadd.f32 %v1042, %v1126
      %v1135 = vadd.f32 %v1044, %v1128
      %v1136 = vadd.f32 %v1046, %v1130
      %v1137 = vadd.f32 %v1048, %v1132
      %1138 = vrot.lane.b32.xlu0 %v878, 1
      %v1139 = vpop.permute.xlu0 %1138
      %1140 = vrot.lane.b32.xlu0 %v879, 1
      %v1141 = vpop.permute.xlu0 %1140
      %vm1142 = vcmp.lt.s32.totalorder %v885, 1
      %v1143 = vsel %vm1142, %v1139, %v1141
      %v1144 = vsel %vm1142, %v1141, %v1139
      %s1145 = scalar_lea.vmem %s3, 6
      %v1146 = vld [vmem:[%s1145] sm:$0x3]
      %v1148 = vlaneseq
      %v1149 = vshrl.u32 %v1148, 7
      %v1150 = vsub.s32 0, %v1149
      %v1151 = vrot.slane %v1146, %v1150
      %v1152 = vlaneseq
      %v1153 = vshrl.u32 %v1152, 7
      %v1154 = vsub.s32 1, %v1153
      %v1155 = vrot.slane %v1146, %v1154
      %v1158 = vmul.f32 %v1144, %v1151
      %v1159 = vmul.f32 %v1143, %v1155
      %s1160 = scalar_lea.vmem %s6, 24
      %v1161 = vld [vmem:[%s1160] sm:$0xf]
      %v1162 = vld [vmem:[%s1160 + $0x4] sm:$0xf]
      %v1163 = vpack.c.bf16 %v1158, %v1158
      %v1164 = vpack.c.bf16 %v1159, %v1159
      %v1167 = vunpack.c.l.b16 %v1161
      %v1168 = vunpack.c.l.b16 %v1162
      %v1169 = vpack.c.b16 %v1168, %v1167
      %v1171 = vsel %vm939, %v1169, 0
      %v1174 = vsel %vm943, %v1163, 0
      %v1177 = vsel %vm943, %v1164, 0
      %1179 = vmatprep.subr.bf16.mxu0 0
      %1180 = vmatpush1.bf16.msra.mxu0 0
      %1181 = vmatprep.subr.bf16.mxu0 0
      %1182 = vmatpush1.bf16.msra.mxu0 0
      %1183 = vmatprep.subr.bf16.mxu0 0
      %1184 = vmatpush1.bf16.msra.mxu0 0
      %1185 = vmatprep.subr.bf16.mxu0 0
      %1186 = vmatpush1.bf16.msra.mxu0 0
      %1187 = vmatprep.subr.bf16.mxu0 0
      %1188 = vmatpush1.bf16.msra.mxu0 0
      %1189 = vmatprep.subr.bf16.mxu0 0
      %1190 = vmatpush1.bf16.msra.mxu0 0
      %1191 = vmatprep.subr.bf16.mxu0 0
      %1192 = vmatpush1.bf16.msra.mxu0 0
      %1193 = vmatprep.subr.bf16.mxu0 %v1177
      %1194 = vmatpush1.bf16.msra.mxu0 %v1174
      %1195 = vmatprep.subr.bf16.mxu0 0
      %1196 = vmatpush2.bf16.msra.mxu0 0
      %1197 = vmatprep.subr.bf16.mxu0 0
      %1198 = vmatpush2.bf16.msra.mxu0 0
      %1199 = vmatprep.subr.bf16.mxu0 0
      %1200 = vmatpush2.bf16.msra.mxu0 0
      %1201 = vmatprep.subr.bf16.mxu0 0
      %1202 = vmatpush2.bf16.msra.mxu0 0
      %1203 = vmatprep.subr.bf16.mxu0 0
      %1204 = vmatpush2.bf16.msra.mxu0 0
      %1205 = vmatprep.subr.bf16.mxu0 0
      %1206 = vmatpush2.bf16.msra.mxu0 0
      %1207 = vmatprep.subr.bf16.mxu0 0
      %1208 = vmatpush2.bf16.msra.mxu0 0
      %1209 = vmatprep.subr.bf16.mxu0 0
      %1210 = vmatpush2.bf16.msra.mxu0 0
      %1211 = vmatprep.mubr.bf16.mxu0 0
      %1212 = vmatmul.mubr.bf16.gmra.mxu0 %v1171
      %v1213 = vpop.f32.mrf.mxu0
      %v1214 = vadd.f32 0.0, %v1213
      %v1215 = vpop.f32.mrf.mxu0
      %v1216 = vadd.f32 0.0, %v1215
      %v1217 = vpop.f32.mrf.mxu0
      %v1218 = vadd.f32 0.0, %v1217
      %v1219 = vpop.f32.mrf.mxu0
      %v1220 = vadd.f32 0.0, %v1219
      %1221 = vdwg.mxu0
      %v1222 = vadd.f32 %v1134, %v1214
      %v1223 = vadd.f32 %v1135, %v1216
      %v1224 = vadd.f32 %v1136, %v1218
      %v1225 = vadd.f32 %v1137, %v1220
      %s1226 = scalar_lea.vmem %s3, 8
      %v1227 = vld [vmem:[%s1226] sm:$0x3]
      %v1229 = vlaneseq
      %v1230 = vshrl.u32 %v1229, 7
      %v1231 = vsub.s32 0, %v1230
      %v1232 = vrot.slane %v1227, %v1231
      %v1233 = vlaneseq
      %v1234 = vshrl.u32 %v1233, 7
      %v1235 = vsub.s32 1, %v1234
      %v1236 = vrot.slane %v1227, %v1235
      %v1239 = vmul.f32 %v878, %v1232
      %v1240 = vmul.f32 %v879, %v1236
      %s1241 = scalar_lea.vmem %s6, 32
      %v1242 = vld [vmem:[%s1241] sm:$0xf]
      %v1243 = vld [vmem:[%s1241 + $0x4] sm:$0xf]
      %v1244 = vpack.c.bf16 %v1239, %v1239
      %v1245 = vpack.c.bf16 %v1240, %v1240
      %v1248 = vunpack.c.l.b16 %v1242
      %v1249 = vunpack.c.l.b16 %v1243
      %v1250 = vpack.c.b16 %v1249, %v1248
      %v1252 = vsel %vm939, %v1250, 0
      %v1255 = vsel %vm943, %v1244, 0
      %v1258 = vsel %vm943, %v1245, 0
      %1260 = vmatprep.subr.bf16.mxu0 0
      %1261 = vmatpush1.bf16.msra.mxu0 0
      %1262 = vmatprep.subr.bf16.mxu0 0
      %1263 = vmatpush1.bf16.msra.mxu0 0
      %1264 = vmatprep.subr.bf16.mxu0 0
      %1265 = vmatpush1.bf16.msra.mxu0 0
      %1266 = vmatprep.subr.bf16.mxu0 0
      %1267 = vmatpush1.bf16.msra.mxu0 0
      %1268 = vmatprep.subr.bf16.mxu0 0
      %1269 = vmatpush1.bf16.msra.mxu0 0
      %1270 = vmatprep.subr.bf16.mxu0 0
      %1271 = vmatpush1.bf16.msra.mxu0 0
      %1272 = vmatprep.subr.bf16.mxu0 0
      %1273 = vmatpush1.bf16.msra.mxu0 0
      %1274 = vmatprep.subr.bf16.mxu0 %v1258
      %1275 = vmatpush1.bf16.msra.mxu0 %v1255
      %1276 = vmatprep.subr.bf16.mxu0 0
      %1277 = vmatpush2.bf16.msra.mxu0 0
      %1278 = vmatprep.subr.bf16.mxu0 0
      %1279 = vmatpush2.bf16.msra.mxu0 0
      %1280 = vmatprep.subr.bf16.mxu0 0
      %1281 = vmatpush2.bf16.msra.mxu0 0
      %1282 = vmatprep.subr.bf16.mxu0 0
      %1283 = vmatpush2.bf16.msra.mxu0 0
      %1284 = vmatprep.subr.bf16.mxu0 0
      %1285 = vmatpush2.bf16.msra.mxu0 0
      %1286 = vmatprep.subr.bf16.mxu0 0
      %1287 = vmatpush2.bf16.msra.mxu0 0
      %1288 = vmatprep.subr.bf16.mxu0 0
      %1289 = vmatpush2.bf16.msra.mxu0 0
      %1290 = vmatprep.subr.bf16.mxu0 0
      %1291 = vmatpush2.bf16.msra.mxu0 0
      %1292 = vmatprep.mubr.bf16.mxu0 0
      %1293 = vmatmul.mubr.bf16.gmra.mxu0 %v1252
      %v1294 = vpop.f32.mrf.mxu0
      %v1295 = vadd.f32 0.0, %v1294
      %v1296 = vpop.f32.mrf.mxu0
      %v1297 = vadd.f32 0.0, %v1296
      %v1298 = vpop.f32.mrf.mxu0
      %v1299 = vadd.f32 0.0, %v1298
      %v1300 = vpop.f32.mrf.mxu0
      %v1301 = vadd.f32 0.0, %v1300
      %1302 = vdwg.mxu0
      %v1303 = vadd.f32 %v1222, %v1295
      %v1304 = vadd.f32 %v1223, %v1297
      %v1305 = vadd.f32 %v1224, %v1299
      %v1306 = vadd.f32 %v1225, %v1301
      %1307 = vrot.lane.b32.xlu0 %v878, 127
      %v1308 = vpop.permute.xlu0 %1307
      %1309 = vrot.lane.b32.xlu0 %v879, 127
      %v1310 = vpop.permute.xlu0 %1309
      %vm1311 = vcmp.lt.s32.totalorder %v885, 127
      %v1312 = vsel %vm1311, %v1308, %v1310
      %v1313 = vsel %vm1311, %v1310, %v1308
      %s1314 = scalar_lea.vmem %s3, 10
      %v1315 = vld [vmem:[%s1314] sm:$0x3]
      %v1317 = vlaneseq
      %v1318 = vshrl.u32 %v1317, 7
      %v1319 = vsub.s32 0, %v1318
      %v1320 = vrot.slane %v1315, %v1319
      %v1321 = vlaneseq
      %v1322 = vshrl.u32 %v1321, 7
      %v1323 = vsub.s32 1, %v1322
      %v1324 = vrot.slane %v1315, %v1323
      %v1327 = vmul.f32 %v1312, %v1320
      %v1328 = vmul.f32 %v1313, %v1324
      %s1329 = scalar_lea.vmem %s6, 40
      %v1330 = vld [vmem:[%s1329] sm:$0xf]
      %v1331 = vld [vmem:[%s1329 + $0x4] sm:$0xf]
      %v1332 = vpack.c.bf16 %v1327, %v1327
      %v1333 = vpack.c.bf16 %v1328, %v1328
      %v1336 = vunpack.c.l.b16 %v1330
      %v1337 = vunpack.c.l.b16 %v1331
      %v1338 = vpack.c.b16 %v1337, %v1336
      %v1340 = vsel %vm939, %v1338, 0
      %v1343 = vsel %vm943, %v1332, 0
      %v1346 = vsel %vm943, %v1333, 0
      %1348 = vmatprep.subr.bf16.mxu0 0
      %1349 = vmatpush1.bf16.msra.mxu0 0
      %1350 = vmatprep.subr.bf16.mxu0 0
      %1351 = vmatpush1.bf16.msra.mxu0 0
      %1352 = vmatprep.subr.bf16.mxu0 0
      %1353 = vmatpush1.bf16.msra.mxu0 0
      %1354 = vmatprep.subr.bf16.mxu0 0
      %1355 = vmatpush1.bf16.msra.mxu0 0
      %1356 = vmatprep.subr.bf16.mxu0 0
      %1357 = vmatpush1.bf16.msra.mxu0 0
      %1358 = vmatprep.subr.bf16.mxu0 0
      %1359 = vmatpush1.bf16.msra.mxu0 0
      %1360 = vmatprep.subr.bf16.mxu0 0
      %1361 = vmatpush1.bf16.msra.mxu0 0
      %1362 = vmatprep.subr.bf16.mxu0 %v1346
      %1363 = vmatpush1.bf16.msra.mxu0 %v1343
      %1364 = vmatprep.subr.bf16.mxu0 0
      %1365 = vmatpush2.bf16.msra.mxu0 0
      %1366 = vmatprep.subr.bf16.mxu0 0
      %1367 = vmatpush2.bf16.msra.mxu0 0
      %1368 = vmatprep.subr.bf16.mxu0 0
      %1369 = vmatpush2.bf16.msra.mxu0 0
      %1370 = vmatprep.subr.bf16.mxu0 0
      %1371 = vmatpush2.bf16.msra.mxu0 0
      %1372 = vmatprep.subr.bf16.mxu0 0
      %1373 = vmatpush2.bf16.msra.mxu0 0
      %1374 = vmatprep.subr.bf16.mxu0 0
      %1375 = vmatpush2.bf16.msra.mxu0 0
      %1376 = vmatprep.subr.bf16.mxu0 0
      %1377 = vmatpush2.bf16.msra.mxu0 0
      %1378 = vmatprep.subr.bf16.mxu0 0
      %1379 = vmatpush2.bf16.msra.mxu0 0
      %1380 = vmatprep.mubr.bf16.mxu0 0
      %1381 = vmatmul.mubr.bf16.gmra.mxu0 %v1340
      %v1382 = vpop.f32.mrf.mxu0
      %v1383 = vadd.f32 0.0, %v1382
      %v1384 = vpop.f32.mrf.mxu0
      %v1385 = vadd.f32 0.0, %v1384
      %v1386 = vpop.f32.mrf.mxu0
      %v1387 = vadd.f32 0.0, %v1386
      %v1388 = vpop.f32.mrf.mxu0
      %v1389 = vadd.f32 0.0, %v1388
      %1390 = vdwg.mxu0
      %v1391 = vadd.f32 %v1303, %v1383
      %v1392 = vadd.f32 %v1304, %v1385
      %v1393 = vadd.f32 %v1305, %v1387
      %v1394 = vadd.f32 %v1306, %v1389
      %1395 = vrot.lane.b32.xlu0 %v878, 113
      %v1396 = vpop.permute.xlu0 %1395
      %1397 = vrot.lane.b32.xlu0 %v879, 113
      %v1398 = vpop.permute.xlu0 %1397
      %vm1399 = vcmp.lt.s32.totalorder %v885, 113
      %v1400 = vsel %vm1399, %v1396, %v1398
      %v1401 = vsel %vm1399, %v1398, %v1396
      %s1402 = scalar_lea.vmem %s3, 12
      %v1403 = vld [vmem:[%s1402] sm:$0x3]
      %v1405 = vlaneseq
      %v1406 = vshrl.u32 %v1405, 7
      %v1407 = vsub.s32 0, %v1406
      %v1408 = vrot.slane %v1403, %v1407
      %v1409 = vlaneseq
      %v1410 = vshrl.u32 %v1409, 7
      %v1411 = vsub.s32 1, %v1410
      %v1412 = vrot.slane %v1403, %v1411
      %v1415 = vmul.f32 %v1400, %v1408
      %v1416 = vmul.f32 %v1401, %v1412
      %s1417 = scalar_lea.vmem %s6, 48
      %v1418 = vld [vmem:[%s1417] sm:$0xf]
      %v1419 = vld [vmem:[%s1417 + $0x4] sm:$0xf]
      %v1420 = vpack.c.bf16 %v1415, %v1415
      %v1421 = vpack.c.bf16 %v1416, %v1416
      %v1424 = vunpack.c.l.b16 %v1418
      %v1425 = vunpack.c.l.b16 %v1419
      %v1426 = vpack.c.b16 %v1425, %v1424
      %v1428 = vsel %vm939, %v1426, 0
      %v1431 = vsel %vm943, %v1420, 0
      %v1434 = vsel %vm943, %v1421, 0
      %1436 = vmatprep.subr.bf16.mxu0 0
      %1437 = vmatpush1.bf16.msra.mxu0 0
      %1438 = vmatprep.subr.bf16.mxu0 0
      %1439 = vmatpush1.bf16.msra.mxu0 0
      %1440 = vmatprep.subr.bf16.mxu0 0
      %1441 = vmatpush1.bf16.msra.mxu0 0
      %1442 = vmatprep.subr.bf16.mxu0 0
      %1443 = vmatpush1.bf16.msra.mxu0 0
      %1444 = vmatprep.subr.bf16.mxu0 0
      %1445 = vmatpush1.bf16.msra.mxu0 0
      %1446 = vmatprep.subr.bf16.mxu0 0
      %1447 = vmatpush1.bf16.msra.mxu0 0
      %1448 = vmatprep.subr.bf16.mxu0 0
      %1449 = vmatpush1.bf16.msra.mxu0 0
      %1450 = vmatprep.subr.bf16.mxu0 %v1434
      %1451 = vmatpush1.bf16.msra.mxu0 %v1431
      %1452 = vmatprep.subr.bf16.mxu0 0
      %1453 = vmatpush2.bf16.msra.mxu0 0
      %1454 = vmatprep.subr.bf16.mxu0 0
      %1455 = vmatpush2.bf16.msra.mxu0 0
      %1456 = vmatprep.subr.bf16.mxu0 0
      %1457 = vmatpush2.bf16.msra.mxu0 0
      %1458 = vmatprep.subr.bf16.mxu0 0
      %1459 = vmatpush2.bf16.msra.mxu0 0
      %1460 = vmatprep.subr.bf16.mxu0 0
      %1461 = vmatpush2.bf16.msra.mxu0 0
      %1462 = vmatprep.subr.bf16.mxu0 0
      %1463 = vmatpush2.bf16.msra.mxu0 0
      %1464 = vmatprep.subr.bf16.mxu0 0
      %1465 = vmatpush2.bf16.msra.mxu0 0
      %1466 = vmatprep.subr.bf16.mxu0 0
      %1467 = vmatpush2.bf16.msra.mxu0 0
      %1468 = vmatprep.mubr.bf16.mxu0 0
      %1469 = vmatmul.mubr.bf16.gmra.mxu0 %v1428
      %v1470 = vpop.f32.mrf.mxu0
      %v1471 = vadd.f32 0.0, %v1470
      %v1472 = vpop.f32.mrf.mxu0
      %v1473 = vadd.f32 0.0, %v1472
      %v1474 = vpop.f32.mrf.mxu0
      %v1475 = vadd.f32 0.0, %v1474
      %v1476 = vpop.f32.mrf.mxu0
      %v1477 = vadd.f32 0.0, %v1476
      %1478 = vdwg.mxu0
      %v1479 = vadd.f32 %v1391, %v1471
      %v1480 = vadd.f32 %v1392, %v1473
      %v1481 = vadd.f32 %v1393, %v1475
      %v1482 = vadd.f32 %v1394, %v1477
      %1483 = vrot.lane.b32.xlu0 %v878, 112
      %v1484 = vpop.permute.xlu0 %1483
      %1485 = vrot.lane.b32.xlu0 %v879, 112
      %v1486 = vpop.permute.xlu0 %1485
      %vm1487 = vcmp.lt.s32.totalorder %v885, 112
      %v1488 = vsel %vm1487, %v1484, %v1486
      %v1489 = vsel %vm1487, %v1486, %v1484
      %s1490 = scalar_lea.vmem %s3, 14
      %v1491 = vld [vmem:[%s1490] sm:$0x3]
      %v1493 = vlaneseq
      %v1494 = vshrl.u32 %v1493, 7
      %v1495 = vsub.s32 0, %v1494
      %v1496 = vrot.slane %v1491, %v1495
      %v1497 = vlaneseq
      %v1498 = vshrl.u32 %v1497, 7
      %v1499 = vsub.s32 1, %v1498
      %v1500 = vrot.slane %v1491, %v1499
      %v1503 = vmul.f32 %v1488, %v1496
      %v1504 = vmul.f32 %v1489, %v1500
      %s1505 = scalar_lea.vmem %s6, 56
      %v1506 = vld [vmem:[%s1505] sm:$0xf]
      %v1507 = vld [vmem:[%s1505 + $0x4] sm:$0xf]
      %v1508 = vpack.c.bf16 %v1503, %v1503
      %v1509 = vpack.c.bf16 %v1504, %v1504
      %v1512 = vunpack.c.l.b16 %v1506
      %v1513 = vunpack.c.l.b16 %v1507
      %v1514 = vpack.c.b16 %v1513, %v1512
      %v1516 = vsel %vm939, %v1514, 0
      %v1519 = vsel %vm943, %v1508, 0
      %v1522 = vsel %vm943, %v1509, 0
      %1524 = vmatprep.subr.bf16.mxu0 0
      %1525 = vmatpush1.bf16.msra.mxu0 0
      %1526 = vmatprep.subr.bf16.mxu0 0
      %1527 = vmatpush1.bf16.msra.mxu0 0
      %1528 = vmatprep.subr.bf16.mxu0 0
      %1529 = vmatpush1.bf16.msra.mxu0 0
      %1530 = vmatprep.subr.bf16.mxu0 0
      %1531 = vmatpush1.bf16.msra.mxu0 0
      %1532 = vmatprep.subr.bf16.mxu0 0
      %1533 = vmatpush1.bf16.msra.mxu0 0
      %1534 = vmatprep.subr.bf16.mxu0 0
      %1535 = vmatpush1.bf16.msra.mxu0 0
      %1536 = vmatprep.subr.bf16.mxu0 0
      %1537 = vmatpush1.bf16.msra.mxu0 0
      %1538 = vmatprep.subr.bf16.mxu0 %v1522
      %1539 = vmatpush1.bf16.msra.mxu0 %v1519
      %1540 = vmatprep.subr.bf16.mxu0 0
      %1541 = vmatpush2.bf16.msra.mxu0 0
      %1542 = vmatprep.subr.bf16.mxu0 0
      %1543 = vmatpush2.bf16.msra.mxu0 0
      %1544 = vmatprep.subr.bf16.mxu0 0
      %1545 = vmatpush2.bf16.msra.mxu0 0
      %1546 = vmatprep.subr.bf16.mxu0 0
      %1547 = vmatpush2.bf16.msra.mxu0 0
      %1548 = vmatprep.subr.bf16.mxu0 0
      %1549 = vmatpush2.bf16.msra.mxu0 0
      %1550 = vmatprep.subr.bf16.mxu0 0
      %1551 = vmatpush2.bf16.msra.mxu0 0
      %1552 = vmatprep.subr.bf16.mxu0 0
      %1553 = vmatpush2.bf16.msra.mxu0 0
      %1554 = vmatprep.subr.bf16.mxu0 0
      %1555 = vmatpush2.bf16.msra.mxu0 0
      %1556 = vmatprep.mubr.bf16.mxu0 0
      %1557 = vmatmul.mubr.bf16.gmra.mxu0 %v1516
      %v1558 = vpop.f32.mrf.mxu0
      %v1559 = vadd.f32 0.0, %v1558
      %v1560 = vpop.f32.mrf.mxu0
      %v1561 = vadd.f32 0.0, %v1560
      %v1562 = vpop.f32.mrf.mxu0
      %v1563 = vadd.f32 0.0, %v1562
      %v1564 = vpop.f32.mrf.mxu0
      %v1565 = vadd.f32 0.0, %v1564
      %1566 = vdwg.mxu0
      %v1567 = vadd.f32 %v1479, %v1559
      %v1568 = vadd.f32 %v1480, %v1561
      %v1569 = vadd.f32 %v1481, %v1563
      %v1570 = vadd.f32 %v1482, %v1565
      %1571 = vrot.lane.b32.xlu0 %v878, 111
      %v1572 = vpop.permute.xlu0 %1571
      %1573 = vrot.lane.b32.xlu0 %v879, 111
      %v1574 = vpop.permute.xlu0 %1573
      %vm1575 = vcmp.lt.s32.totalorder %v885, 111
      %v1576 = vsel %vm1575, %v1572, %v1574
      %v1577 = vsel %vm1575, %v1574, %v1572
      %s1578 = scalar_lea.vmem %s3, 16
      %v1579 = vld [vmem:[%s1578] sm:$0x3]
      %v1581 = vlaneseq
      %v1582 = vshrl.u32 %v1581, 7
      %v1583 = vsub.s32 0, %v1582
      %v1584 = vrot.slane %v1579, %v1583
      %v1585 = vlaneseq
      %v1586 = vshrl.u32 %v1585, 7
      %v1587 = vsub.s32 1, %v1586
      %v1588 = vrot.slane %v1579, %v1587
      %v1591 = vmul.f32 %v1576, %v1584
      %v1592 = vmul.f32 %v1577, %v1588
      %s1593 = scalar_lea.vmem %s6, 64
      %v1594 = vld [vmem:[%s1593] sm:$0xf]
      %v1595 = vld [vmem:[%s1593 + $0x4] sm:$0xf]
      %v1596 = vpack.c.bf16 %v1591, %v1591
      %v1597 = vpack.c.bf16 %v1592, %v1592
      %v1600 = vunpack.c.l.b16 %v1594
      %v1601 = vunpack.c.l.b16 %v1595
      %v1602 = vpack.c.b16 %v1601, %v1600
      %v1604 = vsel %vm939, %v1602, 0
      %v1607 = vsel %vm943, %v1596, 0
      %v1610 = vsel %vm943, %v1597, 0
      %1612 = vmatprep.subr.bf16.mxu0 0
      %1613 = vmatpush1.bf16.msra.mxu0 0
      %1614 = vmatprep.subr.bf16.mxu0 0
      %1615 = vmatpush1.bf16.msra.mxu0 0
      %1616 = vmatprep.subr.bf16.mxu0 0
      %1617 = vmatpush1.bf16.msra.mxu0 0
      %1618 = vmatprep.subr.bf16.mxu0 0
      %1619 = vmatpush1.bf16.msra.mxu0 0
      %1620 = vmatprep.subr.bf16.mxu0 0
      %1621 = vmatpush1.bf16.msra.mxu0 0
      %1622 = vmatprep.subr.bf16.mxu0 0
      %1623 = vmatpush1.bf16.msra.mxu0 0
      %1624 = vmatprep.subr.bf16.mxu0 0
      %1625 = vmatpush1.bf16.msra.mxu0 0
      %1626 = vmatprep.subr.bf16.mxu0 %v1610
      %1627 = vmatpush1.bf16.msra.mxu0 %v1607
      %1628 = vmatprep.subr.bf16.mxu0 0
      %1629 = vmatpush2.bf16.msra.mxu0 0
      %1630 = vmatprep.subr.bf16.mxu0 0
      %1631 = vmatpush2.bf16.msra.mxu0 0
      %1632 = vmatprep.subr.bf16.mxu0 0
      %1633 = vmatpush2.bf16.msra.mxu0 0
      %1634 = vmatprep.subr.bf16.mxu0 0
      %1635 = vmatpush2.bf16.msra.mxu0 0
      %1636 = vmatprep.subr.bf16.mxu0 0
      %1637 = vmatpush2.bf16.msra.mxu0 0
      %1638 = vmatprep.subr.bf16.mxu0 0
      %1639 = vmatpush2.bf16.msra.mxu0 0
      %1640 = vmatprep.subr.bf16.mxu0 0
      %1641 = vmatpush2.bf16.msra.mxu0 0
      %1642 = vmatprep.subr.bf16.mxu0 0
      %1643 = vmatpush2.bf16.msra.mxu0 0
      %1644 = vmatprep.mubr.bf16.mxu0 0
      %1645 = vmatmul.mubr.bf16.gmra.mxu0 %v1604
      %v1646 = vpop.f32.mrf.mxu0
      %v1647 = vadd.f32 0.0, %v1646
      %v1648 = vpop.f32.mrf.mxu0
      %v1649 = vadd.f32 0.0, %v1648
      %v1650 = vpop.f32.mrf.mxu0
      %v1651 = vadd.f32 0.0, %v1650
      %v1652 = vpop.f32.mrf.mxu0
      %v1653 = vadd.f32 0.0, %v1652
      %1654 = vdwg.mxu0
      %v1655 = vadd.f32 %v1567, %v1647
      %v1656 = vadd.f32 %v1568, %v1649
      %v1657 = vadd.f32 %v1569, %v1651
      %v1658 = vadd.f32 %v1570, %v1653
      %1659 = vrot.lane.b32.xlu0 %v872, 17
      %v1660 = vpop.permute.xlu0 %1659
      %1661 = vrot.lane.b32.xlu0 %v874, 17
      %v1662 = vpop.permute.xlu0 %1661
      %v1663 = vsel %vm886, %v1660, %v1662
      %v1664 = vsel %vm886, %v1662, %v1660
      %v1665 = vmul.f32 %v1664, %v894
      %v1666 = vmul.f32 %v1663, %v898
      %v1667 = vld [vmem:[%s7] sm:$0xf]
      %v1668 = vld [vmem:[%s7 + $0x4] sm:$0xf]
      %v1669 = vpack.c.bf16 %v1665, %v1665
      %v1670 = vpack.c.bf16 %v1666, %v1666
      %1671 = vrot.lane.b32.xlu0 %v872, 16
      %v1672 = vpop.permute.xlu0 %1671
      %1673 = vrot.lane.b32.xlu0 %v874, 16
      %v1674 = vpop.permute.xlu0 %1673
      %v1675 = vsel %vm911, %v1672, %v1674
      %v1676 = vsel %vm911, %v1674, %v1672
      %v1677 = vmul.f32 %v1676, %v920
      %v1678 = vmul.f32 %v1675, %v924
      %s1679 = scalar_lea.vmem %s7, 8
      %v1680 = vld [vmem:[%s1679] sm:$0xf]
      %v1681 = vld [vmem:[%s1679 + $0x4] sm:$0xf]
      %v1682 = vpack.c.bf16 %v1677, %v1677
      %v1683 = vpack.c.bf16 %v1678, %v1678
      %v1686 = vunpack.c.l.b16 %v1680
      %v1687 = vunpack.c.l.b16 %v1681
      %v1688 = vpack.c.b16 %v1687, %v1686
      %v1690 = vsel %vm939, %v1688, 0
      %v1693 = vsel %vm943, %v1682, 0
      %v1696 = vsel %vm943, %v1683, 0
      %1698 = vmatprep.subr.bf16.mxu0 0
      %1699 = vmatpush1.bf16.msra.mxu0 0
      %1700 = vmatprep.subr.bf16.mxu0 0
      %1701 = vmatpush1.bf16.msra.mxu0 0
      %1702 = vmatprep.subr.bf16.mxu0 0
      %1703 = vmatpush1.bf16.msra.mxu0 0
      %1704 = vmatprep.subr.bf16.mxu0 0
      %1705 = vmatpush1.bf16.msra.mxu0 0
      %1706 = vmatprep.subr.bf16.mxu0 0
      %1707 = vmatpush1.bf16.msra.mxu0 0
      %1708 = vmatprep.subr.bf16.mxu0 0
      %1709 = vmatpush1.bf16.msra.mxu0 0
      %1710 = vmatprep.subr.bf16.mxu0 0
      %1711 = vmatpush1.bf16.msra.mxu0 0
      %1712 = vmatprep.subr.bf16.mxu0 %v1696
      %1713 = vmatpush1.bf16.msra.mxu0 %v1693
      %1714 = vmatprep.subr.bf16.mxu0 0
      %1715 = vmatpush2.bf16.msra.mxu0 0
      %1716 = vmatprep.subr.bf16.mxu0 0
      %1717 = vmatpush2.bf16.msra.mxu0 0
      %1718 = vmatprep.subr.bf16.mxu0 0
      %1719 = vmatpush2.bf16.msra.mxu0 0
      %1720 = vmatprep.subr.bf16.mxu0 0
      %1721 = vmatpush2.bf16.msra.mxu0 0
      %1722 = vmatprep.subr.bf16.mxu0 0
      %1723 = vmatpush2.bf16.msra.mxu0 0
      %1724 = vmatprep.subr.bf16.mxu0 0
      %1725 = vmatpush2.bf16.msra.mxu0 0
      %1726 = vmatprep.subr.bf16.mxu0 0
      %1727 = vmatpush2.bf16.msra.mxu0 0
      %1728 = vmatprep.subr.bf16.mxu0 0
      %1729 = vmatpush2.bf16.msra.mxu0 0
      %1730 = vmatprep.mubr.bf16.mxu0 0
      %1731 = vmatmul.mubr.bf16.gmra.mxu0 %v1690
      %v1732 = vpop.f32.mrf.mxu0
      %v1733 = vadd.f32 0.0, %v1732
      %v1734 = vpop.f32.mrf.mxu0
      %v1735 = vadd.f32 0.0, %v1734
      %v1736 = vpop.f32.mrf.mxu0
      %v1737 = vadd.f32 0.0, %v1736
      %v1738 = vpop.f32.mrf.mxu0
      %v1739 = vadd.f32 0.0, %v1738
      %1740 = vdwg.mxu0
      %v1743 = vunpack.c.l.b16 %v1667
      %v1744 = vunpack.c.l.b16 %v1668
      %v1745 = vpack.c.b16 %v1744, %v1743
      %v1747 = vsel %vm939, %v1745, 0
      %v1750 = vsel %vm943, %v1669, 0
      %v1753 = vsel %vm943, %v1670, 0
      %1755 = vmatprep.subr.bf16.mxu0 0
      %1756 = vmatpush1.bf16.msra.mxu0 0
      %1757 = vmatprep.subr.bf16.mxu0 0
      %1758 = vmatpush1.bf16.msra.mxu0 0
      %1759 = vmatprep.subr.bf16.mxu0 0
      %1760 = vmatpush1.bf16.msra.mxu0 0
      %1761 = vmatprep.subr.bf16.mxu0 0
      %1762 = vmatpush1.bf16.msra.mxu0 0
      %1763 = vmatprep.subr.bf16.mxu0 0
      %1764 = vmatpush1.bf16.msra.mxu0 0
      %1765 = vmatprep.subr.bf16.mxu0 0
      %1766 = vmatpush1.bf16.msra.mxu0 0
      %1767 = vmatprep.subr.bf16.mxu0 0
      %1768 = vmatpush1.bf16.msra.mxu0 0
      %1769 = vmatprep.subr.bf16.mxu0 %v1753
      %1770 = vmatpush1.bf16.msra.mxu0 %v1750
      %1771 = vmatprep.subr.bf16.mxu0 0
      %1772 = vmatpush2.bf16.msra.mxu0 0
      %1773 = vmatprep.subr.bf16.mxu0 0
      %1774 = vmatpush2.bf16.msra.mxu0 0
      %1775 = vmatprep.subr.bf16.mxu0 0
      %1776 = vmatpush2.bf16.msra.mxu0 0
      %1777 = vmatprep.subr.bf16.mxu0 0
      %1778 = vmatpush2.bf16.msra.mxu0 0
      %1779 = vmatprep.subr.bf16.mxu0 0
      %1780 = vmatpush2.bf16.msra.mxu0 0
      %1781 = vmatprep.subr.bf16.mxu0 0
      %1782 = vmatpush2.bf16.msra.mxu0 0
      %1783 = vmatprep.subr.bf16.mxu0 0
      %1784 = vmatpush2.bf16.msra.mxu0 0
      %1785 = vmatprep.subr.bf16.mxu0 0
      %1786 = vmatpush2.bf16.msra.mxu0 0
      %1787 = vmatprep.mubr.bf16.mxu0 0
      %1788 = vmatmul.mubr.bf16.gmra.mxu0 %v1747
      %v1789 = vpop.f32.mrf.mxu0
      %v1790 = vadd.f32 %v1733, %v1789
      %v1791 = vpop.f32.mrf.mxu0
      %v1792 = vadd.f32 %v1735, %v1791
      %v1793 = vpop.f32.mrf.mxu0
      %v1794 = vadd.f32 %v1737, %v1793
      %v1795 = vpop.f32.mrf.mxu0
      %v1796 = vadd.f32 %v1739, %v1795
      %1797 = vdwg.mxu0
      %1798 = vrot.lane.b32.xlu0 %v872, 15
      %v1799 = vpop.permute.xlu0 %1798
      %1800 = vrot.lane.b32.xlu0 %v874, 15
      %v1801 = vpop.permute.xlu0 %1800
      %v1802 = vsel %vm1054, %v1799, %v1801
      %v1803 = vsel %vm1054, %v1801, %v1799
      %v1804 = vmul.f32 %v1803, %v1063
      %v1805 = vmul.f32 %v1802, %v1067
      %s1806 = scalar_lea.vmem %s7, 16
      %v1807 = vld [vmem:[%s1806] sm:$0xf]
      %v1808 = vld [vmem:[%s1806 + $0x4] sm:$0xf]
      %v1809 = vpack.c.bf16 %v1804, %v1804
      %v1810 = vpack.c.bf16 %v1805, %v1805
      %v1813 = vunpack.c.l.b16 %v1807
      %v1814 = vunpack.c.l.b16 %v1808
      %v1815 = vpack.c.b16 %v1814, %v1813
      %v1817 = vsel %vm939, %v1815, 0
      %v1820 = vsel %vm943, %v1809, 0
      %v1823 = vsel %vm943, %v1810, 0
      %1825 = vmatprep.subr.bf16.mxu0 0
      %1826 = vmatpush1.bf16.msra.mxu0 0
      %1827 = vmatprep.subr.bf16.mxu0 0
      %1828 = vmatpush1.bf16.msra.mxu0 0
      %1829 = vmatprep.subr.bf16.mxu0 0
      %1830 = vmatpush1.bf16.msra.mxu0 0
      %1831 = vmatprep.subr.bf16.mxu0 0
      %1832 = vmatpush1.bf16.msra.mxu0 0
      %1833 = vmatprep.subr.bf16.mxu0 0
      %1834 = vmatpush1.bf16.msra.mxu0 0
      %1835 = vmatprep.subr.bf16.mxu0 0
      %1836 = vmatpush1.bf16.msra.mxu0 0
      %1837 = vmatprep.subr.bf16.mxu0 0
      %1838 = vmatpush1.bf16.msra.mxu0 0
      %1839 = vmatprep.subr.bf16.mxu0 %v1823
      %1840 = vmatpush1.bf16.msra.mxu0 %v1820
      %1841 = vmatprep.subr.bf16.mxu0 0
      %1842 = vmatpush2.bf16.msra.mxu0 0
      %1843 = vmatprep.subr.bf16.mxu0 0
      %1844 = vmatpush2.bf16.msra.mxu0 0
      %1845 = vmatprep.subr.bf16.mxu0 0
      %1846 = vmatpush2.bf16.msra.mxu0 0
      %1847 = vmatprep.subr.bf16.mxu0 0
      %1848 = vmatpush2.bf16.msra.mxu0 0
      %1849 = vmatprep.subr.bf16.mxu0 0
      %1850 = vmatpush2.bf16.msra.mxu0 0
      %1851 = vmatprep.subr.bf16.mxu0 0
      %1852 = vmatpush2.bf16.msra.mxu0 0
      %1853 = vmatprep.subr.bf16.mxu0 0
      %1854 = vmatpush2.bf16.msra.mxu0 0
      %1855 = vmatprep.subr.bf16.mxu0 0
      %1856 = vmatpush2.bf16.msra.mxu0 0
      %1857 = vmatprep.mubr.bf16.mxu0 0
      %1858 = vmatmul.mubr.bf16.gmra.mxu0 %v1817
      %v1859 = vpop.f32.mrf.mxu0
      %v1860 = vadd.f32 0.0, %v1859
      %v1861 = vpop.f32.mrf.mxu0
      %v1862 = vadd.f32 0.0, %v1861
      %v1863 = vpop.f32.mrf.mxu0
      %v1864 = vadd.f32 0.0, %v1863
      %v1865 = vpop.f32.mrf.mxu0
      %v1866 = vadd.f32 0.0, %v1865
      %1867 = vdwg.mxu0
      %v1868 = vadd.f32 %v1790, %v1860
      %v1869 = vadd.f32 %v1792, %v1862
      %v1870 = vadd.f32 %v1794, %v1864
      %v1871 = vadd.f32 %v1796, %v1866
      %1872 = vrot.lane.b32.xlu0 %v872, 1
      %v1873 = vpop.permute.xlu0 %1872
      %1874 = vrot.lane.b32.xlu0 %v874, 1
      %v1875 = vpop.permute.xlu0 %1874
      %v1876 = vsel %vm1142, %v1873, %v1875
      %v1877 = vsel %vm1142, %v1875, %v1873
      %v1878 = vmul.f32 %v1877, %v1151
      %v1879 = vmul.f32 %v1876, %v1155
      %s1880 = scalar_lea.vmem %s7, 24
      %v1881 = vld [vmem:[%s1880] sm:$0xf]
      %v1882 = vld [vmem:[%s1880 + $0x4] sm:$0xf]
      %v1883 = vpack.c.bf16 %v1878, %v1878
      %v1884 = vpack.c.bf16 %v1879, %v1879
      %v1887 = vunpack.c.l.b16 %v1881
      %v1888 = vunpack.c.l.b16 %v1882
      %v1889 = vpack.c.b16 %v1888, %v1887
      %v1891 = vsel %vm939, %v1889, 0
      %v1894 = vsel %vm943, %v1883, 0
      %v1897 = vsel %vm943, %v1884, 0
      %1899 = vmatprep.subr.bf16.mxu0 0
      %1900 = vmatpush1.bf16.msra.mxu0 0
      %1901 = vmatprep.subr.bf16.mxu0 0
      %1902 = vmatpush1.bf16.msra.mxu0 0
      %1903 = vmatprep.subr.bf16.mxu0 0
      %1904 = vmatpush1.bf16.msra.mxu0 0
      %1905 = vmatprep.subr.bf16.mxu0 0
      %1906 = vmatpush1.bf16.msra.mxu0 0
      %1907 = vmatprep.subr.bf16.mxu0 0
      %1908 = vmatpush1.bf16.msra.mxu0 0
      %1909 = vmatprep.subr.bf16.mxu0 0
      %1910 = vmatpush1.bf16.msra.mxu0 0
      %1911 = vmatprep.subr.bf16.mxu0 0
      %1912 = vmatpush1.bf16.msra.mxu0 0
      %1913 = vmatprep.subr.bf16.mxu0 %v1897
      %1914 = vmatpush1.bf16.msra.mxu0 %v1894
      %1915 = vmatprep.subr.bf16.mxu0 0
      %1916 = vmatpush2.bf16.msra.mxu0 0
      %1917 = vmatprep.subr.bf16.mxu0 0
      %1918 = vmatpush2.bf16.msra.mxu0 0
      %1919 = vmatprep.subr.bf16.mxu0 0
      %1920 = vmatpush2.bf16.msra.mxu0 0
      %1921 = vmatprep.subr.bf16.mxu0 0
      %1922 = vmatpush2.bf16.msra.mxu0 0
      %1923 = vmatprep.subr.bf16.mxu0 0
      %1924 = vmatpush2.bf16.msra.mxu0 0
      %1925 = vmatprep.subr.bf16.mxu0 0
      %1926 = vmatpush2.bf16.msra.mxu0 0
      %1927 = vmatprep.subr.bf16.mxu0 0
      %1928 = vmatpush2.bf16.msra.mxu0 0
      %1929 = vmatprep.subr.bf16.mxu0 0
      %1930 = vmatpush2.bf16.msra.mxu0 0
      %1931 = vmatprep.mubr.bf16.mxu0 0
      %1932 = vmatmul.mubr.bf16.gmra.mxu0 %v1891
      %v1933 = vpop.f32.mrf.mxu0
      %v1934 = vadd.f32 0.0, %v1933
      %v1935 = vpop.f32.mrf.mxu0
      %v1936 = vadd.f32 0.0, %v1935
      %v1937 = vpop.f32.mrf.mxu0
      %v1938 = vadd.f32 0.0, %v1937
      %v1939 = vpop.f32.mrf.mxu0
      %v1940 = vadd.f32 0.0, %v1939
      %1941 = vdwg.mxu0
      %v1942 = vadd.f32 %v1868, %v1934
      %v1943 = vadd.f32 %v1869, %v1936
      %v1944 = vadd.f32 %v1870, %v1938
      %v1945 = vadd.f32 %v1871, %v1940
      %v1946 = vmul.f32 %v872, %v1232
      %v1947 = vmul.f32 %v874, %v1236
      %s1948 = scalar_lea.vmem %s7, 32
      %v1949 = vld [vmem:[%s1948] sm:$0xf]
      %v1950 = vld [vmem:[%s1948 + $0x4] sm:$0xf]
      %v1951 = vpack.c.bf16 %v1946, %v1946
      %v1952 = vpack.c.bf16 %v1947, %v1947
      %v1955 = vunpack.c.l.b16 %v1949
      %v1956 = vunpack.c.l.b16 %v1950
      %v1957 = vpack.c.b16 %v1956, %v1955
      %v1959 = vsel %vm939, %v1957, 0
      %v1962 = vsel %vm943, %v1951, 0
      %v1965 = vsel %vm943, %v1952, 0
      %1967 = vmatprep.subr.bf16.mxu0 0
      %1968 = vmatpush1.bf16.msra.mxu0 0
      %1969 = vmatprep.subr.bf16.mxu0 0
      %1970 = vmatpush1.bf16.msra.mxu0 0
      %1971 = vmatprep.subr.bf16.mxu0 0
      %1972 = vmatpush1.bf16.msra.mxu0 0
      %1973 = vmatprep.subr.bf16.mxu0 0
      %1974 = vmatpush1.bf16.msra.mxu0 0
      %1975 = vmatprep.subr.bf16.mxu0 0
      %1976 = vmatpush1.bf16.msra.mxu0 0
      %1977 = vmatprep.subr.bf16.mxu0 0
      %1978 = vmatpush1.bf16.msra.mxu0 0
      %1979 = vmatprep.subr.bf16.mxu0 0
      %1980 = vmatpush1.bf16.msra.mxu0 0
      %1981 = vmatprep.subr.bf16.mxu0 %v1965
      %1982 = vmatpush1.bf16.msra.mxu0 %v1962
      %1983 = vmatprep.subr.bf16.mxu0 0
      %1984 = vmatpush2.bf16.msra.mxu0 0
      %1985 = vmatprep.subr.bf16.mxu0 0
      %1986 = vmatpush2.bf16.msra.mxu0 0
      %1987 = vmatprep.subr.bf16.mxu0 0
      %1988 = vmatpush2.bf16.msra.mxu0 0
      %1989 = vmatprep.subr.bf16.mxu0 0
      %1990 = vmatpush2.bf16.msra.mxu0 0
      %1991 = vmatprep.subr.bf16.mxu0 0
      %1992 = vmatpush2.bf16.msra.mxu0 0
      %1993 = vmatprep.subr.bf16.mxu0 0
      %1994 = vmatpush2.bf16.msra.mxu0 0
      %1995 = vmatprep.subr.bf16.mxu0 0
      %1996 = vmatpush2.bf16.msra.mxu0 0
      %1997 = vmatprep.subr.bf16.mxu0 0
      %1998 = vmatpush2.bf16.msra.mxu0 0
      %1999 = vmatprep.mubr.bf16.mxu0 0
      %2000 = vmatmul.mubr.bf16.gmra.mxu0 %v1959
      %v2001 = vpop.f32.mrf.mxu0
      %v2002 = vadd.f32 0.0, %v2001
      %v2003 = vpop.f32.mrf.mxu0
      %v2004 = vadd.f32 0.0, %v2003
      %v2005 = vpop.f32.mrf.mxu0
      %v2006 = vadd.f32 0.0, %v2005
      %v2007 = vpop.f32.mrf.mxu0
      %v2008 = vadd.f32 0.0, %v2007
      %2009 = vdwg.mxu0
      %v2010 = vadd.f32 %v1942, %v2002
      %v2011 = vadd.f32 %v1943, %v2004
      %v2012 = vadd.f32 %v1944, %v2006
      %v2013 = vadd.f32 %v1945, %v2008
      %2014 = vrot.lane.b32.xlu0 %v872, 127
      %v2015 = vpop.permute.xlu0 %2014
      %2016 = vrot.lane.b32.xlu0 %v874, 127
      %v2017 = vpop.permute.xlu0 %2016
      %v2018 = vsel %vm1311, %v2015, %v2017
      %v2019 = vsel %vm1311, %v2017, %v2015
      %v2020 = vmul.f32 %v2018, %v1320
      %v2021 = vmul.f32 %v2019, %v1324
      %s2022 = scalar_lea.vmem %s7, 40
      %v2023 = vld [vmem:[%s2022] sm:$0xf]
      %v2024 = vld [vmem:[%s2022 + $0x4] sm:$0xf]
      %v2025 = vpack.c.bf16 %v2020, %v2020
      %v2026 = vpack.c.bf16 %v2021, %v2021
      %v2029 = vunpack.c.l.b16 %v2023
      %v2030 = vunpack.c.l.b16 %v2024
      %v2031 = vpack.c.b16 %v2030, %v2029
      %v2033 = vsel %vm939, %v2031, 0
      %v2036 = vsel %vm943, %v2025, 0
      %v2039 = vsel %vm943, %v2026, 0
      %2041 = vmatprep.subr.bf16.mxu0 0
      %2042 = vmatpush1.bf16.msra.mxu0 0
      %2043 = vmatprep.subr.bf16.mxu0 0
      %2044 = vmatpush1.bf16.msra.mxu0 0
      %2045 = vmatprep.subr.bf16.mxu0 0
      %2046 = vmatpush1.bf16.msra.mxu0 0
      %2047 = vmatprep.subr.bf16.mxu0 0
      %2048 = vmatpush1.bf16.msra.mxu0 0
      %2049 = vmatprep.subr.bf16.mxu0 0
      %2050 = vmatpush1.bf16.msra.mxu0 0
      %2051 = vmatprep.subr.bf16.mxu0 0
      %2052 = vmatpush1.bf16.msra.mxu0 0
      %2053 = vmatprep.subr.bf16.mxu0 0
      %2054 = vmatpush1.bf16.msra.mxu0 0
      %2055 = vmatprep.subr.bf16.mxu0 %v2039
      %2056 = vmatpush1.bf16.msra.mxu0 %v2036
      %2057 = vmatprep.subr.bf16.mxu0 0
      %2058 = vmatpush2.bf16.msra.mxu0 0
      %2059 = vmatprep.subr.bf16.mxu0 0
      %2060 = vmatpush2.bf16.msra.mxu0 0
      %2061 = vmatprep.subr.bf16.mxu0 0
      %2062 = vmatpush2.bf16.msra.mxu0 0
      %2063 = vmatprep.subr.bf16.mxu0 0
      %2064 = vmatpush2.bf16.msra.mxu0 0
      %2065 = vmatprep.subr.bf16.mxu0 0
      %2066 = vmatpush2.bf16.msra.mxu0 0
      %2067 = vmatprep.subr.bf16.mxu0 0
      %2068 = vmatpush2.bf16.msra.mxu0 0
      %2069 = vmatprep.subr.bf16.mxu0 0
      %2070 = vmatpush2.bf16.msra.mxu0 0
      %2071 = vmatprep.subr.bf16.mxu0 0
      %2072 = vmatpush2.bf16.msra.mxu0 0
      %2073 = vmatprep.mubr.bf16.mxu0 0
      %2074 = vmatmul.mubr.bf16.gmra.mxu0 %v2033
      %v2075 = vpop.f32.mrf.mxu0
      %v2076 = vadd.f32 0.0, %v2075
      %v2077 = vpop.f32.mrf.mxu0
      %v2078 = vadd.f32 0.0, %v2077
      %v2079 = vpop.f32.mrf.mxu0
      %v2080 = vadd.f32 0.0, %v2079
      %v2081 = vpop.f32.mrf.mxu0
      %v2082 = vadd.f32 0.0, %v2081
      %2083 = vdwg.mxu0
      %v2084 = vadd.f32 %v2010, %v2076
      %v2085 = vadd.f32 %v2011, %v2078
      %v2086 = vadd.f32 %v2012, %v2080
      %v2087 = vadd.f32 %v2013, %v2082
      %2088 = vrot.lane.b32.xlu0 %v872, 113
      %v2089 = vpop.permute.xlu0 %2088
      %2090 = vrot.lane.b32.xlu0 %v874, 113
      %v2091 = vpop.permute.xlu0 %2090
      %v2092 = vsel %vm1399, %v2089, %v2091
      %v2093 = vsel %vm1399, %v2091, %v2089
      %v2094 = vmul.f32 %v2092, %v1408
      %v2095 = vmul.f32 %v2093, %v1412
      %s2096 = scalar_lea.vmem %s7, 48
      %v2097 = vld [vmem:[%s2096] sm:$0xf]
      %v2098 = vld [vmem:[%s2096 + $0x4] sm:$0xf]
      %v2099 = vpack.c.bf16 %v2094, %v2094
      %v2100 = vpack.c.bf16 %v2095, %v2095
      %v2103 = vunpack.c.l.b16 %v2097
      %v2104 = vunpack.c.l.b16 %v2098
      %v2105 = vpack.c.b16 %v2104, %v2103
      %v2107 = vsel %vm939, %v2105, 0
      %v2110 = vsel %vm943, %v2099, 0
      %v2113 = vsel %vm943, %v2100, 0
      %2115 = vmatprep.subr.bf16.mxu0 0
      %2116 = vmatpush1.bf16.msra.mxu0 0
      %2117 = vmatprep.subr.bf16.mxu0 0
      %2118 = vmatpush1.bf16.msra.mxu0 0
      %2119 = vmatprep.subr.bf16.mxu0 0
      %2120 = vmatpush1.bf16.msra.mxu0 0
      %2121 = vmatprep.subr.bf16.mxu0 0
      %2122 = vmatpush1.bf16.msra.mxu0 0
      %2123 = vmatprep.subr.bf16.mxu0 0
      %2124 = vmatpush1.bf16.msra.mxu0 0
      %2125 = vmatprep.subr.bf16.mxu0 0
      %2126 = vmatpush1.bf16.msra.mxu0 0
      %2127 = vmatprep.subr.bf16.mxu0 0
      %2128 = vmatpush1.bf16.msra.mxu0 0
      %2129 = vmatprep.subr.bf16.mxu0 %v2113
      %2130 = vmatpush1.bf16.msra.mxu0 %v2110
      %2131 = vmatprep.subr.bf16.mxu0 0
      %2132 = vmatpush2.bf16.msra.mxu0 0
      %2133 = vmatprep.subr.bf16.mxu0 0
      %2134 = vmatpush2.bf16.msra.mxu0 0
      %2135 = vmatprep.subr.bf16.mxu0 0
      %2136 = vmatpush2.bf16.msra.mxu0 0
      %2137 = vmatprep.subr.bf16.mxu0 0
      %2138 = vmatpush2.bf16.msra.mxu0 0
      %2139 = vmatprep.subr.bf16.mxu0 0
      %2140 = vmatpush2.bf16.msra.mxu0 0
      %2141 = vmatprep.subr.bf16.mxu0 0
      %2142 = vmatpush2.bf16.msra.mxu0 0
      %2143 = vmatprep.subr.bf16.mxu0 0
      %2144 = vmatpush2.bf16.msra.mxu0 0
      %2145 = vmatprep.subr.bf16.mxu0 0
      %2146 = vmatpush2.bf16.msra.mxu0 0
      %2147 = vmatprep.mubr.bf16.mxu0 0
      %2148 = vmatmul.mubr.bf16.gmra.mxu0 %v2107
      %v2149 = vpop.f32.mrf.mxu0
      %v2150 = vadd.f32 0.0, %v2149
      %v2151 = vpop.f32.mrf.mxu0
      %v2152 = vadd.f32 0.0, %v2151
      %v2153 = vpop.f32.mrf.mxu0
      %v2154 = vadd.f32 0.0, %v2153
      %v2155 = vpop.f32.mrf.mxu0
      %v2156 = vadd.f32 0.0, %v2155
      %2157 = vdwg.mxu0
      %v2158 = vadd.f32 %v2084, %v2150
      %v2159 = vadd.f32 %v2085, %v2152
      %v2160 = vadd.f32 %v2086, %v2154
      %v2161 = vadd.f32 %v2087, %v2156
      %2162 = vrot.lane.b32.xlu0 %v872, 112
      %v2163 = vpop.permute.xlu0 %2162
      %2164 = vrot.lane.b32.xlu0 %v874, 112
      %v2165 = vpop.permute.xlu0 %2164
      %v2166 = vsel %vm1487, %v2163, %v2165
      %v2167 = vsel %vm1487, %v2165, %v2163
      %v2168 = vmul.f32 %v2166, %v1496
      %v2169 = vmul.f32 %v2167, %v1500
      %s2170 = scalar_lea.vmem %s7, 56
      %v2171 = vld [vmem:[%s2170] sm:$0xf]
      %v2172 = vld [vmem:[%s2170 + $0x4] sm:$0xf]
      %v2173 = vpack.c.bf16 %v2168, %v2168
      %v2174 = vpack.c.bf16 %v2169, %v2169
      %v2177 = vunpack.c.l.b16 %v2171
      %v2178 = vunpack.c.l.b16 %v2172
      %v2179 = vpack.c.b16 %v2178, %v2177
      %v2181 = vsel %vm939, %v2179, 0
      %v2184 = vsel %vm943, %v2173, 0
      %v2187 = vsel %vm943, %v2174, 0
      %2189 = vmatprep.subr.bf16.mxu0 0
      %2190 = vmatpush1.bf16.msra.mxu0 0
      %2191 = vmatprep.subr.bf16.mxu0 0
      %2192 = vmatpush1.bf16.msra.mxu0 0
      %2193 = vmatprep.subr.bf16.mxu0 0
      %2194 = vmatpush1.bf16.msra.mxu0 0
      %2195 = vmatprep.subr.bf16.mxu0 0
      %2196 = vmatpush1.bf16.msra.mxu0 0
      %2197 = vmatprep.subr.bf16.mxu0 0
      %2198 = vmatpush1.bf16.msra.mxu0 0
      %2199 = vmatprep.subr.bf16.mxu0 0
      %2200 = vmatpush1.bf16.msra.mxu0 0
      %2201 = vmatprep.subr.bf16.mxu0 0
      %2202 = vmatpush1.bf16.msra.mxu0 0
      %2203 = vmatprep.subr.bf16.mxu0 %v2187
      %2204 = vmatpush1.bf16.msra.mxu0 %v2184
      %2205 = vmatprep.subr.bf16.mxu0 0
      %2206 = vmatpush2.bf16.msra.mxu0 0
      %2207 = vmatprep.subr.bf16.mxu0 0
      %2208 = vmatpush2.bf16.msra.mxu0 0
      %2209 = vmatprep.subr.bf16.mxu0 0
      %2210 = vmatpush2.bf16.msra.mxu0 0
      %2211 = vmatprep.subr.bf16.mxu0 0
      %2212 = vmatpush2.bf16.msra.mxu0 0
      %2213 = vmatprep.subr.bf16.mxu0 0
      %2214 = vmatpush2.bf16.msra.mxu0 0
      %2215 = vmatprep.subr.bf16.mxu0 0
      %2216 = vmatpush2.bf16.msra.mxu0 0
      %2217 = vmatprep.subr.bf16.mxu0 0
      %2218 = vmatpush2.bf16.msra.mxu0 0
      %2219 = vmatprep.subr.bf16.mxu0 0
      %2220 = vmatpush2.bf16.msra.mxu0 0
      %2221 = vmatprep.mubr.bf16.mxu0 0
      %2222 = vmatmul.mubr.bf16.gmra.mxu0 %v2181
      %v2223 = vpop.f32.mrf.mxu0
      %v2224 = vadd.f32 0.0, %v2223
      %v2225 = vpop.f32.mrf.mxu0
      %v2226 = vadd.f32 0.0, %v2225
      %v2227 = vpop.f32.mrf.mxu0
      %v2228 = vadd.f32 0.0, %v2227
      %v2229 = vpop.f32.mrf.mxu0
      %v2230 = vadd.f32 0.0, %v2229
      %2231 = vdwg.mxu0
      %v2232 = vadd.f32 %v2158, %v2224
      %v2233 = vadd.f32 %v2159, %v2226
      %v2234 = vadd.f32 %v2160, %v2228
      %v2235 = vadd.f32 %v2161, %v2230
      %2236 = vrot.lane.b32.xlu0 %v872, 111
      %v2237 = vpop.permute.xlu0 %2236
      %2238 = vrot.lane.b32.xlu0 %v874, 111
      %v2239 = vpop.permute.xlu0 %2238
      %v2240 = vsel %vm1575, %v2237, %v2239
      %v2241 = vsel %vm1575, %v2239, %v2237
      %v2242 = vmul.f32 %v2240, %v1584
      %v2243 = vmul.f32 %v2241, %v1588
      %s2244 = scalar_lea.vmem %s7, 64
      %v2245 = vld [vmem:[%s2244] sm:$0xf]
      %v2246 = vld [vmem:[%s2244 + $0x4] sm:$0xf]
      %v2247 = vpack.c.bf16 %v2242, %v2242
      %v2248 = vpack.c.bf16 %v2243, %v2243
      %v2251 = vunpack.c.l.b16 %v2245
      %v2252 = vunpack.c.l.b16 %v2246
      %v2253 = vpack.c.b16 %v2252, %v2251
      %v2255 = vsel %vm939, %v2253, 0
      %v2258 = vsel %vm943, %v2247, 0
      %v2261 = vsel %vm943, %v2248, 0
      %2263 = vmatprep.subr.bf16.mxu0 0
      %2264 = vmatpush1.bf16.msra.mxu0 0
      %2265 = vmatprep.subr.bf16.mxu0 0
      %2266 = vmatpush1.bf16.msra.mxu0 0
      %2267 = vmatprep.subr.bf16.mxu0 0
      %2268 = vmatpush1.bf16.msra.mxu0 0
      %2269 = vmatprep.subr.bf16.mxu0 0
      %2270 = vmatpush1.bf16.msra.mxu0 0
      %2271 = vmatprep.subr.bf16.mxu0 0
      %2272 = vmatpush1.bf16.msra.mxu0 0
      %2273 = vmatprep.subr.bf16.mxu0 0
      %2274 = vmatpush1.bf16.msra.mxu0 0
      %2275 = vmatprep.subr.bf16.mxu0 0
      %2276 = vmatpush1.bf16.msra.mxu0 0
      %2277 = vmatprep.subr.bf16.mxu0 %v2261
      %2278 = vmatpush1.bf16.msra.mxu0 %v2258
      %2279 = vmatprep.subr.bf16.mxu0 0
      %2280 = vmatpush2.bf16.msra.mxu0 0
      %2281 = vmatprep.subr.bf16.mxu0 0
      %2282 = vmatpush2.bf16.msra.mxu0 0
      %2283 = vmatprep.subr.bf16.mxu0 0
      %2284 = vmatpush2.bf16.msra.mxu0 0
      %2285 = vmatprep.subr.bf16.mxu0 0
      %2286 = vmatpush2.bf16.msra.mxu0 0
      %2287 = vmatprep.subr.bf16.mxu0 0
      %2288 = vmatpush2.bf16.msra.mxu0 0
      %2289 = vmatprep.subr.bf16.mxu0 0
      %2290 = vmatpush2.bf16.msra.mxu0 0
      %2291 = vmatprep.subr.bf16.mxu0 0
      %2292 = vmatpush2.bf16.msra.mxu0 0
      %2293 = vmatprep.subr.bf16.mxu0 0
      %2294 = vmatpush2.bf16.msra.mxu0 0
      %2295 = vmatprep.mubr.bf16.mxu0 0
      %2296 = vmatmul.mubr.bf16.gmra.mxu0 %v2255
      %v2297 = vpop.f32.mrf.mxu0
      %v2298 = vadd.f32 0.0, %v2297
      %v2299 = vpop.f32.mrf.mxu0
      %v2300 = vadd.f32 0.0, %v2299
      %v2301 = vpop.f32.mrf.mxu0
      %v2302 = vadd.f32 0.0, %v2301
      %v2303 = vpop.f32.mrf.mxu0
      %v2304 = vadd.f32 0.0, %v2303
      %2305 = vdwg.mxu0
      %v2306 = vadd.f32 %v2232, %v2298
      %v2307 = vadd.f32 %v2233, %v2300
      %v2308 = vadd.f32 %v2234, %v2302
      %v2309 = vadd.f32 %v2235, %v2304
      %v2310 = vadd.f32 %v1655, %v2306
      %v2311 = vadd.f32 %v1656, %v2307
      %v2312 = vadd.f32 %v1657, %v2308
      %v2313 = vadd.f32 %v1658, %v2309
      %v2314 = vadd.f32 %v2310, %v2311
      %2315 = vadd.xlane.f32.xlu0 %v2314
      %v2316 = vpop.xlane.xlu0 %2315
      %v2317 = vadd.f32 %v2312, %v2313
      %2318 = vadd.xlane.f32.xlu0 %v2317
      %v2319 = vpop.xlane.xlu0 %2318
      %v2320 = vmul.f32 %v2310, %v2310
      %v2321 = vmul.f32 %v2311, %v2311
      %v2322 = vmul.f32 %v2312, %v2312
      %v2323 = vmul.f32 %v2313, %v2313
      %v2324 = vadd.f32 %v2320, %v2321
      %2325 = vadd.xlane.f32.xlu0 %v2324
      %v2326 = vpop.xlane.xlu0 %2325
      %v2327 = vadd.f32 %v2322, %v2323
      %2328 = vadd.xlane.f32.xlu0 %v2327
      %v2329 = vpop.xlane.xlu0 %2328
      %v2330 = vld [vmem:[%s5] sm:$0xff]
      %v2331 = vld [vmem:[%s5 + $0x8] sm:$0xff]
      %v2332 = vld [vmem:[%s4] sm:$0xff]
      %vm2333 = vcmask 130048
      %v2335 = vsel %vm2333, %v2332, 0
      %2337 = vmatprep.subr.mxu0 0.0
      %2338 = vmatpush1.msra.mxu0 0.0
      %2339 = vmatprep.subr.mxu0 0.0
      %2340 = vmatpush1.msra.mxu0 0.0
      %2341 = vmatprep.subr.mxu0 0.0
      %2342 = vmatpush1.msra.mxu0 0.0
      %2343 = vmatprep.subr.mxu0 0.0
      %2344 = vmatpush1.msra.mxu0 0.0
      %2345 = vmatprep.subr.mxu0 0.0
      %2346 = vmatpush1.msra.mxu0 0.0
      %2347 = vmatprep.subr.mxu0 0.0
      %2348 = vmatpush1.msra.mxu0 0.0
      %2349 = vmatprep.subr.mxu0 0.0
      %2350 = vmatpush1.msra.mxu0 0.0
      %2351 = vmatprep.subr.mxu0 0.0
      %2352 = vmatpush1.msra.mxu0 0.0
      %2353 = vmatprep.subr.mxu0 0.0
      %2354 = vmatpush1.msra.mxu0 0.0
      %2355 = vmatprep.subr.mxu0 0.0
      %2356 = vmatpush1.msra.mxu0 0.0
      %2357 = vmatprep.subr.mxu0 0.0
      %2358 = vmatpush1.msra.mxu0 0.0
      %2359 = vmatprep.subr.mxu0 0.0
      %2360 = vmatpush1.msra.mxu0 0.0
      %2361 = vmatprep.subr.mxu0 0.0
      %2362 = vmatpush1.msra.mxu0 0.0
      %2363 = vmatprep.subr.mxu0 0.0
      %2364 = vmatpush1.msra.mxu0 0.0
      %2365 = vmatprep.subr.mxu0 0.0
      %2366 = vmatpush1.msra.mxu0 %v2319
      %2367 = vmatprep.subr.mxu0 0.0
      %2368 = vmatpush1.msra.mxu0 %v2316
      %2369 = vmatprep.subr.mxu0 0.0
      %2370 = vmatpush2.msra.mxu0 0.0
      %2371 = vmatprep.subr.mxu0 0.0
      %2372 = vmatpush2.msra.mxu0 0.0
      %2373 = vmatprep.subr.mxu0 0.0
      %2374 = vmatpush2.msra.mxu0 0.0
      %2375 = vmatprep.subr.mxu0 0.0
      %2376 = vmatpush2.msra.mxu0 0.0
      %2377 = vmatprep.subr.mxu0 0.0
      %2378 = vmatpush2.msra.mxu0 0.0
      %2379 = vmatprep.subr.mxu0 0.0
      %2380 = vmatpush2.msra.mxu0 0.0
      %2381 = vmatprep.subr.mxu0 0.0
      %2382 = vmatpush2.msra.mxu0 0.0
      %2383 = vmatprep.subr.mxu0 0.0
      %2384 = vmatpush2.msra.mxu0 0.0
      %2385 = vmatprep.subr.mxu0 0.0
      %2386 = vmatpush2.msra.mxu0 0.0
      %2387 = vmatprep.subr.mxu0 0.0
      %2388 = vmatpush2.msra.mxu0 0.0
      %2389 = vmatprep.subr.mxu0 0.0
      %2390 = vmatpush2.msra.mxu0 0.0
      %2391 = vmatprep.subr.mxu0 0.0
      %2392 = vmatpush2.msra.mxu0 0.0
      %2393 = vmatprep.subr.mxu0 0.0
      %2394 = vmatpush2.msra.mxu0 0.0
      %2395 = vmatprep.subr.mxu0 0.0
      %2396 = vmatpush2.msra.mxu0 0.0
      %2397 = vmatprep.subr.mxu0 0.0
      %2398 = vmatpush2.msra.mxu0 0.0
      %2399 = vmatprep.subr.mxu0 0.0
      %2400 = vmatpush2.msra.mxu0 0.0
      %2401 = vmatprep.mubr.f32.mxu0 0.0
      %2402 = vmatmul.mubr.f32.gmra.mxu0 %v2335
      %v2403 = vpop.f32.mrf.mxu0
      %v2404 = vadd.f32 0.0, %v2403
      %v2405 = vpop.f32.mrf.mxu0
      %2406 = vdwg.mxu0
      %v2408 = vsel %vm939, %v2330, 0
      %v2411 = vsel %vm939, %v2331, 0
      %2413 = vmatprep.subr.mxu0 0.0
      %2414 = vmatpush1.msra.mxu0 0.0
      %2415 = vmatprep.subr.mxu0 0.0
      %2416 = vmatpush1.msra.mxu0 0.0
      %2417 = vmatprep.subr.mxu0 0.0
      %2418 = vmatpush1.msra.mxu0 0.0
      %2419 = vmatprep.subr.mxu0 0.0
      %2420 = vmatpush1.msra.mxu0 0.0
      %2421 = vmatprep.subr.mxu0 0.0
      %2422 = vmatpush1.msra.mxu0 0.0
      %2423 = vmatprep.subr.mxu0 0.0
      %2424 = vmatpush1.msra.mxu0 0.0
      %2425 = vmatprep.subr.mxu0 0.0
      %2426 = vmatpush1.msra.mxu0 0.0
      %2427 = vmatprep.subr.mxu0 0.0
      %2428 = vmatpush1.msra.mxu0 0.0
      %2429 = vmatprep.subr.mxu0 0.0
      %2430 = vmatpush1.msra.mxu0 0.0
      %2431 = vmatprep.subr.mxu0 0.0
      %2432 = vmatpush1.msra.mxu0 0.0
      %2433 = vmatprep.subr.mxu0 0.0
      %2434 = vmatpush1.msra.mxu0 0.0
      %2435 = vmatprep.subr.mxu0 0.0
      %2436 = vmatpush1.msra.mxu0 0.0
      %2437 = vmatprep.subr.mxu0 0.0
      %2438 = vmatpush1.msra.mxu0 0.0
      %2439 = vmatprep.subr.mxu0 0.0
      %2440 = vmatpush1.msra.mxu0 0.0
      %2441 = vmatprep.subr.mxu0 0.0
      %2442 = vmatpush1.msra.mxu0 0.0
      %2443 = vmatprep.subr.mxu0 0.0
      %2444 = vmatpush1.msra.mxu0 %v2404
      %2445 = vmatprep.subr.mxu0 0.0
      %2446 = vmatpush2.msra.mxu0 0.0
      %2447 = vmatprep.subr.mxu0 0.0
      %2448 = vmatpush2.msra.mxu0 0.0
      %2449 = vmatprep.subr.mxu0 0.0
      %2450 = vmatpush2.msra.mxu0 0.0
      %2451 = vmatprep.subr.mxu0 0.0
      %2452 = vmatpush2.msra.mxu0 0.0
      %2453 = vmatprep.subr.mxu0 0.0
      %2454 = vmatpush2.msra.mxu0 0.0
      %2455 = vmatprep.subr.mxu0 0.0
      %2456 = vmatpush2.msra.mxu0 0.0
      %2457 = vmatprep.subr.mxu0 0.0
      %2458 = vmatpush2.msra.mxu0 0.0
      %2459 = vmatprep.subr.mxu0 0.0
      %2460 = vmatpush2.msra.mxu0 0.0
      %2461 = vmatprep.subr.mxu0 0.0
      %2462 = vmatpush2.msra.mxu0 0.0
      %2463 = vmatprep.subr.mxu0 0.0
      %2464 = vmatpush2.msra.mxu0 0.0
      %2465 = vmatprep.subr.mxu0 0.0
      %2466 = vmatpush2.msra.mxu0 0.0
      %2467 = vmatprep.subr.mxu0 0.0
      %2468 = vmatpush2.msra.mxu0 0.0
      %2469 = vmatprep.subr.mxu0 0.0
      %2470 = vmatpush2.msra.mxu0 0.0
      %2471 = vmatprep.subr.mxu0 0.0
      %2472 = vmatpush2.msra.mxu0 0.0
      %2473 = vmatprep.subr.mxu0 0.0
      %2474 = vmatpush2.msra.mxu0 0.0
      %2475 = vmatprep.subr.mxu0 0.0
      %2476 = vmatpush2.msra.mxu0 0.0
      %2477 = vmatprep.mubr.f32.mxu0 0.0
      %2478 = vmatmul.mubr.f32.gmra.mxu0 %v2408
      %v2479 = vpop.f32.mrf.mxu0
      %v2480 = vadd.f32 0.0, %v2479
      %v2481 = vpop.f32.mrf.mxu0
      %2482 = vmatprep.mubr.f32.mxu0 0.0
      %2483 = vmatmul.mubr.f32.gmra.mxu0 %v2411
      %v2484 = vpop.f32.mrf.mxu0
      %v2485 = vadd.f32 0.0, %v2484
      %v2486 = vpop.f32.mrf.mxu0
      %2487 = vdwg.mxu0
      %v2488 = vrcp.pop 512.0
      %v2489 = vmul.f32 %v2480, %v2488
      %v2490 = vmul.f32 %v2485, %v2488
      %2491 = vmatprep.subr.mxu0 0.0
      %2492 = vmatpush1.msra.mxu0 0.0
      %2493 = vmatprep.subr.mxu0 0.0
      %2494 = vmatpush1.msra.mxu0 0.0
      %2495 = vmatprep.subr.mxu0 0.0
      %2496 = vmatpush1.msra.mxu0 0.0
      %2497 = vmatprep.subr.mxu0 0.0
      %2498 = vmatpush1.msra.mxu0 0.0
      %2499 = vmatprep.subr.mxu0 0.0
      %2500 = vmatpush1.msra.mxu0 0.0
      %2501 = vmatprep.subr.mxu0 0.0
      %2502 = vmatpush1.msra.mxu0 0.0
      %2503 = vmatprep.subr.mxu0 0.0
      %2504 = vmatpush1.msra.mxu0 0.0
      %2505 = vmatprep.subr.mxu0 0.0
      %2506 = vmatpush1.msra.mxu0 0.0
      %2507 = vmatprep.subr.mxu0 0.0
      %2508 = vmatpush1.msra.mxu0 0.0
      %2509 = vmatprep.subr.mxu0 0.0
      %2510 = vmatpush1.msra.mxu0 0.0
      %2511 = vmatprep.subr.mxu0 0.0
      %2512 = vmatpush1.msra.mxu0 0.0
      %2513 = vmatprep.subr.mxu0 0.0
      %2514 = vmatpush1.msra.mxu0 0.0
      %2515 = vmatprep.subr.mxu0 0.0
      %2516 = vmatpush1.msra.mxu0 0.0
      %2517 = vmatprep.subr.mxu0 0.0
      %2518 = vmatpush1.msra.mxu0 0.0
      %2519 = vmatprep.subr.mxu0 0.0
      %2520 = vmatpush1.msra.mxu0 %v2329
      %2521 = vmatprep.subr.mxu0 0.0
      %2522 = vmatpush1.msra.mxu0 %v2326
      %2523 = vmatprep.subr.mxu0 0.0
      %2524 = vmatpush2.msra.mxu0 0.0
      %2525 = vmatprep.subr.mxu0 0.0
      %2526 = vmatpush2.msra.mxu0 0.0
      %2527 = vmatprep.subr.mxu0 0.0
      %2528 = vmatpush2.msra.mxu0 0.0
      %2529 = vmatprep.subr.mxu0 0.0
      %2530 = vmatpush2.msra.mxu0 0.0
      %2531 = vmatprep.subr.mxu0 0.0
      %2532 = vmatpush2.msra.mxu0 0.0
      %2533 = vmatprep.subr.mxu0 0.0
      %2534 = vmatpush2.msra.mxu0 0.0
      %2535 = vmatprep.subr.mxu0 0.0
      %2536 = vmatpush2.msra.mxu0 0.0
      %2537 = vmatprep.subr.mxu0 0.0
      %2538 = vmatpush2.msra.mxu0 0.0
      %2539 = vmatprep.subr.mxu0 0.0
      %2540 = vmatpush2.msra.mxu0 0.0
      %2541 = vmatprep.subr.mxu0 0.0
      %2542 = vmatpush2.msra.mxu0 0.0
      %2543 = vmatprep.subr.mxu0 0.0
      %2544 = vmatpush2.msra.mxu0 0.0
      %2545 = vmatprep.subr.mxu0 0.0
      %2546 = vmatpush2.msra.mxu0 0.0
      %2547 = vmatprep.subr.mxu0 0.0
      %2548 = vmatpush2.msra.mxu0 0.0
      %2549 = vmatprep.subr.mxu0 0.0
      %2550 = vmatpush2.msra.mxu0 0.0
      %2551 = vmatprep.subr.mxu0 0.0
      %2552 = vmatpush2.msra.mxu0 0.0
      %2553 = vmatprep.subr.mxu0 0.0
      %2554 = vmatpush2.msra.mxu0 0.0
      %2555 = vmatprep.mubr.f32.mxu0 0.0
      %2556 = vmatmul.mubr.f32.gmra.mxu0 %v2335
      %v2557 = vpop.f32.mrf.mxu0
      %v2558 = vadd.f32 0.0, %v2557
      %v2559 = vpop.f32.mrf.mxu0
      %2560 = vdwg.mxu0
      %2561 = vmatprep.subr.mxu0 0.0
      %2562 = vmatpush1.msra.mxu0 0.0
      %2563 = vmatprep.subr.mxu0 0.0
      %2564 = vmatpush1.msra.mxu0 0.0
      %2565 = vmatprep.subr.mxu0 0.0
      %2566 = vmatpush1.msra.mxu0 0.0
      %2567 = vmatprep.subr.mxu0 0.0
      %2568 = vmatpush1.msra.mxu0 0.0
      %2569 = vmatprep.subr.mxu0 0.0
      %2570 = vmatpush1.msra.mxu0 0.0
      %2571 = vmatprep.subr.mxu0 0.0
      %2572 = vmatpush1.msra.mxu0 0.0
      %2573 = vmatprep.subr.mxu0 0.0
      %2574 = vmatpush1.msra.mxu0 0.0
      %2575 = vmatprep.subr.mxu0 0.0
      %2576 = vmatpush1.msra.mxu0 0.0
      %2577 = vmatprep.subr.mxu0 0.0
      %2578 = vmatpush1.msra.mxu0 0.0
      %2579 = vmatprep.subr.mxu0 0.0
      %2580 = vmatpush1.msra.mxu0 0.0
      %2581 = vmatprep.subr.mxu0 0.0
      %2582 = vmatpush1.msra.mxu0 0.0
      %2583 = vmatprep.subr.mxu0 0.0
      %2584 = vmatpush1.msra.mxu0 0.0
      %2585 = vmatprep.subr.mxu0 0.0
      %2586 = vmatpush1.msra.mxu0 0.0
      %2587 = vmatprep.subr.mxu0 0.0
      %2588 = vmatpush1.msra.mxu0 0.0
      %2589 = vmatprep.subr.mxu0 0.0
      %2590 = vmatpush1.msra.mxu0 0.0
      %2591 = vmatprep.subr.mxu0 0.0
      %2592 = vmatpush1.msra.mxu0 %v2558
      %2593 = vmatprep.subr.mxu0 0.0
      %2594 = vmatpush2.msra.mxu0 0.0
      %2595 = vmatprep.subr.mxu0 0.0
      %2596 = vmatpush2.msra.mxu0 0.0
      %2597 = vmatprep.subr.mxu0 0.0
      %2598 = vmatpush2.msra.mxu0 0.0
      %2599 = vmatprep.subr.mxu0 0.0
      %2600 = vmatpush2.msra.mxu0 0.0
      %2601 = vmatprep.subr.mxu0 0.0
      %2602 = vmatpush2.msra.mxu0 0.0
      %2603 = vmatprep.subr.mxu0 0.0
      %2604 = vmatpush2.msra.mxu0 0.0
      %2605 = vmatprep.subr.mxu0 0.0
      %2606 = vmatpush2.msra.mxu0 0.0
      %2607 = vmatprep.subr.mxu0 0.0
      %2608 = vmatpush2.msra.mxu0 0.0
      %2609 = vmatprep.subr.mxu0 0.0
      %2610 = vmatpush2.msra.mxu0 0.0
      %2611 = vmatprep.subr.mxu0 0.0
      %2612 = vmatpush2.msra.mxu0 0.0
      %2613 = vmatprep.subr.mxu0 0.0
      %2614 = vmatpush2.msra.mxu0 0.0
      %2615 = vmatprep.subr.mxu0 0.0
      %2616 = vmatpush2.msra.mxu0 0.0
      %2617 = vmatprep.subr.mxu0 0.0
      %2618 = vmatpush2.msra.mxu0 0.0
      %2619 = vmatprep.subr.mxu0 0.0
      %2620 = vmatpush2.msra.mxu0 0.0
      %2621 = vmatprep.subr.mxu0 0.0
      %2622 = vmatpush2.msra.mxu0 0.0
      %2623 = vmatprep.subr.mxu0 0.0
      %2624 = vmatpush2.msra.mxu0 0.0
      %2625 = vmatprep.mubr.f32.mxu0 0.0
      %2626 = vmatmul.mubr.f32.gmra.mxu0 %v2408
      %v2627 = vpop.f32.mrf.mxu0
      %v2628 = vadd.f32 0.0, %v2627
      %v2629 = vpop.f32.mrf.mxu0
      %2630 = vmatprep.mubr.f32.mxu0 0.0
      %2631 = vmatmul.mubr.f32.gmra.mxu0 %v2411
      %v2632 = vpop.f32.mrf.mxu0
      %v2633 = vadd.f32 0.0, %v2632
      %v2634 = vpop.f32.mrf.mxu0
      %2635 = vdwg.mxu0
      %v2636 = vmul.f32 %v2628, %v2488
      %v2637 = vmul.f32 %v2633, %v2488
      %v2638 = vmul.f32 %v2489, %v2489
      %v2639 = vmul.f32 %v2490, %v2490
      %v2640 = vsub.f32 %v2636, %v2638
      %v2641 = vsub.f32 %v2637, %v2639
      %v2642 = vadd.f32 %v2640, 1e-05
      %v2643 = vadd.f32 %v2641, 1e-05
      %v2644 = vrsqrt.pop %v2642
      %v2645 = vrsqrt.pop %v2643
      %2647 = vset.pattern.permute.xlu0 0
      %2648 = vperm.xlu0 %2647, %v2489
      %v2649 = vpop.permute.xlu0 %2648
      %2652 = vset.pattern.permute.xlu0 0
      %2653 = vperm.xlu0 %2652, %v2490
      %v2654 = vpop.permute.xlu0 %2653
      %v2656 = vsub.f32 %v2310, %v2649
      %v2657 = vsub.f32 %v2311, %v2649
      %v2658 = vsub.f32 %v2312, %v2654
      %v2659 = vsub.f32 %v2313, %v2654
      %2661 = vset.pattern.permute.xlu0 0
      %2662 = vperm.xlu0 %2661, %v2644
      %v2663 = vpop.permute.xlu0 %2662
      %2666 = vset.pattern.permute.xlu0 0
      %2667 = vperm.xlu0 %2666, %v2645
      %v2668 = vpop.permute.xlu0 %2667
      %v2670 = vmul.f32 %v2656, %v2663
      %v2671 = vmul.f32 %v2657, %v2663
      %v2672 = vmul.f32 %v2658, %v2668
      %v2673 = vmul.f32 %v2659, %v2668
      %v2674 = vld [vmem:[%s8] sm:$0xff]
      %v2675 = vld [vmem:[%s8 + $0x8] sm:$0xff]
      %2677 = vset.pattern.permute.xlu0 0
      %2678 = vperm.xlu0 %2677, %v2674
      %v2679 = vpop.permute.xlu0 %2678
      %2682 = vset.pattern.permute.xlu0 0
      %2683 = vperm.xlu0 %2682, %v2675
      %v2684 = vpop.permute.xlu0 %2683
      %v2686 = vmul.f32 %v2670, %v2679
      %v2687 = vmul.f32 %v2671, %v2679
      %v2688 = vmul.f32 %v2672, %v2684
      %v2689 = vmul.f32 %v2673, %v2684
      %v2690 = vld [vmem:[%s9] sm:$0xff]
      %v2691 = vld [vmem:[%s9 + $0x8] sm:$0xff]
      %2693 = vset.pattern.permute.xlu0 0
      %2694 = vperm.xlu0 %2693, %v2690
      %v2695 = vpop.permute.xlu0 %2694
      %2698 = vset.pattern.permute.xlu0 0
      %2699 = vperm.xlu0 %2698, %v2691
      %v2700 = vpop.permute.xlu0 %2699
      %v2702 = vadd.f32 %v2686, %v2695
      %v2703 = vadd.f32 %v2687, %v2695
      %v2704 = vadd.f32 %v2688, %v2700
      %v2705 = vadd.f32 %v2689, %v2700
      %v2706 = vxor.u32 %v2702, 2147483648
      %v2707 = vxor.u32 %v2703, 2147483648
      %v2708 = vxor.u32 %v2704, 2147483648
      %v2709 = vxor.u32 %v2705, 2147483648
      %v2710 = vmul.f32 %v2706, 1.442695
      %v2711 = vpow.pop %v2710
      %v2712 = vmul.f32 %v2707, 1.442695
      %v2713 = vpow.pop %v2712
      %v2714 = vmul.f32 %v2708, 1.442695
      %v2715 = vpow.pop %v2714
      %v2716 = vmul.f32 %v2709, 1.442695
      %v2717 = vpow.pop %v2716
      %v2718 = vadd.f32 %v2711, 1.0
      %v2719 = vadd.f32 %v2713, 1.0
      %v2720 = vadd.f32 %v2715, 1.0
      %v2721 = vadd.f32 %v2717, 1.0
      %v2722 = vrcp.pop %v2718
      %v2723 = vmul.f32 1.0, %v2722
      %v2724 = vrcp.pop %v2719
      %v2725 = vmul.f32 1.0, %v2724
      %v2726 = vrcp.pop %v2720
      %v2727 = vmul.f32 1.0, %v2726
      %v2728 = vrcp.pop %v2721
      %v2729 = vmul.f32 1.0, %v2728
      %v2730 = vmul.f32 %v2702, %v2723
      %v2731 = vmul.f32 %v2703, %v2725
      %v2732 = vmul.f32 %v2704, %v2727
      %v2733 = vmul.f32 %v2705, %v2729
      %2734 = vrot.lane.b32.xlu0 %v2730, 17
      %v2735 = vpop.permute.xlu0 %2734
      %2736 = vrot.lane.b32.xlu0 %v2732, 17
      %v2737 = vpop.permute.xlu0 %2736
      %2738 = vrot.lane.b32.xlu0 %v2731, 17
      %v2739 = vpop.permute.xlu0 %2738
      %2740 = vrot.lane.b32.xlu0 %v2733, 17
      %v2741 = vpop.permute.xlu0 %2740
      %v2742 = vsel %vm886, %v2735, %v2739
      %v2743 = vsel %vm886, %v2737, %v2741
      %v2744 = vsel %vm886, %v2739, %v2735
      %v2745 = vsel %vm886, %v2741, %v2737
      %v2746 = vmul.f32 %v2744, %v894
      %v2747 = vmul.f32 %v2742, %v898
      %v2748 = vmul.f32 %v2745, %v894
      %v2749 = vmul.f32 %v2743, %v898
      %v2750 = vld [vmem:[%s10] sm:$0xf]
      %v2751 = vld [vmem:[%s10 + $0x4] sm:$0xf]
      %v2752 = vpack.c.bf16 %v2748, %v2746
      %v2753 = vpack.c.bf16 %v2749, %v2747
      %2754 = vrot.lane.b32.xlu0 %v2730, 16
      %v2755 = vpop.permute.xlu0 %2754
      %2756 = vrot.lane.b32.xlu0 %v2732, 16
      %v2757 = vpop.permute.xlu0 %2756
      %2758 = vrot.lane.b32.xlu0 %v2731, 16
      %v2759 = vpop.permute.xlu0 %2758
      %2760 = vrot.lane.b32.xlu0 %v2733, 16
      %v2761 = vpop.permute.xlu0 %2760
      %v2762 = vsel %vm911, %v2755, %v2759
      %v2763 = vsel %vm911, %v2757, %v2761
      %v2764 = vsel %vm911, %v2759, %v2755
      %v2765 = vsel %vm911, %v2761, %v2757
      %v2766 = vmul.f32 %v2764, %v920
      %v2767 = vmul.f32 %v2762, %v924
      %v2768 = vmul.f32 %v2765, %v920
      %v2769 = vmul.f32 %v2763, %v924
      %s2770 = scalar_lea.vmem %s10, 8
      %v2771 = vld [vmem:[%s2770] sm:$0xf]
      %v2772 = vld [vmem:[%s2770 + $0x4] sm:$0xf]
      %v2773 = vpack.c.bf16 %v2768, %v2766
      %v2774 = vpack.c.bf16 %v2769, %v2767
      %v2777 = vunpack.c.l.b16 %v2771
      %v2778 = vunpack.c.l.b16 %v2772
      %v2779 = vpack.c.b16 %v2778, %v2777
      %v2781 = vsel %vm2333, %v2779, 0
      %2783 = vmatprep.subr.bf16.mxu0 0
      %2784 = vmatpush1.bf16.msra.mxu0 0
      %2785 = vmatprep.subr.bf16.mxu0 0
      %2786 = vmatpush1.bf16.msra.mxu0 0
      %2787 = vmatprep.subr.bf16.mxu0 0
      %2788 = vmatpush1.bf16.msra.mxu0 0
      %2789 = vmatprep.subr.bf16.mxu0 0
      %2790 = vmatpush1.bf16.msra.mxu0 0
      %2791 = vmatprep.subr.bf16.mxu0 0
      %2792 = vmatpush1.bf16.msra.mxu0 0
      %2793 = vmatprep.subr.bf16.mxu0 0
      %2794 = vmatpush1.bf16.msra.mxu0 0
      %2795 = vmatprep.subr.bf16.mxu0 0
      %2796 = vmatpush1.bf16.msra.mxu0 0
      %2797 = vmatprep.subr.bf16.mxu0 %v2774
      %2798 = vmatpush1.bf16.msra.mxu0 %v2773
      %2799 = vmatprep.subr.bf16.mxu0 0
      %2800 = vmatpush2.bf16.msra.mxu0 0
      %2801 = vmatprep.subr.bf16.mxu0 0
      %2802 = vmatpush2.bf16.msra.mxu0 0
      %2803 = vmatprep.subr.bf16.mxu0 0
      %2804 = vmatpush2.bf16.msra.mxu0 0
      %2805 = vmatprep.subr.bf16.mxu0 0
      %2806 = vmatpush2.bf16.msra.mxu0 0
      %2807 = vmatprep.subr.bf16.mxu0 0
      %2808 = vmatpush2.bf16.msra.mxu0 0
      %2809 = vmatprep.subr.bf16.mxu0 0
      %2810 = vmatpush2.bf16.msra.mxu0 0
      %2811 = vmatprep.subr.bf16.mxu0 0
      %2812 = vmatpush2.bf16.msra.mxu0 0
      %2813 = vmatprep.subr.bf16.mxu0 0
      %2814 = vmatpush2.bf16.msra.mxu0 0
      %2815 = vmatprep.mubr.bf16.mxu0 0
      %2816 = vmatmul.mubr.bf16.gmra.mxu0 %v2781
      %v2817 = vpop.f32.mrf.mxu0
      %v2818 = vadd.f32 0.0, %v2817
      %v2819 = vpop.f32.mrf.mxu0
      %v2820 = vadd.f32 0.0, %v2819
      %v2821 = vpop.f32.mrf.mxu0
      %v2822 = vadd.f32 0.0, %v2821
      %v2823 = vpop.f32.mrf.mxu0
      %v2824 = vadd.f32 0.0, %v2823
      %2825 = vdwg.mxu0
      %v2828 = vunpack.c.l.b16 %v2750
      %v2829 = vunpack.c.l.b16 %v2751
      %v2830 = vpack.c.b16 %v2829, %v2828
      %v2832 = vsel %vm2333, %v2830, 0
      %2834 = vmatprep.subr.bf16.mxu0 0
      %2835 = vmatpush1.bf16.msra.mxu0 0
      %2836 = vmatprep.subr.bf16.mxu0 0
      %2837 = vmatpush1.bf16.msra.mxu0 0
      %2838 = vmatprep.subr.bf16.mxu0 0
      %2839 = vmatpush1.bf16.msra.mxu0 0
      %2840 = vmatprep.subr.bf16.mxu0 0
      %2841 = vmatpush1.bf16.msra.mxu0 0
      %2842 = vmatprep.subr.bf16.mxu0 0
      %2843 = vmatpush1.bf16.msra.mxu0 0
      %2844 = vmatprep.subr.bf16.mxu0 0
      %2845 = vmatpush1.bf16.msra.mxu0 0
      %2846 = vmatprep.subr.bf16.mxu0 0
      %2847 = vmatpush1.bf16.msra.mxu0 0
      %2848 = vmatprep.subr.bf16.mxu0 %v2753
      %2849 = vmatpush1.bf16.msra.mxu0 %v2752
      %2850 = vmatprep.subr.bf16.mxu0 0
      %2851 = vmatpush2.bf16.msra.mxu0 0
      %2852 = vmatprep.subr.bf16.mxu0 0
      %2853 = vmatpush2.bf16.msra.mxu0 0
      %2854 = vmatprep.subr.bf16.mxu0 0
      %2855 = vmatpush2.bf16.msra.mxu0 0
      %2856 = vmatprep.subr.bf16.mxu0 0
      %2857 = vmatpush2.bf16.msra.mxu0 0
      %2858 = vmatprep.subr.bf16.mxu0 0
      %2859 = vmatpush2.bf16.msra.mxu0 0
      %2860 = vmatprep.subr.bf16.mxu0 0
      %2861 = vmatpush2.bf16.msra.mxu0 0
      %2862 = vmatprep.subr.bf16.mxu0 0
      %2863 = vmatpush2.bf16.msra.mxu0 0
      %2864 = vmatprep.subr.bf16.mxu0 0
      %2865 = vmatpush2.bf16.msra.mxu0 0
      %2866 = vmatprep.mubr.bf16.mxu0 0
      %2867 = vmatmul.mubr.bf16.gmra.mxu0 %v2832
      %v2868 = vpop.f32.mrf.mxu0
      %v2869 = vadd.f32 %v2818, %v2868
      %v2870 = vpop.f32.mrf.mxu0
      %v2871 = vadd.f32 %v2820, %v2870
      %v2872 = vpop.f32.mrf.mxu0
      %v2873 = vadd.f32 %v2822, %v2872
      %v2874 = vpop.f32.mrf.mxu0
      %v2875 = vadd.f32 %v2824, %v2874
      %2876 = vdwg.mxu0
      %2877 = vrot.lane.b32.xlu0 %v2730, 15
      %v2878 = vpop.permute.xlu0 %2877
      %2879 = vrot.lane.b32.xlu0 %v2732, 15
      %v2880 = vpop.permute.xlu0 %2879
      %2881 = vrot.lane.b32.xlu0 %v2731, 15
      %v2882 = vpop.permute.xlu0 %2881
      %2883 = vrot.lane.b32.xlu0 %v2733, 15
      %v2884 = vpop.permute.xlu0 %2883
      %v2885 = vsel %vm1054, %v2878, %v2882
      %v2886 = vsel %vm1054, %v2880, %v2884
      %v2887 = vsel %vm1054, %v2882, %v2878
      %v2888 = vsel %vm1054, %v2884, %v2880
      %v2889 = vmul.f32 %v2887, %v1063
      %v2890 = vmul.f32 %v2885, %v1067
      %v2891 = vmul.f32 %v2888, %v1063
      %v2892 = vmul.f32 %v2886, %v1067
      %s2893 = scalar_lea.vmem %s10, 16
      %v2894 = vld [vmem:[%s2893] sm:$0xf]
      %v2895 = vld [vmem:[%s2893 + $0x4] sm:$0xf]
      %v2896 = vpack.c.bf16 %v2891, %v2889
      %v2897 = vpack.c.bf16 %v2892, %v2890
      %v2900 = vunpack.c.l.b16 %v2894
      %v2901 = vunpack.c.l.b16 %v2895
      %v2902 = vpack.c.b16 %v2901, %v2900
      %v2904 = vsel %vm2333, %v2902, 0
      %2906 = vmatprep.subr.bf16.mxu0 0
      %2907 = vmatpush1.bf16.msra.mxu0 0
      %2908 = vmatprep.subr.bf16.mxu0 0
      %2909 = vmatpush1.bf16.msra.mxu0 0
      %2910 = vmatprep.subr.bf16.mxu0 0
      %2911 = vmatpush1.bf16.msra.mxu0 0
      %2912 = vmatprep.subr.bf16.mxu0 0
      %2913 = vmatpush1.bf16.msra.mxu0 0
      %2914 = vmatprep.subr.bf16.mxu0 0
      %2915 = vmatpush1.bf16.msra.mxu0 0
      %2916 = vmatprep.subr.bf16.mxu0 0
      %2917 = vmatpush1.bf16.msra.mxu0 0
      %2918 = vmatprep.subr.bf16.mxu0 0
      %2919 = vmatpush1.bf16.msra.mxu0 0
      %2920 = vmatprep.subr.bf16.mxu0 %v2897
      %2921 = vmatpush1.bf16.msra.mxu0 %v2896
      %2922 = vmatprep.subr.bf16.mxu0 0
      %2923 = vmatpush2.bf16.msra.mxu0 0
      %2924 = vmatprep.subr.bf16.mxu0 0
      %2925 = vmatpush2.bf16.msra.mxu0 0
      %2926 = vmatprep.subr.bf16.mxu0 0
      %2927 = vmatpush2.bf16.msra.mxu0 0
      %2928 = vmatprep.subr.bf16.mxu0 0
      %2929 = vmatpush2.bf16.msra.mxu0 0
      %2930 = vmatprep.subr.bf16.mxu0 0
      %2931 = vmatpush2.bf16.msra.mxu0 0
      %2932 = vmatprep.subr.bf16.mxu0 0
      %2933 = vmatpush2.bf16.msra.mxu0 0
      %2934 = vmatprep.subr.bf16.mxu0 0
      %2935 = vmatpush2.bf16.msra.mxu0 0
      %2936 = vmatprep.subr.bf16.mxu0 0
      %2937 = vmatpush2.bf16.msra.mxu0 0
      %2938 = vmatprep.mubr.bf16.mxu0 0
      %2939 = vmatmul.mubr.bf16.gmra.mxu0 %v2904
      %v2940 = vpop.f32.mrf.mxu0
      %v2941 = vadd.f32 0.0, %v2940
      %v2942 = vpop.f32.mrf.mxu0
      %v2943 = vadd.f32 0.0, %v2942
      %v2944 = vpop.f32.mrf.mxu0
      %v2945 = vadd.f32 0.0, %v2944
      %v2946 = vpop.f32.mrf.mxu0
      %v2947 = vadd.f32 0.0, %v2946
      %2948 = vdwg.mxu0
      %v2949 = vadd.f32 %v2869, %v2941
      %v2950 = vadd.f32 %v2871, %v2943
      %v2951 = vadd.f32 %v2873, %v2945
      %v2952 = vadd.f32 %v2875, %v2947
      %2953 = vrot.lane.b32.xlu0 %v2730, 1
      %v2954 = vpop.permute.xlu0 %2953
      %2955 = vrot.lane.b32.xlu0 %v2732, 1
      %v2956 = vpop.permute.xlu0 %2955
      %2957 = vrot.lane.b32.xlu0 %v2731, 1
      %v2958 = vpop.permute.xlu0 %2957
      %2959 = vrot.lane.b32.xlu0 %v2733, 1
      %v2960 = vpop.permute.xlu0 %2959
      %v2961 = vsel %vm1142, %v2954, %v2958
      %v2962 = vsel %vm1142, %v2956, %v2960
      %v2963 = vsel %vm1142, %v2958, %v2954
      %v2964 = vsel %vm1142, %v2960, %v2956
      %v2965 = vmul.f32 %v2963, %v1151
      %v2966 = vmul.f32 %v2961, %v1155
      %v2967 = vmul.f32 %v2964, %v1151
      %v2968 = vmul.f32 %v2962, %v1155
      %s2969 = scalar_lea.vmem %s10, 24
      %v2970 = vld [vmem:[%s2969] sm:$0xf]
      %v2971 = vld [vmem:[%s2969 + $0x4] sm:$0xf]
      %v2972 = vpack.c.bf16 %v2967, %v2965
      %v2973 = vpack.c.bf16 %v2968, %v2966
      %v2976 = vunpack.c.l.b16 %v2970
      %v2977 = vunpack.c.l.b16 %v2971
      %v2978 = vpack.c.b16 %v2977, %v2976
      %v2980 = vsel %vm2333, %v2978, 0
      %2982 = vmatprep.subr.bf16.mxu0 0
      %2983 = vmatpush1.bf16.msra.mxu0 0
      %2984 = vmatprep.subr.bf16.mxu0 0
      %2985 = vmatpush1.bf16.msra.mxu0 0
      %2986 = vmatprep.subr.bf16.mxu0 0
      %2987 = vmatpush1.bf16.msra.mxu0 0
      %2988 = vmatprep.subr.bf16.mxu0 0
      %2989 = vmatpush1.bf16.msra.mxu0 0
      %2990 = vmatprep.subr.bf16.mxu0 0
      %2991 = vmatpush1.bf16.msra.mxu0 0
      %2992 = vmatprep.subr.bf16.mxu0 0
      %2993 = vmatpush1.bf16.msra.mxu0 0
      %2994 = vmatprep.subr.bf16.mxu0 0
      %2995 = vmatpush1.bf16.msra.mxu0 0
      %2996 = vmatprep.subr.bf16.mxu0 %v2973
      %2997 = vmatpush1.bf16.msra.mxu0 %v2972
      %2998 = vmatprep.subr.bf16.mxu0 0
      %2999 = vmatpush2.bf16.msra.mxu0 0
      %3000 = vmatprep.subr.bf16.mxu0 0
      %3001 = vmatpush2.bf16.msra.mxu0 0
      %3002 = vmatprep.subr.bf16.mxu0 0
      %3003 = vmatpush2.bf16.msra.mxu0 0
      %3004 = vmatprep.subr.bf16.mxu0 0
      %3005 = vmatpush2.bf16.msra.mxu0 0
      %3006 = vmatprep.subr.bf16.mxu0 0
      %3007 = vmatpush2.bf16.msra.mxu0 0
      %3008 = vmatprep.subr.bf16.mxu0 0
      %3009 = vmatpush2.bf16.msra.mxu0 0
      %3010 = vmatprep.subr.bf16.mxu0 0
      %3011 = vmatpush2.bf16.msra.mxu0 0
      %3012 = vmatprep.subr.bf16.mxu0 0
      %3013 = vmatpush2.bf16.msra.mxu0 0
      %3014 = vmatprep.mubr.bf16.mxu0 0
      %3015 = vmatmul.mubr.bf16.gmra.mxu0 %v2980
      %v3016 = vpop.f32.mrf.mxu0
      %v3017 = vadd.f32 0.0, %v3016
      %v3018 = vpop.f32.mrf.mxu0
      %v3019 = vadd.f32 0.0, %v3018
      %v3020 = vpop.f32.mrf.mxu0
      %v3021 = vadd.f32 0.0, %v3020
      %v3022 = vpop.f32.mrf.mxu0
      %v3023 = vadd.f32 0.0, %v3022
      %3024 = vdwg.mxu0
      %v3025 = vadd.f32 %v2949, %v3017
      %v3026 = vadd.f32 %v2950, %v3019
      %v3027 = vadd.f32 %v2951, %v3021
      %v3028 = vadd.f32 %v2952, %v3023
      %v3029 = vmul.f32 %v2730, %v1232
      %v3030 = vmul.f32 %v2731, %v1236
      %v3031 = vmul.f32 %v2732, %v1232
      %v3032 = vmul.f32 %v2733, %v1236
      %s3033 = scalar_lea.vmem %s10, 32
      %v3034 = vld [vmem:[%s3033] sm:$0xf]
      %v3035 = vld [vmem:[%s3033 + $0x4] sm:$0xf]
      %v3036 = vpack.c.bf16 %v3031, %v3029
      %v3037 = vpack.c.bf16 %v3032, %v3030
      %v3040 = vunpack.c.l.b16 %v3034
      %v3041 = vunpack.c.l.b16 %v3035
      %v3042 = vpack.c.b16 %v3041, %v3040
      %v3044 = vsel %vm2333, %v3042, 0
      %3046 = vmatprep.subr.bf16.mxu0 0
      %3047 = vmatpush1.bf16.msra.mxu0 0
      %3048 = vmatprep.subr.bf16.mxu0 0
      %3049 = vmatpush1.bf16.msra.mxu0 0
      %3050 = vmatprep.subr.bf16.mxu0 0
      %3051 = vmatpush1.bf16.msra.mxu0 0
      %3052 = vmatprep.subr.bf16.mxu0 0
      %3053 = vmatpush1.bf16.msra.mxu0 0
      %3054 = vmatprep.subr.bf16.mxu0 0
      %3055 = vmatpush1.bf16.msra.mxu0 0
      %3056 = vmatprep.subr.bf16.mxu0 0
      %3057 = vmatpush1.bf16.msra.mxu0 0
      %3058 = vmatprep.subr.bf16.mxu0 0
      %3059 = vmatpush1.bf16.msra.mxu0 0
      %3060 = vmatprep.subr.bf16.mxu0 %v3037
      %3061 = vmatpush1.bf16.msra.mxu0 %v3036
      %3062 = vmatprep.subr.bf16.mxu0 0
      %3063 = vmatpush2.bf16.msra.mxu0 0
      %3064 = vmatprep.subr.bf16.mxu0 0
      %3065 = vmatpush2.bf16.msra.mxu0 0
      %3066 = vmatprep.subr.bf16.mxu0 0
      %3067 = vmatpush2.bf16.msra.mxu0 0
      %3068 = vmatprep.subr.bf16.mxu0 0
      %3069 = vmatpush2.bf16.msra.mxu0 0
      %3070 = vmatprep.subr.bf16.mxu0 0
      %3071 = vmatpush2.bf16.msra.mxu0 0
      %3072 = vmatprep.subr.bf16.mxu0 0
      %3073 = vmatpush2.bf16.msra.mxu0 0
      %3074 = vmatprep.subr.bf16.mxu0 0
      %3075 = vmatpush2.bf16.msra.mxu0 0
      %3076 = vmatprep.subr.bf16.mxu0 0
      %3077 = vmatpush2.bf16.msra.mxu0 0
      %3078 = vmatprep.mubr.bf16.mxu0 0
      %3079 = vmatmul.mubr.bf16.gmra.mxu0 %v3044
      %v3080 = vpop.f32.mrf.mxu0
      %v3081 = vadd.f32 0.0, %v3080
      %v3082 = vpop.f32.mrf.mxu0
      %v3083 = vadd.f32 0.0, %v3082
      %v3084 = vpop.f32.mrf.mxu0
      %v3085 = vadd.f32 0.0, %v3084
      %v3086 = vpop.f32.mrf.mxu0
      %v3087 = vadd.f32 0.0, %v3086
      %3088 = vdwg.mxu0
      %v3089 = vadd.f32 %v3025, %v3081
      %v3090 = vadd.f32 %v3026, %v3083
      %v3091 = vadd.f32 %v3027, %v3085
      %v3092 = vadd.f32 %v3028, %v3087
      %3093 = vrot.lane.b32.xlu0 %v2730, 127
      %v3094 = vpop.permute.xlu0 %3093
      %3095 = vrot.lane.b32.xlu0 %v2732, 127
      %v3096 = vpop.permute.xlu0 %3095
      %3097 = vrot.lane.b32.xlu0 %v2731, 127
      %v3098 = vpop.permute.xlu0 %3097
      %3099 = vrot.lane.b32.xlu0 %v2733, 127
      %v3100 = vpop.permute.xlu0 %3099
      %v3101 = vsel %vm1311, %v3094, %v3098
      %v3102 = vsel %vm1311, %v3096, %v3100
      %v3103 = vsel %vm1311, %v3098, %v3094
      %v3104 = vsel %vm1311, %v3100, %v3096
      %v3105 = vmul.f32 %v3101, %v1320
      %v3106 = vmul.f32 %v3103, %v1324
      %v3107 = vmul.f32 %v3102, %v1320
      %v3108 = vmul.f32 %v3104, %v1324
      %s3109 = scalar_lea.vmem %s10, 40
      %v3110 = vld [vmem:[%s3109] sm:$0xf]
      %v3111 = vld [vmem:[%s3109 + $0x4] sm:$0xf]
      %v3112 = vpack.c.bf16 %v3107, %v3105
      %v3113 = vpack.c.bf16 %v3108, %v3106
      %v3116 = vunpack.c.l.b16 %v3110
      %v3117 = vunpack.c.l.b16 %v3111
      %v3118 = vpack.c.b16 %v3117, %v3116
      %v3120 = vsel %vm2333, %v3118, 0
      %3122 = vmatprep.subr.bf16.mxu0 0
      %3123 = vmatpush1.bf16.msra.mxu0 0
      %3124 = vmatprep.subr.bf16.mxu0 0
      %3125 = vmatpush1.bf16.msra.mxu0 0
      %3126 = vmatprep.subr.bf16.mxu0 0
      %3127 = vmatpush1.bf16.msra.mxu0 0
      %3128 = vmatprep.subr.bf16.mxu0 0
      %3129 = vmatpush1.bf16.msra.mxu0 0
      %3130 = vmatprep.subr.bf16.mxu0 0
      %3131 = vmatpush1.bf16.msra.mxu0 0
      %3132 = vmatprep.subr.bf16.mxu0 0
      %3133 = vmatpush1.bf16.msra.mxu0 0
      %3134 = vmatprep.subr.bf16.mxu0 0
      %3135 = vmatpush1.bf16.msra.mxu0 0
      %3136 = vmatprep.subr.bf16.mxu0 %v3113
      %3137 = vmatpush1.bf16.msra.mxu0 %v3112
      %3138 = vmatprep.subr.bf16.mxu0 0
      %3139 = vmatpush2.bf16.msra.mxu0 0
      %3140 = vmatprep.subr.bf16.mxu0 0
      %3141 = vmatpush2.bf16.msra.mxu0 0
      %3142 = vmatprep.subr.bf16.mxu0 0
      %3143 = vmatpush2.bf16.msra.mxu0 0
      %3144 = vmatprep.subr.bf16.mxu0 0
      %3145 = vmatpush2.bf16.msra.mxu0 0
      %3146 = vmatprep.subr.bf16.mxu0 0
      %3147 = vmatpush2.bf16.msra.mxu0 0
      %3148 = vmatprep.subr.bf16.mxu0 0
      %3149 = vmatpush2.bf16.msra.mxu0 0
      %3150 = vmatprep.subr.bf16.mxu0 0
      %3151 = vmatpush2.bf16.msra.mxu0 0
      %3152 = vmatprep.subr.bf16.mxu0 0
      %3153 = vmatpush2.bf16.msra.mxu0 0
      %3154 = vmatprep.mubr.bf16.mxu0 0
      %3155 = vmatmul.mubr.bf16.gmra.mxu0 %v3120
      %v3156 = vpop.f32.mrf.mxu0
      %v3157 = vadd.f32 0.0, %v3156
      %v3158 = vpop.f32.mrf.mxu0
      %v3159 = vadd.f32 0.0, %v3158
      %v3160 = vpop.f32.mrf.mxu0
      %v3161 = vadd.f32 0.0, %v3160
      %v3162 = vpop.f32.mrf.mxu0
      %v3163 = vadd.f32 0.0, %v3162
      %3164 = vdwg.mxu0
      %v3165 = vadd.f32 %v3089, %v3157
      %v3166 = vadd.f32 %v3090, %v3159
      %v3167 = vadd.f32 %v3091, %v3161
      %v3168 = vadd.f32 %v3092, %v3163
      %3169 = vrot.lane.b32.xlu0 %v2730, 113
      %v3170 = vpop.permute.xlu0 %3169
      %3171 = vrot.lane.b32.xlu0 %v2732, 113
      %v3172 = vpop.permute.xlu0 %3171
      %3173 = vrot.lane.b32.xlu0 %v2731, 113
      %v3174 = vpop.permute.xlu0 %3173
      %3175 = vrot.lane.b32.xlu0 %v2733, 113
      %v3176 = vpop.permute.xlu0 %3175
      %v3177 = vsel %vm1399, %v3170, %v3174
      %v3178 = vsel %vm1399, %v3172, %v3176
      %v3179 = vsel %vm1399, %v3174, %v3170
      %v3180 = vsel %vm1399, %v3176, %v3172
      %v3181 = vmul.f32 %v3177, %v1408
      %v3182 = vmul.f32 %v3179, %v1412
      %v3183 = vmul.f32 %v3178, %v1408
      %v3184 = vmul.f32 %v3180, %v1412
      %s3185 = scalar_lea.vmem %s10, 48
      %v3186 = vld [vmem:[%s3185] sm:$0xf]
      %v3187 = vld [vmem:[%s3185 + $0x4] sm:$0xf]
      %v3188 = vpack.c.bf16 %v3183, %v3181
      %v3189 = vpack.c.bf16 %v3184, %v3182
      %v3192 = vunpack.c.l.b16 %v3186
      %v3193 = vunpack.c.l.b16 %v3187
      %v3194 = vpack.c.b16 %v3193, %v3192
      %v3196 = vsel %vm2333, %v3194, 0
      %3198 = vmatprep.subr.bf16.mxu0 0
      %3199 = vmatpush1.bf16.msra.mxu0 0
      %3200 = vmatprep.subr.bf16.mxu0 0
      %3201 = vmatpush1.bf16.msra.mxu0 0
      %3202 = vmatprep.subr.bf16.mxu0 0
      %3203 = vmatpush1.bf16.msra.mxu0 0
      %3204 = vmatprep.subr.bf16.mxu0 0
      %3205 = vmatpush1.bf16.msra.mxu0 0
      %3206 = vmatprep.subr.bf16.mxu0 0
      %3207 = vmatpush1.bf16.msra.mxu0 0
      %3208 = vmatprep.subr.bf16.mxu0 0
      %3209 = vmatpush1.bf16.msra.mxu0 0
      %3210 = vmatprep.subr.bf16.mxu0 0
      %3211 = vmatpush1.bf16.msra.mxu0 0
      %3212 = vmatprep.subr.bf16.mxu0 %v3189
      %3213 = vmatpush1.bf16.msra.mxu0 %v3188
      %3214 = vmatprep.subr.bf16.mxu0 0
      %3215 = vmatpush2.bf16.msra.mxu0 0
      %3216 = vmatprep.subr.bf16.mxu0 0
      %3217 = vmatpush2.bf16.msra.mxu0 0
      %3218 = vmatprep.subr.bf16.mxu0 0
      %3219 = vmatpush2.bf16.msra.mxu0 0
      %3220 = vmatprep.subr.bf16.mxu0 0
      %3221 = vmatpush2.bf16.msra.mxu0 0
      %3222 = vmatprep.subr.bf16.mxu0 0
      %3223 = vmatpush2.bf16.msra.mxu0 0
      %3224 = vmatprep.subr.bf16.mxu0 0
      %3225 = vmatpush2.bf16.msra.mxu0 0
      %3226 = vmatprep.subr.bf16.mxu0 0
      %3227 = vmatpush2.bf16.msra.mxu0 0
      %3228 = vmatprep.subr.bf16.mxu0 0
      %3229 = vmatpush2.bf16.msra.mxu0 0
      %3230 = vmatprep.mubr.bf16.mxu0 0
      %3231 = vmatmul.mubr.bf16.gmra.mxu0 %v3196
      %v3232 = vpop.f32.mrf.mxu0
      %v3233 = vadd.f32 0.0, %v3232
      %v3234 = vpop.f32.mrf.mxu0
      %v3235 = vadd.f32 0.0, %v3234
      %v3236 = vpop.f32.mrf.mxu0
      %v3237 = vadd.f32 0.0, %v3236
      %v3238 = vpop.f32.mrf.mxu0
      %v3239 = vadd.f32 0.0, %v3238
      %3240 = vdwg.mxu0
      %v3241 = vadd.f32 %v3165, %v3233
      %v3242 = vadd.f32 %v3166, %v3235
      %v3243 = vadd.f32 %v3167, %v3237
      %v3244 = vadd.f32 %v3168, %v3239
      %3245 = vrot.lane.b32.xlu0 %v2730, 112
      %v3246 = vpop.permute.xlu0 %3245
      %3247 = vrot.lane.b32.xlu0 %v2732, 112
      %v3248 = vpop.permute.xlu0 %3247
      %3249 = vrot.lane.b32.xlu0 %v2731, 112
      %v3250 = vpop.permute.xlu0 %3249
      %3251 = vrot.lane.b32.xlu0 %v2733, 112
      %v3252 = vpop.permute.xlu0 %3251
      %v3253 = vsel %vm1487, %v3246, %v3250
      %v3254 = vsel %vm1487, %v3248, %v3252
      %v3255 = vsel %vm1487, %v3250, %v3246
      %v3256 = vsel %vm1487, %v3252, %v3248
      %v3257 = vmul.f32 %v3253, %v1496
      %v3258 = vmul.f32 %v3255, %v1500
      %v3259 = vmul.f32 %v3254, %v1496
      %v3260 = vmul.f32 %v3256, %v1500
      %s3261 = scalar_lea.vmem %s10, 56
      %v3262 = vld [vmem:[%s3261] sm:$0xf]
      %v3263 = vld [vmem:[%s3261 + $0x4] sm:$0xf]
      %v3264 = vpack.c.bf16 %v3259, %v3257
      %v3265 = vpack.c.bf16 %v3260, %v3258
      %v3268 = vunpack.c.l.b16 %v3262
      %v3269 = vunpack.c.l.b16 %v3263
      %v3270 = vpack.c.b16 %v3269, %v3268
      %v3272 = vsel %vm2333, %v3270, 0
      %3274 = vmatprep.subr.bf16.mxu0 0
      %3275 = vmatpush1.bf16.msra.mxu0 0
      %3276 = vmatprep.subr.bf16.mxu0 0
      %3277 = vmatpush1.bf16.msra.mxu0 0
      %3278 = vmatprep.subr.bf16.mxu0 0
      %3279 = vmatpush1.bf16.msra.mxu0 0
      %3280 = vmatprep.subr.bf16.mxu0 0
      %3281 = vmatpush1.bf16.msra.mxu0 0
      %3282 = vmatprep.subr.bf16.mxu0 0
      %3283 = vmatpush1.bf16.msra.mxu0 0
      %3284 = vmatprep.subr.bf16.mxu0 0
      %3285 = vmatpush1.bf16.msra.mxu0 0
      %3286 = vmatprep.subr.bf16.mxu0 0
      %3287 = vmatpush1.bf16.msra.mxu0 0
      %3288 = vmatprep.subr.bf16.mxu0 %v3265
      %3289 = vmatpush1.bf16.msra.mxu0 %v3264
      %3290 = vmatprep.subr.bf16.mxu0 0
      %3291 = vmatpush2.bf16.msra.mxu0 0
      %3292 = vmatprep.subr.bf16.mxu0 0
      %3293 = vmatpush2.bf16.msra.mxu0 0
      %3294 = vmatprep.subr.bf16.mxu0 0
      %3295 = vmatpush2.bf16.msra.mxu0 0
      %3296 = vmatprep.subr.bf16.mxu0 0
      %3297 = vmatpush2.bf16.msra.mxu0 0
      %3298 = vmatprep.subr.bf16.mxu0 0
      %3299 = vmatpush2.bf16.msra.mxu0 0
      %3300 = vmatprep.subr.bf16.mxu0 0
      %3301 = vmatpush2.bf16.msra.mxu0 0
      %3302 = vmatprep.subr.bf16.mxu0 0
      %3303 = vmatpush2.bf16.msra.mxu0 0
      %3304 = vmatprep.subr.bf16.mxu0 0
      %3305 = vmatpush2.bf16.msra.mxu0 0
      %3306 = vmatprep.mubr.bf16.mxu0 0
      %3307 = vmatmul.mubr.bf16.gmra.mxu0 %v3272
      %v3308 = vpop.f32.mrf.mxu0
      %v3309 = vadd.f32 0.0, %v3308
      %v3310 = vpop.f32.mrf.mxu0
      %v3311 = vadd.f32 0.0, %v3310
      %v3312 = vpop.f32.mrf.mxu0
      %v3313 = vadd.f32 0.0, %v3312
      %v3314 = vpop.f32.mrf.mxu0
      %v3315 = vadd.f32 0.0, %v3314
      %3316 = vdwg.mxu0
      %v3317 = vadd.f32 %v3241, %v3309
      %v3318 = vadd.f32 %v3242, %v3311
      %v3319 = vadd.f32 %v3243, %v3313
      %v3320 = vadd.f32 %v3244, %v3315
      %3321 = vrot.lane.b32.xlu0 %v2730, 111
      %v3322 = vpop.permute.xlu0 %3321
      %3323 = vrot.lane.b32.xlu0 %v2732, 111
      %v3324 = vpop.permute.xlu0 %3323
      %3325 = vrot.lane.b32.xlu0 %v2731, 111
      %v3326 = vpop.permute.xlu0 %3325
      %3327 = vrot.lane.b32.xlu0 %v2733, 111
      %v3328 = vpop.permute.xlu0 %3327
      %v3329 = vsel %vm1575, %v3322, %v3326
      %v3330 = vsel %vm1575, %v3324, %v3328
      %v3331 = vsel %vm1575, %v3326, %v3322
      %v3332 = vsel %vm1575, %v3328, %v3324
      %v3333 = vmul.f32 %v3329, %v1584
      %v3334 = vmul.f32 %v3331, %v1588
      %v3335 = vmul.f32 %v3330, %v1584
      %v3336 = vmul.f32 %v3332, %v1588
      %s3337 = scalar_lea.vmem %s10, 64
      %v3338 = vld [vmem:[%s3337] sm:$0xf]
      %v3339 = vld [vmem:[%s3337 + $0x4] sm:$0xf]
      %v3340 = vpack.c.bf16 %v3335, %v3333
      %v3341 = vpack.c.bf16 %v3336, %v3334
      %v3344 = vunpack.c.l.b16 %v3338
      %v3345 = vunpack.c.l.b16 %v3339
      %v3346 = vpack.c.b16 %v3345, %v3344
      %v3348 = vsel %vm2333, %v3346, 0
      %3350 = vmatprep.subr.bf16.mxu0 0
      %3351 = vmatpush1.bf16.msra.mxu0 0
      %3352 = vmatprep.subr.bf16.mxu0 0
      %3353 = vmatpush1.bf16.msra.mxu0 0
      %3354 = vmatprep.subr.bf16.mxu0 0
      %3355 = vmatpush1.bf16.msra.mxu0 0
      %3356 = vmatprep.subr.bf16.mxu0 0
      %3357 = vmatpush1.bf16.msra.mxu0 0
      %3358 = vmatprep.subr.bf16.mxu0 0
      %3359 = vmatpush1.bf16.msra.mxu0 0
      %3360 = vmatprep.subr.bf16.mxu0 0
      %3361 = vmatpush1.bf16.msra.mxu0 0
      %3362 = vmatprep.subr.bf16.mxu0 0
      %3363 = vmatpush1.bf16.msra.mxu0 0
      %3364 = vmatprep.subr.bf16.mxu0 %v3341
      %3365 = vmatpush1.bf16.msra.mxu0 %v3340
      %3366 = vmatprep.subr.bf16.mxu0 0
      %3367 = vmatpush2.bf16.msra.mxu0 0
      %3368 = vmatprep.subr.bf16.mxu0 0
      %3369 = vmatpush2.bf16.msra.mxu0 0
      %3370 = vmatprep.subr.bf16.mxu0 0
      %3371 = vmatpush2.bf16.msra.mxu0 0
      %3372 = vmatprep.subr.bf16.mxu0 0
      %3373 = vmatpush2.bf16.msra.mxu0 0
      %3374 = vmatprep.subr.bf16.mxu0 0
      %3375 = vmatpush2.bf16.msra.mxu0 0
      %3376 = vmatprep.subr.bf16.mxu0 0
      %3377 = vmatpush2.bf16.msra.mxu0 0
      %3378 = vmatprep.subr.bf16.mxu0 0
      %3379 = vmatpush2.bf16.msra.mxu0 0
      %3380 = vmatprep.subr.bf16.mxu0 0
      %3381 = vmatpush2.bf16.msra.mxu0 0
      %3382 = vmatprep.mubr.bf16.mxu0 0
      %3383 = vmatmul.mubr.bf16.gmra.mxu0 %v3348
      %v3384 = vpop.f32.mrf.mxu0
      %v3385 = vadd.f32 0.0, %v3384
      %v3386 = vpop.f32.mrf.mxu0
      %v3387 = vadd.f32 0.0, %v3386
      %v3388 = vpop.f32.mrf.mxu0
      %v3389 = vadd.f32 0.0, %v3388
      %v3390 = vpop.f32.mrf.mxu0
      %v3391 = vadd.f32 0.0, %v3390
      %3392 = vdwg.mxu0
      %v3393 = vadd.f32 %v3317, %v3385
      %v3394 = vadd.f32 %v3318, %v3387
      %v3395 = vadd.f32 %v3319, %v3389
      %v3396 = vadd.f32 %v3320, %v3391
      %v3397 = vld [vmem:[%s11] sm:$0xf]
      %v3398 = vld [vmem:[%s11 + $0x4] sm:$0xf]
      %v3399 = vpack.c.bf16 %v3395, %v3393
      %v3400 = vpack.c.bf16 %v3396, %v3394
      %v3401 = vld [vmem:[%s12] sm:$0xff]
      %v3402 = vld [vmem:[%s12 + $0x8] sm:$0xff]
      %3404 = vset.pattern.permute.xlu0 0
      %3405 = vperm.xlu0 %3404, %v3401
      %v3406 = vpop.permute.xlu0 %3405
      %3409 = vset.pattern.permute.xlu0 0
      %3410 = vperm.xlu0 %3409, %v3402
      %v3411 = vpop.permute.xlu0 %3410
      %v3415 = vunpack.c.l.b16 %v3397
      %v3416 = vunpack.c.l.b16 %v3398
      %v3417 = vpack.c.b16 %v3416, %v3415
      %v3419 = vsel %vm2333, %v3417, 0
      %3421 = vmatprep.subr.bf16.mxu0 0
      %3422 = vmatpush1.bf16.msra.mxu0 0
      %3423 = vmatprep.subr.bf16.mxu0 0
      %3424 = vmatpush1.bf16.msra.mxu0 0
      %3425 = vmatprep.subr.bf16.mxu0 0
      %3426 = vmatpush1.bf16.msra.mxu0 0
      %3427 = vmatprep.subr.bf16.mxu0 0
      %3428 = vmatpush1.bf16.msra.mxu0 0
      %3429 = vmatprep.subr.bf16.mxu0 0
      %3430 = vmatpush1.bf16.msra.mxu0 0
      %3431 = vmatprep.subr.bf16.mxu0 0
      %3432 = vmatpush1.bf16.msra.mxu0 0
      %3433 = vmatprep.subr.bf16.mxu0 0
      %3434 = vmatpush1.bf16.msra.mxu0 0
      %3435 = vmatprep.subr.bf16.mxu0 %v3400
      %3436 = vmatpush1.bf16.msra.mxu0 %v3399
      %3437 = vmatprep.subr.bf16.mxu0 0
      %3438 = vmatpush2.bf16.msra.mxu0 0
      %3439 = vmatprep.subr.bf16.mxu0 0
      %3440 = vmatpush2.bf16.msra.mxu0 0
      %3441 = vmatprep.subr.bf16.mxu0 0
      %3442 = vmatpush2.bf16.msra.mxu0 0
      %3443 = vmatprep.subr.bf16.mxu0 0
      %3444 = vmatpush2.bf16.msra.mxu0 0
      %3445 = vmatprep.subr.bf16.mxu0 0
      %3446 = vmatpush2.bf16.msra.mxu0 0
      %3447 = vmatprep.subr.bf16.mxu0 0
      %3448 = vmatpush2.bf16.msra.mxu0 0
      %3449 = vmatprep.subr.bf16.mxu0 0
      %3450 = vmatpush2.bf16.msra.mxu0 0
      %3451 = vmatprep.subr.bf16.mxu0 0
      %3452 = vmatpush2.bf16.msra.mxu0 0
      %3453 = vmatprep.mubr.bf16.mxu0 0
      %3454 = vmatmul.mubr.bf16.gmra.mxu0 %v3419
      %v3455 = vpop.f32.mrf.mxu0
      %v3456 = vadd.f32 %v3406, %v3455
      %v3457 = vpop.f32.mrf.mxu0
      %v3458 = vadd.f32 %v3406, %v3457
      %v3459 = vpop.f32.mrf.mxu0
      %v3460 = vadd.f32 %v3411, %v3459
      %v3461 = vpop.f32.mrf.mxu0
      %v3462 = vadd.f32 %v3411, %v3461
      %3463 = vdwg.mxu0
      %3464 = vrot.lane.b32.xlu0 %v3456, 17
      %v3465 = vpop.permute.xlu0 %3464
      %3466 = vrot.lane.b32.xlu0 %v3460, 17
      %v3467 = vpop.permute.xlu0 %3466
      %3468 = vrot.lane.b32.xlu0 %v3458, 17
      %v3469 = vpop.permute.xlu0 %3468
      %3470 = vrot.lane.b32.xlu0 %v3462, 17
      %v3471 = vpop.permute.xlu0 %3470
      %v3472 = vsel %vm886, %v3465, %v3469
      %v3473 = vsel %vm886, %v3467, %v3471
      %v3474 = vsel %vm886, %v3469, %v3465
      %v3475 = vsel %vm886, %v3471, %v3467
      %v3476 = vmul.f32 %v3474, %v894
      %v3477 = vmul.f32 %v3472, %v898
      %v3478 = vmul.f32 %v3475, %v894
      %v3479 = vmul.f32 %v3473, %v898
      %v3480 = vld [vmem:[%s13] sm:$0xf]
      %v3481 = vld [vmem:[%s13 + $0x4] sm:$0xf]
      %v3482 = vpack.c.bf16 %v3478, %v3476
      %v3483 = vpack.c.bf16 %v3479, %v3477
      %3484 = vrot.lane.b32.xlu0 %v3456, 16
      %v3485 = vpop.permute.xlu0 %3484
      %3486 = vrot.lane.b32.xlu0 %v3460, 16
      %v3487 = vpop.permute.xlu0 %3486
      %3488 = vrot.lane.b32.xlu0 %v3458, 16
      %v3489 = vpop.permute.xlu0 %3488
      %3490 = vrot.lane.b32.xlu0 %v3462, 16
      %v3491 = vpop.permute.xlu0 %3490
      %v3492 = vsel %vm911, %v3485, %v3489
      %v3493 = vsel %vm911, %v3487, %v3491
      %v3494 = vsel %vm911, %v3489, %v3485
      %v3495 = vsel %vm911, %v3491, %v3487
      %v3496 = vmul.f32 %v3494, %v920
      %v3497 = vmul.f32 %v3492, %v924
      %v3498 = vmul.f32 %v3495, %v920
      %v3499 = vmul.f32 %v3493, %v924
      %s3500 = scalar_lea.vmem %s13, 8
      %v3501 = vld [vmem:[%s3500] sm:$0xf]
      %v3502 = vld [vmem:[%s3500 + $0x4] sm:$0xf]
      %v3503 = vpack.c.bf16 %v3498, %v3496
      %v3504 = vpack.c.bf16 %v3499, %v3497
      %v3507 = vunpack.c.l.b16 %v3501
      %v3508 = vunpack.c.l.b16 %v3502
      %v3509 = vpack.c.b16 %v3508, %v3507
      %v3511 = vsel %vm2333, %v3509, 0
      %3513 = vmatprep.subr.bf16.mxu0 0
      %3514 = vmatpush1.bf16.msra.mxu0 0
      %3515 = vmatprep.subr.bf16.mxu0 0
      %3516 = vmatpush1.bf16.msra.mxu0 0
      %3517 = vmatprep.subr.bf16.mxu0 0
      %3518 = vmatpush1.bf16.msra.mxu0 0
      %3519 = vmatprep.subr.bf16.mxu0 0
      %3520 = vmatpush1.bf16.msra.mxu0 0
      %3521 = vmatprep.subr.bf16.mxu0 0
      %3522 = vmatpush1.bf16.msra.mxu0 0
      %3523 = vmatprep.subr.bf16.mxu0 0
      %3524 = vmatpush1.bf16.msra.mxu0 0
      %3525 = vmatprep.subr.bf16.mxu0 0
      %3526 = vmatpush1.bf16.msra.mxu0 0
      %3527 = vmatprep.subr.bf16.mxu0 %v3504
      %3528 = vmatpush1.bf16.msra.mxu0 %v3503
      %3529 = vmatprep.subr.bf16.mxu0 0
      %3530 = vmatpush2.bf16.msra.mxu0 0
      %3531 = vmatprep.subr.bf16.mxu0 0
      %3532 = vmatpush2.bf16.msra.mxu0 0
      %3533 = vmatprep.subr.bf16.mxu0 0
      %3534 = vmatpush2.bf16.msra.mxu0 0
      %3535 = vmatprep.subr.bf16.mxu0 0
      %3536 = vmatpush2.bf16.msra.mxu0 0
      %3537 = vmatprep.subr.bf16.mxu0 0
      %3538 = vmatpush2.bf16.msra.mxu0 0
      %3539 = vmatprep.subr.bf16.mxu0 0
      %3540 = vmatpush2.bf16.msra.mxu0 0
      %3541 = vmatprep.subr.bf16.mxu0 0
      %3542 = vmatpush2.bf16.msra.mxu0 0
      %3543 = vmatprep.subr.bf16.mxu0 0
      %3544 = vmatpush2.bf16.msra.mxu0 0
      %3545 = vmatprep.mubr.bf16.mxu0 0
      %3546 = vmatmul.mubr.bf16.gmra.mxu0 %v3511
      %v3547 = vpop.f32.mrf.mxu0
      %v3548 = vadd.f32 0.0, %v3547
      %v3549 = vpop.f32.mrf.mxu0
      %v3550 = vadd.f32 0.0, %v3549
      %v3551 = vpop.f32.mrf.mxu0
      %v3552 = vadd.f32 0.0, %v3551
      %v3553 = vpop.f32.mrf.mxu0
      %v3554 = vadd.f32 0.0, %v3553
      %3555 = vdwg.mxu0
      %v3558 = vunpack.c.l.b16 %v3480
      %v3559 = vunpack.c.l.b16 %v3481
      %v3560 = vpack.c.b16 %v3559, %v3558
      %v3562 = vsel %vm2333, %v3560, 0
      %3564 = vmatprep.subr.bf16.mxu0 0
      %3565 = vmatpush1.bf16.msra.mxu0 0
      %3566 = vmatprep.subr.bf16.mxu0 0
      %3567 = vmatpush1.bf16.msra.mxu0 0
      %3568 = vmatprep.subr.bf16.mxu0 0
      %3569 = vmatpush1.bf16.msra.mxu0 0
      %3570 = vmatprep.subr.bf16.mxu0 0
      %3571 = vmatpush1.bf16.msra.mxu0 0
      %3572 = vmatprep.subr.bf16.mxu0 0
      %3573 = vmatpush1.bf16.msra.mxu0 0
      %3574 = vmatprep.subr.bf16.mxu0 0
      %3575 = vmatpush1.bf16.msra.mxu0 0
      %3576 = vmatprep.subr.bf16.mxu0 0
      %3577 = vmatpush1.bf16.msra.mxu0 0
      %3578 = vmatprep.subr.bf16.mxu0 %v3483
      %3579 = vmatpush1.bf16.msra.mxu0 %v3482
      %3580 = vmatprep.subr.bf16.mxu0 0
      %3581 = vmatpush2.bf16.msra.mxu0 0
      %3582 = vmatprep.subr.bf16.mxu0 0
      %3583 = vmatpush2.bf16.msra.mxu0 0
      %3584 = vmatprep.subr.bf16.mxu0 0
      %3585 = vmatpush2.bf16.msra.mxu0 0
      %3586 = vmatprep.subr.bf16.mxu0 0
      %3587 = vmatpush2.bf16.msra.mxu0 0
      %3588 = vmatprep.subr.bf16.mxu0 0
      %3589 = vmatpush2.bf16.msra.mxu0 0
      %3590 = vmatprep.subr.bf16.mxu0 0
      %3591 = vmatpush2.bf16.msra.mxu0 0
      %3592 = vmatprep.subr.bf16.mxu0 0
      %3593 = vmatpush2.bf16.msra.mxu0 0
      %3594 = vmatprep.subr.bf16.mxu0 0
      %3595 = vmatpush2.bf16.msra.mxu0 0
      %3596 = vmatprep.mubr.bf16.mxu0 0
      %3597 = vmatmul.mubr.bf16.gmra.mxu0 %v3562
      %v3598 = vpop.f32.mrf.mxu0
      %v3599 = vadd.f32 %v3548, %v3598
      %v3600 = vpop.f32.mrf.mxu0
      %v3601 = vadd.f32 %v3550, %v3600
      %v3602 = vpop.f32.mrf.mxu0
      %v3603 = vadd.f32 %v3552, %v3602
      %v3604 = vpop.f32.mrf.mxu0
      %v3605 = vadd.f32 %v3554, %v3604
      %3606 = vdwg.mxu0
      %3607 = vrot.lane.b32.xlu0 %v3456, 15
      %v3608 = vpop.permute.xlu0 %3607
      %3609 = vrot.lane.b32.xlu0 %v3460, 15
      %v3610 = vpop.permute.xlu0 %3609
      %3611 = vrot.lane.b32.xlu0 %v3458, 15
      %v3612 = vpop.permute.xlu0 %3611
      %3613 = vrot.lane.b32.xlu0 %v3462, 15
      %v3614 = vpop.permute.xlu0 %3613
      %v3615 = vsel %vm1054, %v3608, %v3612
      %v3616 = vsel %vm1054, %v3610, %v3614
      %v3617 = vsel %vm1054, %v3612, %v3608
      %v3618 = vsel %vm1054, %v3614, %v3610
      %v3619 = vmul.f32 %v3617, %v1063
      %v3620 = vmul.f32 %v3615, %v1067
      %v3621 = vmul.f32 %v3618, %v1063
      %v3622 = vmul.f32 %v3616, %v1067
      %s3623 = scalar_lea.vmem %s13, 16
      %v3624 = vld [vmem:[%s3623] sm:$0xf]
      %v3625 = vld [vmem:[%s3623 + $0x4] sm:$0xf]
      %v3626 = vpack.c.bf16 %v3621, %v3619
      %v3627 = vpack.c.bf16 %v3622, %v3620
      %v3630 = vunpack.c.l.b16 %v3624
      %v3631 = vunpack.c.l.b16 %v3625
      %v3632 = vpack.c.b16 %v3631, %v3630
      %v3634 = vsel %vm2333, %v3632, 0
      %3636 = vmatprep.subr.bf16.mxu0 0
      %3637 = vmatpush1.bf16.msra.mxu0 0
      %3638 = vmatprep.subr.bf16.mxu0 0
      %3639 = vmatpush1.bf16.msra.mxu0 0
      %3640 = vmatprep.subr.bf16.mxu0 0
      %3641 = vmatpush1.bf16.msra.mxu0 0
      %3642 = vmatprep.subr.bf16.mxu0 0
      %3643 = vmatpush1.bf16.msra.mxu0 0
      %3644 = vmatprep.subr.bf16.mxu0 0
      %3645 = vmatpush1.bf16.msra.mxu0 0
      %3646 = vmatprep.subr.bf16.mxu0 0
      %3647 = vmatpush1.bf16.msra.mxu0 0
      %3648 = vmatprep.subr.bf16.mxu0 0
      %3649 = vmatpush1.bf16.msra.mxu0 0
      %3650 = vmatprep.subr.bf16.mxu0 %v3627
      %3651 = vmatpush1.bf16.msra.mxu0 %v3626
      %3652 = vmatprep.subr.bf16.mxu0 0
      %3653 = vmatpush2.bf16.msra.mxu0 0
      %3654 = vmatprep.subr.bf16.mxu0 0
      %3655 = vmatpush2.bf16.msra.mxu0 0
      %3656 = vmatprep.subr.bf16.mxu0 0
      %3657 = vmatpush2.bf16.msra.mxu0 0
      %3658 = vmatprep.subr.bf16.mxu0 0
      %3659 = vmatpush2.bf16.msra.mxu0 0
      %3660 = vmatprep.subr.bf16.mxu0 0
      %3661 = vmatpush2.bf16.msra.mxu0 0
      %3662 = vmatprep.subr.bf16.mxu0 0
      %3663 = vmatpush2.bf16.msra.mxu0 0
      %3664 = vmatprep.subr.bf16.mxu0 0
      %3665 = vmatpush2.bf16.msra.mxu0 0
      %3666 = vmatprep.subr.bf16.mxu0 0
      %3667 = vmatpush2.bf16.msra.mxu0 0
      %3668 = vmatprep.mubr.bf16.mxu0 0
      %3669 = vmatmul.mubr.bf16.gmra.mxu0 %v3634
      %v3670 = vpop.f32.mrf.mxu0
      %v3671 = vadd.f32 0.0, %v3670
      %v3672 = vpop.f32.mrf.mxu0
      %v3673 = vadd.f32 0.0, %v3672
      %v3674 = vpop.f32.mrf.mxu0
      %v3675 = vadd.f32 0.0, %v3674
      %v3676 = vpop.f32.mrf.mxu0
      %v3677 = vadd.f32 0.0, %v3676
      %3678 = vdwg.mxu0
      %v3679 = vadd.f32 %v3599, %v3671
      %v3680 = vadd.f32 %v3601, %v3673
      %v3681 = vadd.f32 %v3603, %v3675
      %v3682 = vadd.f32 %v3605, %v3677
      %3683 = vrot.lane.b32.xlu0 %v3456, 1
      %v3684 = vpop.permute.xlu0 %3683
      %3685 = vrot.lane.b32.xlu0 %v3460, 1
      %v3686 = vpop.permute.xlu0 %3685
      %3687 = vrot.lane.b32.xlu0 %v3458, 1
      %v3688 = vpop.permute.xlu0 %3687
      %3689 = vrot.lane.b32.xlu0 %v3462, 1
      %v3690 = vpop.permute.xlu0 %3689
      %v3691 = vsel %vm1142, %v3684, %v3688
      %v3692 = vsel %vm1142, %v3686, %v3690
      %v3693 = vsel %vm1142, %v3688, %v3684
      %v3694 = vsel %vm1142, %v3690, %v3686
      %v3695 = vmul.f32 %v3693, %v1151
      %v3696 = vmul.f32 %v3691, %v1155
      %v3697 = vmul.f32 %v3694, %v1151
      %v3698 = vmul.f32 %v3692, %v1155
      %s3699 = scalar_lea.vmem %s13, 24
      %v3700 = vld [vmem:[%s3699] sm:$0xf]
      %v3701 = vld [vmem:[%s3699 + $0x4] sm:$0xf]
      %v3702 = vpack.c.bf16 %v3697, %v3695
      %v3703 = vpack.c.bf16 %v3698, %v3696
      %v3706 = vunpack.c.l.b16 %v3700
      %v3707 = vunpack.c.l.b16 %v3701
      %v3708 = vpack.c.b16 %v3707, %v3706
      %v3710 = vsel %vm2333, %v3708, 0
      %3712 = vmatprep.subr.bf16.mxu0 0
      %3713 = vmatpush1.bf16.msra.mxu0 0
      %3714 = vmatprep.subr.bf16.mxu0 0
      %3715 = vmatpush1.bf16.msra.mxu0 0
      %3716 = vmatprep.subr.bf16.mxu0 0
      %3717 = vmatpush1.bf16.msra.mxu0 0
      %3718 = vmatprep.subr.bf16.mxu0 0
      %3719 = vmatpush1.bf16.msra.mxu0 0
      %3720 = vmatprep.subr.bf16.mxu0 0
      %3721 = vmatpush1.bf16.msra.mxu0 0
      %3722 = vmatprep.subr.bf16.mxu0 0
      %3723 = vmatpush1.bf16.msra.mxu0 0
      %3724 = vmatprep.subr.bf16.mxu0 0
      %3725 = vmatpush1.bf16.msra.mxu0 0
      %3726 = vmatprep.subr.bf16.mxu0 %v3703
      %3727 = vmatpush1.bf16.msra.mxu0 %v3702
      %3728 = vmatprep.subr.bf16.mxu0 0
      %3729 = vmatpush2.bf16.msra.mxu0 0
      %3730 = vmatprep.subr.bf16.mxu0 0
      %3731 = vmatpush2.bf16.msra.mxu0 0
      %3732 = vmatprep.subr.bf16.mxu0 0
      %3733 = vmatpush2.bf16.msra.mxu0 0
      %3734 = vmatprep.subr.bf16.mxu0 0
      %3735 = vmatpush2.bf16.msra.mxu0 0
      %3736 = vmatprep.subr.bf16.mxu0 0
      %3737 = vmatpush2.bf16.msra.mxu0 0
      %3738 = vmatprep.subr.bf16.mxu0 0
      %3739 = vmatpush2.bf16.msra.mxu0 0
      %3740 = vmatprep.subr.bf16.mxu0 0
      %3741 = vmatpush2.bf16.msra.mxu0 0
      %3742 = vmatprep.subr.bf16.mxu0 0
      %3743 = vmatpush2.bf16.msra.mxu0 0
      %3744 = vmatprep.mubr.bf16.mxu0 0
      %3745 = vmatmul.mubr.bf16.gmra.mxu0 %v3710
      %v3746 = vpop.f32.mrf.mxu0
      %v3747 = vadd.f32 0.0, %v3746
      %v3748 = vpop.f32.mrf.mxu0
      %v3749 = vadd.f32 0.0, %v3748
      %v3750 = vpop.f32.mrf.mxu0
      %v3751 = vadd.f32 0.0, %v3750
      %v3752 = vpop.f32.mrf.mxu0
      %v3753 = vadd.f32 0.0, %v3752
      %3754 = vdwg.mxu0
      %v3755 = vadd.f32 %v3679, %v3747
      %v3756 = vadd.f32 %v3680, %v3749
      %v3757 = vadd.f32 %v3681, %v3751
      %v3758 = vadd.f32 %v3682, %v3753
      %v3759 = vmul.f32 %v3456, %v1232
      %v3760 = vmul.f32 %v3458, %v1236
      %v3761 = vmul.f32 %v3460, %v1232
      %v3762 = vmul.f32 %v3462, %v1236
      %s3763 = scalar_lea.vmem %s13, 32
      %v3764 = vld [vmem:[%s3763] sm:$0xf]
      %v3765 = vld [vmem:[%s3763 + $0x4] sm:$0xf]
      %v3766 = vpack.c.bf16 %v3761, %v3759
      %v3767 = vpack.c.bf16 %v3762, %v3760
      %v3770 = vunpack.c.l.b16 %v3764
      %v3771 = vunpack.c.l.b16 %v3765
      %v3772 = vpack.c.b16 %v3771, %v3770
      %v3774 = vsel %vm2333, %v3772, 0
      %3776 = vmatprep.subr.bf16.mxu0 0
      %3777 = vmatpush1.bf16.msra.mxu0 0
      %3778 = vmatprep.subr.bf16.mxu0 0
      %3779 = vmatpush1.bf16.msra.mxu0 0
      %3780 = vmatprep.subr.bf16.mxu0 0
      %3781 = vmatpush1.bf16.msra.mxu0 0
      %3782 = vmatprep.subr.bf16.mxu0 0
      %3783 = vmatpush1.bf16.msra.mxu0 0
      %3784 = vmatprep.subr.bf16.mxu0 0
      %3785 = vmatpush1.bf16.msra.mxu0 0
      %3786 = vmatprep.subr.bf16.mxu0 0
      %3787 = vmatpush1.bf16.msra.mxu0 0
      %3788 = vmatprep.subr.bf16.mxu0 0
      %3789 = vmatpush1.bf16.msra.mxu0 0
      %3790 = vmatprep.subr.bf16.mxu0 %v3767
      %3791 = vmatpush1.bf16.msra.mxu0 %v3766
      %3792 = vmatprep.subr.bf16.mxu0 0
      %3793 = vmatpush2.bf16.msra.mxu0 0
      %3794 = vmatprep.subr.bf16.mxu0 0
      %3795 = vmatpush2.bf16.msra.mxu0 0
      %3796 = vmatprep.subr.bf16.mxu0 0
      %3797 = vmatpush2.bf16.msra.mxu0 0
      %3798 = vmatprep.subr.bf16.mxu0 0
      %3799 = vmatpush2.bf16.msra.mxu0 0
      %3800 = vmatprep.subr.bf16.mxu0 0
      %3801 = vmatpush2.bf16.msra.mxu0 0
      %3802 = vmatprep.subr.bf16.mxu0 0
      %3803 = vmatpush2.bf16.msra.mxu0 0
      %3804 = vmatprep.subr.bf16.mxu0 0
      %3805 = vmatpush2.bf16.msra.mxu0 0
      %3806 = vmatprep.subr.bf16.mxu0 0
      %3807 = vmatpush2.bf16.msra.mxu0 0
      %3808 = vmatprep.mubr.bf16.mxu0 0
      %3809 = vmatmul.mubr.bf16.gmra.mxu0 %v3774
      %v3810 = vpop.f32.mrf.mxu0
      %v3811 = vadd.f32 0.0, %v3810
      %v3812 = vpop.f32.mrf.mxu0
      %v3813 = vadd.f32 0.0, %v3812
      %v3814 = vpop.f32.mrf.mxu0
      %v3815 = vadd.f32 0.0, %v3814
      %v3816 = vpop.f32.mrf.mxu0
      %v3817 = vadd.f32 0.0, %v3816
      %3818 = vdwg.mxu0
      %v3819 = vadd.f32 %v3755, %v3811
      %v3820 = vadd.f32 %v3756, %v3813
      %v3821 = vadd.f32 %v3757, %v3815
      %v3822 = vadd.f32 %v3758, %v3817
      %3823 = vrot.lane.b32.xlu0 %v3456, 127
      %v3824 = vpop.permute.xlu0 %3823
      %3825 = vrot.lane.b32.xlu0 %v3460, 127
      %v3826 = vpop.permute.xlu0 %3825
      %3827 = vrot.lane.b32.xlu0 %v3458, 127
      %v3828 = vpop.permute.xlu0 %3827
      %3829 = vrot.lane.b32.xlu0 %v3462, 127
      %v3830 = vpop.permute.xlu0 %3829
      %v3831 = vsel %vm1311, %v3824, %v3828
      %v3832 = vsel %vm1311, %v3826, %v3830
      %v3833 = vsel %vm1311, %v3828, %v3824
      %v3834 = vsel %vm1311, %v3830, %v3826
      %v3835 = vmul.f32 %v3831, %v1320
      %v3836 = vmul.f32 %v3833, %v1324
      %v3837 = vmul.f32 %v3832, %v1320
      %v3838 = vmul.f32 %v3834, %v1324
      %s3839 = scalar_lea.vmem %s13, 40
      %v3840 = vld [vmem:[%s3839] sm:$0xf]
      %v3841 = vld [vmem:[%s3839 + $0x4] sm:$0xf]
      %v3842 = vpack.c.bf16 %v3837, %v3835
      %v3843 = vpack.c.bf16 %v3838, %v3836
      %v3846 = vunpack.c.l.b16 %v3840
      %v3847 = vunpack.c.l.b16 %v3841
      %v3848 = vpack.c.b16 %v3847, %v3846
      %v3850 = vsel %vm2333, %v3848, 0
      %3852 = vmatprep.subr.bf16.mxu0 0
      %3853 = vmatpush1.bf16.msra.mxu0 0
      %3854 = vmatprep.subr.bf16.mxu0 0
      %3855 = vmatpush1.bf16.msra.mxu0 0
      %3856 = vmatprep.subr.bf16.mxu0 0
      %3857 = vmatpush1.bf16.msra.mxu0 0
      %3858 = vmatprep.subr.bf16.mxu0 0
      %3859 = vmatpush1.bf16.msra.mxu0 0
      %3860 = vmatprep.subr.bf16.mxu0 0
      %3861 = vmatpush1.bf16.msra.mxu0 0
      %3862 = vmatprep.subr.bf16.mxu0 0
      %3863 = vmatpush1.bf16.msra.mxu0 0
      %3864 = vmatprep.subr.bf16.mxu0 0
      %3865 = vmatpush1.bf16.msra.mxu0 0
      %3866 = vmatprep.subr.bf16.mxu0 %v3843
      %3867 = vmatpush1.bf16.msra.mxu0 %v3842
      %3868 = vmatprep.subr.bf16.mxu0 0
      %3869 = vmatpush2.bf16.msra.mxu0 0
      %3870 = vmatprep.subr.bf16.mxu0 0
      %3871 = vmatpush2.bf16.msra.mxu0 0
      %3872 = vmatprep.subr.bf16.mxu0 0
      %3873 = vmatpush2.bf16.msra.mxu0 0
      %3874 = vmatprep.subr.bf16.mxu0 0
      %3875 = vmatpush2.bf16.msra.mxu0 0
      %3876 = vmatprep.subr.bf16.mxu0 0
      %3877 = vmatpush2.bf16.msra.mxu0 0
      %3878 = vmatprep.subr.bf16.mxu0 0
      %3879 = vmatpush2.bf16.msra.mxu0 0
      %3880 = vmatprep.subr.bf16.mxu0 0
      %3881 = vmatpush2.bf16.msra.mxu0 0
      %3882 = vmatprep.subr.bf16.mxu0 0
      %3883 = vmatpush2.bf16.msra.mxu0 0
      %3884 = vmatprep.mubr.bf16.mxu0 0
      %3885 = vmatmul.mubr.bf16.gmra.mxu0 %v3850
      %v3886 = vpop.f32.mrf.mxu0
      %v3887 = vadd.f32 0.0, %v3886
      %v3888 = vpop.f32.mrf.mxu0
      %v3889 = vadd.f32 0.0, %v3888
      %v3890 = vpop.f32.mrf.mxu0
      %v3891 = vadd.f32 0.0, %v3890
      %v3892 = vpop.f32.mrf.mxu0
      %v3893 = vadd.f32 0.0, %v3892
      %3894 = vdwg.mxu0
      %v3895 = vadd.f32 %v3819, %v3887
      %v3896 = vadd.f32 %v3820, %v3889
      %v3897 = vadd.f32 %v3821, %v3891
      %v3898 = vadd.f32 %v3822, %v3893
      %3899 = vrot.lane.b32.xlu0 %v3456, 113
      %v3900 = vpop.permute.xlu0 %3899
      %3901 = vrot.lane.b32.xlu0 %v3460, 113
      %v3902 = vpop.permute.xlu0 %3901
      %3903 = vrot.lane.b32.xlu0 %v3458, 113
      %v3904 = vpop.permute.xlu0 %3903
      %3905 = vrot.lane.b32.xlu0 %v3462, 113
      %v3906 = vpop.permute.xlu0 %3905
      %v3907 = vsel %vm1399, %v3900, %v3904
      %v3908 = vsel %vm1399, %v3902, %v3906
      %v3909 = vsel %vm1399, %v3904, %v3900
      %v3910 = vsel %vm1399, %v3906, %v3902
      %v3911 = vmul.f32 %v3907, %v1408
      %v3912 = vmul.f32 %v3909, %v1412
      %v3913 = vmul.f32 %v3908, %v1408
      %v3914 = vmul.f32 %v3910, %v1412
      %s3915 = scalar_lea.vmem %s13, 48
      %v3916 = vld [vmem:[%s3915] sm:$0xf]
      %v3917 = vld [vmem:[%s3915 + $0x4] sm:$0xf]
      %v3918 = vpack.c.bf16 %v3913, %v3911
      %v3919 = vpack.c.bf16 %v3914, %v3912
      %v3922 = vunpack.c.l.b16 %v3916
      %v3923 = vunpack.c.l.b16 %v3917
      %v3924 = vpack.c.b16 %v3923, %v3922
      %v3926 = vsel %vm2333, %v3924, 0
      %3928 = vmatprep.subr.bf16.mxu0 0
      %3929 = vmatpush1.bf16.msra.mxu0 0
      %3930 = vmatprep.subr.bf16.mxu0 0
      %3931 = vmatpush1.bf16.msra.mxu0 0
      %3932 = vmatprep.subr.bf16.mxu0 0
      %3933 = vmatpush1.bf16.msra.mxu0 0
      %3934 = vmatprep.subr.bf16.mxu0 0
      %3935 = vmatpush1.bf16.msra.mxu0 0
      %3936 = vmatprep.subr.bf16.mxu0 0
      %3937 = vmatpush1.bf16.msra.mxu0 0
      %3938 = vmatprep.subr.bf16.mxu0 0
      %3939 = vmatpush1.bf16.msra.mxu0 0
      %3940 = vmatprep.subr.bf16.mxu0 0
      %3941 = vmatpush1.bf16.msra.mxu0 0
      %3942 = vmatprep.subr.bf16.mxu0 %v3919
      %3943 = vmatpush1.bf16.msra.mxu0 %v3918
      %3944 = vmatprep.subr.bf16.mxu0 0
      %3945 = vmatpush2.bf16.msra.mxu0 0
      %3946 = vmatprep.subr.bf16.mxu0 0
      %3947 = vmatpush2.bf16.msra.mxu0 0
      %3948 = vmatprep.subr.bf16.mxu0 0
      %3949 = vmatpush2.bf16.msra.mxu0 0
      %3950 = vmatprep.subr.bf16.mxu0 0
      %3951 = vmatpush2.bf16.msra.mxu0 0
      %3952 = vmatprep.subr.bf16.mxu0 0
      %3953 = vmatpush2.bf16.msra.mxu0 0
      %3954 = vmatprep.subr.bf16.mxu0 0
      %3955 = vmatpush2.bf16.msra.mxu0 0
      %3956 = vmatprep.subr.bf16.mxu0 0
      %3957 = vmatpush2.bf16.msra.mxu0 0
      %3958 = vmatprep.subr.bf16.mxu0 0
      %3959 = vmatpush2.bf16.msra.mxu0 0
      %3960 = vmatprep.mubr.bf16.mxu0 0
      %3961 = vmatmul.mubr.bf16.gmra.mxu0 %v3926
      %v3962 = vpop.f32.mrf.mxu0
      %v3963 = vadd.f32 0.0, %v3962
      %v3964 = vpop.f32.mrf.mxu0
      %v3965 = vadd.f32 0.0, %v3964
      %v3966 = vpop.f32.mrf.mxu0
      %v3967 = vadd.f32 0.0, %v3966
      %v3968 = vpop.f32.mrf.mxu0
      %v3969 = vadd.f32 0.0, %v3968
      %3970 = vdwg.mxu0
      %v3971 = vadd.f32 %v3895, %v3963
      %v3972 = vadd.f32 %v3896, %v3965
      %v3973 = vadd.f32 %v3897, %v3967
      %v3974 = vadd.f32 %v3898, %v3969
      %3975 = vrot.lane.b32.xlu0 %v3456, 112
      %v3976 = vpop.permute.xlu0 %3975
      %3977 = vrot.lane.b32.xlu0 %v3460, 112
      %v3978 = vpop.permute.xlu0 %3977
      %3979 = vrot.lane.b32.xlu0 %v3458, 112
      %v3980 = vpop.permute.xlu0 %3979
      %3981 = vrot.lane.b32.xlu0 %v3462, 112
      %v3982 = vpop.permute.xlu0 %3981
      %v3983 = vsel %vm1487, %v3976, %v3980
      %v3984 = vsel %vm1487, %v3978, %v3982
      %v3985 = vsel %vm1487, %v3980, %v3976
      %v3986 = vsel %vm1487, %v3982, %v3978
      %v3987 = vmul.f32 %v3983, %v1496
      %v3988 = vmul.f32 %v3985, %v1500
      %v3989 = vmul.f32 %v3984, %v1496
      %v3990 = vmul.f32 %v3986, %v1500
      %s3991 = scalar_lea.vmem %s13, 56
      %v3992 = vld [vmem:[%s3991] sm:$0xf]
      %v3993 = vld [vmem:[%s3991 + $0x4] sm:$0xf]
      %v3994 = vpack.c.bf16 %v3989, %v3987
      %v3995 = vpack.c.bf16 %v3990, %v3988
      %v3998 = vunpack.c.l.b16 %v3992
      %v3999 = vunpack.c.l.b16 %v3993
      %v4000 = vpack.c.b16 %v3999, %v3998
      %v4002 = vsel %vm2333, %v4000, 0
      %4004 = vmatprep.subr.bf16.mxu0 0
      %4005 = vmatpush1.bf16.msra.mxu0 0
      %4006 = vmatprep.subr.bf16.mxu0 0
      %4007 = vmatpush1.bf16.msra.mxu0 0
      %4008 = vmatprep.subr.bf16.mxu0 0
      %4009 = vmatpush1.bf16.msra.mxu0 0
      %4010 = vmatprep.subr.bf16.mxu0 0
      %4011 = vmatpush1.bf16.msra.mxu0 0
      %4012 = vmatprep.subr.bf16.mxu0 0
      %4013 = vmatpush1.bf16.msra.mxu0 0
      %4014 = vmatprep.subr.bf16.mxu0 0
      %4015 = vmatpush1.bf16.msra.mxu0 0
      %4016 = vmatprep.subr.bf16.mxu0 0
      %4017 = vmatpush1.bf16.msra.mxu0 0
      %4018 = vmatprep.subr.bf16.mxu0 %v3995
      %4019 = vmatpush1.bf16.msra.mxu0 %v3994
      %4020 = vmatprep.subr.bf16.mxu0 0
      %4021 = vmatpush2.bf16.msra.mxu0 0
      %4022 = vmatprep.subr.bf16.mxu0 0
      %4023 = vmatpush2.bf16.msra.mxu0 0
      %4024 = vmatprep.subr.bf16.mxu0 0
      %4025 = vmatpush2.bf16.msra.mxu0 0
      %4026 = vmatprep.subr.bf16.mxu0 0
      %4027 = vmatpush2.bf16.msra.mxu0 0
      %4028 = vmatprep.subr.bf16.mxu0 0
      %4029 = vmatpush2.bf16.msra.mxu0 0
      %4030 = vmatprep.subr.bf16.mxu0 0
      %4031 = vmatpush2.bf16.msra.mxu0 0
      %4032 = vmatprep.subr.bf16.mxu0 0
      %4033 = vmatpush2.bf16.msra.mxu0 0
      %4034 = vmatprep.subr.bf16.mxu0 0
      %4035 = vmatpush2.bf16.msra.mxu0 0
      %4036 = vmatprep.mubr.bf16.mxu0 0
      %4037 = vmatmul.mubr.bf16.gmra.mxu0 %v4002
      %v4038 = vpop.f32.mrf.mxu0
      %v4039 = vadd.f32 0.0, %v4038
      %v4040 = vpop.f32.mrf.mxu0
      %v4041 = vadd.f32 0.0, %v4040
      %v4042 = vpop.f32.mrf.mxu0
      %v4043 = vadd.f32 0.0, %v4042
      %v4044 = vpop.f32.mrf.mxu0
      %v4045 = vadd.f32 0.0, %v4044
      %4046 = vdwg.mxu0
      %v4047 = vadd.f32 %v3971, %v4039
      %v4048 = vadd.f32 %v3972, %v4041
      %v4049 = vadd.f32 %v3973, %v4043
      %v4050 = vadd.f32 %v3974, %v4045
      %4051 = vrot.lane.b32.xlu0 %v3456, 111
      %v4052 = vpop.permute.xlu0 %4051
      %4053 = vrot.lane.b32.xlu0 %v3460, 111
      %v4054 = vpop.permute.xlu0 %4053
      %4055 = vrot.lane.b32.xlu0 %v3458, 111
      %v4056 = vpop.permute.xlu0 %4055
      %4057 = vrot.lane.b32.xlu0 %v3462, 111
      %v4058 = vpop.permute.xlu0 %4057
      %v4059 = vsel %vm1575, %v4052, %v4056
      %v4060 = vsel %vm1575, %v4054, %v4058
      %v4061 = vsel %vm1575, %v4056, %v4052
      %v4062 = vsel %vm1575, %v4058, %v4054
      %v4063 = vmul.f32 %v4059, %v1584
      %v4064 = vmul.f32 %v4061, %v1588
      %v4065 = vmul.f32 %v4060, %v1584
      %v4066 = vmul.f32 %v4062, %v1588
      %s4067 = scalar_lea.vmem %s13, 64
      %v4068 = vld [vmem:[%s4067] sm:$0xf]
      %v4069 = vld [vmem:[%s4067 + $0x4] sm:$0xf]
      %v4070 = vpack.c.bf16 %v4065, %v4063
      %v4071 = vpack.c.bf16 %v4066, %v4064
      %v4074 = vunpack.c.l.b16 %v4068
      %v4075 = vunpack.c.l.b16 %v4069
      %v4076 = vpack.c.b16 %v4075, %v4074
      %v4078 = vsel %vm2333, %v4076, 0
      %4080 = vmatprep.subr.bf16.mxu0 0
      %4081 = vmatpush1.bf16.msra.mxu0 0
      %4082 = vmatprep.subr.bf16.mxu0 0
      %4083 = vmatpush1.bf16.msra.mxu0 0
      %4084 = vmatprep.subr.bf16.mxu0 0
      %4085 = vmatpush1.bf16.msra.mxu0 0
      %4086 = vmatprep.subr.bf16.mxu0 0
      %4087 = vmatpush1.bf16.msra.mxu0 0
      %4088 = vmatprep.subr.bf16.mxu0 0
      %4089 = vmatpush1.bf16.msra.mxu0 0
      %4090 = vmatprep.subr.bf16.mxu0 0
      %4091 = vmatpush1.bf16.msra.mxu0 0
      %4092 = vmatprep.subr.bf16.mxu0 0
      %4093 = vmatpush1.bf16.msra.mxu0 0
      %4094 = vmatprep.subr.bf16.mxu0 %v4071
      %4095 = vmatpush1.bf16.msra.mxu0 %v4070
      %4096 = vmatprep.subr.bf16.mxu0 0
      %4097 = vmatpush2.bf16.msra.mxu0 0
      %4098 = vmatprep.subr.bf16.mxu0 0
      %4099 = vmatpush2.bf16.msra.mxu0 0
      %4100 = vmatprep.subr.bf16.mxu0 0
      %4101 = vmatpush2.bf16.msra.mxu0 0
      %4102 = vmatprep.subr.bf16.mxu0 0
      %4103 = vmatpush2.bf16.msra.mxu0 0
      %4104 = vmatprep.subr.bf16.mxu0 0
      %4105 = vmatpush2.bf16.msra.mxu0 0
      %4106 = vmatprep.subr.bf16.mxu0 0
      %4107 = vmatpush2.bf16.msra.mxu0 0
      %4108 = vmatprep.subr.bf16.mxu0 0
      %4109 = vmatpush2.bf16.msra.mxu0 0
      %4110 = vmatprep.subr.bf16.mxu0 0
      %4111 = vmatpush2.bf16.msra.mxu0 0
      %4112 = vmatprep.mubr.bf16.mxu0 0
      %4113 = vmatmul.mubr.bf16.gmra.mxu0 %v4078
      %v4114 = vpop.f32.mrf.mxu0
      %v4115 = vadd.f32 0.0, %v4114
      %v4116 = vpop.f32.mrf.mxu0
      %v4117 = vadd.f32 0.0, %v4116
      %v4118 = vpop.f32.mrf.mxu0
      %v4119 = vadd.f32 0.0, %v4118
      %v4120 = vpop.f32.mrf.mxu0
      %v4121 = vadd.f32 0.0, %v4120
      %4122 = vdwg.mxu0
      %v4123 = vadd.f32 %v4047, %v4115
      %v4124 = vadd.f32 %v4048, %v4117
      %v4125 = vadd.f32 %v4049, %v4119
      %v4126 = vadd.f32 %v4050, %v4121
      %v4127 = vld [vmem:[%s14] sm:$0xff]
      %v4128 = vld [vmem:[%s14 + $0x8] sm:$0xff]
      %4130 = vset.pattern.permute.xlu0 0
      %4131 = vperm.xlu0 %4130, %v4127
      %v4132 = vpop.permute.xlu0 %4131
      %4135 = vset.pattern.permute.xlu0 0
      %4136 = vperm.xlu0 %4135, %v4128
      %v4137 = vpop.permute.xlu0 %4136
      %v4139 = vadd.f32 %v4123, %v4132
      %v4140 = vadd.f32 %v4124, %v4132
      %v4141 = vadd.f32 %v4125, %v4137
      %v4142 = vadd.f32 %v4126, %v4137
      %v4143 = vadd.f32 %v4139, %v4140
      %4144 = vadd.xlane.f32.xlu0 %v4143
      %v4145 = vpop.xlane.xlu0 %4144
      %v4146 = vadd.f32 %v4141, %v4142
      %4147 = vadd.xlane.f32.xlu0 %v4146
      %v4148 = vpop.xlane.xlu0 %4147
      %v4149 = vmul.f32 %v4139, %v4139
      %v4150 = vmul.f32 %v4140, %v4140
      %v4151 = vmul.f32 %v4141, %v4141
      %v4152 = vmul.f32 %v4142, %v4142
      %v4153 = vadd.f32 %v4149, %v4150
      %4154 = vadd.xlane.f32.xlu0 %v4153
      %v4155 = vpop.xlane.xlu0 %4154
      %v4156 = vadd.f32 %v4151, %v4152
      %4157 = vadd.xlane.f32.xlu0 %v4156
      %v4158 = vpop.xlane.xlu0 %4157
      %4159 = vmatprep.subr.mxu0 0.0
      %4160 = vmatpush1.msra.mxu0 0.0
      %4161 = vmatprep.subr.mxu0 0.0
      %4162 = vmatpush1.msra.mxu0 0.0
      %4163 = vmatprep.subr.mxu0 0.0
      %4164 = vmatpush1.msra.mxu0 0.0
      %4165 = vmatprep.subr.mxu0 0.0
      %4166 = vmatpush1.msra.mxu0 0.0
      %4167 = vmatprep.subr.mxu0 0.0
      %4168 = vmatpush1.msra.mxu0 0.0
      %4169 = vmatprep.subr.mxu0 0.0
      %4170 = vmatpush1.msra.mxu0 0.0
      %4171 = vmatprep.subr.mxu0 0.0
      %4172 = vmatpush1.msra.mxu0 0.0
      %4173 = vmatprep.subr.mxu0 0.0
      %4174 = vmatpush1.msra.mxu0 0.0
      %4175 = vmatprep.subr.mxu0 0.0
      %4176 = vmatpush1.msra.mxu0 0.0
      %4177 = vmatprep.subr.mxu0 0.0
      %4178 = vmatpush1.msra.mxu0 0.0
      %4179 = vmatprep.subr.mxu0 0.0
      %4180 = vmatpush1.msra.mxu0 0.0
      %4181 = vmatprep.subr.mxu0 0.0
      %4182 = vmatpush1.msra.mxu0 0.0
      %4183 = vmatprep.subr.mxu0 0.0
      %4184 = vmatpush1.msra.mxu0 0.0
      %4185 = vmatprep.subr.mxu0 0.0
      %4186 = vmatpush1.msra.mxu0 0.0
      %4187 = vmatprep.subr.mxu0 0.0
      %4188 = vmatpush1.msra.mxu0 %v4148
      %4189 = vmatprep.subr.mxu0 0.0
      %4190 = vmatpush1.msra.mxu0 %v4145
      %4191 = vmatprep.subr.mxu0 0.0
      %4192 = vmatpush2.msra.mxu0 0.0
      %4193 = vmatprep.subr.mxu0 0.0
      %4194 = vmatpush2.msra.mxu0 0.0
      %4195 = vmatprep.subr.mxu0 0.0
      %4196 = vmatpush2.msra.mxu0 0.0
      %4197 = vmatprep.subr.mxu0 0.0
      %4198 = vmatpush2.msra.mxu0 0.0
      %4199 = vmatprep.subr.mxu0 0.0
      %4200 = vmatpush2.msra.mxu0 0.0
      %4201 = vmatprep.subr.mxu0 0.0
      %4202 = vmatpush2.msra.mxu0 0.0
      %4203 = vmatprep.subr.mxu0 0.0
      %4204 = vmatpush2.msra.mxu0 0.0
      %4205 = vmatprep.subr.mxu0 0.0
      %4206 = vmatpush2.msra.mxu0 0.0
      %4207 = vmatprep.subr.mxu0 0.0
      %4208 = vmatpush2.msra.mxu0 0.0
      %4209 = vmatprep.subr.mxu0 0.0
      %4210 = vmatpush2.msra.mxu0 0.0
      %4211 = vmatprep.subr.mxu0 0.0
      %4212 = vmatpush2.msra.mxu0 0.0
      %4213 = vmatprep.subr.mxu0 0.0
      %4214 = vmatpush2.msra.mxu0 0.0
      %4215 = vmatprep.subr.mxu0 0.0
      %4216 = vmatpush2.msra.mxu0 0.0
      %4217 = vmatprep.subr.mxu0 0.0
      %4218 = vmatpush2.msra.mxu0 0.0
      %4219 = vmatprep.subr.mxu0 0.0
      %4220 = vmatpush2.msra.mxu0 0.0
      %4221 = vmatprep.subr.mxu0 0.0
      %4222 = vmatpush2.msra.mxu0 0.0
      %4223 = vmatprep.mubr.f32.mxu0 0.0
      %4224 = vmatmul.mubr.f32.gmra.mxu0 %v2335
      %v4225 = vpop.f32.mrf.mxu0
      %v4226 = vadd.f32 0.0, %v4225
      %v4227 = vpop.f32.mrf.mxu0
      %4228 = vdwg.mxu0
      %4229 = vmatprep.subr.mxu0 0.0
      %4230 = vmatpush1.msra.mxu0 0.0
      %4231 = vmatprep.subr.mxu0 0.0
      %4232 = vmatpush1.msra.mxu0 0.0
      %4233 = vmatprep.subr.mxu0 0.0
      %4234 = vmatpush1.msra.mxu0 0.0
      %4235 = vmatprep.subr.mxu0 0.0
      %4236 = vmatpush1.msra.mxu0 0.0
      %4237 = vmatprep.subr.mxu0 0.0
      %4238 = vmatpush1.msra.mxu0 0.0
      %4239 = vmatprep.subr.mxu0 0.0
      %4240 = vmatpush1.msra.mxu0 0.0
      %4241 = vmatprep.subr.mxu0 0.0
      %4242 = vmatpush1.msra.mxu0 0.0
      %4243 = vmatprep.subr.mxu0 0.0
      %4244 = vmatpush1.msra.mxu0 0.0
      %4245 = vmatprep.subr.mxu0 0.0
      %4246 = vmatpush1.msra.mxu0 0.0
      %4247 = vmatprep.subr.mxu0 0.0
      %4248 = vmatpush1.msra.mxu0 0.0
      %4249 = vmatprep.subr.mxu0 0.0
      %4250 = vmatpush1.msra.mxu0 0.0
      %4251 = vmatprep.subr.mxu0 0.0
      %4252 = vmatpush1.msra.mxu0 0.0
      %4253 = vmatprep.subr.mxu0 0.0
      %4254 = vmatpush1.msra.mxu0 0.0
      %4255 = vmatprep.subr.mxu0 0.0
      %4256 = vmatpush1.msra.mxu0 0.0
      %4257 = vmatprep.subr.mxu0 0.0
      %4258 = vmatpush1.msra.mxu0 0.0
      %4259 = vmatprep.subr.mxu0 0.0
      %4260 = vmatpush1.msra.mxu0 %v4226
      %4261 = vmatprep.subr.mxu0 0.0
      %4262 = vmatpush2.msra.mxu0 0.0
      %4263 = vmatprep.subr.mxu0 0.0
      %4264 = vmatpush2.msra.mxu0 0.0
      %4265 = vmatprep.subr.mxu0 0.0
      %4266 = vmatpush2.msra.mxu0 0.0
      %4267 = vmatprep.subr.mxu0 0.0
      %4268 = vmatpush2.msra.mxu0 0.0
      %4269 = vmatprep.subr.mxu0 0.0
      %4270 = vmatpush2.msra.mxu0 0.0
      %4271 = vmatprep.subr.mxu0 0.0
      %4272 = vmatpush2.msra.mxu0 0.0
      %4273 = vmatprep.subr.mxu0 0.0
      %4274 = vmatpush2.msra.mxu0 0.0
      %4275 = vmatprep.subr.mxu0 0.0
      %4276 = vmatpush2.msra.mxu0 0.0
      %4277 = vmatprep.subr.mxu0 0.0
      %4278 = vmatpush2.msra.mxu0 0.0
      %4279 = vmatprep.subr.mxu0 0.0
      %4280 = vmatpush2.msra.mxu0 0.0
      %4281 = vmatprep.subr.mxu0 0.0
      %4282 = vmatpush2.msra.mxu0 0.0
      %4283 = vmatprep.subr.mxu0 0.0
      %4284 = vmatpush2.msra.mxu0 0.0
      %4285 = vmatprep.subr.mxu0 0.0
      %4286 = vmatpush2.msra.mxu0 0.0
      %4287 = vmatprep.subr.mxu0 0.0
      %4288 = vmatpush2.msra.mxu0 0.0
      %4289 = vmatprep.subr.mxu0 0.0
      %4290 = vmatpush2.msra.mxu0 0.0
      %4291 = vmatprep.subr.mxu0 0.0
      %4292 = vmatpush2.msra.mxu0 0.0
      %4293 = vmatprep.mubr.f32.mxu0 0.0
      %4294 = vmatmul.mubr.f32.gmra.mxu0 %v2408
      %v4295 = vpop.f32.mrf.mxu0
      %v4296 = vadd.f32 0.0, %v4295
      %v4297 = vpop.f32.mrf.mxu0
      %4298 = vmatprep.mubr.f32.mxu0 0.0
      %4299 = vmatmul.mubr.f32.gmra.mxu0 %v2411
      %v4300 = vpop.f32.mrf.mxu0
      %v4301 = vadd.f32 0.0, %v4300
      %v4302 = vpop.f32.mrf.mxu0
      %4303 = vdwg.mxu0
      %v4304 = vmul.f32 %v4296, %v2488
      %v4305 = vmul.f32 %v4301, %v2488
      %4306 = vmatprep.subr.mxu0 0.0
      %4307 = vmatpush1.msra.mxu0 0.0
      %4308 = vmatprep.subr.mxu0 0.0
      %4309 = vmatpush1.msra.mxu0 0.0
      %4310 = vmatprep.subr.mxu0 0.0
      %4311 = vmatpush1.msra.mxu0 0.0
      %4312 = vmatprep.subr.mxu0 0.0
      %4313 = vmatpush1.msra.mxu0 0.0
      %4314 = vmatprep.subr.mxu0 0.0
      %4315 = vmatpush1.msra.mxu0 0.0
      %4316 = vmatprep.subr.mxu0 0.0
      %4317 = vmatpush1.msra.mxu0 0.0
      %4318 = vmatprep.subr.mxu0 0.0
      %4319 = vmatpush1.msra.mxu0 0.0
      %4320 = vmatprep.subr.mxu0 0.0
      %4321 = vmatpush1.msra.mxu0 0.0
      %4322 = vmatprep.subr.mxu0 0.0
      %4323 = vmatpush1.msra.mxu0 0.0
      %4324 = vmatprep.subr.mxu0 0.0
      %4325 = vmatpush1.msra.mxu0 0.0
      %4326 = vmatprep.subr.mxu0 0.0
      %4327 = vmatpush1.msra.mxu0 0.0
      %4328 = vmatprep.subr.mxu0 0.0
      %4329 = vmatpush1.msra.mxu0 0.0
      %4330 = vmatprep.subr.mxu0 0.0
      %4331 = vmatpush1.msra.mxu0 0.0
      %4332 = vmatprep.subr.mxu0 0.0
      %4333 = vmatpush1.msra.mxu0 0.0
      %4334 = vmatprep.subr.mxu0 0.0
      %4335 = vmatpush1.msra.mxu0 %v4158
      %4336 = vmatprep.subr.mxu0 0.0
      %4337 = vmatpush1.msra.mxu0 %v4155
      %4338 = vmatprep.subr.mxu0 0.0
      %4339 = vmatpush2.msra.mxu0 0.0
      %4340 = vmatprep.subr.mxu0 0.0
      %4341 = vmatpush2.msra.mxu0 0.0
      %4342 = vmatprep.subr.mxu0 0.0
      %4343 = vmatpush2.msra.mxu0 0.0
      %4344 = vmatprep.subr.mxu0 0.0
      %4345 = vmatpush2.msra.mxu0 0.0
      %4346 = vmatprep.subr.mxu0 0.0
      %4347 = vmatpush2.msra.mxu0 0.0
      %4348 = vmatprep.subr.mxu0 0.0
      %4349 = vmatpush2.msra.mxu0 0.0
      %4350 = vmatprep.subr.mxu0 0.0
      %4351 = vmatpush2.msra.mxu0 0.0
      %4352 = vmatprep.subr.mxu0 0.0
      %4353 = vmatpush2.msra.mxu0 0.0
      %4354 = vmatprep.subr.mxu0 0.0
      %4355 = vmatpush2.msra.mxu0 0.0
      %4356 = vmatprep.subr.mxu0 0.0
      %4357 = vmatpush2.msra.mxu0 0.0
      %4358 = vmatprep.subr.mxu0 0.0
      %4359 = vmatpush2.msra.mxu0 0.0
      %4360 = vmatprep.subr.mxu0 0.0
      %4361 = vmatpush2.msra.mxu0 0.0
      %4362 = vmatprep.subr.mxu0 0.0
      %4363 = vmatpush2.msra.mxu0 0.0
      %4364 = vmatprep.subr.mxu0 0.0
      %4365 = vmatpush2.msra.mxu0 0.0
      %4366 = vmatprep.subr.mxu0 0.0
      %4367 = vmatpush2.msra.mxu0 0.0
      %4368 = vmatprep.subr.mxu0 0.0
      %4369 = vmatpush2.msra.mxu0 0.0
      %4370 = vmatprep.mubr.f32.mxu0 0.0
      %4371 = vmatmul.mubr.f32.gmra.mxu0 %v2335
      %v4372 = vpop.f32.mrf.mxu0
      %v4373 = vadd.f32 0.0, %v4372
      %v4374 = vpop.f32.mrf.mxu0
      %4375 = vdwg.mxu0
      %4376 = vmatprep.subr.mxu0 0.0
      %4377 = vmatpush1.msra.mxu0 0.0
      %4378 = vmatprep.subr.mxu0 0.0
      %4379 = vmatpush1.msra.mxu0 0.0
      %4380 = vmatprep.subr.mxu0 0.0
      %4381 = vmatpush1.msra.mxu0 0.0
      %4382 = vmatprep.subr.mxu0 0.0
      %4383 = vmatpush1.msra.mxu0 0.0
      %4384 = vmatprep.subr.mxu0 0.0
      %4385 = vmatpush1.msra.mxu0 0.0
      %4386 = vmatprep.subr.mxu0 0.0
      %4387 = vmatpush1.msra.mxu0 0.0
      %4388 = vmatprep.subr.mxu0 0.0
      %4389 = vmatpush1.msra.mxu0 0.0
      %4390 = vmatprep.subr.mxu0 0.0
      %4391 = vmatpush1.msra.mxu0 0.0
      %4392 = vmatprep.subr.mxu0 0.0
      %4393 = vmatpush1.msra.mxu0 0.0
      %4394 = vmatprep.subr.mxu0 0.0
      %4395 = vmatpush1.msra.mxu0 0.0
      %4396 = vmatprep.subr.mxu0 0.0
      %4397 = vmatpush1.msra.mxu0 0.0
      %4398 = vmatprep.subr.mxu0 0.0
      %4399 = vmatpush1.msra.mxu0 0.0
      %4400 = vmatprep.subr.mxu0 0.0
      %4401 = vmatpush1.msra.mxu0 0.0
      %4402 = vmatprep.subr.mxu0 0.0
      %4403 = vmatpush1.msra.mxu0 0.0
      %4404 = vmatprep.subr.mxu0 0.0
      %4405 = vmatpush1.msra.mxu0 0.0
      %4406 = vmatprep.subr.mxu0 0.0
      %4407 = vmatpush1.msra.mxu0 %v4373
      %4408 = vmatprep.subr.mxu0 0.0
      %4409 = vmatpush2.msra.mxu0 0.0
      %4410 = vmatprep.subr.mxu0 0.0
      %4411 = vmatpush2.msra.mxu0 0.0
      %4412 = vmatprep.subr.mxu0 0.0
      %4413 = vmatpush2.msra.mxu0 0.0
      %4414 = vmatprep.subr.mxu0 0.0
      %4415 = vmatpush2.msra.mxu0 0.0
      %4416 = vmatprep.subr.mxu0 0.0
      %4417 = vmatpush2.msra.mxu0 0.0
      %4418 = vmatprep.subr.mxu0 0.0
      %4419 = vmatpush2.msra.mxu0 0.0
      %4420 = vmatprep.subr.mxu0 0.0
      %4421 = vmatpush2.msra.mxu0 0.0
      %4422 = vmatprep.subr.mxu0 0.0
      %4423 = vmatpush2.msra.mxu0 0.0
      %4424 = vmatprep.subr.mxu0 0.0
      %4425 = vmatpush2.msra.mxu0 0.0
      %4426 = vmatprep.subr.mxu0 0.0
      %4427 = vmatpush2.msra.mxu0 0.0
      %4428 = vmatprep.subr.mxu0 0.0
      %4429 = vmatpush2.msra.mxu0 0.0
      %4430 = vmatprep.subr.mxu0 0.0
      %4431 = vmatpush2.msra.mxu0 0.0
      %4432 = vmatprep.subr.mxu0 0.0
      %4433 = vmatpush2.msra.mxu0 0.0
      %4434 = vmatprep.subr.mxu0 0.0
      %4435 = vmatpush2.msra.mxu0 0.0
      %4436 = vmatprep.subr.mxu0 0.0
      %4437 = vmatpush2.msra.mxu0 0.0
      %4438 = vmatprep.subr.mxu0 0.0
      %4439 = vmatpush2.msra.mxu0 0.0
      %4440 = vmatprep.mubr.f32.mxu0 0.0
      %4441 = vmatmul.mubr.f32.gmra.mxu0 %v2408
      %v4442 = vpop.f32.mrf.mxu0
      %v4443 = vadd.f32 0.0, %v4442
      %v4444 = vpop.f32.mrf.mxu0
      %4445 = vmatprep.mubr.f32.mxu0 0.0
      %4446 = vmatmul.mubr.f32.gmra.mxu0 %v2411
      %v4447 = vpop.f32.mrf.mxu0
      %v4448 = vadd.f32 0.0, %v4447
      %v4449 = vpop.f32.mrf.mxu0
      %4450 = vdwg.mxu0
      %v4451 = vmul.f32 %v4443, %v2488
      %v4452 = vmul.f32 %v4448, %v2488
      %v4453 = vmul.f32 %v4304, %v4304
      %v4454 = vmul.f32 %v4305, %v4305
      %v4455 = vsub.f32 %v4451, %v4453
      %v4456 = vsub.f32 %v4452, %v4454
      %v4457 = vadd.f32 %v4455, 1e-05
      %v4458 = vadd.f32 %v4456, 1e-05
      %v4459 = vrsqrt.pop %v4457
      %v4460 = vrsqrt.pop %v4458
      %4462 = vset.pattern.permute.xlu0 0
      %4463 = vperm.xlu0 %4462, %v4304
      %v4464 = vpop.permute.xlu0 %4463
      %4467 = vset.pattern.permute.xlu0 0
      %4468 = vperm.xlu0 %4467, %v4305
      %v4469 = vpop.permute.xlu0 %4468
      %v4471 = vsub.f32 %v4139, %v4464
      %v4472 = vsub.f32 %v4140, %v4464
      %v4473 = vsub.f32 %v4141, %v4469
      %v4474 = vsub.f32 %v4142, %v4469
      %4476 = vset.pattern.permute.xlu0 0
      %4477 = vperm.xlu0 %4476, %v4459
      %v4478 = vpop.permute.xlu0 %4477
      %4481 = vset.pattern.permute.xlu0 0
      %4482 = vperm.xlu0 %4481, %v4460
      %v4483 = vpop.permute.xlu0 %4482
      %v4485 = vmul.f32 %v4471, %v4478
      %v4486 = vmul.f32 %v4472, %v4478
      %v4487 = vmul.f32 %v4473, %v4483
      %v4488 = vmul.f32 %v4474, %v4483
      %v4489 = vld [vmem:[%s15] sm:$0xff]
      %v4490 = vld [vmem:[%s15 + $0x8] sm:$0xff]
      %4492 = vset.pattern.permute.xlu0 0
      %4493 = vperm.xlu0 %4492, %v4489
      %v4494 = vpop.permute.xlu0 %4493
      %4497 = vset.pattern.permute.xlu0 0
      %4498 = vperm.xlu0 %4497, %v4490
      %v4499 = vpop.permute.xlu0 %4498
      %v4501 = vmul.f32 %v4485, %v4494
      %v4502 = vmul.f32 %v4486, %v4494
      %v4503 = vmul.f32 %v4487, %v4499
      %v4504 = vmul.f32 %v4488, %v4499
      %v4505 = vld [vmem:[%s16] sm:$0xff]
      %v4506 = vld [vmem:[%s16 + $0x8] sm:$0xff]
      %4508 = vset.pattern.permute.xlu0 0
      %4509 = vperm.xlu0 %4508, %v4505
      %v4510 = vpop.permute.xlu0 %4509
      %4513 = vset.pattern.permute.xlu0 0
      %4514 = vperm.xlu0 %4513, %v4506
      %v4515 = vpop.permute.xlu0 %4514
      %v4517 = vadd.f32 %v4501, %v4510
      %v4518 = vadd.f32 %v4502, %v4510
      %v4519 = vadd.f32 %v4503, %v4515
      %v4520 = vadd.f32 %v4504, %v4515
      %v4521 = vxor.u32 %v4517, 2147483648
      %v4522 = vxor.u32 %v4518, 2147483648
      %v4523 = vxor.u32 %v4519, 2147483648
      %v4524 = vxor.u32 %v4520, 2147483648
      %v4525 = vmul.f32 %v4521, 1.442695
      %v4526 = vpow.pop %v4525
      %v4527 = vmul.f32 %v4522, 1.442695
      %v4528 = vpow.pop %v4527
      %v4529 = vmul.f32 %v4523, 1.442695
      %v4530 = vpow.pop %v4529
      %v4531 = vmul.f32 %v4524, 1.442695
      %v4532 = vpow.pop %v4531
      %v4533 = vadd.f32 %v4526, 1.0
      %v4534 = vadd.f32 %v4528, 1.0
      %v4535 = vadd.f32 %v4530, 1.0
      %v4536 = vadd.f32 %v4532, 1.0
      %v4537 = vrcp.pop %v4533
      %v4538 = vmul.f32 1.0, %v4537
      %v4539 = vrcp.pop %v4534
      %v4540 = vmul.f32 1.0, %v4539
      %v4541 = vrcp.pop %v4535
      %v4542 = vmul.f32 1.0, %v4541
      %v4543 = vrcp.pop %v4536
      %v4544 = vmul.f32 1.0, %v4543
      %v4545 = vmul.f32 %v4517, %v4538
      %v4546 = vmul.f32 %v4518, %v4540
      %v4547 = vmul.f32 %v4519, %v4542
      %v4548 = vmul.f32 %v4520, %v4544
      %v4549 = vadd.f32 %v4545, %v3456
      %v4550 = vadd.f32 %v4546, %v3458
      %v4551 = vadd.f32 %v4547, %v3460
      %v4552 = vadd.f32 %v4548, %v3462
      %4553 = vrot.lane.b32.xlu0 %v4549, 17
      %v4554 = vpop.permute.xlu0 %4553
      %4555 = vrot.lane.b32.xlu0 %v4551, 17
      %v4556 = vpop.permute.xlu0 %4555
      %4557 = vrot.lane.b32.xlu0 %v4550, 17
      %v4558 = vpop.permute.xlu0 %4557
      %4559 = vrot.lane.b32.xlu0 %v4552, 17
      %v4560 = vpop.permute.xlu0 %4559
      %v4561 = vsel %vm886, %v4554, %v4558
      %v4562 = vsel %vm886, %v4556, %v4560
      %v4563 = vsel %vm886, %v4558, %v4554
      %v4564 = vsel %vm886, %v4560, %v4556
      %v4565 = vmul.f32 %v4563, %v894
      %v4566 = vmul.f32 %v4561, %v898
      %v4567 = vmul.f32 %v4564, %v894
      %v4568 = vmul.f32 %v4562, %v898
      %v4569 = vld [vmem:[%s17] sm:$0xf]
      %v4570 = vld [vmem:[%s17 + $0x4] sm:$0xf]
      %v4571 = vpack.c.bf16 %v4567, %v4565
      %v4572 = vpack.c.bf16 %v4568, %v4566
      %4573 = vrot.lane.b32.xlu0 %v4549, 16
      %v4574 = vpop.permute.xlu0 %4573
      %4575 = vrot.lane.b32.xlu0 %v4551, 16
      %v4576 = vpop.permute.xlu0 %4575
      %4577 = vrot.lane.b32.xlu0 %v4550, 16
      %v4578 = vpop.permute.xlu0 %4577
      %4579 = vrot.lane.b32.xlu0 %v4552, 16
      %v4580 = vpop.permute.xlu0 %4579
      %v4581 = vsel %vm911, %v4574, %v4578
      %v4582 = vsel %vm911, %v4576, %v4580
      %v4583 = vsel %vm911, %v4578, %v4574
      %v4584 = vsel %vm911, %v4580, %v4576
      %v4585 = vmul.f32 %v4583, %v920
      %v4586 = vmul.f32 %v4581, %v924
      %v4587 = vmul.f32 %v4584, %v920
      %v4588 = vmul.f32 %v4582, %v924
      %s4589 = scalar_lea.vmem %s17, 8
      %v4590 = vld [vmem:[%s4589] sm:$0xf]
      %v4591 = vld [vmem:[%s4589 + $0x4] sm:$0xf]
      %v4592 = vpack.c.bf16 %v4587, %v4585
      %v4593 = vpack.c.bf16 %v4588, %v4586
      %v4596 = vunpack.c.l.b16 %v4590
      %v4597 = vunpack.c.l.b16 %v4591
      %v4598 = vpack.c.b16 %v4597, %v4596
      %v4600 = vsel %vm2333, %v4598, 0
      %4602 = vmatprep.subr.bf16.mxu0 0
      %4603 = vmatpush1.bf16.msra.mxu0 0
      %4604 = vmatprep.subr.bf16.mxu0 0
      %4605 = vmatpush1.bf16.msra.mxu0 0
      %4606 = vmatprep.subr.bf16.mxu0 0
      %4607 = vmatpush1.bf16.msra.mxu0 0
      %4608 = vmatprep.subr.bf16.mxu0 0
      %4609 = vmatpush1.bf16.msra.mxu0 0
      %4610 = vmatprep.subr.bf16.mxu0 0
      %4611 = vmatpush1.bf16.msra.mxu0 0
      %4612 = vmatprep.subr.bf16.mxu0 0
      %4613 = vmatpush1.bf16.msra.mxu0 0
      %4614 = vmatprep.subr.bf16.mxu0 0
      %4615 = vmatpush1.bf16.msra.mxu0 0
      %4616 = vmatprep.subr.bf16.mxu0 %v4593
      %4617 = vmatpush1.bf16.msra.mxu0 %v4592
      %4618 = vmatprep.subr.bf16.mxu0 0
      %4619 = vmatpush2.bf16.msra.mxu0 0
      %4620 = vmatprep.subr.bf16.mxu0 0
      %4621 = vmatpush2.bf16.msra.mxu0 0
      %4622 = vmatprep.subr.bf16.mxu0 0
      %4623 = vmatpush2.bf16.msra.mxu0 0
      %4624 = vmatprep.subr.bf16.mxu0 0
      %4625 = vmatpush2.bf16.msra.mxu0 0
      %4626 = vmatprep.subr.bf16.mxu0 0
      %4627 = vmatpush2.bf16.msra.mxu0 0
      %4628 = vmatprep.subr.bf16.mxu0 0
      %4629 = vmatpush2.bf16.msra.mxu0 0
      %4630 = vmatprep.subr.bf16.mxu0 0
      %4631 = vmatpush2.bf16.msra.mxu0 0
      %4632 = vmatprep.subr.bf16.mxu0 0
      %4633 = vmatpush2.bf16.msra.mxu0 0
      %4634 = vmatprep.mubr.bf16.mxu0 0
      %4635 = vmatmul.mubr.bf16.gmra.mxu0 %v4600
      %v4636 = vpop.f32.mrf.mxu0
      %v4637 = vadd.f32 0.0, %v4636
      %v4638 = vpop.f32.mrf.mxu0
      %v4639 = vadd.f32 0.0, %v4638
      %v4640 = vpop.f32.mrf.mxu0
      %v4641 = vadd.f32 0.0, %v4640
      %v4642 = vpop.f32.mrf.mxu0
      %v4643 = vadd.f32 0.0, %v4642
      %4644 = vdwg.mxu0
      %v4647 = vunpack.c.l.b16 %v4569
      %v4648 = vunpack.c.l.b16 %v4570
      %v4649 = vpack.c.b16 %v4648, %v4647
      %v4651 = vsel %vm2333, %v4649, 0
      %4653 = vmatprep.subr.bf16.mxu0 0
      %4654 = vmatpush1.bf16.msra.mxu0 0
      %4655 = vmatprep.subr.bf16.mxu0 0
      %4656 = vmatpush1.bf16.msra.mxu0 0
      %4657 = vmatprep.subr.bf16.mxu0 0
      %4658 = vmatpush1.bf16.msra.mxu0 0
      %4659 = vmatprep.subr.bf16.mxu0 0
      %4660 = vmatpush1.bf16.msra.mxu0 0
      %4661 = vmatprep.subr.bf16.mxu0 0
      %4662 = vmatpush1.bf16.msra.mxu0 0
      %4663 = vmatprep.subr.bf16.mxu0 0
      %4664 = vmatpush1.bf16.msra.mxu0 0
      %4665 = vmatprep.subr.bf16.mxu0 0
      %4666 = vmatpush1.bf16.msra.mxu0 0
      %4667 = vmatprep.subr.bf16.mxu0 %v4572
      %4668 = vmatpush1.bf16.msra.mxu0 %v4571
      %4669 = vmatprep.subr.bf16.mxu0 0
      %4670 = vmatpush2.bf16.msra.mxu0 0
      %4671 = vmatprep.subr.bf16.mxu0 0
      %4672 = vmatpush2.bf16.msra.mxu0 0
      %4673 = vmatprep.subr.bf16.mxu0 0
      %4674 = vmatpush2.bf16.msra.mxu0 0
      %4675 = vmatprep.subr.bf16.mxu0 0
      %4676 = vmatpush2.bf16.msra.mxu0 0
      %4677 = vmatprep.subr.bf16.mxu0 0
      %4678 = vmatpush2.bf16.msra.mxu0 0
      %4679 = vmatprep.subr.bf16.mxu0 0
      %4680 = vmatpush2.bf16.msra.mxu0 0
      %4681 = vmatprep.subr.bf16.mxu0 0
      %4682 = vmatpush2.bf16.msra.mxu0 0
      %4683 = vmatprep.subr.bf16.mxu0 0
      %4684 = vmatpush2.bf16.msra.mxu0 0
      %4685 = vmatprep.mubr.bf16.mxu0 0
      %4686 = vmatmul.mubr.bf16.gmra.mxu0 %v4651
      %v4687 = vpop.f32.mrf.mxu0
      %v4688 = vadd.f32 %v4637, %v4687
      %v4689 = vpop.f32.mrf.mxu0
      %v4690 = vadd.f32 %v4639, %v4689
      %v4691 = vpop.f32.mrf.mxu0
      %v4692 = vadd.f32 %v4641, %v4691
      %v4693 = vpop.f32.mrf.mxu0
      %v4694 = vadd.f32 %v4643, %v4693
      %4695 = vdwg.mxu0
      %4696 = vrot.lane.b32.xlu0 %v4549, 15
      %v4697 = vpop.permute.xlu0 %4696
      %4698 = vrot.lane.b32.xlu0 %v4551, 15
      %v4699 = vpop.permute.xlu0 %4698
      %4700 = vrot.lane.b32.xlu0 %v4550, 15
      %v4701 = vpop.permute.xlu0 %4700
      %4702 = vrot.lane.b32.xlu0 %v4552, 15
      %v4703 = vpop.permute.xlu0 %4702
      %v4704 = vsel %vm1054, %v4697, %v4701
      %v4705 = vsel %vm1054, %v4699, %v4703
      %v4706 = vsel %vm1054, %v4701, %v4697
      %v4707 = vsel %vm1054, %v4703, %v4699
      %v4708 = vmul.f32 %v4706, %v1063
      %v4709 = vmul.f32 %v4704, %v1067
      %v4710 = vmul.f32 %v4707, %v1063
      %v4711 = vmul.f32 %v4705, %v1067
      %s4712 = scalar_lea.vmem %s17, 16
      %v4713 = vld [vmem:[%s4712] sm:$0xf]
      %v4714 = vld [vmem:[%s4712 + $0x4] sm:$0xf]
      %v4715 = vpack.c.bf16 %v4710, %v4708
      %v4716 = vpack.c.bf16 %v4711, %v4709
      %v4719 = vunpack.c.l.b16 %v4713
      %v4720 = vunpack.c.l.b16 %v4714
      %v4721 = vpack.c.b16 %v4720, %v4719
      %v4723 = vsel %vm2333, %v4721, 0
      %4725 = vmatprep.subr.bf16.mxu0 0
      %4726 = vmatpush1.bf16.msra.mxu0 0
      %4727 = vmatprep.subr.bf16.mxu0 0
      %4728 = vmatpush1.bf16.msra.mxu0 0
      %4729 = vmatprep.subr.bf16.mxu0 0
      %4730 = vmatpush1.bf16.msra.mxu0 0
      %4731 = vmatprep.subr.bf16.mxu0 0
      %4732 = vmatpush1.bf16.msra.mxu0 0
      %4733 = vmatprep.subr.bf16.mxu0 0
      %4734 = vmatpush1.bf16.msra.mxu0 0
      %4735 = vmatprep.subr.bf16.mxu0 0
      %4736 = vmatpush1.bf16.msra.mxu0 0
      %4737 = vmatprep.subr.bf16.mxu0 0
      %4738 = vmatpush1.bf16.msra.mxu0 0
      %4739 = vmatprep.subr.bf16.mxu0 %v4716
      %4740 = vmatpush1.bf16.msra.mxu0 %v4715
      %4741 = vmatprep.subr.bf16.mxu0 0
      %4742 = vmatpush2.bf16.msra.mxu0 0
      %4743 = vmatprep.subr.bf16.mxu0 0
      %4744 = vmatpush2.bf16.msra.mxu0 0
      %4745 = vmatprep.subr.bf16.mxu0 0
      %4746 = vmatpush2.bf16.msra.mxu0 0
      %4747 = vmatprep.subr.bf16.mxu0 0
      %4748 = vmatpush2.bf16.msra.mxu0 0
      %4749 = vmatprep.subr.bf16.mxu0 0
      %4750 = vmatpush2.bf16.msra.mxu0 0
      %4751 = vmatprep.subr.bf16.mxu0 0
      %4752 = vmatpush2.bf16.msra.mxu0 0
      %4753 = vmatprep.subr.bf16.mxu0 0
      %4754 = vmatpush2.bf16.msra.mxu0 0
      %4755 = vmatprep.subr.bf16.mxu0 0
      %4756 = vmatpush2.bf16.msra.mxu0 0
      %4757 = vmatprep.mubr.bf16.mxu0 0
      %4758 = vmatmul.mubr.bf16.gmra.mxu0 %v4723
      %v4759 = vpop.f32.mrf.mxu0
      %v4760 = vadd.f32 0.0, %v4759
      %v4761 = vpop.f32.mrf.mxu0
      %v4762 = vadd.f32 0.0, %v4761
      %v4763 = vpop.f32.mrf.mxu0
      %v4764 = vadd.f32 0.0, %v4763
      %v4765 = vpop.f32.mrf.mxu0
      %v4766 = vadd.f32 0.0, %v4765
      %4767 = vdwg.mxu0
      %v4768 = vadd.f32 %v4688, %v4760
      %v4769 = vadd.f32 %v4690, %v4762
      %v4770 = vadd.f32 %v4692, %v4764
      %v4771 = vadd.f32 %v4694, %v4766
      %4772 = vrot.lane.b32.xlu0 %v4549, 1
      %v4773 = vpop.permute.xlu0 %4772
      %4774 = vrot.lane.b32.xlu0 %v4551, 1
      %v4775 = vpop.permute.xlu0 %4774
      %4776 = vrot.lane.b32.xlu0 %v4550, 1
      %v4777 = vpop.permute.xlu0 %4776
      %4778 = vrot.lane.b32.xlu0 %v4552, 1
      %v4779 = vpop.permute.xlu0 %4778
      %v4780 = vsel %vm1142, %v4773, %v4777
      %v4781 = vsel %vm1142, %v4775, %v4779
      %v4782 = vsel %vm1142, %v4777, %v4773
      %v4783 = vsel %vm1142, %v4779, %v4775
      %v4784 = vmul.f32 %v4782, %v1151
      %v4785 = vmul.f32 %v4780, %v1155
      %v4786 = vmul.f32 %v4783, %v1151
      %v4787 = vmul.f32 %v4781, %v1155
      %s4788 = scalar_lea.vmem %s17, 24
      %v4789 = vld [vmem:[%s4788] sm:$0xf]
      %v4790 = vld [vmem:[%s4788 + $0x4] sm:$0xf]
      %v4791 = vpack.c.bf16 %v4786, %v4784
      %v4792 = vpack.c.bf16 %v4787, %v4785
      %v4795 = vunpack.c.l.b16 %v4789
      %v4796 = vunpack.c.l.b16 %v4790
      %v4797 = vpack.c.b16 %v4796, %v4795
      %v4799 = vsel %vm2333, %v4797, 0
      %4801 = vmatprep.subr.bf16.mxu0 0
      %4802 = vmatpush1.bf16.msra.mxu0 0
      %4803 = vmatprep.subr.bf16.mxu0 0
      %4804 = vmatpush1.bf16.msra.mxu0 0
      %4805 = vmatprep.subr.bf16.mxu0 0
      %4806 = vmatpush1.bf16.msra.mxu0 0
      %4807 = vmatprep.subr.bf16.mxu0 0
      %4808 = vmatpush1.bf16.msra.mxu0 0
      %4809 = vmatprep.subr.bf16.mxu0 0
      %4810 = vmatpush1.bf16.msra.mxu0 0
      %4811 = vmatprep.subr.bf16.mxu0 0
      %4812 = vmatpush1.bf16.msra.mxu0 0
      %4813 = vmatprep.subr.bf16.mxu0 0
      %4814 = vmatpush1.bf16.msra.mxu0 0
      %4815 = vmatprep.subr.bf16.mxu0 %v4792
      %4816 = vmatpush1.bf16.msra.mxu0 %v4791
      %4817 = vmatprep.subr.bf16.mxu0 0
      %4818 = vmatpush2.bf16.msra.mxu0 0
      %4819 = vmatprep.subr.bf16.mxu0 0
      %4820 = vmatpush2.bf16.msra.mxu0 0
      %4821 = vmatprep.subr.bf16.mxu0 0
      %4822 = vmatpush2.bf16.msra.mxu0 0
      %4823 = vmatprep.subr.bf16.mxu0 0
      %4824 = vmatpush2.bf16.msra.mxu0 0
      %4825 = vmatprep.subr.bf16.mxu0 0
      %4826 = vmatpush2.bf16.msra.mxu0 0
      %4827 = vmatprep.subr.bf16.mxu0 0
      %4828 = vmatpush2.bf16.msra.mxu0 0
      %4829 = vmatprep.subr.bf16.mxu0 0
      %4830 = vmatpush2.bf16.msra.mxu0 0
      %4831 = vmatprep.subr.bf16.mxu0 0
      %4832 = vmatpush2.bf16.msra.mxu0 0
      %4833 = vmatprep.mubr.bf16.mxu0 0
      %4834 = vmatmul.mubr.bf16.gmra.mxu0 %v4799
      %v4835 = vpop.f32.mrf.mxu0
      %v4836 = vadd.f32 0.0, %v4835
      %v4837 = vpop.f32.mrf.mxu0
      %v4838 = vadd.f32 0.0, %v4837
      %v4839 = vpop.f32.mrf.mxu0
      %v4840 = vadd.f32 0.0, %v4839
      %v4841 = vpop.f32.mrf.mxu0
      %v4842 = vadd.f32 0.0, %v4841
      %4843 = vdwg.mxu0
      %v4844 = vadd.f32 %v4768, %v4836
      %v4845 = vadd.f32 %v4769, %v4838
      %v4846 = vadd.f32 %v4770, %v4840
      %v4847 = vadd.f32 %v4771, %v4842
      %v4848 = vmul.f32 %v4549, %v1232
      %v4849 = vmul.f32 %v4550, %v1236
      %v4850 = vmul.f32 %v4551, %v1232
      %v4851 = vmul.f32 %v4552, %v1236
      %s4852 = scalar_lea.vmem %s17, 32
      %v4853 = vld [vmem:[%s4852] sm:$0xf]
      %v4854 = vld [vmem:[%s4852 + $0x4] sm:$0xf]
      %v4855 = vpack.c.bf16 %v4850, %v4848
      %v4856 = vpack.c.bf16 %v4851, %v4849
      %v4859 = vunpack.c.l.b16 %v4853
      %v4860 = vunpack.c.l.b16 %v4854
      %v4861 = vpack.c.b16 %v4860, %v4859
      %v4863 = vsel %vm2333, %v4861, 0
      %4865 = vmatprep.subr.bf16.mxu0 0
      %4866 = vmatpush1.bf16.msra.mxu0 0
      %4867 = vmatprep.subr.bf16.mxu0 0
      %4868 = vmatpush1.bf16.msra.mxu0 0
      %4869 = vmatprep.subr.bf16.mxu0 0
      %4870 = vmatpush1.bf16.msra.mxu0 0
      %4871 = vmatprep.subr.bf16.mxu0 0
      %4872 = vmatpush1.bf16.msra.mxu0 0
      %4873 = vmatprep.subr.bf16.mxu0 0
      %4874 = vmatpush1.bf16.msra.mxu0 0
      %4875 = vmatprep.subr.bf16.mxu0 0
      %4876 = vmatpush1.bf16.msra.mxu0 0
      %4877 = vmatprep.subr.bf16.mxu0 0
      %4878 = vmatpush1.bf16.msra.mxu0 0
      %4879 = vmatprep.subr.bf16.mxu0 %v4856
      %4880 = vmatpush1.bf16.msra.mxu0 %v4855
      %4881 = vmatprep.subr.bf16.mxu0 0
      %4882 = vmatpush2.bf16.msra.mxu0 0
      %4883 = vmatprep.subr.bf16.mxu0 0
      %4884 = vmatpush2.bf16.msra.mxu0 0
      %4885 = vmatprep.subr.bf16.mxu0 0
      %4886 = vmatpush2.bf16.msra.mxu0 0
      %4887 = vmatprep.subr.bf16.mxu0 0
      %4888 = vmatpush2.bf16.msra.mxu0 0
      %4889 = vmatprep.subr.bf16.mxu0 0
      %4890 = vmatpush2.bf16.msra.mxu0 0
      %4891 = vmatprep.subr.bf16.mxu0 0
      %4892 = vmatpush2.bf16.msra.mxu0 0
      %4893 = vmatprep.subr.bf16.mxu0 0
      %4894 = vmatpush2.bf16.msra.mxu0 0
      %4895 = vmatprep.subr.bf16.mxu0 0
      %4896 = vmatpush2.bf16.msra.mxu0 0
      %4897 = vmatprep.mubr.bf16.mxu0 0
      %4898 = vmatmul.mubr.bf16.gmra.mxu0 %v4863
      %v4899 = vpop.f32.mrf.mxu0
      %v4900 = vadd.f32 0.0, %v4899
      %v4901 = vpop.f32.mrf.mxu0
      %v4902 = vadd.f32 0.0, %v4901
      %v4903 = vpop.f32.mrf.mxu0
      %v4904 = vadd.f32 0.0, %v4903
      %v4905 = vpop.f32.mrf.mxu0
      %v4906 = vadd.f32 0.0, %v4905
      %4907 = vdwg.mxu0
      %v4908 = vadd.f32 %v4844, %v4900
      %v4909 = vadd.f32 %v4845, %v4902
      %v4910 = vadd.f32 %v4846, %v4904
      %v4911 = vadd.f32 %v4847, %v4906
      %4912 = vrot.lane.b32.xlu0 %v4549, 127
      %v4913 = vpop.permute.xlu0 %4912
      %4914 = vrot.lane.b32.xlu0 %v4551, 127
      %v4915 = vpop.permute.xlu0 %4914
      %4916 = vrot.lane.b32.xlu0 %v4550, 127
      %v4917 = vpop.permute.xlu0 %4916
      %4918 = vrot.lane.b32.xlu0 %v4552, 127
      %v4919 = vpop.permute.xlu0 %4918
      %v4920 = vsel %vm1311, %v4913, %v4917
      %v4921 = vsel %vm1311, %v4915, %v4919
      %v4922 = vsel %vm1311, %v4917, %v4913
      %v4923 = vsel %vm1311, %v4919, %v4915
      %v4924 = vmul.f32 %v4920, %v1320
      %v4925 = vmul.f32 %v4922, %v1324
      %v4926 = vmul.f32 %v4921, %v1320
      %v4927 = vmul.f32 %v4923, %v1324
      %s4928 = scalar_lea.vmem %s17, 40
      %v4929 = vld [vmem:[%s4928] sm:$0xf]
      %v4930 = vld [vmem:[%s4928 + $0x4] sm:$0xf]
      %v4931 = vpack.c.bf16 %v4926, %v4924
      %v4932 = vpack.c.bf16 %v4927, %v4925
      %v4935 = vunpack.c.l.b16 %v4929
      %v4936 = vunpack.c.l.b16 %v4930
      %v4937 = vpack.c.b16 %v4936, %v4935
      %v4939 = vsel %vm2333, %v4937, 0
      %4941 = vmatprep.subr.bf16.mxu0 0
      %4942 = vmatpush1.bf16.msra.mxu0 0
      %4943 = vmatprep.subr.bf16.mxu0 0
      %4944 = vmatpush1.bf16.msra.mxu0 0
      %4945 = vmatprep.subr.bf16.mxu0 0
      %4946 = vmatpush1.bf16.msra.mxu0 0
      %4947 = vmatprep.subr.bf16.mxu0 0
      %4948 = vmatpush1.bf16.msra.mxu0 0
      %4949 = vmatprep.subr.bf16.mxu0 0
      %4950 = vmatpush1.bf16.msra.mxu0 0
      %4951 = vmatprep.subr.bf16.mxu0 0
      %4952 = vmatpush1.bf16.msra.mxu0 0
      %4953 = vmatprep.subr.bf16.mxu0 0
      %4954 = vmatpush1.bf16.msra.mxu0 0
      %4955 = vmatprep.subr.bf16.mxu0 %v4932
      %4956 = vmatpush1.bf16.msra.mxu0 %v4931
      %4957 = vmatprep.subr.bf16.mxu0 0
      %4958 = vmatpush2.bf16.msra.mxu0 0
      %4959 = vmatprep.subr.bf16.mxu0 0
      %4960 = vmatpush2.bf16.msra.mxu0 0
      %4961 = vmatprep.subr.bf16.mxu0 0
      %4962 = vmatpush2.bf16.msra.mxu0 0
      %4963 = vmatprep.subr.bf16.mxu0 0
      %4964 = vmatpush2.bf16.msra.mxu0 0
      %4965 = vmatprep.subr.bf16.mxu0 0
      %4966 = vmatpush2.bf16.msra.mxu0 0
      %4967 = vmatprep.subr.bf16.mxu0 0
      %4968 = vmatpush2.bf16.msra.mxu0 0
      %4969 = vmatprep.subr.bf16.mxu0 0
      %4970 = vmatpush2.bf16.msra.mxu0 0
      %4971 = vmatprep.subr.bf16.mxu0 0
      %4972 = vmatpush2.bf16.msra.mxu0 0
      %4973 = vmatprep.mubr.bf16.mxu0 0
      %4974 = vmatmul.mubr.bf16.gmra.mxu0 %v4939
      %v4975 = vpop.f32.mrf.mxu0
      %v4976 = vadd.f32 0.0, %v4975
      %v4977 = vpop.f32.mrf.mxu0
      %v4978 = vadd.f32 0.0, %v4977
      %v4979 = vpop.f32.mrf.mxu0
      %v4980 = vadd.f32 0.0, %v4979
      %v4981 = vpop.f32.mrf.mxu0
      %v4982 = vadd.f32 0.0, %v4981
      %4983 = vdwg.mxu0
      %v4984 = vadd.f32 %v4908, %v4976
      %v4985 = vadd.f32 %v4909, %v4978
      %v4986 = vadd.f32 %v4910, %v4980
      %v4987 = vadd.f32 %v4911, %v4982
      %4988 = vrot.lane.b32.xlu0 %v4549, 113
      %v4989 = vpop.permute.xlu0 %4988
      %4990 = vrot.lane.b32.xlu0 %v4551, 113
      %v4991 = vpop.permute.xlu0 %4990
      %4992 = vrot.lane.b32.xlu0 %v4550, 113
      %v4993 = vpop.permute.xlu0 %4992
      %4994 = vrot.lane.b32.xlu0 %v4552, 113
      %v4995 = vpop.permute.xlu0 %4994
      %v4996 = vsel %vm1399, %v4989, %v4993
      %v4997 = vsel %vm1399, %v4991, %v4995
      %v4998 = vsel %vm1399, %v4993, %v4989
      %v4999 = vsel %vm1399, %v4995, %v4991
      %v5000 = vmul.f32 %v4996, %v1408
      %v5001 = vmul.f32 %v4998, %v1412
      %v5002 = vmul.f32 %v4997, %v1408
      %v5003 = vmul.f32 %v4999, %v1412
      %s5004 = scalar_lea.vmem %s17, 48
      %v5005 = vld [vmem:[%s5004] sm:$0xf]
      %v5006 = vld [vmem:[%s5004 + $0x4] sm:$0xf]
      %v5007 = vpack.c.bf16 %v5002, %v5000
      %v5008 = vpack.c.bf16 %v5003, %v5001
      %v5011 = vunpack.c.l.b16 %v5005
      %v5012 = vunpack.c.l.b16 %v5006
      %v5013 = vpack.c.b16 %v5012, %v5011
      %v5015 = vsel %vm2333, %v5013, 0
      %5017 = vmatprep.subr.bf16.mxu0 0
      %5018 = vmatpush1.bf16.msra.mxu0 0
      %5019 = vmatprep.subr.bf16.mxu0 0
      %5020 = vmatpush1.bf16.msra.mxu0 0
      %5021 = vmatprep.subr.bf16.mxu0 0
      %5022 = vmatpush1.bf16.msra.mxu0 0
      %5023 = vmatprep.subr.bf16.mxu0 0
      %5024 = vmatpush1.bf16.msra.mxu0 0
      %5025 = vmatprep.subr.bf16.mxu0 0
      %5026 = vmatpush1.bf16.msra.mxu0 0
      %5027 = vmatprep.subr.bf16.mxu0 0
      %5028 = vmatpush1.bf16.msra.mxu0 0
      %5029 = vmatprep.subr.bf16.mxu0 0
      %5030 = vmatpush1.bf16.msra.mxu0 0
      %5031 = vmatprep.subr.bf16.mxu0 %v5008
      %5032 = vmatpush1.bf16.msra.mxu0 %v5007
      %5033 = vmatprep.subr.bf16.mxu0 0
      %5034 = vmatpush2.bf16.msra.mxu0 0
      %5035 = vmatprep.subr.bf16.mxu0 0
      %5036 = vmatpush2.bf16.msra.mxu0 0
      %5037 = vmatprep.subr.bf16.mxu0 0
      %5038 = vmatpush2.bf16.msra.mxu0 0
      %5039 = vmatprep.subr.bf16.mxu0 0
      %5040 = vmatpush2.bf16.msra.mxu0 0
      %5041 = vmatprep.subr.bf16.mxu0 0
      %5042 = vmatpush2.bf16.msra.mxu0 0
      %5043 = vmatprep.subr.bf16.mxu0 0
      %5044 = vmatpush2.bf16.msra.mxu0 0
      %5045 = vmatprep.subr.bf16.mxu0 0
      %5046 = vmatpush2.bf16.msra.mxu0 0
      %5047 = vmatprep.subr.bf16.mxu0 0
      %5048 = vmatpush2.bf16.msra.mxu0 0
      %5049 = vmatprep.mubr.bf16.mxu0 0
      %5050 = vmatmul.mubr.bf16.gmra.mxu0 %v5015
      %v5051 = vpop.f32.mrf.mxu0
      %v5052 = vadd.f32 0.0, %v5051
      %v5053 = vpop.f32.mrf.mxu0
      %v5054 = vadd.f32 0.0, %v5053
      %v5055 = vpop.f32.mrf.mxu0
      %v5056 = vadd.f32 0.0, %v5055
      %v5057 = vpop.f32.mrf.mxu0
      %v5058 = vadd.f32 0.0, %v5057
      %5059 = vdwg.mxu0
      %v5060 = vadd.f32 %v4984, %v5052
      %v5061 = vadd.f32 %v4985, %v5054
      %v5062 = vadd.f32 %v4986, %v5056
      %v5063 = vadd.f32 %v4987, %v5058
      %5064 = vrot.lane.b32.xlu0 %v4549, 112
      %v5065 = vpop.permute.xlu0 %5064
      %5066 = vrot.lane.b32.xlu0 %v4551, 112
      %v5067 = vpop.permute.xlu0 %5066
      %5068 = vrot.lane.b32.xlu0 %v4550, 112
      %v5069 = vpop.permute.xlu0 %5068
      %5070 = vrot.lane.b32.xlu0 %v4552, 112
      %v5071 = vpop.permute.xlu0 %5070
      %v5072 = vsel %vm1487, %v5065, %v5069
      %v5073 = vsel %vm1487, %v5067, %v5071
      %v5074 = vsel %vm1487, %v5069, %v5065
      %v5075 = vsel %vm1487, %v5071, %v5067
      %v5076 = vmul.f32 %v5072, %v1496
      %v5077 = vmul.f32 %v5074, %v1500
      %v5078 = vmul.f32 %v5073, %v1496
      %v5079 = vmul.f32 %v5075, %v1500
      %s5080 = scalar_lea.vmem %s17, 56
      %v5081 = vld [vmem:[%s5080] sm:$0xf]
      %v5082 = vld [vmem:[%s5080 + $0x4] sm:$0xf]
      %v5083 = vpack.c.bf16 %v5078, %v5076
      %v5084 = vpack.c.bf16 %v5079, %v5077
      %v5087 = vunpack.c.l.b16 %v5081
      %v5088 = vunpack.c.l.b16 %v5082
      %v5089 = vpack.c.b16 %v5088, %v5087
      %v5091 = vsel %vm2333, %v5089, 0
      %5093 = vmatprep.subr.bf16.mxu0 0
      %5094 = vmatpush1.bf16.msra.mxu0 0
      %5095 = vmatprep.subr.bf16.mxu0 0
      %5096 = vmatpush1.bf16.msra.mxu0 0
      %5097 = vmatprep.subr.bf16.mxu0 0
      %5098 = vmatpush1.bf16.msra.mxu0 0
      %5099 = vmatprep.subr.bf16.mxu0 0
      %5100 = vmatpush1.bf16.msra.mxu0 0
      %5101 = vmatprep.subr.bf16.mxu0 0
      %5102 = vmatpush1.bf16.msra.mxu0 0
      %5103 = vmatprep.subr.bf16.mxu0 0
      %5104 = vmatpush1.bf16.msra.mxu0 0
      %5105 = vmatprep.subr.bf16.mxu0 0
      %5106 = vmatpush1.bf16.msra.mxu0 0
      %5107 = vmatprep.subr.bf16.mxu0 %v5084
      %5108 = vmatpush1.bf16.msra.mxu0 %v5083
      %5109 = vmatprep.subr.bf16.mxu0 0
      %5110 = vmatpush2.bf16.msra.mxu0 0
      %5111 = vmatprep.subr.bf16.mxu0 0
      %5112 = vmatpush2.bf16.msra.mxu0 0
      %5113 = vmatprep.subr.bf16.mxu0 0
      %5114 = vmatpush2.bf16.msra.mxu0 0
      %5115 = vmatprep.subr.bf16.mxu0 0
      %5116 = vmatpush2.bf16.msra.mxu0 0
      %5117 = vmatprep.subr.bf16.mxu0 0
      %5118 = vmatpush2.bf16.msra.mxu0 0
      %5119 = vmatprep.subr.bf16.mxu0 0
      %5120 = vmatpush2.bf16.msra.mxu0 0
      %5121 = vmatprep.subr.bf16.mxu0 0
      %5122 = vmatpush2.bf16.msra.mxu0 0
      %5123 = vmatprep.subr.bf16.mxu0 0
      %5124 = vmatpush2.bf16.msra.mxu0 0
      %5125 = vmatprep.mubr.bf16.mxu0 0
      %5126 = vmatmul.mubr.bf16.gmra.mxu0 %v5091
      %v5127 = vpop.f32.mrf.mxu0
      %v5128 = vadd.f32 0.0, %v5127
      %v5129 = vpop.f32.mrf.mxu0
      %v5130 = vadd.f32 0.0, %v5129
      %v5131 = vpop.f32.mrf.mxu0
      %v5132 = vadd.f32 0.0, %v5131
      %v5133 = vpop.f32.mrf.mxu0
      %v5134 = vadd.f32 0.0, %v5133
      %5135 = vdwg.mxu0
      %v5136 = vadd.f32 %v5060, %v5128
      %v5137 = vadd.f32 %v5061, %v5130
      %v5138 = vadd.f32 %v5062, %v5132
      %v5139 = vadd.f32 %v5063, %v5134
      %5140 = vrot.lane.b32.xlu0 %v4549, 111
      %v5141 = vpop.permute.xlu0 %5140
      %5142 = vrot.lane.b32.xlu0 %v4551, 111
      %v5143 = vpop.permute.xlu0 %5142
      %5144 = vrot.lane.b32.xlu0 %v4550, 111
      %v5145 = vpop.permute.xlu0 %5144
      %5146 = vrot.lane.b32.xlu0 %v4552, 111
      %v5147 = vpop.permute.xlu0 %5146
      %v5148 = vsel %vm1575, %v5141, %v5145
      %v5149 = vsel %vm1575, %v5143, %v5147
      %v5150 = vsel %vm1575, %v5145, %v5141
      %v5151 = vsel %vm1575, %v5147, %v5143
      %v5152 = vmul.f32 %v5148, %v1584
      %v5153 = vmul.f32 %v5150, %v1588
      %v5154 = vmul.f32 %v5149, %v1584
      %v5155 = vmul.f32 %v5151, %v1588
      %s5156 = scalar_lea.vmem %s17, 64
      %v5157 = vld [vmem:[%s5156] sm:$0xf]
      %v5158 = vld [vmem:[%s5156 + $0x4] sm:$0xf]
      %v5159 = vpack.c.bf16 %v5154, %v5152
      %v5160 = vpack.c.bf16 %v5155, %v5153
      %v5163 = vunpack.c.l.b16 %v5157
      %v5164 = vunpack.c.l.b16 %v5158
      %v5165 = vpack.c.b16 %v5164, %v5163
      %v5167 = vsel %vm2333, %v5165, 0
      %5169 = vmatprep.subr.bf16.mxu0 0
      %5170 = vmatpush1.bf16.msra.mxu0 0
      %5171 = vmatprep.subr.bf16.mxu0 0
      %5172 = vmatpush1.bf16.msra.mxu0 0
      %5173 = vmatprep.subr.bf16.mxu0 0
      %5174 = vmatpush1.bf16.msra.mxu0 0
      %5175 = vmatprep.subr.bf16.mxu0 0
      %5176 = vmatpush1.bf16.msra.mxu0 0
      %5177 = vmatprep.subr.bf16.mxu0 0
      %5178 = vmatpush1.bf16.msra.mxu0 0
      %5179 = vmatprep.subr.bf16.mxu0 0
      %5180 = vmatpush1.bf16.msra.mxu0 0
      %5181 = vmatprep.subr.bf16.mxu0 0
      %5182 = vmatpush1.bf16.msra.mxu0 0
      %5183 = vmatprep.subr.bf16.mxu0 %v5160
      %5184 = vmatpush1.bf16.msra.mxu0 %v5159
      %5185 = vmatprep.subr.bf16.mxu0 0
      %5186 = vmatpush2.bf16.msra.mxu0 0
      %5187 = vmatprep.subr.bf16.mxu0 0
      %5188 = vmatpush2.bf16.msra.mxu0 0
      %5189 = vmatprep.subr.bf16.mxu0 0
      %5190 = vmatpush2.bf16.msra.mxu0 0
      %5191 = vmatprep.subr.bf16.mxu0 0
      %5192 = vmatpush2.bf16.msra.mxu0 0
      %5193 = vmatprep.subr.bf16.mxu0 0
      %5194 = vmatpush2.bf16.msra.mxu0 0
      %5195 = vmatprep.subr.bf16.mxu0 0
      %5196 = vmatpush2.bf16.msra.mxu0 0
      %5197 = vmatprep.subr.bf16.mxu0 0
      %5198 = vmatpush2.bf16.msra.mxu0 0
      %5199 = vmatprep.subr.bf16.mxu0 0
      %5200 = vmatpush2.bf16.msra.mxu0 0
      %5201 = vmatprep.mubr.bf16.mxu0 0
      %5202 = vmatmul.mubr.bf16.gmra.mxu0 %v5167
      %v5203 = vpop.f32.mrf.mxu0
      %v5204 = vadd.f32 0.0, %v5203
      %v5205 = vpop.f32.mrf.mxu0
      %v5206 = vadd.f32 0.0, %v5205
      %v5207 = vpop.f32.mrf.mxu0
      %v5208 = vadd.f32 0.0, %v5207
      %v5209 = vpop.f32.mrf.mxu0
      %v5210 = vadd.f32 0.0, %v5209
      %5211 = vdwg.mxu0
      %v5212 = vadd.f32 %v5136, %v5204
      %v5213 = vadd.f32 %v5137, %v5206
      %v5214 = vadd.f32 %v5138, %v5208
      %v5215 = vadd.f32 %v5139, %v5210
      %v5216 = vld [vmem:[%s18] sm:$0xff]
      %v5217 = vld [vmem:[%s18 + $0x8] sm:$0xff]
      %5219 = vset.pattern.permute.xlu0 0
      %5220 = vperm.xlu0 %5219, %v5216
      %v5221 = vpop.permute.xlu0 %5220
      %5224 = vset.pattern.permute.xlu0 0
      %5225 = vperm.xlu0 %5224, %v5217
      %v5226 = vpop.permute.xlu0 %5225
      %v5228 = vadd.f32 %v5212, %v5221
      %v5229 = vadd.f32 %v5213, %v5221
      %v5230 = vadd.f32 %v5214, %v5226
      %v5231 = vadd.f32 %v5215, %v5226
      %v5232 = vadd.f32 %v5228, %v5229
      %5233 = vadd.xlane.f32.xlu0 %v5232
      %v5234 = vpop.xlane.xlu0 %5233
      %v5235 = vadd.f32 %v5230, %v5231
      %5236 = vadd.xlane.f32.xlu0 %v5235
      %v5237 = vpop.xlane.xlu0 %5236
      %v5238 = vmul.f32 %v5228, %v5228
      %v5239 = vmul.f32 %v5229, %v5229
      %v5240 = vmul.f32 %v5230, %v5230
      %v5241 = vmul.f32 %v5231, %v5231
      %v5242 = vadd.f32 %v5238, %v5239
      %5243 = vadd.xlane.f32.xlu0 %v5242
      %v5244 = vpop.xlane.xlu0 %5243
      %v5245 = vadd.f32 %v5240, %v5241
      %5246 = vadd.xlane.f32.xlu0 %v5245
      %v5247 = vpop.xlane.xlu0 %5246
      %5248 = vmatprep.subr.mxu0 0.0
      %5249 = vmatpush1.msra.mxu0 0.0
      %5250 = vmatprep.subr.mxu0 0.0
      %5251 = vmatpush1.msra.mxu0 0.0
      %5252 = vmatprep.subr.mxu0 0.0
      %5253 = vmatpush1.msra.mxu0 0.0
      %5254 = vmatprep.subr.mxu0 0.0
      %5255 = vmatpush1.msra.mxu0 0.0
      %5256 = vmatprep.subr.mxu0 0.0
      %5257 = vmatpush1.msra.mxu0 0.0
      %5258 = vmatprep.subr.mxu0 0.0
      %5259 = vmatpush1.msra.mxu0 0.0
      %5260 = vmatprep.subr.mxu0 0.0
      %5261 = vmatpush1.msra.mxu0 0.0
      %5262 = vmatprep.subr.mxu0 0.0
      %5263 = vmatpush1.msra.mxu0 0.0
      %5264 = vmatprep.subr.mxu0 0.0
      %5265 = vmatpush1.msra.mxu0 0.0
      %5266 = vmatprep.subr.mxu0 0.0
      %5267 = vmatpush1.msra.mxu0 0.0
      %5268 = vmatprep.subr.mxu0 0.0
      %5269 = vmatpush1.msra.mxu0 0.0
      %5270 = vmatprep.subr.mxu0 0.0
      %5271 = vmatpush1.msra.mxu0 0.0
      %5272 = vmatprep.subr.mxu0 0.0
      %5273 = vmatpush1.msra.mxu0 0.0
      %5274 = vmatprep.subr.mxu0 0.0
      %5275 = vmatpush1.msra.mxu0 0.0
      %5276 = vmatprep.subr.mxu0 0.0
      %5277 = vmatpush1.msra.mxu0 %v5237
      %5278 = vmatprep.subr.mxu0 0.0
      %5279 = vmatpush1.msra.mxu0 %v5234
      %5280 = vmatprep.subr.mxu0 0.0
      %5281 = vmatpush2.msra.mxu0 0.0
      %5282 = vmatprep.subr.mxu0 0.0
      %5283 = vmatpush2.msra.mxu0 0.0
      %5284 = vmatprep.subr.mxu0 0.0
      %5285 = vmatpush2.msra.mxu0 0.0
      %5286 = vmatprep.subr.mxu0 0.0
      %5287 = vmatpush2.msra.mxu0 0.0
      %5288 = vmatprep.subr.mxu0 0.0
      %5289 = vmatpush2.msra.mxu0 0.0
      %5290 = vmatprep.subr.mxu0 0.0
      %5291 = vmatpush2.msra.mxu0 0.0
      %5292 = vmatprep.subr.mxu0 0.0
      %5293 = vmatpush2.msra.mxu0 0.0
      %5294 = vmatprep.subr.mxu0 0.0
      %5295 = vmatpush2.msra.mxu0 0.0
      %5296 = vmatprep.subr.mxu0 0.0
      %5297 = vmatpush2.msra.mxu0 0.0
      %5298 = vmatprep.subr.mxu0 0.0
      %5299 = vmatpush2.msra.mxu0 0.0
      %5300 = vmatprep.subr.mxu0 0.0
      %5301 = vmatpush2.msra.mxu0 0.0
      %5302 = vmatprep.subr.mxu0 0.0
      %5303 = vmatpush2.msra.mxu0 0.0
      %5304 = vmatprep.subr.mxu0 0.0
      %5305 = vmatpush2.msra.mxu0 0.0
      %5306 = vmatprep.subr.mxu0 0.0
      %5307 = vmatpush2.msra.mxu0 0.0
      %5308 = vmatprep.subr.mxu0 0.0
      %5309 = vmatpush2.msra.mxu0 0.0
      %5310 = vmatprep.subr.mxu0 0.0
      %5311 = vmatpush2.msra.mxu0 0.0
      %5312 = vmatprep.mubr.f32.mxu0 0.0
      %5313 = vmatmul.mubr.f32.gmra.mxu0 %v2335
      %v5314 = vpop.f32.mrf.mxu0
      %v5315 = vadd.f32 0.0, %v5314
      %v5316 = vpop.f32.mrf.mxu0
      %5317 = vdwg.mxu0
      %5318 = vmatprep.subr.mxu0 0.0
      %5319 = vmatpush1.msra.mxu0 0.0
      %5320 = vmatprep.subr.mxu0 0.0
      %5321 = vmatpush1.msra.mxu0 0.0
      %5322 = vmatprep.subr.mxu0 0.0
      %5323 = vmatpush1.msra.mxu0 0.0
      %5324 = vmatprep.subr.mxu0 0.0
      %5325 = vmatpush1.msra.mxu0 0.0
      %5326 = vmatprep.subr.mxu0 0.0
      %5327 = vmatpush1.msra.mxu0 0.0
      %5328 = vmatprep.subr.mxu0 0.0
      %5329 = vmatpush1.msra.mxu0 0.0
      %5330 = vmatprep.subr.mxu0 0.0
      %5331 = vmatpush1.msra.mxu0 0.0
      %5332 = vmatprep.subr.mxu0 0.0
      %5333 = vmatpush1.msra.mxu0 0.0
      %5334 = vmatprep.subr.mxu0 0.0
      %5335 = vmatpush1.msra.mxu0 0.0
      %5336 = vmatprep.subr.mxu0 0.0
      %5337 = vmatpush1.msra.mxu0 0.0
      %5338 = vmatprep.subr.mxu0 0.0
      %5339 = vmatpush1.msra.mxu0 0.0
      %5340 = vmatprep.subr.mxu0 0.0
      %5341 = vmatpush1.msra.mxu0 0.0
      %5342 = vmatprep.subr.mxu0 0.0
      %5343 = vmatpush1.msra.mxu0 0.0
      %5344 = vmatprep.subr.mxu0 0.0
      %5345 = vmatpush1.msra.mxu0 0.0
      %5346 = vmatprep.subr.mxu0 0.0
      %5347 = vmatpush1.msra.mxu0 0.0
      %5348 = vmatprep.subr.mxu0 0.0
      %5349 = vmatpush1.msra.mxu0 %v5315
      %5350 = vmatprep.subr.mxu0 0.0
      %5351 = vmatpush2.msra.mxu0 0.0
      %5352 = vmatprep.subr.mxu0 0.0
      %5353 = vmatpush2.msra.mxu0 0.0
      %5354 = vmatprep.subr.mxu0 0.0
      %5355 = vmatpush2.msra.mxu0 0.0
      %5356 = vmatprep.subr.mxu0 0.0
      %5357 = vmatpush2.msra.mxu0 0.0
      %5358 = vmatprep.subr.mxu0 0.0
      %5359 = vmatpush2.msra.mxu0 0.0
      %5360 = vmatprep.subr.mxu0 0.0
      %5361 = vmatpush2.msra.mxu0 0.0
      %5362 = vmatprep.subr.mxu0 0.0
      %5363 = vmatpush2.msra.mxu0 0.0
      %5364 = vmatprep.subr.mxu0 0.0
      %5365 = vmatpush2.msra.mxu0 0.0
      %5366 = vmatprep.subr.mxu0 0.0
      %5367 = vmatpush2.msra.mxu0 0.0
      %5368 = vmatprep.subr.mxu0 0.0
      %5369 = vmatpush2.msra.mxu0 0.0
      %5370 = vmatprep.subr.mxu0 0.0
      %5371 = vmatpush2.msra.mxu0 0.0
      %5372 = vmatprep.subr.mxu0 0.0
      %5373 = vmatpush2.msra.mxu0 0.0
      %5374 = vmatprep.subr.mxu0 0.0
      %5375 = vmatpush2.msra.mxu0 0.0
      %5376 = vmatprep.subr.mxu0 0.0
      %5377 = vmatpush2.msra.mxu0 0.0
      %5378 = vmatprep.subr.mxu0 0.0
      %5379 = vmatpush2.msra.mxu0 0.0
      %5380 = vmatprep.subr.mxu0 0.0
      %5381 = vmatpush2.msra.mxu0 0.0
      %5382 = vmatprep.mubr.f32.mxu0 0.0
      %5383 = vmatmul.mubr.f32.gmra.mxu0 %v2408
      %v5384 = vpop.f32.mrf.mxu0
      %v5385 = vadd.f32 0.0, %v5384
      %v5386 = vpop.f32.mrf.mxu0
      %5387 = vmatprep.mubr.f32.mxu0 0.0
      %5388 = vmatmul.mubr.f32.gmra.mxu0 %v2411
      %v5389 = vpop.f32.mrf.mxu0
      %v5390 = vadd.f32 0.0, %v5389
      %v5391 = vpop.f32.mrf.mxu0
      %5392 = vdwg.mxu0
      %v5393 = vmul.f32 %v5385, %v2488
      %v5394 = vmul.f32 %v5390, %v2488
      %5395 = vmatprep.subr.mxu0 0.0
      %5396 = vmatpush1.msra.mxu0 0.0
      %5397 = vmatprep.subr.mxu0 0.0
      %5398 = vmatpush1.msra.mxu0 0.0
      %5399 = vmatprep.subr.mxu0 0.0
      %5400 = vmatpush1.msra.mxu0 0.0
      %5401 = vmatprep.subr.mxu0 0.0
      %5402 = vmatpush1.msra.mxu0 0.0
      %5403 = vmatprep.subr.mxu0 0.0
      %5404 = vmatpush1.msra.mxu0 0.0
      %5405 = vmatprep.subr.mxu0 0.0
      %5406 = vmatpush1.msra.mxu0 0.0
      %5407 = vmatprep.subr.mxu0 0.0
      %5408 = vmatpush1.msra.mxu0 0.0
      %5409 = vmatprep.subr.mxu0 0.0
      %5410 = vmatpush1.msra.mxu0 0.0
      %5411 = vmatprep.subr.mxu0 0.0
      %5412 = vmatpush1.msra.mxu0 0.0
      %5413 = vmatprep.subr.mxu0 0.0
      %5414 = vmatpush1.msra.mxu0 0.0
      %5415 = vmatprep.subr.mxu0 0.0
      %5416 = vmatpush1.msra.mxu0 0.0
      %5417 = vmatprep.subr.mxu0 0.0
      %5418 = vmatpush1.msra.mxu0 0.0
      %5419 = vmatprep.subr.mxu0 0.0
      %5420 = vmatpush1.msra.mxu0 0.0
      %5421 = vmatprep.subr.mxu0 0.0
      %5422 = vmatpush1.msra.mxu0 0.0
      %5423 = vmatprep.subr.mxu0 0.0
      %5424 = vmatpush1.msra.mxu0 %v5247
      %5425 = vmatprep.subr.mxu0 0.0
      %5426 = vmatpush1.msra.mxu0 %v5244
      %5427 = vmatprep.subr.mxu0 0.0
      %5428 = vmatpush2.msra.mxu0 0.0
      %5429 = vmatprep.subr.mxu0 0.0
      %5430 = vmatpush2.msra.mxu0 0.0
      %5431 = vmatprep.subr.mxu0 0.0
      %5432 = vmatpush2.msra.mxu0 0.0
      %5433 = vmatprep.subr.mxu0 0.0
      %5434 = vmatpush2.msra.mxu0 0.0
      %5435 = vmatprep.subr.mxu0 0.0
      %5436 = vmatpush2.msra.mxu0 0.0
      %5437 = vmatprep.subr.mxu0 0.0
      %5438 = vmatpush2.msra.mxu0 0.0
      %5439 = vmatprep.subr.mxu0 0.0
      %5440 = vmatpush2.msra.mxu0 0.0
      %5441 = vmatprep.subr.mxu0 0.0
      %5442 = vmatpush2.msra.mxu0 0.0
      %5443 = vmatprep.subr.mxu0 0.0
      %5444 = vmatpush2.msra.mxu0 0.0
      %5445 = vmatprep.subr.mxu0 0.0
      %5446 = vmatpush2.msra.mxu0 0.0
      %5447 = vmatprep.subr.mxu0 0.0
      %5448 = vmatpush2.msra.mxu0 0.0
      %5449 = vmatprep.subr.mxu0 0.0
      %5450 = vmatpush2.msra.mxu0 0.0
      %5451 = vmatprep.subr.mxu0 0.0
      %5452 = vmatpush2.msra.mxu0 0.0
      %5453 = vmatprep.subr.mxu0 0.0
      %5454 = vmatpush2.msra.mxu0 0.0
      %5455 = vmatprep.subr.mxu0 0.0
      %5456 = vmatpush2.msra.mxu0 0.0
      %5457 = vmatprep.subr.mxu0 0.0
      %5458 = vmatpush2.msra.mxu0 0.0
      %5459 = vmatprep.mubr.f32.mxu0 0.0
      %5460 = vmatmul.mubr.f32.gmra.mxu0 %v2335
      %v5461 = vpop.f32.mrf.mxu0
      %v5462 = vadd.f32 0.0, %v5461
      %v5463 = vpop.f32.mrf.mxu0
      %5464 = vdwg.mxu0
      %5465 = vmatprep.subr.mxu0 0.0
      %5466 = vmatpush1.msra.mxu0 0.0
      %5467 = vmatprep.subr.mxu0 0.0
      %5468 = vmatpush1.msra.mxu0 0.0
      %5469 = vmatprep.subr.mxu0 0.0
      %5470 = vmatpush1.msra.mxu0 0.0
      %5471 = vmatprep.subr.mxu0 0.0
      %5472 = vmatpush1.msra.mxu0 0.0
      %5473 = vmatprep.subr.mxu0 0.0
      %5474 = vmatpush1.msra.mxu0 0.0
      %5475 = vmatprep.subr.mxu0 0.0
      %5476 = vmatpush1.msra.mxu0 0.0
      %5477 = vmatprep.subr.mxu0 0.0
      %5478 = vmatpush1.msra.mxu0 0.0
      %5479 = vmatprep.subr.mxu0 0.0
      %5480 = vmatpush1.msra.mxu0 0.0
      %5481 = vmatprep.subr.mxu0 0.0
      %5482 = vmatpush1.msra.mxu0 0.0
      %5483 = vmatprep.subr.mxu0 0.0
      %5484 = vmatpush1.msra.mxu0 0.0
      %5485 = vmatprep.subr.mxu0 0.0
      %5486 = vmatpush1.msra.mxu0 0.0
      %5487 = vmatprep.subr.mxu0 0.0
      %5488 = vmatpush1.msra.mxu0 0.0
      %5489 = vmatprep.subr.mxu0 0.0
      %5490 = vmatpush1.msra.mxu0 0.0
      %5491 = vmatprep.subr.mxu0 0.0
      %5492 = vmatpush1.msra.mxu0 0.0
      %5493 = vmatprep.subr.mxu0 0.0
      %5494 = vmatpush1.msra.mxu0 0.0
      %5495 = vmatprep.subr.mxu0 0.0
      %5496 = vmatpush1.msra.mxu0 %v5462
      %5497 = vmatprep.subr.mxu0 0.0
      %5498 = vmatpush2.msra.mxu0 0.0
      %5499 = vmatprep.subr.mxu0 0.0
      %5500 = vmatpush2.msra.mxu0 0.0
      %5501 = vmatprep.subr.mxu0 0.0
      %5502 = vmatpush2.msra.mxu0 0.0
      %5503 = vmatprep.subr.mxu0 0.0
      %5504 = vmatpush2.msra.mxu0 0.0
      %5505 = vmatprep.subr.mxu0 0.0
      %5506 = vmatpush2.msra.mxu0 0.0
      %5507 = vmatprep.subr.mxu0 0.0
      %5508 = vmatpush2.msra.mxu0 0.0
      %5509 = vmatprep.subr.mxu0 0.0
      %5510 = vmatpush2.msra.mxu0 0.0
      %5511 = vmatprep.subr.mxu0 0.0
      %5512 = vmatpush2.msra.mxu0 0.0
      %5513 = vmatprep.subr.mxu0 0.0
      %5514 = vmatpush2.msra.mxu0 0.0
      %5515 = vmatprep.subr.mxu0 0.0
      %5516 = vmatpush2.msra.mxu0 0.0
      %5517 = vmatprep.subr.mxu0 0.0
      %5518 = vmatpush2.msra.mxu0 0.0
      %5519 = vmatprep.subr.mxu0 0.0
      %5520 = vmatpush2.msra.mxu0 0.0
      %5521 = vmatprep.subr.mxu0 0.0
      %5522 = vmatpush2.msra.mxu0 0.0
      %5523 = vmatprep.subr.mxu0 0.0
      %5524 = vmatpush2.msra.mxu0 0.0
      %5525 = vmatprep.subr.mxu0 0.0
      %5526 = vmatpush2.msra.mxu0 0.0
      %5527 = vmatprep.subr.mxu0 0.0
      %5528 = vmatpush2.msra.mxu0 0.0
      %5529 = vmatprep.mubr.f32.mxu0 0.0
      %5530 = vmatmul.mubr.f32.gmra.mxu0 %v2408
      %v5531 = vpop.f32.mrf.mxu0
      %v5532 = vadd.f32 0.0, %v5531
      %v5533 = vpop.f32.mrf.mxu0
      %5534 = vmatprep.mubr.f32.mxu0 0.0
      %5535 = vmatmul.mubr.f32.gmra.mxu0 %v2411
      %v5536 = vpop.f32.mrf.mxu0
      %v5537 = vadd.f32 0.0, %v5536
      %v5538 = vpop.f32.mrf.mxu0
      %5539 = vdwg.mxu0
      %v5540 = vmul.f32 %v5532, %v2488
      %v5541 = vmul.f32 %v5537, %v2488
      %v5542 = vmul.f32 %v5393, %v5393
      %v5543 = vmul.f32 %v5394, %v5394
      %v5544 = vsub.f32 %v5540, %v5542
      %v5545 = vsub.f32 %v5541, %v5543
      %v5546 = vadd.f32 %v5544, 1e-05
      %v5547 = vadd.f32 %v5545, 1e-05
      %v5548 = vrsqrt.pop %v5546
      %v5549 = vrsqrt.pop %v5547
      %5551 = vset.pattern.permute.xlu0 0
      %5552 = vperm.xlu0 %5551, %v5393
      %v5553 = vpop.permute.xlu0 %5552
      %5556 = vset.pattern.permute.xlu0 0
      %5557 = vperm.xlu0 %5556, %v5394
      %v5558 = vpop.permute.xlu0 %5557
      %v5560 = vsub.f32 %v5228, %v5553
      %v5561 = vsub.f32 %v5229, %v5553
      %v5562 = vsub.f32 %v5230, %v5558
      %v5563 = vsub.f32 %v5231, %v5558
      %5565 = vset.pattern.permute.xlu0 0
      %5566 = vperm.xlu0 %5565, %v5548
      %v5567 = vpop.permute.xlu0 %5566
      %5570 = vset.pattern.permute.xlu0 0
      %5571 = vperm.xlu0 %5570, %v5549
      %v5572 = vpop.permute.xlu0 %5571
      %v5574 = vmul.f32 %v5560, %v5567
      %v5575 = vmul.f32 %v5561, %v5567
      %v5576 = vmul.f32 %v5562, %v5572
      %v5577 = vmul.f32 %v5563, %v5572
      %v5578 = vld [vmem:[%s19] sm:$0xff]
      %v5579 = vld [vmem:[%s19 + $0x8] sm:$0xff]
      %5581 = vset.pattern.permute.xlu0 0
      %5582 = vperm.xlu0 %5581, %v5578
      %v5583 = vpop.permute.xlu0 %5582
      %5586 = vset.pattern.permute.xlu0 0
      %5587 = vperm.xlu0 %5586, %v5579
      %v5588 = vpop.permute.xlu0 %5587
      %v5590 = vmul.f32 %v5574, %v5583
      %v5591 = vmul.f32 %v5575, %v5583
      %v5592 = vmul.f32 %v5576, %v5588
      %v5593 = vmul.f32 %v5577, %v5588
      %v5594 = vld [vmem:[%s20] sm:$0xff]
      %v5595 = vld [vmem:[%s20 + $0x8] sm:$0xff]
      %5597 = vset.pattern.permute.xlu0 0
      %5598 = vperm.xlu0 %5597, %v5594
      %v5599 = vpop.permute.xlu0 %5598
      %5602 = vset.pattern.permute.xlu0 0
      %5603 = vperm.xlu0 %5602, %v5595
      %v5604 = vpop.permute.xlu0 %5603
      %v5606 = vadd.f32 %v5590, %v5599
      %v5607 = vadd.f32 %v5591, %v5599
      %v5608 = vadd.f32 %v5592, %v5604
      %v5609 = vadd.f32 %v5593, %v5604
      %v5610 = vxor.u32 %v5606, 2147483648
      %v5611 = vxor.u32 %v5607, 2147483648
      %v5612 = vxor.u32 %v5608, 2147483648
      %v5613 = vxor.u32 %v5609, 2147483648
      %v5614 = vmul.f32 %v5610, 1.442695
      %v5615 = vpow.pop %v5614
      %v5616 = vmul.f32 %v5611, 1.442695
      %v5617 = vpow.pop %v5616
      %v5618 = vmul.f32 %v5612, 1.442695
      %v5619 = vpow.pop %v5618
      %v5620 = vmul.f32 %v5613, 1.442695
      %v5621 = vpow.pop %v5620
      %v5622 = vadd.f32 %v5615, 1.0
      %v5623 = vadd.f32 %v5617, 1.0
      %v5624 = vadd.f32 %v5619, 1.0
      %v5625 = vadd.f32 %v5621, 1.0
      %v5626 = vrcp.pop %v5622
      %v5627 = vmul.f32 1.0, %v5626
      %v5628 = vrcp.pop %v5623
      %v5629 = vmul.f32 1.0, %v5628
      %v5630 = vrcp.pop %v5624
      %v5631 = vmul.f32 1.0, %v5630
      %v5632 = vrcp.pop %v5625
      %v5633 = vmul.f32 1.0, %v5632
      %v5634 = vmul.f32 %v5606, %v5627
      %v5635 = vmul.f32 %v5607, %v5629
      %v5636 = vmul.f32 %v5608, %v5631
      %v5637 = vmul.f32 %v5609, %v5633
      %v5638 = vadd.f32 %v5634, %v4549
      %v5639 = vadd.f32 %v5635, %v4550
      %v5640 = vadd.f32 %v5636, %v4551
      %v5641 = vadd.f32 %v5637, %v4552
      %v5642 = vadd.f32 %v5638, %v5638
      %v5643 = vadd.f32 %v5639, %v5639
      %v5644 = vadd.f32 %v5640, %v5640
      %v5645 = vadd.f32 %v5641, %v5641
      %v5646 = vld [vmem:[%s21] sm:$0xf]
      %v5647 = vld [vmem:[%s21 + $0x4] sm:$0xf]
      %v5648 = vpack.c.bf16 %v5644, %v5642
      %v5649 = vpack.c.bf16 %v5645, %v5643
      %v5650 = vld [vmem:[%s22] sm:$0xff]
      %v5651 = vld [vmem:[%s22 + $0x8] sm:$0xff]
      %5653 = vset.pattern.permute.xlu0 0
      %5654 = vperm.xlu0 %5653, %v5650
      %v5655 = vpop.permute.xlu0 %5654
      %5658 = vset.pattern.permute.xlu0 0
      %5659 = vperm.xlu0 %5658, %v5651
      %v5660 = vpop.permute.xlu0 %5659
      %v5664 = vunpack.c.l.b16 %v5646
      %v5665 = vunpack.c.l.b16 %v5647
      %v5666 = vpack.c.b16 %v5665, %v5664
      %v5668 = vsel %vm2333, %v5666, 0
      %5670 = vmatprep.subr.bf16.mxu0 0
      %5671 = vmatpush1.bf16.msra.mxu0 0
      %5672 = vmatprep.subr.bf16.mxu0 0
      %5673 = vmatpush1.bf16.msra.mxu0 0
      %5674 = vmatprep.subr.bf16.mxu0 0
      %5675 = vmatpush1.bf16.msra.mxu0 0
      %5676 = vmatprep.subr.bf16.mxu0 0
      %5677 = vmatpush1.bf16.msra.mxu0 0
      %5678 = vmatprep.subr.bf16.mxu0 0
      %5679 = vmatpush1.bf16.msra.mxu0 0
      %5680 = vmatprep.subr.bf16.mxu0 0
      %5681 = vmatpush1.bf16.msra.mxu0 0
      %5682 = vmatprep.subr.bf16.mxu0 0
      %5683 = vmatpush1.bf16.msra.mxu0 0
      %5684 = vmatprep.subr.bf16.mxu0 %v5649
      %5685 = vmatpush1.bf16.msra.mxu0 %v5648
      %5686 = vmatprep.subr.bf16.mxu0 0
      %5687 = vmatpush2.bf16.msra.mxu0 0
      %5688 = vmatprep.subr.bf16.mxu0 0
      %5689 = vmatpush2.bf16.msra.mxu0 0
      %5690 = vmatprep.subr.bf16.mxu0 0
      %5691 = vmatpush2.bf16.msra.mxu0 0
      %5692 = vmatprep.subr.bf16.mxu0 0
      %5693 = vmatpush2.bf16.msra.mxu0 0
      %5694 = vmatprep.subr.bf16.mxu0 0
      %5695 = vmatpush2.bf16.msra.mxu0 0
      %5696 = vmatprep.subr.bf16.mxu0 0
      %5697 = vmatpush2.bf16.msra.mxu0 0
      %5698 = vmatprep.subr.bf16.mxu0 0
      %5699 = vmatpush2.bf16.msra.mxu0 0
      %5700 = vmatprep.subr.bf16.mxu0 0
      %5701 = vmatpush2.bf16.msra.mxu0 0
      %5702 = vmatprep.mubr.bf16.mxu0 0
      %5703 = vmatmul.mubr.bf16.gmra.mxu0 %v5668
      %v5704 = vpop.f32.mrf.mxu0
      %v5705 = vadd.f32 %v5655, %v5704
      %v5706 = vpop.f32.mrf.mxu0
      %v5707 = vadd.f32 %v5655, %v5706
      %v5708 = vpop.f32.mrf.mxu0
      %v5709 = vadd.f32 %v5660, %v5708
      %v5710 = vpop.f32.mrf.mxu0
      %v5711 = vadd.f32 %v5660, %v5710
      %5712 = vdwg.mxu0
      %v5713 = vadd.f32 %v5705, %v5707
      %5714 = vadd.xlane.f32.xlu0 %v5713
      %v5715 = vpop.xlane.xlu0 %5714
      %v5716 = vadd.f32 %v5709, %v5711
      %5717 = vadd.xlane.f32.xlu0 %v5716
      %v5718 = vpop.xlane.xlu0 %5717
      %v5719 = vmul.f32 %v5705, %v5705
      %v5720 = vmul.f32 %v5707, %v5707
      %v5721 = vmul.f32 %v5709, %v5709
      %v5722 = vmul.f32 %v5711, %v5711
      %v5723 = vadd.f32 %v5719, %v5720
      %5724 = vadd.xlane.f32.xlu0 %v5723
      %v5725 = vpop.xlane.xlu0 %5724
      %v5726 = vadd.f32 %v5721, %v5722
      %5727 = vadd.xlane.f32.xlu0 %v5726
      %v5728 = vpop.xlane.xlu0 %5727
      %5729 = vmatprep.subr.mxu0 0.0
      %5730 = vmatpush1.msra.mxu0 0.0
      %5731 = vmatprep.subr.mxu0 0.0
      %5732 = vmatpush1.msra.mxu0 0.0
      %5733 = vmatprep.subr.mxu0 0.0
      %5734 = vmatpush1.msra.mxu0 0.0
      %5735 = vmatprep.subr.mxu0 0.0
      %5736 = vmatpush1.msra.mxu0 0.0
      %5737 = vmatprep.subr.mxu0 0.0
      %5738 = vmatpush1.msra.mxu0 0.0
      %5739 = vmatprep.subr.mxu0 0.0
      %5740 = vmatpush1.msra.mxu0 0.0
      %5741 = vmatprep.subr.mxu0 0.0
      %5742 = vmatpush1.msra.mxu0 0.0
      %5743 = vmatprep.subr.mxu0 0.0
      %5744 = vmatpush1.msra.mxu0 0.0
      %5745 = vmatprep.subr.mxu0 0.0
      %5746 = vmatpush1.msra.mxu0 0.0
      %5747 = vmatprep.subr.mxu0 0.0
      %5748 = vmatpush1.msra.mxu0 0.0
      %5749 = vmatprep.subr.mxu0 0.0
      %5750 = vmatpush1.msra.mxu0 0.0
      %5751 = vmatprep.subr.mxu0 0.0
      %5752 = vmatpush1.msra.mxu0 0.0
      %5753 = vmatprep.subr.mxu0 0.0
      %5754 = vmatpush1.msra.mxu0 0.0
      %5755 = vmatprep.subr.mxu0 0.0
      %5756 = vmatpush1.msra.mxu0 0.0
      %5757 = vmatprep.subr.mxu0 0.0
      %5758 = vmatpush1.msra.mxu0 %v5718
      %5759 = vmatprep.subr.mxu0 0.0
      %5760 = vmatpush1.msra.mxu0 %v5715
      %5761 = vmatprep.subr.mxu0 0.0
      %5762 = vmatpush2.msra.mxu0 0.0
      %5763 = vmatprep.subr.mxu0 0.0
      %5764 = vmatpush2.msra.mxu0 0.0
      %5765 = vmatprep.subr.mxu0 0.0
      %5766 = vmatpush2.msra.mxu0 0.0
      %5767 = vmatprep.subr.mxu0 0.0
      %5768 = vmatpush2.msra.mxu0 0.0
      %5769 = vmatprep.subr.mxu0 0.0
      %5770 = vmatpush2.msra.mxu0 0.0
      %5771 = vmatprep.subr.mxu0 0.0
      %5772 = vmatpush2.msra.mxu0 0.0
      %5773 = vmatprep.subr.mxu0 0.0
      %5774 = vmatpush2.msra.mxu0 0.0
      %5775 = vmatprep.subr.mxu0 0.0
      %5776 = vmatpush2.msra.mxu0 0.0
      %5777 = vmatprep.subr.mxu0 0.0
      %5778 = vmatpush2.msra.mxu0 0.0
      %5779 = vmatprep.subr.mxu0 0.0
      %5780 = vmatpush2.msra.mxu0 0.0
      %5781 = vmatprep.subr.mxu0 0.0
      %5782 = vmatpush2.msra.mxu0 0.0
      %5783 = vmatprep.subr.mxu0 0.0
      %5784 = vmatpush2.msra.mxu0 0.0
      %5785 = vmatprep.subr.mxu0 0.0
      %5786 = vmatpush2.msra.mxu0 0.0
      %5787 = vmatprep.subr.mxu0 0.0
      %5788 = vmatpush2.msra.mxu0 0.0
      %5789 = vmatprep.subr.mxu0 0.0
      %5790 = vmatpush2.msra.mxu0 0.0
      %5791 = vmatprep.subr.mxu0 0.0
      %5792 = vmatpush2.msra.mxu0 0.0
      %5793 = vmatprep.mubr.f32.mxu0 0.0
      %5794 = vmatmul.mubr.f32.gmra.mxu0 %v2335
      %v5795 = vpop.f32.mrf.mxu0
      %v5796 = vadd.f32 0.0, %v5795
      %v5797 = vpop.f32.mrf.mxu0
      %5798 = vdwg.mxu0
      %5799 = vmatprep.subr.mxu0 0.0
      %5800 = vmatpush1.msra.mxu0 0.0
      %5801 = vmatprep.subr.mxu0 0.0
      %5802 = vmatpush1.msra.mxu0 0.0
      %5803 = vmatprep.subr.mxu0 0.0
      %5804 = vmatpush1.msra.mxu0 0.0
      %5805 = vmatprep.subr.mxu0 0.0
      %5806 = vmatpush1.msra.mxu0 0.0
      %5807 = vmatprep.subr.mxu0 0.0
      %5808 = vmatpush1.msra.mxu0 0.0
      %5809 = vmatprep.subr.mxu0 0.0
      %5810 = vmatpush1.msra.mxu0 0.0
      %5811 = vmatprep.subr.mxu0 0.0
      %5812 = vmatpush1.msra.mxu0 0.0
      %5813 = vmatprep.subr.mxu0 0.0
      %5814 = vmatpush1.msra.mxu0 0.0
      %5815 = vmatprep.subr.mxu0 0.0
      %5816 = vmatpush1.msra.mxu0 0.0
      %5817 = vmatprep.subr.mxu0 0.0
      %5818 = vmatpush1.msra.mxu0 0.0
      %5819 = vmatprep.subr.mxu0 0.0
      %5820 = vmatpush1.msra.mxu0 0.0
      %5821 = vmatprep.subr.mxu0 0.0
      %5822 = vmatpush1.msra.mxu0 0.0
      %5823 = vmatprep.subr.mxu0 0.0
      %5824 = vmatpush1.msra.mxu0 0.0
      %5825 = vmatprep.subr.mxu0 0.0
      %5826 = vmatpush1.msra.mxu0 0.0
      %5827 = vmatprep.subr.mxu0 0.0
      %5828 = vmatpush1.msra.mxu0 0.0
      %5829 = vmatprep.subr.mxu0 0.0
      %5830 = vmatpush1.msra.mxu0 %v5796
      %5831 = vmatprep.subr.mxu0 0.0
      %5832 = vmatpush2.msra.mxu0 0.0
      %5833 = vmatprep.subr.mxu0 0.0
      %5834 = vmatpush2.msra.mxu0 0.0
      %5835 = vmatprep.subr.mxu0 0.0
      %5836 = vmatpush2.msra.mxu0 0.0
      %5837 = vmatprep.subr.mxu0 0.0
      %5838 = vmatpush2.msra.mxu0 0.0
      %5839 = vmatprep.subr.mxu0 0.0
      %5840 = vmatpush2.msra.mxu0 0.0
      %5841 = vmatprep.subr.mxu0 0.0
      %5842 = vmatpush2.msra.mxu0 0.0
      %5843 = vmatprep.subr.mxu0 0.0
      %5844 = vmatpush2.msra.mxu0 0.0
      %5845 = vmatprep.subr.mxu0 0.0
      %5846 = vmatpush2.msra.mxu0 0.0
      %5847 = vmatprep.subr.mxu0 0.0
      %5848 = vmatpush2.msra.mxu0 0.0
      %5849 = vmatprep.subr.mxu0 0.0
      %5850 = vmatpush2.msra.mxu0 0.0
      %5851 = vmatprep.subr.mxu0 0.0
      %5852 = vmatpush2.msra.mxu0 0.0
      %5853 = vmatprep.subr.mxu0 0.0
      %5854 = vmatpush2.msra.mxu0 0.0
      %5855 = vmatprep.subr.mxu0 0.0
      %5856 = vmatpush2.msra.mxu0 0.0
      %5857 = vmatprep.subr.mxu0 0.0
      %5858 = vmatpush2.msra.mxu0 0.0
      %5859 = vmatprep.subr.mxu0 0.0
      %5860 = vmatpush2.msra.mxu0 0.0
      %5861 = vmatprep.subr.mxu0 0.0
      %5862 = vmatpush2.msra.mxu0 0.0
      %5863 = vmatprep.mubr.f32.mxu0 0.0
      %5864 = vmatmul.mubr.f32.gmra.mxu0 %v2408
      %v5865 = vpop.f32.mrf.mxu0
      %v5866 = vadd.f32 0.0, %v5865
      %v5867 = vpop.f32.mrf.mxu0
      %5868 = vmatprep.mubr.f32.mxu0 0.0
      %5869 = vmatmul.mubr.f32.gmra.mxu0 %v2411
      %v5870 = vpop.f32.mrf.mxu0
      %v5871 = vadd.f32 0.0, %v5870
      %v5872 = vpop.f32.mrf.mxu0
      %5873 = vdwg.mxu0
      %v5874 = vmul.f32 %v5866, %v2488
      %v5875 = vmul.f32 %v5871, %v2488
      %5876 = vmatprep.subr.mxu0 0.0
      %5877 = vmatpush1.msra.mxu0 0.0
      %5878 = vmatprep.subr.mxu0 0.0
      %5879 = vmatpush1.msra.mxu0 0.0
      %5880 = vmatprep.subr.mxu0 0.0
      %5881 = vmatpush1.msra.mxu0 0.0
      %5882 = vmatprep.subr.mxu0 0.0
      %5883 = vmatpush1.msra.mxu0 0.0
      %5884 = vmatprep.subr.mxu0 0.0
      %5885 = vmatpush1.msra.mxu0 0.0
      %5886 = vmatprep.subr.mxu0 0.0
      %5887 = vmatpush1.msra.mxu0 0.0
      %5888 = vmatprep.subr.mxu0 0.0
      %5889 = vmatpush1.msra.mxu0 0.0
      %5890 = vmatprep.subr.mxu0 0.0
      %5891 = vmatpush1.msra.mxu0 0.0
      %5892 = vmatprep.subr.mxu0 0.0
      %5893 = vmatpush1.msra.mxu0 0.0
      %5894 = vmatprep.subr.mxu0 0.0
      %5895 = vmatpush1.msra.mxu0 0.0
      %5896 = vmatprep.subr.mxu0 0.0
      %5897 = vmatpush1.msra.mxu0 0.0
      %5898 = vmatprep.subr.mxu0 0.0
      %5899 = vmatpush1.msra.mxu0 0.0
      %5900 = vmatprep.subr.mxu0 0.0
      %5901 = vmatpush1.msra.mxu0 0.0
      %5902 = vmatprep.subr.mxu0 0.0
      %5903 = vmatpush1.msra.mxu0 0.0
      %5904 = vmatprep.subr.mxu0 0.0
      %5905 = vmatpush1.msra.mxu0 %v5728
      %5906 = vmatprep.subr.mxu0 0.0
      %5907 = vmatpush1.msra.mxu0 %v5725
      %5908 = vmatprep.subr.mxu0 0.0
      %5909 = vmatpush2.msra.mxu0 0.0
      %5910 = vmatprep.subr.mxu0 0.0
      %5911 = vmatpush2.msra.mxu0 0.0
      %5912 = vmatprep.subr.mxu0 0.0
      %5913 = vmatpush2.msra.mxu0 0.0
      %5914 = vmatprep.subr.mxu0 0.0
      %5915 = vmatpush2.msra.mxu0 0.0
      %5916 = vmatprep.subr.mxu0 0.0
      %5917 = vmatpush2.msra.mxu0 0.0
      %5918 = vmatprep.subr.mxu0 0.0
      %5919 = vmatpush2.msra.mxu0 0.0
      %5920 = vmatprep.subr.mxu0 0.0
      %5921 = vmatpush2.msra.mxu0 0.0
      %5922 = vmatprep.subr.mxu0 0.0
      %5923 = vmatpush2.msra.mxu0 0.0
      %5924 = vmatprep.subr.mxu0 0.0
      %5925 = vmatpush2.msra.mxu0 0.0
      %5926 = vmatprep.subr.mxu0 0.0
      %5927 = vmatpush2.msra.mxu0 0.0
      %5928 = vmatprep.subr.mxu0 0.0
      %5929 = vmatpush2.msra.mxu0 0.0
      %5930 = vmatprep.subr.mxu0 0.0
      %5931 = vmatpush2.msra.mxu0 0.0
      %5932 = vmatprep.subr.mxu0 0.0
      %5933 = vmatpush2.msra.mxu0 0.0
      %5934 = vmatprep.subr.mxu0 0.0
      %5935 = vmatpush2.msra.mxu0 0.0
      %5936 = vmatprep.subr.mxu0 0.0
      %5937 = vmatpush2.msra.mxu0 0.0
      %5938 = vmatprep.subr.mxu0 0.0
      %5939 = vmatpush2.msra.mxu0 0.0
      %5940 = vmatprep.mubr.f32.mxu0 0.0
      %5941 = vmatmul.mubr.f32.gmra.mxu0 %v2335
      %v5942 = vpop.f32.mrf.mxu0
      %v5943 = vadd.f32 0.0, %v5942
      %v5944 = vpop.f32.mrf.mxu0
      %5945 = vdwg.mxu0
      %5946 = vmatprep.subr.mxu0 0.0
      %5947 = vmatpush1.msra.mxu0 0.0
      %5948 = vmatprep.subr.mxu0 0.0
      %5949 = vmatpush1.msra.mxu0 0.0
      %5950 = vmatprep.subr.mxu0 0.0
      %5951 = vmatpush1.msra.mxu0 0.0
      %5952 = vmatprep.subr.mxu0 0.0
      %5953 = vmatpush1.msra.mxu0 0.0
      %5954 = vmatprep.subr.mxu0 0.0
      %5955 = vmatpush1.msra.mxu0 0.0
      %5956 = vmatprep.subr.mxu0 0.0
      %5957 = vmatpush1.msra.mxu0 0.0
      %5958 = vmatprep.subr.mxu0 0.0
      %5959 = vmatpush1.msra.mxu0 0.0
      %5960 = vmatprep.subr.mxu0 0.0
      %5961 = vmatpush1.msra.mxu0 0.0
      %5962 = vmatprep.subr.mxu0 0.0
      %5963 = vmatpush1.msra.mxu0 0.0
      %5964 = vmatprep.subr.mxu0 0.0
      %5965 = vmatpush1.msra.mxu0 0.0
      %5966 = vmatprep.subr.mxu0 0.0
      %5967 = vmatpush1.msra.mxu0 0.0
      %5968 = vmatprep.subr.mxu0 0.0
      %5969 = vmatpush1.msra.mxu0 0.0
      %5970 = vmatprep.subr.mxu0 0.0
      %5971 = vmatpush1.msra.mxu0 0.0
      %5972 = vmatprep.subr.mxu0 0.0
      %5973 = vmatpush1.msra.mxu0 0.0
      %5974 = vmatprep.subr.mxu0 0.0
      %5975 = vmatpush1.msra.mxu0 0.0
      %5976 = vmatprep.subr.mxu0 0.0
      %5977 = vmatpush1.msra.mxu0 %v5943
      %5978 = vmatprep.subr.mxu0 0.0
      %5979 = vmatpush2.msra.mxu0 0.0
      %5980 = vmatprep.subr.mxu0 0.0
      %5981 = vmatpush2.msra.mxu0 0.0
      %5982 = vmatprep.subr.mxu0 0.0
      %5983 = vmatpush2.msra.mxu0 0.0
      %5984 = vmatprep.subr.mxu0 0.0
      %5985 = vmatpush2.msra.mxu0 0.0
      %5986 = vmatprep.subr.mxu0 0.0
      %5987 = vmatpush2.msra.mxu0 0.0
      %5988 = vmatprep.subr.mxu0 0.0
      %5989 = vmatpush2.msra.mxu0 0.0
      %5990 = vmatprep.subr.mxu0 0.0
      %5991 = vmatpush2.msra.mxu0 0.0
      %5992 = vmatprep.subr.mxu0 0.0
      %5993 = vmatpush2.msra.mxu0 0.0
      %5994 = vmatprep.subr.mxu0 0.0
      %5995 = vmatpush2.msra.mxu0 0.0
      %5996 = vmatprep.subr.mxu0 0.0
      %5997 = vmatpush2.msra.mxu0 0.0
      %5998 = vmatprep.subr.mxu0 0.0
      %5999 = vmatpush2.msra.mxu0 0.0
      %6000 = vmatprep.subr.mxu0 0.0
      %6001 = vmatpush2.msra.mxu0 0.0
      %6002 = vmatprep.subr.mxu0 0.0
      %6003 = vmatpush2.msra.mxu0 0.0
      %6004 = vmatprep.subr.mxu0 0.0
      %6005 = vmatpush2.msra.mxu0 0.0
      %6006 = vmatprep.subr.mxu0 0.0
      %6007 = vmatpush2.msra.mxu0 0.0
      %6008 = vmatprep.subr.mxu0 0.0
      %6009 = vmatpush2.msra.mxu0 0.0
      %6010 = vmatprep.mubr.f32.mxu0 0.0
      %6011 = vmatmul.mubr.f32.gmra.mxu0 %v2408
      %v6012 = vpop.f32.mrf.mxu0
      %v6013 = vadd.f32 0.0, %v6012
      %v6014 = vpop.f32.mrf.mxu0
      %6015 = vmatprep.mubr.f32.mxu0 0.0
      %6016 = vmatmul.mubr.f32.gmra.mxu0 %v2411
      %v6017 = vpop.f32.mrf.mxu0
      %v6018 = vadd.f32 0.0, %v6017
      %v6019 = vpop.f32.mrf.mxu0
      %6020 = vdwg.mxu0
      %v6021 = vmul.f32 %v6013, %v2488
      %v6022 = vmul.f32 %v6018, %v2488
      %v6023 = vmul.f32 %v5874, %v5874
      %v6024 = vmul.f32 %v5875, %v5875
      %v6025 = vsub.f32 %v6021, %v6023
      %v6026 = vsub.f32 %v6022, %v6024
      %v6027 = vadd.f32 %v6025, 1e-05
      %v6028 = vadd.f32 %v6026, 1e-05
      %v6029 = vrsqrt.pop %v6027
      %v6030 = vrsqrt.pop %v6028
      %6032 = vset.pattern.permute.xlu0 0
      %6033 = vperm.xlu0 %6032, %v5874
      %v6034 = vpop.permute.xlu0 %6033
      %6037 = vset.pattern.permute.xlu0 0
      %6038 = vperm.xlu0 %6037, %v5875
      %v6039 = vpop.permute.xlu0 %6038
      %v6041 = vsub.f32 %v5705, %v6034
      %v6042 = vsub.f32 %v5707, %v6034
      %v6043 = vsub.f32 %v5709, %v6039
      %v6044 = vsub.f32 %v5711, %v6039
      %6046 = vset.pattern.permute.xlu0 0
      %6047 = vperm.xlu0 %6046, %v6029
      %v6048 = vpop.permute.xlu0 %6047
      %6051 = vset.pattern.permute.xlu0 0
      %6052 = vperm.xlu0 %6051, %v6030
      %v6053 = vpop.permute.xlu0 %6052
      %v6055 = vmul.f32 %v6041, %v6048
      %v6056 = vmul.f32 %v6042, %v6048
      %v6057 = vmul.f32 %v6043, %v6053
      %v6058 = vmul.f32 %v6044, %v6053
      %v6059 = vld [vmem:[%s23] sm:$0xff]
      %v6060 = vld [vmem:[%s23 + $0x8] sm:$0xff]
      %6062 = vset.pattern.permute.xlu0 0
      %6063 = vperm.xlu0 %6062, %v6059
      %v6064 = vpop.permute.xlu0 %6063
      %6067 = vset.pattern.permute.xlu0 0
      %6068 = vperm.xlu0 %6067, %v6060
      %v6069 = vpop.permute.xlu0 %6068
      %v6071 = vmul.f32 %v6055, %v6064
      %v6072 = vmul.f32 %v6056, %v6064
      %v6073 = vmul.f32 %v6057, %v6069
      %v6074 = vmul.f32 %v6058, %v6069
      %v6075 = vld [vmem:[%s24] sm:$0xff]
      %v6076 = vld [vmem:[%s24 + $0x8] sm:$0xff]
      %6078 = vset.pattern.permute.xlu0 0
      %6079 = vperm.xlu0 %6078, %v6075
      %v6080 = vpop.permute.xlu0 %6079
      %6083 = vset.pattern.permute.xlu0 0
      %6084 = vperm.xlu0 %6083, %v6076
      %v6085 = vpop.permute.xlu0 %6084
      %v6087 = vadd.f32 %v6071, %v6080
      %v6088 = vadd.f32 %v6072, %v6080
      %v6089 = vadd.f32 %v6073, %v6085
      %v6090 = vadd.f32 %v6074, %v6085
      %v6091 = vxor.u32 %v6087, 2147483648
      %v6092 = vxor.u32 %v6088, 2147483648
      %v6093 = vxor.u32 %v6089, 2147483648
      %v6094 = vxor.u32 %v6090, 2147483648
      %v6095 = vmul.f32 %v6091, 1.442695
      %v6096 = vpow.pop %v6095
      %v6097 = vmul.f32 %v6092, 1.442695
      %v6098 = vpow.pop %v6097
      %v6099 = vmul.f32 %v6093, 1.442695
      %v6100 = vpow.pop %v6099
      %v6101 = vmul.f32 %v6094, 1.442695
      %v6102 = vpow.pop %v6101
      %v6103 = vadd.f32 %v6096, 1.0
      %v6104 = vadd.f32 %v6098, 1.0
      %v6105 = vadd.f32 %v6100, 1.0
      %v6106 = vadd.f32 %v6102, 1.0
      %v6107 = vrcp.pop %v6103
      %v6108 = vmul.f32 1.0, %v6107
      %v6109 = vrcp.pop %v6104
      %v6110 = vmul.f32 1.0, %v6109
      %v6111 = vrcp.pop %v6105
      %v6112 = vmul.f32 1.0, %v6111
      %v6113 = vrcp.pop %v6106
      %v6114 = vmul.f32 1.0, %v6113
      %v6115 = vmul.f32 %v6087, %v6108
      %v6116 = vmul.f32 %v6088, %v6110
      %v6117 = vmul.f32 %v6089, %v6112
      %v6118 = vmul.f32 %v6090, %v6114
      %6119 = vst [vmem:[%s781] sm:$0xff] %v6115
      %6120 = vst [vmem:[%s781 + $0x8] sm:$0xff] %v6116
      %6121 = vst [vmem:[%s781 + $0x10] sm:$0xff] %v6117
      %6122 = vst [vmem:[%s781 + $0x18] sm:$0xff] %v6118
      %p6123 = scmp.lt.s32.totalorder %s36, 1
      %s6124 = scalar_select %p6123, %s36, 1
      %s6125 = smul.addr %s6124, 4
      %s6126 = smul.addr %s6125, 8
      %s6127 = scalar_lea.vmem %s25, %s6126
      // Predicated region
      $region121: #{up_forward.1} parent=119 // pred_check
        %p6128 = pneg %p589
      $region122: #{up_forward.1} parent=119 // pred_check_branch
        %6130 = sbr.rel (%p6128) target = $region124
      $region123: #{up_forward.1} parent=119 // pred_region
        _
      $region124: #{up_forward.1} parent=119 // pred_fallthru
        _
    $region120: #{up_forward.1} parent=5 // pred_fallthru
      _
    %p6131 = scmp.le.s32.totalorder 2, %s31
    // Predicated region
    $region125: #{up_forward.1} parent=5 // pred_check
      %p6132 = pneg %p6131
    $region126: #{up_forward.1} parent=5 // pred_check_branch
      %6134 = sbr.rel (%p6132) target = $region128
    $region127: #{up_forward.1} parent=5 // pred_region
      %s6135 = ssub.s32 %s31, 2
      // Predicated region
      $region129: #{up_forward.1} parent=127 // pred_check
        %p6136 = pneg %p595
      $region130: #{up_forward.1} parent=127 // pred_check_branch
        %6138 = sbr.rel (%p6136) target = $region132
      $region131: #{up_forward.1} parent=127 // pred_region
        %p6139 = scmp.lt.s32.totalorder %s37, 1
        %s6140 = scalar_select %p6139, %s37, 1
        %s6141 = smul.addr %s6140, 4
        %s6142 = smul.addr %s6141, 8
        %s6143 = scalar_lea.vmem %s25, %s6142
      $region132: #{up_forward.1} parent=127 // pred_fallthru
        _
    $region128: #{up_forward.1} parent=5 // pred_fallthru
      _
  $region6: #{up_forward.1} parent=0 // loop_footer
    %s35 = sadd.s32 1, %s31
  $region7: #{up_forward.1} parent=0 // loop_footer_branch
    %30 = sbr.rel target = $region3
  $region8: #{up_forward.1} parent=0 // loop_exit
    _

</llo_original>
